<compile_context>
chip_gen: v7x
topology: tpu7x:2x2x1
jax: 0.10.0
libtpu: 0.0.40
codegen_flags: <defaults>
</compile_context>

<pallas_src>
import math
import functools

import jax
import jax.numpy as jnp
from jax.experimental import pallas as pl
from jax.experimental.pallas import tpu as pltpu


def ginn_kernel(x_ref, m_ref, ag_ref, af_ref, nrm_ref, w_in_ref, w_hm_ref, b_ref,
                out_ref, xw1_scr, xs_scr, h_scr, u_scr, c_scr):
    f32 = jnp.float32
    bf16 = jnp.bfloat16

    G, N, _ = ag_ref.shape
    GN, Fin = x_ref.shape
    H = w_hm_ref.shape[0] - Fin

    # ---- unpack shared parameters ------------------------------------------
    w_in = w_in_ref[...].astype(bf16)          # (Fin, H+Fin) = [W1 | ws]
    wh = w_hm_ref[0:H, :].astype(bf16)         # (H, Fin)
    wm = w_hm_ref[H:H + Fin, :].astype(bf16)   # (Fin, Fin)
    b1 = b_ref[0:1, 0:H]                       # (1, H)
    b_out = b_ref[1:2, 0:Fin]                  # (1, Fin) = bh + bs + bm

    nrm = nrm_ref[...]                         # (GN, 2) = [norm_g | norm_f]
    ng_all = nrm[:, 0:1]
    nf_all = nrm[:, 1:2]

    # ---- batched front-end (one MXU issue over all G graphs each) ----------
    xw = jnp.dot(x_ref[...].astype(bf16), w_in,
                 preferred_element_type=f32)                     # (GN, H+Fin)
    xw1_scr[...] = (xw[:, 0:H] * ng_all).astype(bf16)            # ng * (x @ W1)
    xs_scr[...] = (xw[:, H:H + Fin] * nf_all).astype(bf16)       # nf * (x @ ws)
    # m @ wm + (bh + bs + bm): independent of graph structure.
    c_scr[...] = jnp.dot(m_ref[...].astype(bf16), wm,
                         preferred_element_type=f32) + b_out

    # ---- per-graph propagation 1: h = relu(ng * (Ag @ (ng * xW1)) + b1) ----
    for g in range(G):
        r0 = g * N
        r1 = r0 + N
        ng_g = nrm_ref[r0:r1, 0:1]                               # (N, 1)
        ag = ag_ref[g].astype(bf16)                              # (N, N)
        acc = jnp.dot(ag, xw1_scr[r0:r1, :], preferred_element_type=f32)
        h = jnp.maximum(acc * ng_g + b1, 0.0)
        # store ng * h so the next shared GEMM already carries the pre-prop scale
        h_scr[r0:r1, :] = (h * ng_g).astype(bf16)

    # ---- batched middle: u = (ng * h) @ wh == ng * (h @ wh) -----------------
    u_scr[...] = jnp.dot(h_scr[...], wh,
                         preferred_element_type=f32).astype(bf16)

    # ---- per-graph propagation 2 + skip connections + sigmoid ---------------
    for g in range(G):
        r0 = g * N
        r1 = r0 + N
        ng_g = nrm_ref[r0:r1, 0:1]
        nf_g = nrm_ref[r0:r1, 1:2]
        ag = ag_ref[g].astype(bf16)
        af = af_ref[g].astype(bf16)
        pg = jnp.dot(ag, u_scr[r0:r1, :], preferred_element_type=f32) * ng_g
        pf = jnp.dot(af, xs_scr[r0:r1, :], preferred_element_type=f32) * nf_g
        out_ref[r0:r1, :] = jax.nn.sigmoid(
            pg + pf + c_scr[r0:r1, :]).astype(out_ref.dtype)


def ginn_autoencoder_global_forward(features, mask, m_mat, a_g, a_f,
                                    norm_g, norm_f, params, *, graphs_per_step=8):
    """Batched fused forward pass of ginn_autoencoder_global."""
    f32 = jnp.float32
    B, N, Fin = features.shape
    H = params["w1"].shape[1]

    G = min(graphs_per_step, B)
    pad = (-B) % G
    if pad:
        def padb(a):
            return jnp.pad(a, ((0, pad),) + ((0, 0),) * (a.ndim - 1))
        features, mask, m_mat, a_g, a_f, norm_g, norm_f = map(
            padb, (features, mask, m_mat, a_g, a_f, norm_g, norm_f))
    Bp = B + pad
    nblocks = Bp // G

    # Flat per-node layouts (free reshapes) — graph g occupies rows [g*N, (g+1)*N).
    x2 = (features * mask).astype(f32).reshape(Bp * N, Fin)
    m2 = m_mat.astype(f32).reshape(Bp * N, Fin)
    nrm2 = jnp.concatenate([norm_g, norm_f], axis=2).astype(f32).reshape(Bp * N, 2)

    # Tiny packed parameters (shared across the whole grid).
    w_in = jnp.concatenate([params["w1"], params["ws"]], axis=1).astype(f32)   # (Fin, H+Fin)
    w_hm = jnp.concatenate([params["wh"], params["wm"]], axis=0).astype(f32)   # (H+Fin, Fin)
    b_out = params["bh"] + params["bs"] + params["bm"]
    b_pack = jnp.zeros((2, H + Fin), f32)
    b_pack = b_pack.at[0, :H].set(params["b1"][0])
    b_pack = b_pack.at[1, :Fin].set(b_out[0])

    out2 = pl.pallas_call(
        ginn_kernel,
        out_shape=jax.ShapeDtypeStruct((Bp * N, Fin), f32),
        grid=(nblocks,),
        in_specs=[
            pl.BlockSpec((G * N, Fin), lambda b: (b, 0)),      # x = features*mask
            pl.BlockSpec((G * N, Fin), lambda b: (b, 0)),      # m
            pl.BlockSpec((G, N, N), lambda b: (b, 0, 0)),      # A_g (raw)
            pl.BlockSpec((G, N, N), lambda b: (b, 0, 0)),      # A_f (raw)
            pl.BlockSpec((G * N, 2), lambda b: (b, 0)),        # [norm_g | norm_f]
            pl.BlockSpec((Fin, H + Fin), lambda b: (0, 0)),    # [W1 | ws]
            pl.BlockSpec((H + Fin, Fin), lambda b: (0, 0)),    # [wh ; wm]
            pl.BlockSpec((2, H + Fin), lambda b: (0, 0)),      # [b1 ; bh+bs+bm]
        ],
        out_specs=pl.BlockSpec((G * N, Fin), lambda b: (b, 0)),
        scratch_shapes=[
            pltpu.VMEM((G * N, H), jnp.bfloat16),    # ng * (x @ W1)
            pltpu.VMEM((G * N, Fin), jnp.bfloat16),  # nf * (x @ ws)
            pltpu.VMEM((G * N, H), jnp.bfloat16),    # ng * h
            pltpu.VMEM((G * N, Fin), jnp.bfloat16),  # ng * (h @ wh)
            pltpu.VMEM((G * N, Fin), f32),           # m @ wm + b_out
        ],
        compiler_params=pltpu.CompilerParams(
            dimension_semantics=("parallel",)),
    )(x2, m2, a_g.astype(f32), a_f.astype(f32), nrm2, w_in, w_hm, b_pack)

    return out2.reshape(Bp, N, Fin)[:B]


def reference_forward(features, mask, m_mat, a_g, a_f, norm_g, norm_f, p):
    """Plain-JAX f32 reference mirroring the PyTorch module (batched over graphs)."""
    x = features * mask
    h = jnp.einsum('bnf,fh->bnh', x, p["w1"]) * norm_g
    h = jnp.einsum('bij,bjh->bih', a_g, h) * norm_g + p["b1"]
    h = jnp.maximum(h, 0.0)

    h2 = jnp.einsum('bnh,hf->bnf', h, p["wh"]) * norm_g
    h2 = jnp.einsum('bij,bjf->bif', a_g, h2) * norm_g + p["bh"]
    s = jnp.einsum('bnf,fg->bng', x, p["ws"]) * norm_f
    s = jnp.einsum('bij,bjf->bif', a_f, s) * norm_f + p["bs"]
    mm = jnp.einsum('bnf,fg->bng', m_mat, p["wm"]) + p["bm"]
    return jax.nn.sigmoid(h2 + s + mm)


def init_params(key, in_feats, h_feats):
    """Deterministic init mirroring the PyTorch reset_parameters() uniform ranges."""
    ks = jax.random.split(key, 8)
    stdv1 = 1.0 / math.sqrt(h_feats)     # masked_gcn weight (in, h)
    stdv2 = 1.0 / math.sqrt(in_feats)    # output layer weights (out = in_feats)

    def u(k, shape, s):
        return jax.random.uniform(k, shape, jnp.float32, minval=-s, maxval=s)

    return {
        "w1": u(ks[0], (in_feats, h_feats), stdv1),
        "b1": u(ks[1], (1, h_feats), stdv1),
        "wh": u(ks[2], (h_feats, in_feats), stdv2),
        "bh": u(ks[3], (1, in_feats), stdv2),
        "ws": u(ks[4], (in_feats, in_feats), stdv2),
        "bs": u(ks[5], (1, in_feats), stdv2),
        "wm": u(ks[6], (in_feats, in_feats), stdv2),
        "bm": u(ks[7], (1, in_feats), stdv2),
    }


def make_graphs(key, batch, n_nodes, p_edge=0.15):
    """Batch of dense symmetric adjacencies with self-loops + GCN norm (D^-1/2)."""
    adj = (jax.random.uniform(key, (batch, n_nodes, n_nodes)) < p_edge).astype(jnp.float32)
    adj = jnp.maximum(adj, jnp.swapaxes(adj, -1, -2))
    adj = jnp.maximum(adj, jnp.eye(n_nodes, dtype=jnp.float32))
    deg = adj.sum(axis=-1, keepdims=True)
    norm = 1.0 / jnp.sqrt(deg)
    return adj, norm.astype(jnp.float32)


if __name__ == "__main__":
    B = 64          # graphs; processed G per grid step
    N = 64          # nodes per graph
    IN_FEATS = 16
    H_FEATS = 32
    G = 8           # graphs per grid step -> 8 grid steps

    key = jax.random.PRNGKey(0)
    k_feat, k_mask, k_m, k_ag, k_af, k_params = jax.random.split(key, 6)

    features = jax.random.normal(k_feat, (B, N, IN_FEATS), jnp.float32)
    mask = (jax.random.uniform(k_mask, (B, N, IN_FEATS)) > 0.3).astype(jnp.float32)
    m_mat = jax.random.normal(k_m, (B, N, IN_FEATS), jnp.float32)

    a_g, norm_g = make_graphs(k_ag, B, N)
    a_f, norm_f = make_graphs(k_af, B, N)

    params = init_params(k_params, IN_FEATS, H_FEATS)

    fwd = jax.jit(functools.partial(ginn_autoencoder_global_forward,
                                    graphs_per_step=G))
    out = jax.block_until_ready(fwd(features, mask, m_mat, a_g, a_f,
                                    norm_g, norm_f, params))

    ref = reference_forward(features, mask, m_mat, a_g, a_f, norm_g, norm_f, params)
    assert out.shape == (B, N, IN_FEATS)
    max_err = float(jnp.max(jnp.abs(out - ref)))
    # bf16 MXU operands with f32 accumulation -> loosened tolerance vs f32 reference
    assert max_err < 2e-2, f"mismatch vs reference: max abs err {max_err}"

    print("KERNEL_OK")
</pallas_src>

<mosaic_0001>
module attributes {stable_mosaic.version = 11 : i64} {
  func.func @ginn_kernel(%arg0: i32, %arg1: memref<512x16xf32, #tpu.memory_space<vmem>>, %arg2: memref<512x16xf32, #tpu.memory_space<vmem>>, %arg3: memref<8x64x64xf32, #tpu.memory_space<vmem>>, %arg4: memref<8x64x64xf32, #tpu.memory_space<vmem>>, %arg5: memref<512x2xf32, #tpu.memory_space<vmem>>, %arg6: memref<16x48xf32, #tpu.memory_space<vmem>>, %arg7: memref<48x16xf32, #tpu.memory_space<vmem>>, %arg8: memref<2x48xf32, #tpu.memory_space<vmem>>, %arg9: memref<512x16xf32, #tpu.memory_space<vmem>>, %arg10: memref<512x32xbf16, #tpu.memory_space<vmem>>, %arg11: memref<512x16xbf16, #tpu.memory_space<vmem>>, %arg12: memref<512x32xbf16, #tpu.memory_space<vmem>>, %arg13: memref<512x16xbf16, #tpu.memory_space<vmem>>, %arg14: memref<512x16xf32, #tpu.memory_space<vmem>>) attributes {dimension_semantics = [#tpu.dimension_semantics<parallel>], iteration_bounds = array<i64: 8>, scalar_prefetch = 0 : i64, scratch_operands = 5 : i64, tpu.core_type = #tpu.core_type<tc>, window_params = [{transform_indices = @transform_0, window_bounds = array<i64: 512, 16>}, {transform_indices = @transform_1, window_bounds = array<i64: 512, 16>}, {transform_indices = @transform_2, window_bounds = array<i64: 8, 64, 64>}, {transform_indices = @transform_3, window_bounds = array<i64: 8, 64, 64>}, {transform_indices = @transform_4, window_bounds = array<i64: 512, 2>}, {pipeline_mode = #tpu.pipeline_mode<synchronous>, transform_indices = @transform_5, window_bounds = array<i64: 16, 48>}, {pipeline_mode = #tpu.pipeline_mode<synchronous>, transform_indices = @transform_6, window_bounds = array<i64: 48, 16>}, {pipeline_mode = #tpu.pipeline_mode<synchronous>, transform_indices = @transform_7, window_bounds = array<i64: 2, 48>}, {transform_indices = @transform_8, window_bounds = array<i64: 512, 16>}]} {
    %c0 = arith.constant 0 : index
    %c0_0 = arith.constant 0 : index
    %0 = vector.load %arg6[%c0, %c0_0] : memref<16x48xf32, #tpu.memory_space<vmem>>, vector<16x48xf32>
    %1 = arith.truncf %0 : vector<16x48xf32> to vector<16x48xbf16>
    %c0_1 = arith.constant 0 : index
    %c0_2 = arith.constant 0 : index
    %2 = vector.load %arg7[%c0_1, %c0_2] : memref<48x16xf32, #tpu.memory_space<vmem>>, vector<32x16xf32>
    %3 = arith.truncf %2 : vector<32x16xf32> to vector<32x16xbf16>
    %c32 = arith.constant 32 : index
    %c0_3 = arith.constant 0 : index
    %4 = vector.load %arg7[%c32, %c0_3] : memref<48x16xf32, #tpu.memory_space<vmem>>, vector<16x16xf32>
    %5 = arith.truncf %4 : vector<16x16xf32> to vector<16x16xbf16>
    %c0_4 = arith.constant 0 : index
    %c0_5 = arith.constant 0 : index
    %6 = vector.load %arg8[%c0_4, %c0_5] : memref<2x48xf32, #tpu.memory_space<vmem>>, vector<1x32xf32>
    %c1 = arith.constant 1 : index
    %c0_6 = arith.constant 0 : index
    %7 = vector.load %arg8[%c1, %c0_6] : memref<2x48xf32, #tpu.memory_space<vmem>>, vector<1x16xf32>
    %c0_7 = arith.constant 0 : index
    %c0_8 = arith.constant 0 : index
    %8 = vector.load %arg5[%c0_7, %c0_8] : memref<512x2xf32, #tpu.memory_space<vmem>>, vector<512x2xf32>
    %9 = vector.extract_strided_slice %8 {offsets = [0, 0], sizes = [512, 1], strides = [1, 1]} : vector<512x2xf32> to vector<512x1xf32>
    %10 = vector.extract_strided_slice %8 {offsets = [0, 1], sizes = [512, 1], strides = [1, 1]} : vector<512x2xf32> to vector<512x1xf32>
    %c0_9 = arith.constant 0 : index
    %c0_10 = arith.constant 0 : index
    %11 = vector.load %arg1[%c0_9, %c0_10] : memref<512x16xf32, #tpu.memory_space<vmem>>, vector<512x16xf32>
    %12 = arith.truncf %11 : vector<512x16xf32> to vector<512x16xbf16>
    %cst = arith.constant dense<0.000000e+00> : vector<512x48xf32>
    %13 = tpu.matmul %12, %1, %cst {dimension_numbers = #tpu.dot_dimension_numbers<[1], [0], [0], [1], [0, 0, 1, 1], [], []>} : vector<512x16xbf16>, vector<16x48xbf16>, vector<512x48xf32> -> vector<512x48xf32>
    %14 = vector.extract_strided_slice %13 {offsets = [0, 0], sizes = [512, 32], strides = [1, 1]} : vector<512x48xf32> to vector<512x32xf32>
    %15 = vector.broadcast %9 : vector<512x1xf32> to vector<512x32xf32>
    %16 = arith.mulf %14, %15 : vector<512x32xf32>
    %17 = arith.truncf %16 : vector<512x32xf32> to vector<512x32xbf16>
    %c0_11 = arith.constant 0 : index
    %c0_12 = arith.constant 0 : index
    %18 = vector.load %arg10[%c0_11, %c0_12] : memref<512x32xbf16, #tpu.memory_space<vmem>>, vector<512x32xbf16>
    tpu.vector_store %arg10[%c0_11, %c0_12], %17 {strides = array<i32>} : memref<512x32xbf16, #tpu.memory_space<vmem>>, vector<512x32xbf16>,
    %19 = vector.extract_strided_slice %13 {offsets = [0, 32], sizes = [512, 16], strides = [1, 1]} : vector<512x48xf32> to vector<512x16xf32>
    %20 = vector.broadcast %10 : vector<512x1xf32> to vector<512x16xf32>
    %21 = arith.mulf %19, %20 : vector<512x16xf32>
    %22 = arith.truncf %21 : vector<512x16xf32> to vector<512x16xbf16>
    %c0_13 = arith.constant 0 : index
    %c0_14 = arith.constant 0 : index
    %23 = vector.load %arg11[%c0_13, %c0_14] : memref<512x16xbf16, #tpu.memory_space<vmem>>, vector<512x16xbf16>
    tpu.vector_store %arg11[%c0_13, %c0_14], %22 {strides = array<i32>} : memref<512x16xbf16, #tpu.memory_space<vmem>>, vector<512x16xbf16>,
    %c0_15 = arith.constant 0 : index
    %c0_16 = arith.constant 0 : index
    %24 = vector.load %arg2[%c0_15, %c0_16] : memref<512x16xf32, #tpu.memory_space<vmem>>, vector<512x16xf32>
    %25 = arith.truncf %24 : vector<512x16xf32> to vector<512x16xbf16>
    %cst_17 = arith.constant dense<0.000000e+00> : vector<512x16xf32>
    %26 = tpu.matmul %25, %5, %cst_17 {dimension_numbers = #tpu.dot_dimension_numbers<[1], [0], [0], [1], [0, 0, 1, 1], [], []>} : vector<512x16xbf16>, vector<16x16xbf16>, vector<512x16xf32> -> vector<512x16xf32>
    %27 = vector.broadcast %7 : vector<1x16xf32> to vector<512x16xf32>
    %28 = arith.addf %26, %27 : vector<512x16xf32>
    %c0_18 = arith.constant 0 : index
    %c0_19 = arith.constant 0 : index
    %29 = vector.load %arg14[%c0_18, %c0_19] : memref<512x16xf32, #tpu.memory_space<vmem>>, vector<512x16xf32>
    tpu.vector_store %arg14[%c0_18, %c0_19], %28 {strides = array<i32>} : memref<512x16xf32, #tpu.memory_space<vmem>>, vector<512x16xf32>,
    %c0_20 = arith.constant 0 : index
    %c0_21 = arith.constant 0 : index
    %30 = vector.load %arg5[%c0_20, %c0_21] : memref<512x2xf32, #tpu.memory_space<vmem>>, vector<64x1xf32>
    %c0_22 = arith.constant 0 : index
    %c0_23 = arith.constant 0 : index
    %c0_24 = arith.constant 0 : index
    %31 = vector.load %arg3[%c0_22, %c0_23, %c0_24] : memref<8x64x64xf32, #tpu.memory_space<vmem>>, vector<1x64x64xf32>
    %32 = vector.shape_cast %31 : vector<1x64x64xf32> to vector<64x64xf32>
    %33 = arith.truncf %32 : vector<64x64xf32> to vector<64x64xbf16>
    %c0_25 = arith.constant 0 : index
    %c0_26 = arith.constant 0 : index
    %34 = vector.load %arg10[%c0_25, %c0_26] : memref<512x32xbf16, #tpu.memory_space<vmem>>, vector<64x32xbf16>
    %cst_27 = arith.constant dense<0.000000e+00> : vector<64x32xf32>
    %35 = tpu.matmul %33, %34, %cst_27 {dimension_numbers = #tpu.dot_dimension_numbers<[1], [0], [0], [1], [0, 0, 1, 1], [], []>} : vector<64x64xbf16>, vector<64x32xbf16>, vector<64x32xf32> -> vector<64x32xf32>
    %36 = vector.broadcast %30 : vector<64x1xf32> to vector<64x32xf32>
    %37 = arith.mulf %35, %36 : vector<64x32xf32>
    %38 = vector.broadcast %6 : vector<1x32xf32> to vector<64x32xf32>
    %39 = arith.addf %37, %38 : vector<64x32xf32>
    %cst_28 = arith.constant 0.000000e+00 : f32
    %40 = vector.broadcast %cst_28 : f32 to vector<64x32xf32>
    %41 = arith.maximumf %39, %40 : vector<64x32xf32>
    %42 = vector.broadcast %30 : vector<64x1xf32> to vector<64x32xf32>
    %43 = arith.mulf %41, %42 : vector<64x32xf32>
    %44 = arith.truncf %43 : vector<64x32xf32> to vector<64x32xbf16>
    %c0_29 = arith.constant 0 : index
    %c0_30 = arith.constant 0 : index
    %45 = vector.load %arg12[%c0_29, %c0_30] : memref<512x32xbf16, #tpu.memory_space<vmem>>, vector<64x32xbf16>
    tpu.vector_store %arg12[%c0_29, %c0_30], %44 {strides = array<i32>} : memref<512x32xbf16, #tpu.memory_space<vmem>>, vector<64x32xbf16>,
    %c64 = arith.constant 64 : index
    %c0_31 = arith.constant 0 : index
    %46 = vector.load %arg5[%c64, %c0_31] : memref<512x2xf32, #tpu.memory_space<vmem>>, vector<64x1xf32>
    %c1_32 = arith.constant 1 : index
    %c0_33 = arith.constant 0 : index
    %c0_34 = arith.constant 0 : index
    %47 = vector.load %arg3[%c1_32, %c0_33, %c0_34] : memref<8x64x64xf32, #tpu.memory_space<vmem>>, vector<1x64x64xf32>
    %48 = vector.shape_cast %47 : vector<1x64x64xf32> to vector<64x64xf32>
    %49 = arith.truncf %48 : vector<64x64xf32> to vector<64x64xbf16>
    %c64_35 = arith.constant 64 : index
    %c0_36 = arith.constant 0 : index
    %50 = vector.load %arg10[%c64_35, %c0_36] : memref<512x32xbf16, #tpu.memory_space<vmem>>, vector<64x32xbf16>
    %cst_37 = arith.constant dense<0.000000e+00> : vector<64x32xf32>
    %51 = tpu.matmul %49, %50, %cst_37 {dimension_numbers = #tpu.dot_dimension_numbers<[1], [0], [0], [1], [0, 0, 1, 1], [], []>} : vector<64x64xbf16>, vector<64x32xbf16>, vector<64x32xf32> -> vector<64x32xf32>
    %52 = vector.broadcast %46 : vector<64x1xf32> to vector<64x32xf32>
    %53 = arith.mulf %51, %52 : vector<64x32xf32>
    %54 = vector.broadcast %6 : vector<1x32xf32> to vector<64x32xf32>
    %55 = arith.addf %53, %54 : vector<64x32xf32>
    %cst_38 = arith.constant 0.000000e+00 : f32
    %56 = vector.broadcast %cst_38 : f32 to vector<64x32xf32>
    %57 = arith.maximumf %55, %56 : vector<64x32xf32>
    %58 = vector.broadcast %46 : vector<64x1xf32> to vector<64x32xf32>
    %59 = arith.mulf %57, %58 : vector<64x32xf32>
    %60 = arith.truncf %59 : vector<64x32xf32> to vector<64x32xbf16>
    %c64_39 = arith.constant 64 : index
    %c0_40 = arith.constant 0 : index
    %61 = vector.load %arg12[%c64_39, %c0_40] : memref<512x32xbf16, #tpu.memory_space<vmem>>, vector<64x32xbf16>
    tpu.vector_store %arg12[%c64_39, %c0_40], %60 {strides = array<i32>} : memref<512x32xbf16, #tpu.memory_space<vmem>>, vector<64x32xbf16>,
    %c128 = arith.constant 128 : index
    %c0_41 = arith.constant 0 : index
    %62 = vector.load %arg5[%c128, %c0_41] : memref<512x2xf32, #tpu.memory_space<vmem>>, vector<64x1xf32>
    %c2 = arith.constant 2 : index
    %c0_42 = arith.constant 0 : index
    %c0_43 = arith.constant 0 : index
    %63 = vector.load %arg3[%c2, %c0_42, %c0_43] : memref<8x64x64xf32, #tpu.memory_space<vmem>>, vector<1x64x64xf32>
    %64 = vector.shape_cast %63 : vector<1x64x64xf32> to vector<64x64xf32>
    %65 = arith.truncf %64 : vector<64x64xf32> to vector<64x64xbf16>
    %c128_44 = arith.constant 128 : index
    %c0_45 = arith.constant 0 : index
    %66 = vector.load %arg10[%c128_44, %c0_45] : memref<512x32xbf16, #tpu.memory_space<vmem>>, vector<64x32xbf16>
    %cst_46 = arith.constant dense<0.000000e+00> : vector<64x32xf32>
    %67 = tpu.matmul %65, %66, %cst_46 {dimension_numbers = #tpu.dot_dimension_numbers<[1], [0], [0], [1], [0, 0, 1, 1], [], []>} : vector<64x64xbf16>, vector<64x32xbf16>, vector<64x32xf32> -> vector<64x32xf32>
    %68 = vector.broadcast %62 : vector<64x1xf32> to vector<64x32xf32>
    %69 = arith.mulf %67, %68 : vector<64x32xf32>
    %70 = vector.broadcast %6 : vector<1x32xf32> to vector<64x32xf32>
    %71 = arith.addf %69, %70 : vector<64x32xf32>
    %cst_47 = arith.constant 0.000000e+00 : f32
    %72 = vector.broadcast %cst_47 : f32 to vector<64x32xf32>
    %73 = arith.maximumf %71, %72 : vector<64x32xf32>
    %74 = vector.broadcast %62 : vector<64x1xf32> to vector<64x32xf32>
    %75 = arith.mulf %73, %74 : vector<64x32xf32>
    %76 = arith.truncf %75 : vector<64x32xf32> to vector<64x32xbf16>
    %c128_48 = arith.constant 128 : index
    %c0_49 = arith.constant 0 : index
    %77 = vector.load %arg12[%c128_48, %c0_49] : memref<512x32xbf16, #tpu.memory_space<vmem>>, vector<64x32xbf16>
    tpu.vector_store %arg12[%c128_48, %c0_49], %76 {strides = array<i32>} : memref<512x32xbf16, #tpu.memory_space<vmem>>, vector<64x32xbf16>,
    %c192 = arith.constant 192 : index
    %c0_50 = arith.constant 0 : index
    %78 = vector.load %arg5[%c192, %c0_50] : memref<512x2xf32, #tpu.memory_space<vmem>>, vector<64x1xf32>
    %c3 = arith.constant 3 : index
    %c0_51 = arith.constant 0 : index
    %c0_52 = arith.constant 0 : index
    %79 = vector.load %arg3[%c3, %c0_51, %c0_52] : memref<8x64x64xf32, #tpu.memory_space<vmem>>, vector<1x64x64xf32>
    %80 = vector.shape_cast %79 : vector<1x64x64xf32> to vector<64x64xf32>
    %81 = arith.truncf %80 : vector<64x64xf32> to vector<64x64xbf16>
    %c192_53 = arith.constant 192 : index
    %c0_54 = arith.constant 0 : index
    %82 = vector.load %arg10[%c192_53, %c0_54] : memref<512x32xbf16, #tpu.memory_space<vmem>>, vector<64x32xbf16>
    %cst_55 = arith.constant dense<0.000000e+00> : vector<64x32xf32>
    %83 = tpu.matmul %81, %82, %cst_55 {dimension_numbers = #tpu.dot_dimension_numbers<[1], [0], [0], [1], [0, 0, 1, 1], [], []>} : vector<64x64xbf16>, vector<64x32xbf16>, vector<64x32xf32> -> vector<64x32xf32>
    %84 = vector.broadcast %78 : vector<64x1xf32> to vector<64x32xf32>
    %85 = arith.mulf %83, %84 : vector<64x32xf32>
    %86 = vector.broadcast %6 : vector<1x32xf32> to vector<64x32xf32>
    %87 = arith.addf %85, %86 : vector<64x32xf32>
    %cst_56 = arith.constant 0.000000e+00 : f32
    %88 = vector.broadcast %cst_56 : f32 to vector<64x32xf32>
    %89 = arith.maximumf %87, %88 : vector<64x32xf32>
    %90 = vector.broadcast %78 : vector<64x1xf32> to vector<64x32xf32>
    %91 = arith.mulf %89, %90 : vector<64x32xf32>
    %92 = arith.truncf %91 : vector<64x32xf32> to vector<64x32xbf16>
    %c192_57 = arith.constant 192 : index
    %c0_58 = arith.constant 0 : index
    %93 = vector.load %arg12[%c192_57, %c0_58] : memref<512x32xbf16, #tpu.memory_space<vmem>>, vector<64x32xbf16>
    tpu.vector_store %arg12[%c192_57, %c0_58], %92 {strides = array<i32>} : memref<512x32xbf16, #tpu.memory_space<vmem>>, vector<64x32xbf16>,
    %c256 = arith.constant 256 : index
    %c0_59 = arith.constant 0 : index
    %94 = vector.load %arg5[%c256, %c0_59] : memref<512x2xf32, #tpu.memory_space<vmem>>, vector<64x1xf32>
    %c4 = arith.constant 4 : index
    %c0_60 = arith.constant 0 : index
    %c0_61 = arith.constant 0 : index
    %95 = vector.load %arg3[%c4, %c0_60, %c0_61] : memref<8x64x64xf32, #tpu.memory_space<vmem>>, vector<1x64x64xf32>
    %96 = vector.shape_cast %95 : vector<1x64x64xf32> to vector<64x64xf32>
    %97 = arith.truncf %96 : vector<64x64xf32> to vector<64x64xbf16>
    %c256_62 = arith.constant 256 : index
    %c0_63 = arith.constant 0 : index
    %98 = vector.load %arg10[%c256_62, %c0_63] : memref<512x32xbf16, #tpu.memory_space<vmem>>, vector<64x32xbf16>
    %cst_64 = arith.constant dense<0.000000e+00> : vector<64x32xf32>
    %99 = tpu.matmul %97, %98, %cst_64 {dimension_numbers = #tpu.dot_dimension_numbers<[1], [0], [0], [1], [0, 0, 1, 1], [], []>} : vector<64x64xbf16>, vector<64x32xbf16>, vector<64x32xf32> -> vector<64x32xf32>
    %100 = vector.broadcast %94 : vector<64x1xf32> to vector<64x32xf32>
    %101 = arith.mulf %99, %100 : vector<64x32xf32>
    %102 = vector.broadcast %6 : vector<1x32xf32> to vector<64x32xf32>
    %103 = arith.addf %101, %102 : vector<64x32xf32>
    %cst_65 = arith.constant 0.000000e+00 : f32
    %104 = vector.broadcast %cst_65 : f32 to vector<64x32xf32>
    %105 = arith.maximumf %103, %104 : vector<64x32xf32>
    %106 = vector.broadcast %94 : vector<64x1xf32> to vector<64x32xf32>
    %107 = arith.mulf %105, %106 : vector<64x32xf32>
    %108 = arith.truncf %107 : vector<64x32xf32> to vector<64x32xbf16>
    %c256_66 = arith.constant 256 : index
    %c0_67 = arith.constant 0 : index
    %109 = vector.load %arg12[%c256_66, %c0_67] : memref<512x32xbf16, #tpu.memory_space<vmem>>, vector<64x32xbf16>
    tpu.vector_store %arg12[%c256_66, %c0_67], %108 {strides = array<i32>} : memref<512x32xbf16, #tpu.memory_space<vmem>>, vector<64x32xbf16>,
    %c320 = arith.constant 320 : index
    %c0_68 = arith.constant 0 : index
    %110 = vector.load %arg5[%c320, %c0_68] : memref<512x2xf32, #tpu.memory_space<vmem>>, vector<64x1xf32>
    %c5 = arith.constant 5 : index
    %c0_69 = arith.constant 0 : index
    %c0_70 = arith.constant 0 : index
    %111 = vector.load %arg3[%c5, %c0_69, %c0_70] : memref<8x64x64xf32, #tpu.memory_space<vmem>>, vector<1x64x64xf32>
    %112 = vector.shape_cast %111 : vector<1x64x64xf32> to vector<64x64xf32>
    %113 = arith.truncf %112 : vector<64x64xf32> to vector<64x64xbf16>
    %c320_71 = arith.constant 320 : index
    %c0_72 = arith.constant 0 : index
    %114 = vector.load %arg10[%c320_71, %c0_72] : memref<512x32xbf16, #tpu.memory_space<vmem>>, vector<64x32xbf16>
    %cst_73 = arith.constant dense<0.000000e+00> : vector<64x32xf32>
    %115 = tpu.matmul %113, %114, %cst_73 {dimension_numbers = #tpu.dot_dimension_numbers<[1], [0], [0], [1], [0, 0, 1, 1], [], []>} : vector<64x64xbf16>, vector<64x32xbf16>, vector<64x32xf32> -> vector<64x32xf32>
    %116 = vector.broadcast %110 : vector<64x1xf32> to vector<64x32xf32>
    %117 = arith.mulf %115, %116 : vector<64x32xf32>
    %118 = vector.broadcast %6 : vector<1x32xf32> to vector<64x32xf32>
    %119 = arith.addf %117, %118 : vector<64x32xf32>
    %cst_74 = arith.constant 0.000000e+00 : f32
    %120 = vector.broadcast %cst_74 : f32 to vector<64x32xf32>
    %121 = arith.maximumf %119, %120 : vector<64x32xf32>
    %122 = vector.broadcast %110 : vector<64x1xf32> to vector<64x32xf32>
    %123 = arith.mulf %121, %122 : vector<64x32xf32>
    %124 = arith.truncf %123 : vector<64x32xf32> to vector<64x32xbf16>
    %c320_75 = arith.constant 320 : index
    %c0_76 = arith.constant 0 : index
    %125 = vector.load %arg12[%c320_75, %c0_76] : memref<512x32xbf16, #tpu.memory_space<vmem>>, vector<64x32xbf16>
    tpu.vector_store %arg12[%c320_75, %c0_76], %124 {strides = array<i32>} : memref<512x32xbf16, #tpu.memory_space<vmem>>, vector<64x32xbf16>,
    %c384 = arith.constant 384 : index
    %c0_77 = arith.constant 0 : index
    %126 = vector.load %arg5[%c384, %c0_77] : memref<512x2xf32, #tpu.memory_space<vmem>>, vector<64x1xf32>
    %c6 = arith.constant 6 : index
    %c0_78 = arith.constant 0 : index
    %c0_79 = arith.constant 0 : index
    %127 = vector.load %arg3[%c6, %c0_78, %c0_79] : memref<8x64x64xf32, #tpu.memory_space<vmem>>, vector<1x64x64xf32>
    %128 = vector.shape_cast %127 : vector<1x64x64xf32> to vector<64x64xf32>
    %129 = arith.truncf %128 : vector<64x64xf32> to vector<64x64xbf16>
    %c384_80 = arith.constant 384 : index
    %c0_81 = arith.constant 0 : index
    %130 = vector.load %arg10[%c384_80, %c0_81] : memref<512x32xbf16, #tpu.memory_space<vmem>>, vector<64x32xbf16>
    %cst_82 = arith.constant dense<0.000000e+00> : vector<64x32xf32>
    %131 = tpu.matmul %129, %130, %cst_82 {dimension_numbers = #tpu.dot_dimension_numbers<[1], [0], [0], [1], [0, 0, 1, 1], [], []>} : vector<64x64xbf16>, vector<64x32xbf16>, vector<64x32xf32> -> vector<64x32xf32>
    %132 = vector.broadcast %126 : vector<64x1xf32> to vector<64x32xf32>
    %133 = arith.mulf %131, %132 : vector<64x32xf32>
    %134 = vector.broadcast %6 : vector<1x32xf32> to vector<64x32xf32>
    %135 = arith.addf %133, %134 : vector<64x32xf32>
    %cst_83 = arith.constant 0.000000e+00 : f32
    %136 = vector.broadcast %cst_83 : f32 to vector<64x32xf32>
    %137 = arith.maximumf %135, %136 : vector<64x32xf32>
    %138 = vector.broadcast %126 : vector<64x1xf32> to vector<64x32xf32>
    %139 = arith.mulf %137, %138 : vector<64x32xf32>
    %140 = arith.truncf %139 : vector<64x32xf32> to vector<64x32xbf16>
    %c384_84 = arith.constant 384 : index
    %c0_85 = arith.constant 0 : index
    %141 = vector.load %arg12[%c384_84, %c0_85] : memref<512x32xbf16, #tpu.memory_space<vmem>>, vector<64x32xbf16>
    tpu.vector_store %arg12[%c384_84, %c0_85], %140 {strides = array<i32>} : memref<512x32xbf16, #tpu.memory_space<vmem>>, vector<64x32xbf16>,
    %c448 = arith.constant 448 : index
    %c0_86 = arith.constant 0 : index
    %142 = vector.load %arg5[%c448, %c0_86] : memref<512x2xf32, #tpu.memory_space<vmem>>, vector<64x1xf32>
    %c7 = arith.constant 7 : index
    %c0_87 = arith.constant 0 : index
    %c0_88 = arith.constant 0 : index
    %143 = vector.load %arg3[%c7, %c0_87, %c0_88] : memref<8x64x64xf32, #tpu.memory_space<vmem>>, vector<1x64x64xf32>
    %144 = vector.shape_cast %143 : vector<1x64x64xf32> to vector<64x64xf32>
    %145 = arith.truncf %144 : vector<64x64xf32> to vector<64x64xbf16>
    %c448_89 = arith.constant 448 : index
    %c0_90 = arith.constant 0 : index
    %146 = vector.load %arg10[%c448_89, %c0_90] : memref<512x32xbf16, #tpu.memory_space<vmem>>, vector<64x32xbf16>
    %cst_91 = arith.constant dense<0.000000e+00> : vector<64x32xf32>
    %147 = tpu.matmul %145, %146, %cst_91 {dimension_numbers = #tpu.dot_dimension_numbers<[1], [0], [0], [1], [0, 0, 1, 1], [], []>} : vector<64x64xbf16>, vector<64x32xbf16>, vector<64x32xf32> -> vector<64x32xf32>
    %148 = vector.broadcast %142 : vector<64x1xf32> to vector<64x32xf32>
    %149 = arith.mulf %147, %148 : vector<64x32xf32>
    %150 = vector.broadcast %6 : vector<1x32xf32> to vector<64x32xf32>
    %151 = arith.addf %149, %150 : vector<64x32xf32>
    %cst_92 = arith.constant 0.000000e+00 : f32
    %152 = vector.broadcast %cst_92 : f32 to vector<64x32xf32>
    %153 = arith.maximumf %151, %152 : vector<64x32xf32>
    %154 = vector.broadcast %142 : vector<64x1xf32> to vector<64x32xf32>
    %155 = arith.mulf %153, %154 : vector<64x32xf32>
    %156 = arith.truncf %155 : vector<64x32xf32> to vector<64x32xbf16>
    %c448_93 = arith.constant 448 : index
    %c0_94 = arith.constant 0 : index
    %157 = vector.load %arg12[%c448_93, %c0_94] : memref<512x32xbf16, #tpu.memory_space<vmem>>, vector<64x32xbf16>
    tpu.vector_store %arg12[%c448_93, %c0_94], %156 {strides = array<i32>} : memref<512x32xbf16, #tpu.memory_space<vmem>>, vector<64x32xbf16>,
    %c0_95 = arith.constant 0 : index
    %c0_96 = arith.constant 0 : index
    %158 = vector.load %arg12[%c0_95, %c0_96] : memref<512x32xbf16, #tpu.memory_space<vmem>>, vector<512x32xbf16>
    %cst_97 = arith.constant dense<0.000000e+00> : vector<512x16xf32>
    %159 = tpu.matmul %158, %3, %cst_97 {dimension_numbers = #tpu.dot_dimension_numbers<[1], [0], [0], [1], [0, 0, 1, 1], [], []>} : vector<512x32xbf16>, vector<32x16xbf16>, vector<512x16xf32> -> vector<512x16xf32>
    %160 = arith.truncf %159 : vector<512x16xf32> to vector<512x16xbf16>
    %c0_98 = arith.constant 0 : index
    %c0_99 = arith.constant 0 : index
    %161 = vector.load %arg13[%c0_98, %c0_99] : memref<512x16xbf16, #tpu.memory_space<vmem>>, vector<512x16xbf16>
    tpu.vector_store %arg13[%c0_98, %c0_99], %160 {strides = array<i32>} : memref<512x16xbf16, #tpu.memory_space<vmem>>, vector<512x16xbf16>,
    %c0_100 = arith.constant 0 : index
    %c0_101 = arith.constant 0 : index
    %162 = vector.load %arg5[%c0_100, %c0_101] : memref<512x2xf32, #tpu.memory_space<vmem>>, vector<64x1xf32>
    %c0_102 = arith.constant 0 : index
    %c1_103 = arith.constant 1 : index
    %163 = vector.load %arg5[%c0_102, %c1_103] : memref<512x2xf32, #tpu.memory_space<vmem>>, vector<64x1xf32>
    %c0_104 = arith.constant 0 : index
    %c0_105 = arith.constant 0 : index
    %c0_106 = arith.constant 0 : index
    %164 = vector.load %arg3[%c0_104, %c0_105, %c0_106] : memref<8x64x64xf32, #tpu.memory_space<vmem>>, vector<1x64x64xf32>
    %165 = vector.shape_cast %164 : vector<1x64x64xf32> to vector<64x64xf32>
    %166 = arith.truncf %165 : vector<64x64xf32> to vector<64x64xbf16>
    %c0_107 = arith.constant 0 : index
    %c0_108 = arith.constant 0 : index
    %c0_109 = arith.constant 0 : index
    %167 = vector.load %arg4[%c0_107, %c0_108, %c0_109] : memref<8x64x64xf32, #tpu.memory_space<vmem>>, vector<1x64x64xf32>
    %168 = vector.shape_cast %167 : vector<1x64x64xf32> to vector<64x64xf32>
    %169 = arith.truncf %168 : vector<64x64xf32> to vector<64x64xbf16>
    %c0_110 = arith.constant 0 : index
    %c0_111 = arith.constant 0 : index
    %170 = vector.load %arg13[%c0_110, %c0_111] : memref<512x16xbf16, #tpu.memory_space<vmem>>, vector<64x16xbf16>
    %cst_112 = arith.constant dense<0.000000e+00> : vector<64x16xf32>
    %171 = tpu.matmul %166, %170, %cst_112 {dimension_numbers = #tpu.dot_dimension_numbers<[1], [0], [0], [1], [0, 0, 1, 1], [], []>} : vector<64x64xbf16>, vector<64x16xbf16>, vector<64x16xf32> -> vector<64x16xf32>
    %172 = vector.broadcast %162 : vector<64x1xf32> to vector<64x16xf32>
    %173 = arith.mulf %171, %172 : vector<64x16xf32>
    %c0_113 = arith.constant 0 : index
    %c0_114 = arith.constant 0 : index
    %174 = vector.load %arg11[%c0_113, %c0_114] : memref<512x16xbf16, #tpu.memory_space<vmem>>, vector<64x16xbf16>
    %cst_115 = arith.constant dense<0.000000e+00> : vector<64x16xf32>
    %175 = tpu.matmul %169, %174, %cst_115 {dimension_numbers = #tpu.dot_dimension_numbers<[1], [0], [0], [1], [0, 0, 1, 1], [], []>} : vector<64x64xbf16>, vector<64x16xbf16>, vector<64x16xf32> -> vector<64x16xf32>
    %176 = vector.broadcast %163 : vector<64x1xf32> to vector<64x16xf32>
    %177 = arith.mulf %175, %176 : vector<64x16xf32>
    %178 = arith.addf %173, %177 : vector<64x16xf32>
    %c0_116 = arith.constant 0 : index
    %c0_117 = arith.constant 0 : index
    %179 = vector.load %arg14[%c0_116, %c0_117] : memref<512x16xf32, #tpu.memory_space<vmem>>, vector<64x16xf32>
    %180 = arith.addf %178, %179 : vector<64x16xf32>
    %181 = arith.negf %180 : vector<64x16xf32>
    %182 = math.exp %181 : vector<64x16xf32>
    %cst_118 = arith.constant 1.000000e+00 : f32
    %183 = vector.broadcast %cst_118 : f32 to vector<64x16xf32>
    %184 = arith.addf %183, %182 : vector<64x16xf32>
    %185 = arith.divf %183, %184 : vector<64x16xf32>
    %c0_119 = arith.constant 0 : index
    %c0_120 = arith.constant 0 : index
    %186 = vector.load %arg9[%c0_119, %c0_120] : memref<512x16xf32, #tpu.memory_space<vmem>>, vector<64x16xf32>
    tpu.vector_store %arg9[%c0_119, %c0_120], %185 {strides = array<i32>} : memref<512x16xf32, #tpu.memory_space<vmem>>, vector<64x16xf32>,
    %c64_121 = arith.constant 64 : index
    %c0_122 = arith.constant 0 : index
    %187 = vector.load %arg5[%c64_121, %c0_122] : memref<512x2xf32, #tpu.memory_space<vmem>>, vector<64x1xf32>
    %c64_123 = arith.constant 64 : index
    %c1_124 = arith.constant 1 : index
    %188 = vector.load %arg5[%c64_123, %c1_124] : memref<512x2xf32, #tpu.memory_space<vmem>>, vector<64x1xf32>
    %c1_125 = arith.constant 1 : index
    %c0_126 = arith.constant 0 : index
    %c0_127 = arith.constant 0 : index
    %189 = vector.load %arg3[%c1_125, %c0_126, %c0_127] : memref<8x64x64xf32, #tpu.memory_space<vmem>>, vector<1x64x64xf32>
    %190 = vector.shape_cast %189 : vector<1x64x64xf32> to vector<64x64xf32>
    %191 = arith.truncf %190 : vector<64x64xf32> to vector<64x64xbf16>
    %c1_128 = arith.constant 1 : index
    %c0_129 = arith.constant 0 : index
    %c0_130 = arith.constant 0 : index
    %192 = vector.load %arg4[%c1_128, %c0_129, %c0_130] : memref<8x64x64xf32, #tpu.memory_space<vmem>>, vector<1x64x64xf32>
    %193 = vector.shape_cast %192 : vector<1x64x64xf32> to vector<64x64xf32>
    %194 = arith.truncf %193 : vector<64x64xf32> to vector<64x64xbf16>
    %c64_131 = arith.constant 64 : index
    %c0_132 = arith.constant 0 : index
    %195 = vector.load %arg13[%c64_131, %c0_132] : memref<512x16xbf16, #tpu.memory_space<vmem>>, vector<64x16xbf16>
    %cst_133 = arith.constant dense<0.000000e+00> : vector<64x16xf32>
    %196 = tpu.matmul %191, %195, %cst_133 {dimension_numbers = #tpu.dot_dimension_numbers<[1], [0], [0], [1], [0, 0, 1, 1], [], []>} : vector<64x64xbf16>, vector<64x16xbf16>, vector<64x16xf32> -> vector<64x16xf32>
    %197 = vector.broadcast %187 : vector<64x1xf32> to vector<64x16xf32>
    %198 = arith.mulf %196, %197 : vector<64x16xf32>
    %c64_134 = arith.constant 64 : index
    %c0_135 = arith.constant 0 : index
    %199 = vector.load %arg11[%c64_134, %c0_135] : memref<512x16xbf16, #tpu.memory_space<vmem>>, vector<64x16xbf16>
    %cst_136 = arith.constant dense<0.000000e+00> : vector<64x16xf32>
    %200 = tpu.matmul %194, %199, %cst_136 {dimension_numbers = #tpu.dot_dimension_numbers<[1], [0], [0], [1], [0, 0, 1, 1], [], []>} : vector<64x64xbf16>, vector<64x16xbf16>, vector<64x16xf32> -> vector<64x16xf32>
    %201 = vector.broadcast %188 : vector<64x1xf32> to vector<64x16xf32>
    %202 = arith.mulf %200, %201 : vector<64x16xf32>
    %203 = arith.addf %198, %202 : vector<64x16xf32>
    %c64_137 = arith.constant 64 : index
    %c0_138 = arith.constant 0 : index
    %204 = vector.load %arg14[%c64_137, %c0_138] : memref<512x16xf32, #tpu.memory_space<vmem>>, vector<64x16xf32>
    %205 = arith.addf %203, %204 : vector<64x16xf32>
    %206 = arith.negf %205 : vector<64x16xf32>
    %207 = math.exp %206 : vector<64x16xf32>
    %cst_139 = arith.constant 1.000000e+00 : f32
    %208 = vector.broadcast %cst_139 : f32 to vector<64x16xf32>
    %209 = arith.addf %208, %207 : vector<64x16xf32>
    %210 = arith.divf %208, %209 : vector<64x16xf32>
    %c64_140 = arith.constant 64 : index
    %c0_141 = arith.constant 0 : index
    %211 = vector.load %arg9[%c64_140, %c0_141] : memref<512x16xf32, #tpu.memory_space<vmem>>, vector<64x16xf32>
    tpu.vector_store %arg9[%c64_140, %c0_141], %210 {strides = array<i32>} : memref<512x16xf32, #tpu.memory_space<vmem>>, vector<64x16xf32>,
    %c128_142 = arith.constant 128 : index
    %c0_143 = arith.constant 0 : index
    %212 = vector.load %arg5[%c128_142, %c0_143] : memref<512x2xf32, #tpu.memory_space<vmem>>, vector<64x1xf32>
    %c128_144 = arith.constant 128 : index
    %c1_145 = arith.constant 1 : index
    %213 = vector.load %arg5[%c128_144, %c1_145] : memref<512x2xf32, #tpu.memory_space<vmem>>, vector<64x1xf32>
    %c2_146 = arith.constant 2 : index
    %c0_147 = arith.constant 0 : index
    %c0_148 = arith.constant 0 : index
    %214 = vector.load %arg3[%c2_146, %c0_147, %c0_148] : memref<8x64x64xf32, #tpu.memory_space<vmem>>, vector<1x64x64xf32>
    %215 = vector.shape_cast %214 : vector<1x64x64xf32> to vector<64x64xf32>
    %216 = arith.truncf %215 : vector<64x64xf32> to vector<64x64xbf16>
    %c2_149 = arith.constant 2 : index
    %c0_150 = arith.constant 0 : index
    %c0_151 = arith.constant 0 : index
    %217 = vector.load %arg4[%c2_149, %c0_150, %c0_151] : memref<8x64x64xf32, #tpu.memory_space<vmem>>, vector<1x64x64xf32>
    %218 = vector.shape_cast %217 : vector<1x64x64xf32> to vector<64x64xf32>
    %219 = arith.truncf %218 : vector<64x64xf32> to vector<64x64xbf16>
    %c128_152 = arith.constant 128 : index
    %c0_153 = arith.constant 0 : index
    %220 = vector.load %arg13[%c128_152, %c0_153] : memref<512x16xbf16, #tpu.memory_space<vmem>>, vector<64x16xbf16>
    %cst_154 = arith.constant dense<0.000000e+00> : vector<64x16xf32>
    %221 = tpu.matmul %216, %220, %cst_154 {dimension_numbers = #tpu.dot_dimension_numbers<[1], [0], [0], [1], [0, 0, 1, 1], [], []>} : vector<64x64xbf16>, vector<64x16xbf16>, vector<64x16xf32> -> vector<64x16xf32>
    %222 = vector.broadcast %212 : vector<64x1xf32> to vector<64x16xf32>
    %223 = arith.mulf %221, %222 : vector<64x16xf32>
    %c128_155 = arith.constant 128 : index
    %c0_156 = arith.constant 0 : index
    %224 = vector.load %arg11[%c128_155, %c0_156] : memref<512x16xbf16, #tpu.memory_space<vmem>>, vector<64x16xbf16>
    %cst_157 = arith.constant dense<0.000000e+00> : vector<64x16xf32>
    %225 = tpu.matmul %219, %224, %cst_157 {dimension_numbers = #tpu.dot_dimension_numbers<[1], [0], [0], [1], [0, 0, 1, 1], [], []>} : vector<64x64xbf16>, vector<64x16xbf16>, vector<64x16xf32> -> vector<64x16xf32>
    %226 = vector.broadcast %213 : vector<64x1xf32> to vector<64x16xf32>
    %227 = arith.mulf %225, %226 : vector<64x16xf32>
    %228 = arith.addf %223, %227 : vector<64x16xf32>
    %c128_158 = arith.constant 128 : index
    %c0_159 = arith.constant 0 : index
    %229 = vector.load %arg14[%c128_158, %c0_159] : memref<512x16xf32, #tpu.memory_space<vmem>>, vector<64x16xf32>
    %230 = arith.addf %228, %229 : vector<64x16xf32>
    %231 = arith.negf %230 : vector<64x16xf32>
    %232 = math.exp %231 : vector<64x16xf32>
    %cst_160 = arith.constant 1.000000e+00 : f32
    %233 = vector.broadcast %cst_160 : f32 to vector<64x16xf32>
    %234 = arith.addf %233, %232 : vector<64x16xf32>
    %235 = arith.divf %233, %234 : vector<64x16xf32>
    %c128_161 = arith.constant 128 : index
    %c0_162 = arith.constant 0 : index
    %236 = vector.load %arg9[%c128_161, %c0_162] : memref<512x16xf32, #tpu.memory_space<vmem>>, vector<64x16xf32>
    tpu.vector_store %arg9[%c128_161, %c0_162], %235 {strides = array<i32>} : memref<512x16xf32, #tpu.memory_space<vmem>>, vector<64x16xf32>,
    %c192_163 = arith.constant 192 : index
    %c0_164 = arith.constant 0 : index
    %237 = vector.load %arg5[%c192_163, %c0_164] : memref<512x2xf32, #tpu.memory_space<vmem>>, vector<64x1xf32>
    %c192_165 = arith.constant 192 : index
    %c1_166 = arith.constant 1 : index
    %238 = vector.load %arg5[%c192_165, %c1_166] : memref<512x2xf32, #tpu.memory_space<vmem>>, vector<64x1xf32>
    %c3_167 = arith.constant 3 : index
    %c0_168 = arith.constant 0 : index
    %c0_169 = arith.constant 0 : index
    %239 = vector.load %arg3[%c3_167, %c0_168, %c0_169] : memref<8x64x64xf32, #tpu.memory_space<vmem>>, vector<1x64x64xf32>
    %240 = vector.shape_cast %239 : vector<1x64x64xf32> to vector<64x64xf32>
    %241 = arith.truncf %240 : vector<64x64xf32> to vector<64x64xbf16>
    %c3_170 = arith.constant 3 : index
    %c0_171 = arith.constant 0 : index
    %c0_172 = arith.constant 0 : index
    %242 = vector.load %arg4[%c3_170, %c0_171, %c0_172] : memref<8x64x64xf32, #tpu.memory_space<vmem>>, vector<1x64x64xf32>
    %243 = vector.shape_cast %242 : vector<1x64x64xf32> to vector<64x64xf32>
    %244 = arith.truncf %243 : vector<64x64xf32> to vector<64x64xbf16>
    %c192_173 = arith.constant 192 : index
    %c0_174 = arith.constant 0 : index
    %245 = vector.load %arg13[%c192_173, %c0_174] : memref<512x16xbf16, #tpu.memory_space<vmem>>, vector<64x16xbf16>
    %cst_175 = arith.constant dense<0.000000e+00> : vector<64x16xf32>
    %246 = tpu.matmul %241, %245, %cst_175 {dimension_numbers = #tpu.dot_dimension_numbers<[1], [0], [0], [1], [0, 0, 1, 1], [], []>} : vector<64x64xbf16>, vector<64x16xbf16>, vector<64x16xf32> -> vector<64x16xf32>
    %247 = vector.broadcast %237 : vector<64x1xf32> to vector<64x16xf32>
    %248 = arith.mulf %246, %247 : vector<64x16xf32>
    %c192_176 = arith.constant 192 : index
    %c0_177 = arith.constant 0 : index
    %249 = vector.load %arg11[%c192_176, %c0_177] : memref<512x16xbf16, #tpu.memory_space<vmem>>, vector<64x16xbf16>
    %cst_178 = arith.constant dense<0.000000e+00> : vector<64x16xf32>
    %250 = tpu.matmul %244, %249, %cst_178 {dimension_numbers = #tpu.dot_dimension_numbers<[1], [0], [0], [1], [0, 0, 1, 1], [], []>} : vector<64x64xbf16>, vector<64x16xbf16>, vector<64x16xf32> -> vector<64x16xf32>
    %251 = vector.broadcast %238 : vector<64x1xf32> to vector<64x16xf32>
    %252 = arith.mulf %250, %251 : vector<64x16xf32>
    %253 = arith.addf %248, %252 : vector<64x16xf32>
    %c192_179 = arith.constant 192 : index
    %c0_180 = arith.constant 0 : index
    %254 = vector.load %arg14[%c192_179, %c0_180] : memref<512x16xf32, #tpu.memory_space<vmem>>, vector<64x16xf32>
    %255 = arith.addf %253, %254 : vector<64x16xf32>
    %256 = arith.negf %255 : vector<64x16xf32>
    %257 = math.exp %256 : vector<64x16xf32>
    %cst_181 = arith.constant 1.000000e+00 : f32
    %258 = vector.broadcast %cst_181 : f32 to vector<64x16xf32>
    %259 = arith.addf %258, %257 : vector<64x16xf32>
    %260 = arith.divf %258, %259 : vector<64x16xf32>
    %c192_182 = arith.constant 192 : index
    %c0_183 = arith.constant 0 : index
    %261 = vector.load %arg9[%c192_182, %c0_183] : memref<512x16xf32, #tpu.memory_space<vmem>>, vector<64x16xf32>
    tpu.vector_store %arg9[%c192_182, %c0_183], %260 {strides = array<i32>} : memref<512x16xf32, #tpu.memory_space<vmem>>, vector<64x16xf32>,
    %c256_184 = arith.constant 256 : index
    %c0_185 = arith.constant 0 : index
    %262 = vector.load %arg5[%c256_184, %c0_185] : memref<512x2xf32, #tpu.memory_space<vmem>>, vector<64x1xf32>
    %c256_186 = arith.constant 256 : index
    %c1_187 = arith.constant 1 : index
    %263 = vector.load %arg5[%c256_186, %c1_187] : memref<512x2xf32, #tpu.memory_space<vmem>>, vector<64x1xf32>
    %c4_188 = arith.constant 4 : index
    %c0_189 = arith.constant 0 : index
    %c0_190 = arith.constant 0 : index
    %264 = vector.load %arg3[%c4_188, %c0_189, %c0_190] : memref<8x64x64xf32, #tpu.memory_space<vmem>>, vector<1x64x64xf32>
    %265 = vector.shape_cast %264 : vector<1x64x64xf32> to vector<64x64xf32>
    %266 = arith.truncf %265 : vector<64x64xf32> to vector<64x64xbf16>
    %c4_191 = arith.constant 4 : index
    %c0_192 = arith.constant 0 : index
    %c0_193 = arith.constant 0 : index
    %267 = vector.load %arg4[%c4_191, %c0_192, %c0_193] : memref<8x64x64xf32, #tpu.memory_space<vmem>>, vector<1x64x64xf32>
    %268 = vector.shape_cast %267 : vector<1x64x64xf32> to vector<64x64xf32>
    %269 = arith.truncf %268 : vector<64x64xf32> to vector<64x64xbf16>
    %c256_194 = arith.constant 256 : index
    %c0_195 = arith.constant 0 : index
    %270 = vector.load %arg13[%c256_194, %c0_195] : memref<512x16xbf16, #tpu.memory_space<vmem>>, vector<64x16xbf16>
    %cst_196 = arith.constant dense<0.000000e+00> : vector<64x16xf32>
    %271 = tpu.matmul %266, %270, %cst_196 {dimension_numbers = #tpu.dot_dimension_numbers<[1], [0], [0], [1], [0, 0, 1, 1], [], []>} : vector<64x64xbf16>, vector<64x16xbf16>, vector<64x16xf32> -> vector<64x16xf32>
    %272 = vector.broadcast %262 : vector<64x1xf32> to vector<64x16xf32>
    %273 = arith.mulf %271, %272 : vector<64x16xf32>
    %c256_197 = arith.constant 256 : index
    %c0_198 = arith.constant 0 : index
    %274 = vector.load %arg11[%c256_197, %c0_198] : memref<512x16xbf16, #tpu.memory_space<vmem>>, vector<64x16xbf16>
    %cst_199 = arith.constant dense<0.000000e+00> : vector<64x16xf32>
    %275 = tpu.matmul %269, %274, %cst_199 {dimension_numbers = #tpu.dot_dimension_numbers<[1], [0], [0], [1], [0, 0, 1, 1], [], []>} : vector<64x64xbf16>, vector<64x16xbf16>, vector<64x16xf32> -> vector<64x16xf32>
    %276 = vector.broadcast %263 : vector<64x1xf32> to vector<64x16xf32>
    %277 = arith.mulf %275, %276 : vector<64x16xf32>
    %278 = arith.addf %273, %277 : vector<64x16xf32>
    %c256_200 = arith.constant 256 : index
    %c0_201 = arith.constant 0 : index
    %279 = vector.load %arg14[%c256_200, %c0_201] : memref<512x16xf32, #tpu.memory_space<vmem>>, vector<64x16xf32>
    %280 = arith.addf %278, %279 : vector<64x16xf32>
    %281 = arith.negf %280 : vector<64x16xf32>
    %282 = math.exp %281 : vector<64x16xf32>
    %cst_202 = arith.constant 1.000000e+00 : f32
    %283 = vector.broadcast %cst_202 : f32 to vector<64x16xf32>
    %284 = arith.addf %283, %282 : vector<64x16xf32>
    %285 = arith.divf %283, %284 : vector<64x16xf32>
    %c256_203 = arith.constant 256 : index
    %c0_204 = arith.constant 0 : index
    %286 = vector.load %arg9[%c256_203, %c0_204] : memref<512x16xf32, #tpu.memory_space<vmem>>, vector<64x16xf32>
    tpu.vector_store %arg9[%c256_203, %c0_204], %285 {strides = array<i32>} : memref<512x16xf32, #tpu.memory_space<vmem>>, vector<64x16xf32>,
    %c320_205 = arith.constant 320 : index
    %c0_206 = arith.constant 0 : index
    %287 = vector.load %arg5[%c320_205, %c0_206] : memref<512x2xf32, #tpu.memory_space<vmem>>, vector<64x1xf32>
    %c320_207 = arith.constant 320 : index
    %c1_208 = arith.constant 1 : index
    %288 = vector.load %arg5[%c320_207, %c1_208] : memref<512x2xf32, #tpu.memory_space<vmem>>, vector<64x1xf32>
    %c5_209 = arith.constant 5 : index
    %c0_210 = arith.constant 0 : index
    %c0_211 = arith.constant 0 : index
    %289 = vector.load %arg3[%c5_209, %c0_210, %c0_211] : memref<8x64x64xf32, #tpu.memory_space<vmem>>, vector<1x64x64xf32>
    %290 = vector.shape_cast %289 : vector<1x64x64xf32> to vector<64x64xf32>
    %291 = arith.truncf %290 : vector<64x64xf32> to vector<64x64xbf16>
    %c5_212 = arith.constant 5 : index
    %c0_213 = arith.constant 0 : index
    %c0_214 = arith.constant 0 : index
    %292 = vector.load %arg4[%c5_212, %c0_213, %c0_214] : memref<8x64x64xf32, #tpu.memory_space<vmem>>, vector<1x64x64xf32>
    %293 = vector.shape_cast %292 : vector<1x64x64xf32> to vector<64x64xf32>
    %294 = arith.truncf %293 : vector<64x64xf32> to vector<64x64xbf16>
    %c320_215 = arith.constant 320 : index
    %c0_216 = arith.constant 0 : index
    %295 = vector.load %arg13[%c320_215, %c0_216] : memref<512x16xbf16, #tpu.memory_space<vmem>>, vector<64x16xbf16>
    %cst_217 = arith.constant dense<0.000000e+00> : vector<64x16xf32>
    %296 = tpu.matmul %291, %295, %cst_217 {dimension_numbers = #tpu.dot_dimension_numbers<[1], [0], [0], [1], [0, 0, 1, 1], [], []>} : vector<64x64xbf16>, vector<64x16xbf16>, vector<64x16xf32> -> vector<64x16xf32>
    %297 = vector.broadcast %287 : vector<64x1xf32> to vector<64x16xf32>
    %298 = arith.mulf %296, %297 : vector<64x16xf32>
    %c320_218 = arith.constant 320 : index
    %c0_219 = arith.constant 0 : index
    %299 = vector.load %arg11[%c320_218, %c0_219] : memref<512x16xbf16, #tpu.memory_space<vmem>>, vector<64x16xbf16>
    %cst_220 = arith.constant dense<0.000000e+00> : vector<64x16xf32>
    %300 = tpu.matmul %294, %299, %cst_220 {dimension_numbers = #tpu.dot_dimension_numbers<[1], [0], [0], [1], [0, 0, 1, 1], [], []>} : vector<64x64xbf16>, vector<64x16xbf16>, vector<64x16xf32> -> vector<64x16xf32>
    %301 = vector.broadcast %288 : vector<64x1xf32> to vector<64x16xf32>
    %302 = arith.mulf %300, %301 : vector<64x16xf32>
    %303 = arith.addf %298, %302 : vector<64x16xf32>
    %c320_221 = arith.constant 320 : index
    %c0_222 = arith.constant 0 : index
    %304 = vector.load %arg14[%c320_221, %c0_222] : memref<512x16xf32, #tpu.memory_space<vmem>>, vector<64x16xf32>
    %305 = arith.addf %303, %304 : vector<64x16xf32>
    %306 = arith.negf %305 : vector<64x16xf32>
    %307 = math.exp %306 : vector<64x16xf32>
    %cst_223 = arith.constant 1.000000e+00 : f32
    %308 = vector.broadcast %cst_223 : f32 to vector<64x16xf32>
    %309 = arith.addf %308, %307 : vector<64x16xf32>
    %310 = arith.divf %308, %309 : vector<64x16xf32>
    %c320_224 = arith.constant 320 : index
    %c0_225 = arith.constant 0 : index
    %311 = vector.load %arg9[%c320_224, %c0_225] : memref<512x16xf32, #tpu.memory_space<vmem>>, vector<64x16xf32>
    tpu.vector_store %arg9[%c320_224, %c0_225], %310 {strides = array<i32>} : memref<512x16xf32, #tpu.memory_space<vmem>>, vector<64x16xf32>,
    %c384_226 = arith.constant 384 : index
    %c0_227 = arith.constant 0 : index
    %312 = vector.load %arg5[%c384_226, %c0_227] : memref<512x2xf32, #tpu.memory_space<vmem>>, vector<64x1xf32>
    %c384_228 = arith.constant 384 : index
    %c1_229 = arith.constant 1 : index
    %313 = vector.load %arg5[%c384_228, %c1_229] : memref<512x2xf32, #tpu.memory_space<vmem>>, vector<64x1xf32>
    %c6_230 = arith.constant 6 : index
    %c0_231 = arith.constant 0 : index
    %c0_232 = arith.constant 0 : index
    %314 = vector.load %arg3[%c6_230, %c0_231, %c0_232] : memref<8x64x64xf32, #tpu.memory_space<vmem>>, vector<1x64x64xf32>
    %315 = vector.shape_cast %314 : vector<1x64x64xf32> to vector<64x64xf32>
    %316 = arith.truncf %315 : vector<64x64xf32> to vector<64x64xbf16>
    %c6_233 = arith.constant 6 : index
    %c0_234 = arith.constant 0 : index
    %c0_235 = arith.constant 0 : index
    %317 = vector.load %arg4[%c6_233, %c0_234, %c0_235] : memref<8x64x64xf32, #tpu.memory_space<vmem>>, vector<1x64x64xf32>
    %318 = vector.shape_cast %317 : vector<1x64x64xf32> to vector<64x64xf32>
    %319 = arith.truncf %318 : vector<64x64xf32> to vector<64x64xbf16>
    %c384_236 = arith.constant 384 : index
    %c0_237 = arith.constant 0 : index
    %320 = vector.load %arg13[%c384_236, %c0_237] : memref<512x16xbf16, #tpu.memory_space<vmem>>, vector<64x16xbf16>
    %cst_238 = arith.constant dense<0.000000e+00> : vector<64x16xf32>
    %321 = tpu.matmul %316, %320, %cst_238 {dimension_numbers = #tpu.dot_dimension_numbers<[1], [0], [0], [1], [0, 0, 1, 1], [], []>} : vector<64x64xbf16>, vector<64x16xbf16>, vector<64x16xf32> -> vector<64x16xf32>
    %322 = vector.broadcast %312 : vector<64x1xf32> to vector<64x16xf32>
    %323 = arith.mulf %321, %322 : vector<64x16xf32>
    %c384_239 = arith.constant 384 : index
    %c0_240 = arith.constant 0 : index
    %324 = vector.load %arg11[%c384_239, %c0_240] : memref<512x16xbf16, #tpu.memory_space<vmem>>, vector<64x16xbf16>
    %cst_241 = arith.constant dense<0.000000e+00> : vector<64x16xf32>
    %325 = tpu.matmul %319, %324, %cst_241 {dimension_numbers = #tpu.dot_dimension_numbers<[1], [0], [0], [1], [0, 0, 1, 1], [], []>} : vector<64x64xbf16>, vector<64x16xbf16>, vector<64x16xf32> -> vector<64x16xf32>
    %326 = vector.broadcast %313 : vector<64x1xf32> to vector<64x16xf32>
    %327 = arith.mulf %325, %326 : vector<64x16xf32>
    %328 = arith.addf %323, %327 : vector<64x16xf32>
    %c384_242 = arith.constant 384 : index
    %c0_243 = arith.constant 0 : index
    %329 = vector.load %arg14[%c384_242, %c0_243] : memref<512x16xf32, #tpu.memory_space<vmem>>, vector<64x16xf32>
    %330 = arith.addf %328, %329 : vector<64x16xf32>
    %331 = arith.negf %330 : vector<64x16xf32>
    %332 = math.exp %331 : vector<64x16xf32>
    %cst_244 = arith.constant 1.000000e+00 : f32
    %333 = vector.broadcast %cst_244 : f32 to vector<64x16xf32>
    %334 = arith.addf %333, %332 : vector<64x16xf32>
    %335 = arith.divf %333, %334 : vector<64x16xf32>
    %c384_245 = arith.constant 384 : index
    %c0_246 = arith.constant 0 : index
    %336 = vector.load %arg9[%c384_245, %c0_246] : memref<512x16xf32, #tpu.memory_space<vmem>>, vector<64x16xf32>
    tpu.vector_store %arg9[%c384_245, %c0_246], %335 {strides = array<i32>} : memref<512x16xf32, #tpu.memory_space<vmem>>, vector<64x16xf32>,
    %c448_247 = arith.constant 448 : index
    %c0_248 = arith.constant 0 : index
    %337 = vector.load %arg5[%c448_247, %c0_248] : memref<512x2xf32, #tpu.memory_space<vmem>>, vector<64x1xf32>
    %c448_249 = arith.constant 448 : index
    %c1_250 = arith.constant 1 : index
    %338 = vector.load %arg5[%c448_249, %c1_250] : memref<512x2xf32, #tpu.memory_space<vmem>>, vector<64x1xf32>
    %c7_251 = arith.constant 7 : index
    %c0_252 = arith.constant 0 : index
    %c0_253 = arith.constant 0 : index
    %339 = vector.load %arg3[%c7_251, %c0_252, %c0_253] : memref<8x64x64xf32, #tpu.memory_space<vmem>>, vector<1x64x64xf32>
    %340 = vector.shape_cast %339 : vector<1x64x64xf32> to vector<64x64xf32>
    %341 = arith.truncf %340 : vector<64x64xf32> to vector<64x64xbf16>
    %c7_254 = arith.constant 7 : index
    %c0_255 = arith.constant 0 : index
    %c0_256 = arith.constant 0 : index
    %342 = vector.load %arg4[%c7_254, %c0_255, %c0_256] : memref<8x64x64xf32, #tpu.memory_space<vmem>>, vector<1x64x64xf32>
    %343 = vector.shape_cast %342 : vector<1x64x64xf32> to vector<64x64xf32>
    %344 = arith.truncf %343 : vector<64x64xf32> to vector<64x64xbf16>
    %c448_257 = arith.constant 448 : index
    %c0_258 = arith.constant 0 : index
    %345 = vector.load %arg13[%c448_257, %c0_258] : memref<512x16xbf16, #tpu.memory_space<vmem>>, vector<64x16xbf16>
    %cst_259 = arith.constant dense<0.000000e+00> : vector<64x16xf32>
    %346 = tpu.matmul %341, %345, %cst_259 {dimension_numbers = #tpu.dot_dimension_numbers<[1], [0], [0], [1], [0, 0, 1, 1], [], []>} : vector<64x64xbf16>, vector<64x16xbf16>, vector<64x16xf32> -> vector<64x16xf32>
    %347 = vector.broadcast %337 : vector<64x1xf32> to vector<64x16xf32>
    %348 = arith.mulf %346, %347 : vector<64x16xf32>
    %c448_260 = arith.constant 448 : index
    %c0_261 = arith.constant 0 : index
    %349 = vector.load %arg11[%c448_260, %c0_261] : memref<512x16xbf16, #tpu.memory_space<vmem>>, vector<64x16xbf16>
    %cst_262 = arith.constant dense<0.000000e+00> : vector<64x16xf32>
    %350 = tpu.matmul %344, %349, %cst_262 {dimension_numbers = #tpu.dot_dimension_numbers<[1], [0], [0], [1], [0, 0, 1, 1], [], []>} : vector<64x64xbf16>, vector<64x16xbf16>, vector<64x16xf32> -> vector<64x16xf32>
    %351 = vector.broadcast %338 : vector<64x1xf32> to vector<64x16xf32>
    %352 = arith.mulf %350, %351 : vector<64x16xf32>
    %353 = arith.addf %348, %352 : vector<64x16xf32>
    %c448_263 = arith.constant 448 : index
    %c0_264 = arith.constant 0 : index
    %354 = vector.load %arg14[%c448_263, %c0_264] : memref<512x16xf32, #tpu.memory_space<vmem>>, vector<64x16xf32>
    %355 = arith.addf %353, %354 : vector<64x16xf32>
    %356 = arith.negf %355 : vector<64x16xf32>
    %357 = math.exp %356 : vector<64x16xf32>
    %cst_265 = arith.constant 1.000000e+00 : f32
    %358 = vector.broadcast %cst_265 : f32 to vector<64x16xf32>
    %359 = arith.addf %358, %357 : vector<64x16xf32>
    %360 = arith.divf %358, %359 : vector<64x16xf32>
    %c448_266 = arith.constant 448 : index
    %c0_267 = arith.constant 0 : index
    %361 = vector.load %arg9[%c448_266, %c0_267] : memref<512x16xf32, #tpu.memory_space<vmem>>, vector<64x16xf32>
    tpu.vector_store %arg9[%c448_266, %c0_267], %360 {strides = array<i32>} : memref<512x16xf32, #tpu.memory_space<vmem>>, vector<64x16xf32>,
    return
  }
  func.func @transform_0(%arg0: i32) -> (i32, i32) {
    %c0_i32 = arith.constant 0 : i32
    %c0_i32_0 = arith.constant 0 : i32
    return %arg0, %c0_i32 : i32, i32
  }
  func.func @transform_1(%arg0: i32) -> (i32, i32) {
    %c0_i32 = arith.constant 0 : i32
    %c0_i32_0 = arith.constant 0 : i32
    return %arg0, %c0_i32 : i32, i32
  }
  func.func @transform_2(%arg0: i32) -> (i32, i32, i32) {
    %c0_i32 = arith.constant 0 : i32
    %c0_i32_0 = arith.constant 0 : i32
    %c0_i32_1 = arith.constant 0 : i32
    return %arg0, %c0_i32, %c0_i32_0 : i32, i32, i32
  }
  func.func @transform_3(%arg0: i32) -> (i32, i32, i32) {
    %c0_i32 = arith.constant 0 : i32
    %c0_i32_0 = arith.constant 0 : i32
    %c0_i32_1 = arith.constant 0 : i32
    return %arg0, %c0_i32, %c0_i32_0 : i32, i32, i32
  }
  func.func @transform_4(%arg0: i32) -> (i32, i32) {
    %c0_i32 = arith.constant 0 : i32
    %c0_i32_0 = arith.constant 0 : i32
    return %arg0, %c0_i32 : i32, i32
  }
  func.func @transform_5(%arg0: i32) -> (i32, i32) {
    %c0_i32 = arith.constant 0 : i32
    %c0_i32_0 = arith.constant 0 : i32
    %c0_i32_1 = arith.constant 0 : i32
    return %c0_i32, %c0_i32_0 : i32, i32
  }
  func.func @transform_6(%arg0: i32) -> (i32, i32) {
    %c0_i32 = arith.constant 0 : i32
    %c0_i32_0 = arith.constant 0 : i32
    %c0_i32_1 = arith.constant 0 : i32
    return %c0_i32, %c0_i32_0 : i32, i32
  }
  func.func @transform_7(%arg0: i32) -> (i32, i32) {
    %c0_i32 = arith.constant 0 : i32
    %c0_i32_0 = arith.constant 0 : i32
    %c0_i32_1 = arith.constant 0 : i32
    return %c0_i32, %c0_i32_0 : i32, i32
  }
  func.func @transform_8(%arg0: i32) -> (i32, i32) {
    %c0_i32 = arith.constant 0 : i32
    %c0_i32_0 = arith.constant 0 : i32
    return %arg0, %c0_i32 : i32, i32
  }
}

</mosaic_0001>

<llo_original>
// kernel: mul.1
$region0: #{mul.1}
  #allocation4 [shape = 's32[1]{0}', space=sflag, size = 0x4, scoped, tag = 'scoped memory for mul.1']
  %s0 = inlined_call_operand.hbm [shape: f32[64,64,16], index: 0, kind: input, shape index: {}]
  %s1 = inlined_call_operand.hbm [shape: f32[64,64,16], index: 1, kind: input, shape index: {}]
  %s2 = inlined_call_operand.vmem [shape: f32[64,64,16], index: 2, kind: output, shape index: {}]
  $region1: #{mul.1} parent=0
    #allocation0 [shape = 'u8[524288]{0}', space=vmem, size = 0x80000, scoped, tag = 'operand span for operand 0']
    #allocation1 [shape = 's32[1]{0}', space=sflag, size = 0x4, scoped, tag = 'scoped memory for mul.1']
    #allocation2 [shape = 'u8[524288]{0}', space=vmem, size = 0x80000, scoped, tag = 'operand span for operand 1']
    #allocation3 [shape = 's32[1]{0}', space=sflag, size = 0x4, scoped, tag = 'scoped memory for mul.1']
    %3 = vsyncpa [#allocation1], 0
    %4 = vsyncpa [#allocation3], 0
    %s6 = ssub.s32 16384, 16384
    %7 = vsyncadd [#allocation1], %s6
    %s8 = sshll.u32 [#allocation0], 4
    %s9 = int_to_ptr.vmem [resolvable:$true] %s8
    %14 = dma.hbm_to_vmem [thread:$0]  %s0, 16384, %s9, [#allocation1], 128, 128, 8
    %s16 = ssub.s32 16384, 16384
    %17 = vsyncadd [#allocation3], %s16
    %s18 = sshll.u32 [#allocation2], 4
    %s19 = int_to_ptr.vmem [resolvable:$true] %s18
    %24 = dma.hbm_to_vmem [thread:$0]  %s1, 16384, %s19, [#allocation3], 128, 128, 8
    %25 = dma.done [#allocation1], 16384
    %26 = dma.done [#allocation3], 16384
    %v27 = vld [vmem:[#allocation0] sm:$0xff]
    %v28 = vld [vmem:[#allocation2] sm:$0xff]
    %29 = xla_tuple %v27, %v28
    %30 = xla_tuple %29
    %v31 = vmul.f32 %v27, %v28
    %32 = xla_tuple %v31
    %33 = vst [vmem:[%s2] sm:$0xff] %v31
    %s34 = scalar_lea.vmem [#allocation0], 16
    %v35 = vld [vmem:[%s34] sm:$0xff]
    %s36 = scalar_lea.vmem [#allocation2], 16
    %v37 = vld [vmem:[%s36] sm:$0xff]
    %38 = xla_tuple %v35, %v37
    %39 = xla_tuple %38
    %v40 = vmul.f32 %v35, %v37
    %41 = xla_tuple %v40
    %s42 = scalar_lea.vmem %s2, 16
    %43 = vst [vmem:[%s42] sm:$0xff] %v40
    %s44 = scalar_lea.vmem [#allocation0], 32
    %v45 = vld [vmem:[%s44] sm:$0xff]
    %s46 = scalar_lea.vmem [#allocation2], 32
    %v47 = vld [vmem:[%s46] sm:$0xff]
    %48 = xla_tuple %v45, %v47
    %49 = xla_tuple %48
    %v50 = vmul.f32 %v45, %v47
    %51 = xla_tuple %v50
    %s52 = scalar_lea.vmem %s2, 32
    %53 = vst [vmem:[%s52] sm:$0xff] %v50
    %s54 = scalar_lea.vmem [#allocation0], 48
    %v55 = vld [vmem:[%s54] sm:$0xff]
    %s56 = scalar_lea.vmem [#allocation2], 48
    %v57 = vld [vmem:[%s56] sm:$0xff]
    %58 = xla_tuple %v55, %v57
    %59 = xla_tuple %58
    %v60 = vmul.f32 %v55, %v57
    %61 = xla_tuple %v60
    %s62 = scalar_lea.vmem %s2, 48
    %63 = vst [vmem:[%s62] sm:$0xff] %v60
    %s64 = scalar_lea.vmem [#allocation0], 64
    %v65 = vld [vmem:[%s64] sm:$0xff]
    %s66 = scalar_lea.vmem [#allocation2], 64
    %v67 = vld [vmem:[%s66] sm:$0xff]
    %68 = xla_tuple %v65, %v67
    %69 = xla_tuple %68
    %v70 = vmul.f32 %v65, %v67
    %71 = xla_tuple %v70
    %s72 = scalar_lea.vmem %s2, 64
    %73 = vst [vmem:[%s72] sm:$0xff] %v70
    %s74 = scalar_lea.vmem [#allocation0], 80
    %v75 = vld [vmem:[%s74] sm:$0xff]
    %s76 = scalar_lea.vmem [#allocation2], 80
    %v77 = vld [vmem:[%s76] sm:$0xff]
    %78 = xla_tuple %v75, %v77
    %79 = xla_tuple %78
    %v80 = vmul.f32 %v75, %v77
    %81 = xla_tuple %v80
    %s82 = scalar_lea.vmem %s2, 80
    %83 = vst [vmem:[%s82] sm:$0xff] %v80
    %s84 = scalar_lea.vmem [#allocation0], 96
    %v85 = vld [vmem:[%s84] sm:$0xff]
    %s86 = scalar_lea.vmem [#allocation2], 96
    %v87 = vld [vmem:[%s86] sm:$0xff]
    %88 = xla_tuple %v85, %v87
    %89 = xla_tuple %88
    %v90 = vmul.f32 %v85, %v87
    %91 = xla_tuple %v90
    %s92 = scalar_lea.vmem %s2, 96
    %93 = vst [vmem:[%s92] sm:$0xff] %v90
    %s94 = scalar_lea.vmem [#allocation0], 112
    %v95 = vld [vmem:[%s94] sm:$0xff]
    %s96 = scalar_lea.vmem [#allocation2], 112
    %v97 = vld [vmem:[%s96] sm:$0xff]
    %98 = xla_tuple %v95, %v97
    %99 = xla_tuple %98
    %v100 = vmul.f32 %v95, %v97
    %101 = xla_tuple %v100
    %s102 = scalar_lea.vmem %s2, 112
    %103 = vst [vmem:[%s102] sm:$0xff] %v100
    %s104 = scalar_lea.vmem [#allocation0], 128
    %v105 = vld [vmem:[%s104] sm:$0xff]
    %s106 = scalar_lea.vmem [#allocation2], 128
    %v107 = vld [vmem:[%s106] sm:$0xff]
    %108 = xla_tuple %v105, %v107
    %109 = xla_tuple %108
    %v110 = vmul.f32 %v105, %v107
    %111 = xla_tuple %v110
    %s112 = scalar_lea.vmem %s2, 128
    %113 = vst [vmem:[%s112] sm:$0xff] %v110
    %s114 = scalar_lea.vmem [#allocation0], 144
    %v115 = vld [vmem:[%s114] sm:$0xff]
    %s116 = scalar_lea.vmem [#allocation2], 144
    %v117 = vld [vmem:[%s116] sm:$0xff]
    %118 = xla_tuple %v115, %v117
    %119 = xla_tuple %118
    %v120 = vmul.f32 %v115, %v117
    %121 = xla_tuple %v120
    %s122 = scalar_lea.vmem %s2, 144
    %123 = vst [vmem:[%s122] sm:$0xff] %v120
    %s124 = scalar_lea.vmem [#allocation0], 160
    %v125 = vld [vmem:[%s124] sm:$0xff]
    %s126 = scalar_lea.vmem [#allocation2], 160
    %v127 = vld [vmem:[%s126] sm:$0xff]
    %128 = xla_tuple %v125, %v127
    %129 = xla_tuple %128
    %v130 = vmul.f32 %v125, %v127
    %131 = xla_tuple %v130
    %s132 = scalar_lea.vmem %s2, 160
    %133 = vst [vmem:[%s132] sm:$0xff] %v130
    %s134 = scalar_lea.vmem [#allocation0], 176
    %v135 = vld [vmem:[%s134] sm:$0xff]
    %s136 = scalar_lea.vmem [#allocation2], 176
    %v137 = vld [vmem:[%s136] sm:$0xff]
    %138 = xla_tuple %v135, %v137
    %139 = xla_tuple %138
    %v140 = vmul.f32 %v135, %v137
    %141 = xla_tuple %v140
    %s142 = scalar_lea.vmem %s2, 176
    %143 = vst [vmem:[%s142] sm:$0xff] %v140
    %s144 = scalar_lea.vmem [#allocation0], 192
    %v145 = vld [vmem:[%s144] sm:$0xff]
    %s146 = scalar_lea.vmem [#allocation2], 192
    %v147 = vld [vmem:[%s146] sm:$0xff]
    %148 = xla_tuple %v145, %v147
    %149 = xla_tuple %148
    %v150 = vmul.f32 %v145, %v147
    %151 = xla_tuple %v150
    %s152 = scalar_lea.vmem %s2, 192
    %153 = vst [vmem:[%s152] sm:$0xff] %v150
    %s154 = scalar_lea.vmem [#allocation0], 208
    %v155 = vld [vmem:[%s154] sm:$0xff]
    %s156 = scalar_lea.vmem [#allocation2], 208
    %v157 = vld [vmem:[%s156] sm:$0xff]
    %158 = xla_tuple %v155, %v157
    %159 = xla_tuple %158
    %v160 = vmul.f32 %v155, %v157
    %161 = xla_tuple %v160
    %s162 = scalar_lea.vmem %s2, 208
    %163 = vst [vmem:[%s162] sm:$0xff] %v160
    %s164 = scalar_lea.vmem [#allocation0], 224
    %v165 = vld [vmem:[%s164] sm:$0xff]
    %s166 = scalar_lea.vmem [#allocation2], 224
    %v167 = vld [vmem:[%s166] sm:$0xff]
    %168 = xla_tuple %v165, %v167
    %169 = xla_tuple %168
    %v170 = vmul.f32 %v165, %v167
    %171 = xla_tuple %v170
    %s172 = scalar_lea.vmem %s2, 224
    %173 = vst [vmem:[%s172] sm:$0xff] %v170
    %s174 = scalar_lea.vmem [#allocation0], 240
    %v175 = vld [vmem:[%s174] sm:$0xff]
    %s176 = scalar_lea.vmem [#allocation2], 240
    %v177 = vld [vmem:[%s176] sm:$0xff]
    %178 = xla_tuple %v175, %v177
    %179 = xla_tuple %178
    %v180 = vmul.f32 %v175, %v177
    %181 = xla_tuple %v180
    %s182 = scalar_lea.vmem %s2, 240
    %183 = vst [vmem:[%s182] sm:$0xff] %v180
    %s184 = scalar_lea.vmem [#allocation0], 256
    %v185 = vld [vmem:[%s184] sm:$0xff]
    %s186 = scalar_lea.vmem [#allocation2], 256
    %v187 = vld [vmem:[%s186] sm:$0xff]
    %188 = xla_tuple %v185, %v187
    %189 = xla_tuple %188
    %v190 = vmul.f32 %v185, %v187
    %191 = xla_tuple %v190
    %s192 = scalar_lea.vmem %s2, 256
    %193 = vst [vmem:[%s192] sm:$0xff] %v190
    %s194 = scalar_lea.vmem [#allocation0], 272
    %v195 = vld [vmem:[%s194] sm:$0xff]
    %s196 = scalar_lea.vmem [#allocation2], 272
    %v197 = vld [vmem:[%s196] sm:$0xff]
    %198 = xla_tuple %v195, %v197
    %199 = xla_tuple %198
    %v200 = vmul.f32 %v195, %v197
    %201 = xla_tuple %v200
    %s202 = scalar_lea.vmem %s2, 272
    %203 = vst [vmem:[%s202] sm:$0xff] %v200
    %s204 = scalar_lea.vmem [#allocation0], 288
    %v205 = vld [vmem:[%s204] sm:$0xff]
    %s206 = scalar_lea.vmem [#allocation2], 288
    %v207 = vld [vmem:[%s206] sm:$0xff]
    %208 = xla_tuple %v205, %v207
    %209 = xla_tuple %208
    %v210 = vmul.f32 %v205, %v207
    %211 = xla_tuple %v210
    %s212 = scalar_lea.vmem %s2, 288
    %213 = vst [vmem:[%s212] sm:$0xff] %v210
    %s214 = scalar_lea.vmem [#allocation0], 304
    %v215 = vld [vmem:[%s214] sm:$0xff]
    %s216 = scalar_lea.vmem [#allocation2], 304
    %v217 = vld [vmem:[%s216] sm:$0xff]
    %218 = xla_tuple %v215, %v217
    %219 = xla_tuple %218
    %v220 = vmul.f32 %v215, %v217
    %221 = xla_tuple %v220
    %s222 = scalar_lea.vmem %s2, 304
    %223 = vst [vmem:[%s222] sm:$0xff] %v220
    %s224 = scalar_lea.vmem [#allocation0], 320
    %v225 = vld [vmem:[%s224] sm:$0xff]
    %s226 = scalar_lea.vmem [#allocation2], 320
    %v227 = vld [vmem:[%s226] sm:$0xff]
    %228 = xla_tuple %v225, %v227
    %229 = xla_tuple %228
    %v230 = vmul.f32 %v225, %v227
    %231 = xla_tuple %v230
    %s232 = scalar_lea.vmem %s2, 320
    %233 = vst [vmem:[%s232] sm:$0xff] %v230
    %s234 = scalar_lea.vmem [#allocation0], 336
    %v235 = vld [vmem:[%s234] sm:$0xff]
    %s236 = scalar_lea.vmem [#allocation2], 336
    %v237 = vld [vmem:[%s236] sm:$0xff]
    %238 = xla_tuple %v235, %v237
    %239 = xla_tuple %238
    %v240 = vmul.f32 %v235, %v237
    %241 = xla_tuple %v240
    %s242 = scalar_lea.vmem %s2, 336
    %243 = vst [vmem:[%s242] sm:$0xff] %v240
    %s244 = scalar_lea.vmem [#allocation0], 352
    %v245 = vld [vmem:[%s244] sm:$0xff]
    %s246 = scalar_lea.vmem [#allocation2], 352
    %v247 = vld [vmem:[%s246] sm:$0xff]
    %248 = xla_tuple %v245, %v247
    %249 = xla_tuple %248
    %v250 = vmul.f32 %v245, %v247
    %251 = xla_tuple %v250
    %s252 = scalar_lea.vmem %s2, 352
    %253 = vst [vmem:[%s252] sm:$0xff] %v250
    %s254 = scalar_lea.vmem [#allocation0], 368
    %v255 = vld [vmem:[%s254] sm:$0xff]
    %s256 = scalar_lea.vmem [#allocation2], 368
    %v257 = vld [vmem:[%s256] sm:$0xff]
    %258 = xla_tuple %v255, %v257
    %259 = xla_tuple %258
    %v260 = vmul.f32 %v255, %v257
    %261 = xla_tuple %v260
    %s262 = scalar_lea.vmem %s2, 368
    %263 = vst [vmem:[%s262] sm:$0xff] %v260
    %s264 = scalar_lea.vmem [#allocation0], 384
    %v265 = vld [vmem:[%s264] sm:$0xff]
    %s266 = scalar_lea.vmem [#allocation2], 384
    %v267 = vld [vmem:[%s266] sm:$0xff]
    %268 = xla_tuple %v265, %v267
    %269 = xla_tuple %268
    %v270 = vmul.f32 %v265, %v267
    %271 = xla_tuple %v270
    %s272 = scalar_lea.vmem %s2, 384
    %273 = vst [vmem:[%s272] sm:$0xff] %v270
    %s274 = scalar_lea.vmem [#allocation0], 400
    %v275 = vld [vmem:[%s274] sm:$0xff]
    %s276 = scalar_lea.vmem [#allocation2], 400
    %v277 = vld [vmem:[%s276] sm:$0xff]
    %278 = xla_tuple %v275, %v277
    %279 = xla_tuple %278
    %v280 = vmul.f32 %v275, %v277
    %281 = xla_tuple %v280
    %s282 = scalar_lea.vmem %s2, 400
    %283 = vst [vmem:[%s282] sm:$0xff] %v280
    %s284 = scalar_lea.vmem [#allocation0], 416
    %v285 = vld [vmem:[%s284] sm:$0xff]
    %s286 = scalar_lea.vmem [#allocation2], 416
    %v287 = vld [vmem:[%s286] sm:$0xff]
    %288 = xla_tuple %v285, %v287
    %289 = xla_tuple %288
    %v290 = vmul.f32 %v285, %v287
    %291 = xla_tuple %v290
    %s292 = scalar_lea.vmem %s2, 416
    %293 = vst [vmem:[%s292] sm:$0xff] %v290
    %s294 = scalar_lea.vmem [#allocation0], 432
    %v295 = vld [vmem:[%s294] sm:$0xff]
    %s296 = scalar_lea.vmem [#allocation2], 432
    %v297 = vld [vmem:[%s296] sm:$0xff]
    %298 = xla_tuple %v295, %v297
    %299 = xla_tuple %298
    %v300 = vmul.f32 %v295, %v297
    %301 = xla_tuple %v300
    %s302 = scalar_lea.vmem %s2, 432
    %303 = vst [vmem:[%s302] sm:$0xff] %v300
    %s304 = scalar_lea.vmem [#allocation0], 448
    %v305 = vld [vmem:[%s304] sm:$0xff]
    %s306 = scalar_lea.vmem [#allocation2], 448
    %v307 = vld [vmem:[%s306] sm:$0xff]
    %308 = xla_tuple %v305, %v307
    %309 = xla_tuple %308
    %v310 = vmul.f32 %v305, %v307
    %311 = xla_tuple %v310
    %s312 = scalar_lea.vmem %s2, 448
    %313 = vst [vmem:[%s312] sm:$0xff] %v310
    %s314 = scalar_lea.vmem [#allocation0], 464
    %v315 = vld [vmem:[%s314] sm:$0xff]
    %s316 = scalar_lea.vmem [#allocation2], 464
    %v317 = vld [vmem:[%s316] sm:$0xff]
    %318 = xla_tuple %v315, %v317
    %319 = xla_tuple %318
    %v320 = vmul.f32 %v315, %v317
    %321 = xla_tuple %v320
    %s322 = scalar_lea.vmem %s2, 464
    %323 = vst [vmem:[%s322] sm:$0xff] %v320
    %s324 = scalar_lea.vmem [#allocation0], 480
    %v325 = vld [vmem:[%s324] sm:$0xff]
    %s326 = scalar_lea.vmem [#allocation2], 480
    %v327 = vld [vmem:[%s326] sm:$0xff]
    %328 = xla_tuple %v325, %v327
    %329 = xla_tuple %328
    %v330 = vmul.f32 %v325, %v327
    %331 = xla_tuple %v330
    %s332 = scalar_lea.vmem %s2, 480
    %333 = vst [vmem:[%s332] sm:$0xff] %v330
    %s334 = scalar_lea.vmem [#allocation0], 496
    %v335 = vld [vmem:[%s334] sm:$0xff]
    %s336 = scalar_lea.vmem [#allocation2], 496
    %v337 = vld [vmem:[%s336] sm:$0xff]
    %338 = xla_tuple %v335, %v337
    %339 = xla_tuple %338
    %v340 = vmul.f32 %v335, %v337
    %341 = xla_tuple %v340
    %s342 = scalar_lea.vmem %s2, 496
    %343 = vst [vmem:[%s342] sm:$0xff] %v340
    %s344 = scalar_lea.vmem [#allocation0], 512
    %v345 = vld [vmem:[%s344] sm:$0xff]
    %s346 = scalar_lea.vmem [#allocation2], 512
    %v347 = vld [vmem:[%s346] sm:$0xff]
    %348 = xla_tuple %v345, %v347
    %349 = xla_tuple %348
    %v350 = vmul.f32 %v345, %v347
    %351 = xla_tuple %v350
    %s352 = scalar_lea.vmem %s2, 512
    %353 = vst [vmem:[%s352] sm:$0xff] %v350
    %s354 = scalar_lea.vmem [#allocation0], 528
    %v355 = vld [vmem:[%s354] sm:$0xff]
    %s356 = scalar_lea.vmem [#allocation2], 528
    %v357 = vld [vmem:[%s356] sm:$0xff]
    %358 = xla_tuple %v355, %v357
    %359 = xla_tuple %358
    %v360 = vmul.f32 %v355, %v357
    %361 = xla_tuple %v360
    %s362 = scalar_lea.vmem %s2, 528
    %363 = vst [vmem:[%s362] sm:$0xff] %v360
    %s364 = scalar_lea.vmem [#allocation0], 544
    %v365 = vld [vmem:[%s364] sm:$0xff]
    %s366 = scalar_lea.vmem [#allocation2], 544
    %v367 = vld [vmem:[%s366] sm:$0xff]
    %368 = xla_tuple %v365, %v367
    %369 = xla_tuple %368
    %v370 = vmul.f32 %v365, %v367
    %371 = xla_tuple %v370
    %s372 = scalar_lea.vmem %s2, 544
    %373 = vst [vmem:[%s372] sm:$0xff] %v370
    %s374 = scalar_lea.vmem [#allocation0], 560
    %v375 = vld [vmem:[%s374] sm:$0xff]
    %s376 = scalar_lea.vmem [#allocation2], 560
    %v377 = vld [vmem:[%s376] sm:$0xff]
    %378 = xla_tuple %v375, %v377
    %379 = xla_tuple %378
    %v380 = vmul.f32 %v375, %v377
    %381 = xla_tuple %v380
    %s382 = scalar_lea.vmem %s2, 560
    %383 = vst [vmem:[%s382] sm:$0xff] %v380
    %s384 = scalar_lea.vmem [#allocation0], 576
    %v385 = vld [vmem:[%s384] sm:$0xff]
    %s386 = scalar_lea.vmem [#allocation2], 576
    %v387 = vld [vmem:[%s386] sm:$0xff]
    %388 = xla_tuple %v385, %v387
    %389 = xla_tuple %388
    %v390 = vmul.f32 %v385, %v387
    %391 = xla_tuple %v390
    %s392 = scalar_lea.vmem %s2, 576
    %393 = vst [vmem:[%s392] sm:$0xff] %v390
    %s394 = scalar_lea.vmem [#allocation0], 592
    %v395 = vld [vmem:[%s394] sm:$0xff]
    %s396 = scalar_lea.vmem [#allocation2], 592
    %v397 = vld [vmem:[%s396] sm:$0xff]
    %398 = xla_tuple %v395, %v397
    %399 = xla_tuple %398
    %v400 = vmul.f32 %v395, %v397
    %401 = xla_tuple %v400
    %s402 = scalar_lea.vmem %s2, 592
    %403 = vst [vmem:[%s402] sm:$0xff] %v400
    %s404 = scalar_lea.vmem [#allocation0], 608
    %v405 = vld [vmem:[%s404] sm:$0xff]
    %s406 = scalar_lea.vmem [#allocation2], 608
    %v407 = vld [vmem:[%s406] sm:$0xff]
    %408 = xla_tuple %v405, %v407
    %409 = xla_tuple %408
    %v410 = vmul.f32 %v405, %v407
    %411 = xla_tuple %v410
    %s412 = scalar_lea.vmem %s2, 608
    %413 = vst [vmem:[%s412] sm:$0xff] %v410
    %s414 = scalar_lea.vmem [#allocation0], 624
    %v415 = vld [vmem:[%s414] sm:$0xff]
    %s416 = scalar_lea.vmem [#allocation2], 624
    %v417 = vld [vmem:[%s416] sm:$0xff]
    %418 = xla_tuple %v415, %v417
    %419 = xla_tuple %418
    %v420 = vmul.f32 %v415, %v417
    %421 = xla_tuple %v420
    %s422 = scalar_lea.vmem %s2, 624
    %423 = vst [vmem:[%s422] sm:$0xff] %v420
    %s424 = scalar_lea.vmem [#allocation0], 640
    %v425 = vld [vmem:[%s424] sm:$0xff]
    %s426 = scalar_lea.vmem [#allocation2], 640
    %v427 = vld [vmem:[%s426] sm:$0xff]
    %428 = xla_tuple %v425, %v427
    %429 = xla_tuple %428
    %v430 = vmul.f32 %v425, %v427
    %431 = xla_tuple %v430
    %s432 = scalar_lea.vmem %s2, 640
    %433 = vst [vmem:[%s432] sm:$0xff] %v430
    %s434 = scalar_lea.vmem [#allocation0], 656
    %v435 = vld [vmem:[%s434] sm:$0xff]
    %s436 = scalar_lea.vmem [#allocation2], 656
    %v437 = vld [vmem:[%s436] sm:$0xff]
    %438 = xla_tuple %v435, %v437
    %439 = xla_tuple %438
    %v440 = vmul.f32 %v435, %v437
    %441 = xla_tuple %v440
    %s442 = scalar_lea.vmem %s2, 656
    %443 = vst [vmem:[%s442] sm:$0xff] %v440
    %s444 = scalar_lea.vmem [#allocation0], 672
    %v445 = vld [vmem:[%s444] sm:$0xff]
    %s446 = scalar_lea.vmem [#allocation2], 672
    %v447 = vld [vmem:[%s446] sm:$0xff]
    %448 = xla_tuple %v445, %v447
    %449 = xla_tuple %448
    %v450 = vmul.f32 %v445, %v447
    %451 = xla_tuple %v450
    %s452 = scalar_lea.vmem %s2, 672
    %453 = vst [vmem:[%s452] sm:$0xff] %v450
    %s454 = scalar_lea.vmem [#allocation0], 688
    %v455 = vld [vmem:[%s454] sm:$0xff]
    %s456 = scalar_lea.vmem [#allocation2], 688
    %v457 = vld [vmem:[%s456] sm:$0xff]
    %458 = xla_tuple %v455, %v457
    %459 = xla_tuple %458
    %v460 = vmul.f32 %v455, %v457
    %461 = xla_tuple %v460
    %s462 = scalar_lea.vmem %s2, 688
    %463 = vst [vmem:[%s462] sm:$0xff] %v460
    %s464 = scalar_lea.vmem [#allocation0], 704
    %v465 = vld [vmem:[%s464] sm:$0xff]
    %s466 = scalar_lea.vmem [#allocation2], 704
    %v467 = vld [vmem:[%s466] sm:$0xff]
    %468 = xla_tuple %v465, %v467
    %469 = xla_tuple %468
    %v470 = vmul.f32 %v465, %v467
    %471 = xla_tuple %v470
    %s472 = scalar_lea.vmem %s2, 704
    %473 = vst [vmem:[%s472] sm:$0xff] %v470
    %s474 = scalar_lea.vmem [#allocation0], 720
    %v475 = vld [vmem:[%s474] sm:$0xff]
    %s476 = scalar_lea.vmem [#allocation2], 720
    %v477 = vld [vmem:[%s476] sm:$0xff]
    %478 = xla_tuple %v475, %v477
    %479 = xla_tuple %478
    %v480 = vmul.f32 %v475, %v477
    %481 = xla_tuple %v480
    %s482 = scalar_lea.vmem %s2, 720
    %483 = vst [vmem:[%s482] sm:$0xff] %v480
    %s484 = scalar_lea.vmem [#allocation0], 736
    %v485 = vld [vmem:[%s484] sm:$0xff]
    %s486 = scalar_lea.vmem [#allocation2], 736
    %v487 = vld [vmem:[%s486] sm:$0xff]
    %488 = xla_tuple %v485, %v487
    %489 = xla_tuple %488
    %v490 = vmul.f32 %v485, %v487
    %491 = xla_tuple %v490
    %s492 = scalar_lea.vmem %s2, 736
    %493 = vst [vmem:[%s492] sm:$0xff] %v490
    %s494 = scalar_lea.vmem [#allocation0], 752
    %v495 = vld [vmem:[%s494] sm:$0xff]
    %s496 = scalar_lea.vmem [#allocation2], 752
    %v497 = vld [vmem:[%s496] sm:$0xff]
    %498 = xla_tuple %v495, %v497
    %499 = xla_tuple %498
    %v500 = vmul.f32 %v495, %v497
    %501 = xla_tuple %v500
    %s502 = scalar_lea.vmem %s2, 752
    %503 = vst [vmem:[%s502] sm:$0xff] %v500
    %s504 = scalar_lea.vmem [#allocation0], 768
    %v505 = vld [vmem:[%s504] sm:$0xff]
    %s506 = scalar_lea.vmem [#allocation2], 768
    %v507 = vld [vmem:[%s506] sm:$0xff]
    %508 = xla_tuple %v505, %v507
    %509 = xla_tuple %508
    %v510 = vmul.f32 %v505, %v507
    %511 = xla_tuple %v510
    %s512 = scalar_lea.vmem %s2, 768
    %513 = vst [vmem:[%s512] sm:$0xff] %v510
    %s514 = scalar_lea.vmem [#allocation0], 784
    %v515 = vld [vmem:[%s514] sm:$0xff]
    %s516 = scalar_lea.vmem [#allocation2], 784
    %v517 = vld [vmem:[%s516] sm:$0xff]
    %518 = xla_tuple %v515, %v517
    %519 = xla_tuple %518
    %v520 = vmul.f32 %v515, %v517
    %521 = xla_tuple %v520
    %s522 = scalar_lea.vmem %s2, 784
    %523 = vst [vmem:[%s522] sm:$0xff] %v520
    %s524 = scalar_lea.vmem [#allocation0], 800
    %v525 = vld [vmem:[%s524] sm:$0xff]
    %s526 = scalar_lea.vmem [#allocation2], 800
    %v527 = vld [vmem:[%s526] sm:$0xff]
    %528 = xla_tuple %v525, %v527
    %529 = xla_tuple %528
    %v530 = vmul.f32 %v525, %v527
    %531 = xla_tuple %v530
    %s532 = scalar_lea.vmem %s2, 800
    %533 = vst [vmem:[%s532] sm:$0xff] %v530
    %s534 = scalar_lea.vmem [#allocation0], 816
    %v535 = vld [vmem:[%s534] sm:$0xff]
    %s536 = scalar_lea.vmem [#allocation2], 816
    %v537 = vld [vmem:[%s536] sm:$0xff]
    %538 = xla_tuple %v535, %v537
    %539 = xla_tuple %538
    %v540 = vmul.f32 %v535, %v537
    %541 = xla_tuple %v540
    %s542 = scalar_lea.vmem %s2, 816
    %543 = vst [vmem:[%s542] sm:$0xff] %v540
    %s544 = scalar_lea.vmem [#allocation0], 832
    %v545 = vld [vmem:[%s544] sm:$0xff]
    %s546 = scalar_lea.vmem [#allocation2], 832
    %v547 = vld [vmem:[%s546] sm:$0xff]
    %548 = xla_tuple %v545, %v547
    %549 = xla_tuple %548
    %v550 = vmul.f32 %v545, %v547
    %551 = xla_tuple %v550
    %s552 = scalar_lea.vmem %s2, 832
    %553 = vst [vmem:[%s552] sm:$0xff] %v550
    %s554 = scalar_lea.vmem [#allocation0], 848
    %v555 = vld [vmem:[%s554] sm:$0xff]
    %s556 = scalar_lea.vmem [#allocation2], 848
    %v557 = vld [vmem:[%s556] sm:$0xff]
    %558 = xla_tuple %v555, %v557
    %559 = xla_tuple %558
    %v560 = vmul.f32 %v555, %v557
    %561 = xla_tuple %v560
    %s562 = scalar_lea.vmem %s2, 848
    %563 = vst [vmem:[%s562] sm:$0xff] %v560
    %s564 = scalar_lea.vmem [#allocation0], 864
    %v565 = vld [vmem:[%s564] sm:$0xff]
    %s566 = scalar_lea.vmem [#allocation2], 864
    %v567 = vld [vmem:[%s566] sm:$0xff]
    %568 = xla_tuple %v565, %v567
    %569 = xla_tuple %568
    %v570 = vmul.f32 %v565, %v567
    %571 = xla_tuple %v570
    %s572 = scalar_lea.vmem %s2, 864
    %573 = vst [vmem:[%s572] sm:$0xff] %v570
    %s574 = scalar_lea.vmem [#allocation0], 880
    %v575 = vld [vmem:[%s574] sm:$0xff]
    %s576 = scalar_lea.vmem [#allocation2], 880
    %v577 = vld [vmem:[%s576] sm:$0xff]
    %578 = xla_tuple %v575, %v577
    %579 = xla_tuple %578
    %v580 = vmul.f32 %v575, %v577
    %581 = xla_tuple %v580
    %s582 = scalar_lea.vmem %s2, 880
    %583 = vst [vmem:[%s582] sm:$0xff] %v580
    %s584 = scalar_lea.vmem [#allocation0], 896
    %v585 = vld [vmem:[%s584] sm:$0xff]
    %s586 = scalar_lea.vmem [#allocation2], 896
    %v587 = vld [vmem:[%s586] sm:$0xff]
    %588 = xla_tuple %v585, %v587
    %589 = xla_tuple %588
    %v590 = vmul.f32 %v585, %v587
    %591 = xla_tuple %v590
    %s592 = scalar_lea.vmem %s2, 896
    %593 = vst [vmem:[%s592] sm:$0xff] %v590
    %s594 = scalar_lea.vmem [#allocation0], 912
    %v595 = vld [vmem:[%s594] sm:$0xff]
    %s596 = scalar_lea.vmem [#allocation2], 912
    %v597 = vld [vmem:[%s596] sm:$0xff]
    %598 = xla_tuple %v595, %v597
    %599 = xla_tuple %598
    %v600 = vmul.f32 %v595, %v597
    %601 = xla_tuple %v600
    %s602 = scalar_lea.vmem %s2, 912
    %603 = vst [vmem:[%s602] sm:$0xff] %v600
    %s604 = scalar_lea.vmem [#allocation0], 928
    %v605 = vld [vmem:[%s604] sm:$0xff]
    %s606 = scalar_lea.vmem [#allocation2], 928
    %v607 = vld [vmem:[%s606] sm:$0xff]
    %608 = xla_tuple %v605, %v607
    %609 = xla_tuple %608
    %v610 = vmul.f32 %v605, %v607
    %611 = xla_tuple %v610
    %s612 = scalar_lea.vmem %s2, 928
    %613 = vst [vmem:[%s612] sm:$0xff] %v610
    %s614 = scalar_lea.vmem [#allocation0], 944
    %v615 = vld [vmem:[%s614] sm:$0xff]
    %s616 = scalar_lea.vmem [#allocation2], 944
    %v617 = vld [vmem:[%s616] sm:$0xff]
    %618 = xla_tuple %v615, %v617
    %619 = xla_tuple %618
    %v620 = vmul.f32 %v615, %v617
    %621 = xla_tuple %v620
    %s622 = scalar_lea.vmem %s2, 944
    %623 = vst [vmem:[%s622] sm:$0xff] %v620
    %s624 = scalar_lea.vmem [#allocation0], 960
    %v625 = vld [vmem:[%s624] sm:$0xff]
    %s626 = scalar_lea.vmem [#allocation2], 960
    %v627 = vld [vmem:[%s626] sm:$0xff]
    %628 = xla_tuple %v625, %v627
    %629 = xla_tuple %628
    %v630 = vmul.f32 %v625, %v627
    %631 = xla_tuple %v630
    %s632 = scalar_lea.vmem %s2, 960
    %633 = vst [vmem:[%s632] sm:$0xff] %v630
    %s634 = scalar_lea.vmem [#allocation0], 976
    %v635 = vld [vmem:[%s634] sm:$0xff]
    %s636 = scalar_lea.vmem [#allocation2], 976
    %v637 = vld [vmem:[%s636] sm:$0xff]
    %638 = xla_tuple %v635, %v637
    %639 = xla_tuple %638
    %v640 = vmul.f32 %v635, %v637
    %641 = xla_tuple %v640
    %s642 = scalar_lea.vmem %s2, 976
    %643 = vst [vmem:[%s642] sm:$0xff] %v640
    %s644 = scalar_lea.vmem [#allocation0], 992
    %v645 = vld [vmem:[%s644] sm:$0xff]
    %s646 = scalar_lea.vmem [#allocation2], 992
    %v647 = vld [vmem:[%s646] sm:$0xff]
    %648 = xla_tuple %v645, %v647
    %649 = xla_tuple %648
    %v650 = vmul.f32 %v645, %v647
    %651 = xla_tuple %v650
    %s652 = scalar_lea.vmem %s2, 992
    %653 = vst [vmem:[%s652] sm:$0xff] %v650
    %s654 = scalar_lea.vmem [#allocation0], 1008
    %v655 = vld [vmem:[%s654] sm:$0xff]
    %s656 = scalar_lea.vmem [#allocation2], 1008
    %v657 = vld [vmem:[%s656] sm:$0xff]
    %658 = xla_tuple %v655, %v657
    %659 = xla_tuple %658
    %v660 = vmul.f32 %v655, %v657
    %661 = xla_tuple %v660
    %s662 = scalar_lea.vmem %s2, 1008
    %663 = vst [vmem:[%s662] sm:$0xff] %v660
    %s664 = scalar_lea.vmem [#allocation0], 8
    %v665 = vld [vmem:[%s664] sm:$0xff]
    %s666 = scalar_lea.vmem [#allocation2], 8
    %v667 = vld [vmem:[%s666] sm:$0xff]
    %668 = xla_tuple %v665, %v667
    %669 = xla_tuple %668
    %v670 = vmul.f32 %v665, %v667
    %671 = xla_tuple %v670
    %s672 = scalar_lea.vmem %s2, 8
    %673 = vst [vmem:[%s672] sm:$0xff] %v670
    %s674 = scalar_lea.vmem [#allocation0], 24
    %v675 = vld [vmem:[%s674] sm:$0xff]
    %s676 = scalar_lea.vmem [#allocation2], 24
    %v677 = vld [vmem:[%s676] sm:$0xff]
    %678 = xla_tuple %v675, %v677
    %679 = xla_tuple %678
    %v680 = vmul.f32 %v675, %v677
    %681 = xla_tuple %v680
    %s682 = scalar_lea.vmem %s2, 24
    %683 = vst [vmem:[%s682] sm:$0xff] %v680
    %s684 = scalar_lea.vmem [#allocation0], 40
    %v685 = vld [vmem:[%s684] sm:$0xff]
    %s686 = scalar_lea.vmem [#allocation2], 40
    %v687 = vld [vmem:[%s686] sm:$0xff]
    %688 = xla_tuple %v685, %v687
    %689 = xla_tuple %688
    %v690 = vmul.f32 %v685, %v687
    %691 = xla_tuple %v690
    %s692 = scalar_lea.vmem %s2, 40
    %693 = vst [vmem:[%s692] sm:$0xff] %v690
    %s694 = scalar_lea.vmem [#allocation0], 56
    %v695 = vld [vmem:[%s694] sm:$0xff]
    %s696 = scalar_lea.vmem [#allocation2], 56
    %v697 = vld [vmem:[%s696] sm:$0xff]
    %698 = xla_tuple %v695, %v697
    %699 = xla_tuple %698
    %v700 = vmul.f32 %v695, %v697
    %701 = xla_tuple %v700
    %s702 = scalar_lea.vmem %s2, 56
    %703 = vst [vmem:[%s702] sm:$0xff] %v700
    %s704 = scalar_lea.vmem [#allocation0], 72
    %v705 = vld [vmem:[%s704] sm:$0xff]
    %s706 = scalar_lea.vmem [#allocation2], 72
    %v707 = vld [vmem:[%s706] sm:$0xff]
    %708 = xla_tuple %v705, %v707
    %709 = xla_tuple %708
    %v710 = vmul.f32 %v705, %v707
    %711 = xla_tuple %v710
    %s712 = scalar_lea.vmem %s2, 72
    %713 = vst [vmem:[%s712] sm:$0xff] %v710
    %s714 = scalar_lea.vmem [#allocation0], 88
    %v715 = vld [vmem:[%s714] sm:$0xff]
    %s716 = scalar_lea.vmem [#allocation2], 88
    %v717 = vld [vmem:[%s716] sm:$0xff]
    %718 = xla_tuple %v715, %v717
    %719 = xla_tuple %718
    %v720 = vmul.f32 %v715, %v717
    %721 = xla_tuple %v720
    %s722 = scalar_lea.vmem %s2, 88
    %723 = vst [vmem:[%s722] sm:$0xff] %v720
    %s724 = scalar_lea.vmem [#allocation0], 104
    %v725 = vld [vmem:[%s724] sm:$0xff]
    %s726 = scalar_lea.vmem [#allocation2], 104
    %v727 = vld [vmem:[%s726] sm:$0xff]
    %728 = xla_tuple %v725, %v727
    %729 = xla_tuple %728
    %v730 = vmul.f32 %v725, %v727
    %731 = xla_tuple %v730
    %s732 = scalar_lea.vmem %s2, 104
    %733 = vst [vmem:[%s732] sm:$0xff] %v730
    %s734 = scalar_lea.vmem [#allocation0], 120
    %v735 = vld [vmem:[%s734] sm:$0xff]
    %s736 = scalar_lea.vmem [#allocation2], 120
    %v737 = vld [vmem:[%s736] sm:$0xff]
    %738 = xla_tuple %v735, %v737
    %739 = xla_tuple %738
    %v740 = vmul.f32 %v735, %v737
    %741 = xla_tuple %v740
    %s742 = scalar_lea.vmem %s2, 120
    %743 = vst [vmem:[%s742] sm:$0xff] %v740
    %s744 = scalar_lea.vmem [#allocation0], 136
    %v745 = vld [vmem:[%s744] sm:$0xff]
    %s746 = scalar_lea.vmem [#allocation2], 136
    %v747 = vld [vmem:[%s746] sm:$0xff]
    %748 = xla_tuple %v745, %v747
    %749 = xla_tuple %748
    %v750 = vmul.f32 %v745, %v747
    %751 = xla_tuple %v750
    %s752 = scalar_lea.vmem %s2, 136
    %753 = vst [vmem:[%s752] sm:$0xff] %v750
    %s754 = scalar_lea.vmem [#allocation0], 152
    %v755 = vld [vmem:[%s754] sm:$0xff]
    %s756 = scalar_lea.vmem [#allocation2], 152
    %v757 = vld [vmem:[%s756] sm:$0xff]
    %758 = xla_tuple %v755, %v757
    %759 = xla_tuple %758
    %v760 = vmul.f32 %v755, %v757
    %761 = xla_tuple %v760
    %s762 = scalar_lea.vmem %s2, 152
    %763 = vst [vmem:[%s762] sm:$0xff] %v760
    %s764 = scalar_lea.vmem [#allocation0], 168
    %v765 = vld [vmem:[%s764] sm:$0xff]
    %s766 = scalar_lea.vmem [#allocation2], 168
    %v767 = vld [vmem:[%s766] sm:$0xff]
    %768 = xla_tuple %v765, %v767
    %769 = xla_tuple %768
    %v770 = vmul.f32 %v765, %v767
    %771 = xla_tuple %v770
    %s772 = scalar_lea.vmem %s2, 168
    %773 = vst [vmem:[%s772] sm:$0xff] %v770
    %s774 = scalar_lea.vmem [#allocation0], 184
    %v775 = vld [vmem:[%s774] sm:$0xff]
    %s776 = scalar_lea.vmem [#allocation2], 184
    %v777 = vld [vmem:[%s776] sm:$0xff]
    %778 = xla_tuple %v775, %v777
    %779 = xla_tuple %778
    %v780 = vmul.f32 %v775, %v777
    %781 = xla_tuple %v780
    %s782 = scalar_lea.vmem %s2, 184
    %783 = vst [vmem:[%s782] sm:$0xff] %v780
    %s784 = scalar_lea.vmem [#allocation0], 200
    %v785 = vld [vmem:[%s784] sm:$0xff]
    %s786 = scalar_lea.vmem [#allocation2], 200
    %v787 = vld [vmem:[%s786] sm:$0xff]
    %788 = xla_tuple %v785, %v787
    %789 = xla_tuple %788
    %v790 = vmul.f32 %v785, %v787
    %791 = xla_tuple %v790
    %s792 = scalar_lea.vmem %s2, 200
    %793 = vst [vmem:[%s792] sm:$0xff] %v790
    %s794 = scalar_lea.vmem [#allocation0], 216
    %v795 = vld [vmem:[%s794] sm:$0xff]
    %s796 = scalar_lea.vmem [#allocation2], 216
    %v797 = vld [vmem:[%s796] sm:$0xff]
    %798 = xla_tuple %v795, %v797
    %799 = xla_tuple %798
    %v800 = vmul.f32 %v795, %v797
    %801 = xla_tuple %v800
    %s802 = scalar_lea.vmem %s2, 216
    %803 = vst [vmem:[%s802] sm:$0xff] %v800
    %s804 = scalar_lea.vmem [#allocation0], 232
    %v805 = vld [vmem:[%s804] sm:$0xff]
    %s806 = scalar_lea.vmem [#allocation2], 232
    %v807 = vld [vmem:[%s806] sm:$0xff]
    %808 = xla_tuple %v805, %v807
    %809 = xla_tuple %808
    %v810 = vmul.f32 %v805, %v807
    %811 = xla_tuple %v810
    %s812 = scalar_lea.vmem %s2, 232
    %813 = vst [vmem:[%s812] sm:$0xff] %v810
    %s814 = scalar_lea.vmem [#allocation0], 248
    %v815 = vld [vmem:[%s814] sm:$0xff]
    %s816 = scalar_lea.vmem [#allocation2], 248
    %v817 = vld [vmem:[%s816] sm:$0xff]
    %818 = xla_tuple %v815, %v817
    %819 = xla_tuple %818
    %v820 = vmul.f32 %v815, %v817
    %821 = xla_tuple %v820
    %s822 = scalar_lea.vmem %s2, 248
    %823 = vst [vmem:[%s822] sm:$0xff] %v820
    %s824 = scalar_lea.vmem [#allocation0], 264
    %v825 = vld [vmem:[%s824] sm:$0xff]
    %s826 = scalar_lea.vmem [#allocation2], 264
    %v827 = vld [vmem:[%s826] sm:$0xff]
    %828 = xla_tuple %v825, %v827
    %829 = xla_tuple %828
    %v830 = vmul.f32 %v825, %v827
    %831 = xla_tuple %v830
    %s832 = scalar_lea.vmem %s2, 264
    %833 = vst [vmem:[%s832] sm:$0xff] %v830
    %s834 = scalar_lea.vmem [#allocation0], 280
    %v835 = vld [vmem:[%s834] sm:$0xff]
    %s836 = scalar_lea.vmem [#allocation2], 280
    %v837 = vld [vmem:[%s836] sm:$0xff]
    %838 = xla_tuple %v835, %v837
    %839 = xla_tuple %838
    %v840 = vmul.f32 %v835, %v837
    %841 = xla_tuple %v840
    %s842 = scalar_lea.vmem %s2, 280
    %843 = vst [vmem:[%s842] sm:$0xff] %v840
    %s844 = scalar_lea.vmem [#allocation0], 296
    %v845 = vld [vmem:[%s844] sm:$0xff]
    %s846 = scalar_lea.vmem [#allocation2], 296
    %v847 = vld [vmem:[%s846] sm:$0xff]
    %848 = xla_tuple %v845, %v847
    %849 = xla_tuple %848
    %v850 = vmul.f32 %v845, %v847
    %851 = xla_tuple %v850
    %s852 = scalar_lea.vmem %s2, 296
    %853 = vst [vmem:[%s852] sm:$0xff] %v850
    %s854 = scalar_lea.vmem [#allocation0], 312
    %v855 = vld [vmem:[%s854] sm:$0xff]
    %s856 = scalar_lea.vmem [#allocation2], 312
    %v857 = vld [vmem:[%s856] sm:$0xff]
    %858 = xla_tuple %v855, %v857
    %859 = xla_tuple %858
    %v860 = vmul.f32 %v855, %v857
    %861 = xla_tuple %v860
    %s862 = scalar_lea.vmem %s2, 312
    %863 = vst [vmem:[%s862] sm:$0xff] %v860
    %s864 = scalar_lea.vmem [#allocation0], 328
    %v865 = vld [vmem:[%s864] sm:$0xff]
    %s866 = scalar_lea.vmem [#allocation2], 328
    %v867 = vld [vmem:[%s866] sm:$0xff]
    %868 = xla_tuple %v865, %v867
    %869 = xla_tuple %868
    %v870 = vmul.f32 %v865, %v867
    %871 = xla_tuple %v870
    %s872 = scalar_lea.vmem %s2, 328
    %873 = vst [vmem:[%s872] sm:$0xff] %v870
    %s874 = scalar_lea.vmem [#allocation0], 344
    %v875 = vld [vmem:[%s874] sm:$0xff]
    %s876 = scalar_lea.vmem [#allocation2], 344
    %v877 = vld [vmem:[%s876] sm:$0xff]
    %878 = xla_tuple %v875, %v877
    %879 = xla_tuple %878
    %v880 = vmul.f32 %v875, %v877
    %881 = xla_tuple %v880
    %s882 = scalar_lea.vmem %s2, 344
    %883 = vst [vmem:[%s882] sm:$0xff] %v880
    %s884 = scalar_lea.vmem [#allocation0], 360
    %v885 = vld [vmem:[%s884] sm:$0xff]
    %s886 = scalar_lea.vmem [#allocation2], 360
    %v887 = vld [vmem:[%s886] sm:$0xff]
    %888 = xla_tuple %v885, %v887
    %889 = xla_tuple %888
    %v890 = vmul.f32 %v885, %v887
    %891 = xla_tuple %v890
    %s892 = scalar_lea.vmem %s2, 360
    %893 = vst [vmem:[%s892] sm:$0xff] %v890
    %s894 = scalar_lea.vmem [#allocation0], 376
    %v895 = vld [vmem:[%s894] sm:$0xff]
    %s896 = scalar_lea.vmem [#allocation2], 376
    %v897 = vld [vmem:[%s896] sm:$0xff]
    %898 = xla_tuple %v895, %v897
    %899 = xla_tuple %898
    %v900 = vmul.f32 %v895, %v897
    %901 = xla_tuple %v900
    %s902 = scalar_lea.vmem %s2, 376
    %903 = vst [vmem:[%s902] sm:$0xff] %v900
    %s904 = scalar_lea.vmem [#allocation0], 392
    %v905 = vld [vmem:[%s904] sm:$0xff]
    %s906 = scalar_lea.vmem [#allocation2], 392
    %v907 = vld [vmem:[%s906] sm:$0xff]
    %908 = xla_tuple %v905, %v907
    %909 = xla_tuple %908
    %v910 = vmul.f32 %v905, %v907
    %911 = xla_tuple %v910
    %s912 = scalar_lea.vmem %s2, 392
    %913 = vst [vmem:[%s912] sm:$0xff] %v910
    %s914 = scalar_lea.vmem [#allocation0], 408
    %v915 = vld [vmem:[%s914] sm:$0xff]
    %s916 = scalar_lea.vmem [#allocation2], 408
    %v917 = vld [vmem:[%s916] sm:$0xff]
    %918 = xla_tuple %v915, %v917
    %919 = xla_tuple %918
    %v920 = vmul.f32 %v915, %v917
    %921 = xla_tuple %v920
    %s922 = scalar_lea.vmem %s2, 408
    %923 = vst [vmem:[%s922] sm:$0xff] %v920
    %s924 = scalar_lea.vmem [#allocation0], 424
    %v925 = vld [vmem:[%s924] sm:$0xff]
    %s926 = scalar_lea.vmem [#allocation2], 424
    %v927 = vld [vmem:[%s926] sm:$0xff]
    %928 = xla_tuple %v925, %v927
    %929 = xla_tuple %928
    %v930 = vmul.f32 %v925, %v927
    %931 = xla_tuple %v930
    %s932 = scalar_lea.vmem %s2, 424
    %933 = vst [vmem:[%s932] sm:$0xff] %v930
    %s934 = scalar_lea.vmem [#allocation0], 440
    %v935 = vld [vmem:[%s934] sm:$0xff]
    %s936 = scalar_lea.vmem [#allocation2], 440
    %v937 = vld [vmem:[%s936] sm:$0xff]
    %938 = xla_tuple %v935, %v937
    %939 = xla_tuple %938
    %v940 = vmul.f32 %v935, %v937
    %941 = xla_tuple %v940
    %s942 = scalar_lea.vmem %s2, 440
    %943 = vst [vmem:[%s942] sm:$0xff] %v940
    %s944 = scalar_lea.vmem [#allocation0], 456
    %v945 = vld [vmem:[%s944] sm:$0xff]
    %s946 = scalar_lea.vmem [#allocation2], 456
    %v947 = vld [vmem:[%s946] sm:$0xff]
    %948 = xla_tuple %v945, %v947
    %949 = xla_tuple %948
    %v950 = vmul.f32 %v945, %v947
    %951 = xla_tuple %v950
    %s952 = scalar_lea.vmem %s2, 456
    %953 = vst [vmem:[%s952] sm:$0xff] %v950
    %s954 = scalar_lea.vmem [#allocation0], 472
    %v955 = vld [vmem:[%s954] sm:$0xff]
    %s956 = scalar_lea.vmem [#allocation2], 472
    %v957 = vld [vmem:[%s956] sm:$0xff]
    %958 = xla_tuple %v955, %v957
    %959 = xla_tuple %958
    %v960 = vmul.f32 %v955, %v957
    %961 = xla_tuple %v960
    %s962 = scalar_lea.vmem %s2, 472
    %963 = vst [vmem:[%s962] sm:$0xff] %v960
    %s964 = scalar_lea.vmem [#allocation0], 488
    %v965 = vld [vmem:[%s964] sm:$0xff]
    %s966 = scalar_lea.vmem [#allocation2], 488
    %v967 = vld [vmem:[%s966] sm:$0xff]
    %968 = xla_tuple %v965, %v967
    %969 = xla_tuple %968
    %v970 = vmul.f32 %v965, %v967
    %971 = xla_tuple %v970
    %s972 = scalar_lea.vmem %s2, 488
    %973 = vst [vmem:[%s972] sm:$0xff] %v970
    %s974 = scalar_lea.vmem [#allocation0], 504
    %v975 = vld [vmem:[%s974] sm:$0xff]
    %s976 = scalar_lea.vmem [#allocation2], 504
    %v977 = vld [vmem:[%s976] sm:$0xff]
    %978 = xla_tuple %v975, %v977
    %979 = xla_tuple %978
    %v980 = vmul.f32 %v975, %v977
    %981 = xla_tuple %v980
    %s982 = scalar_lea.vmem %s2, 504
    %983 = vst [vmem:[%s982] sm:$0xff] %v980
    %s984 = scalar_lea.vmem [#allocation0], 520
    %v985 = vld [vmem:[%s984] sm:$0xff]
    %s986 = scalar_lea.vmem [#allocation2], 520
    %v987 = vld [vmem:[%s986] sm:$0xff]
    %988 = xla_tuple %v985, %v987
    %989 = xla_tuple %988
    %v990 = vmul.f32 %v985, %v987
    %991 = xla_tuple %v990
    %s992 = scalar_lea.vmem %s2, 520
    %993 = vst [vmem:[%s992] sm:$0xff] %v990
    %s994 = scalar_lea.vmem [#allocation0], 536
    %v995 = vld [vmem:[%s994] sm:$0xff]
    %s996 = scalar_lea.vmem [#allocation2], 536
    %v997 = vld [vmem:[%s996] sm:$0xff]
    %998 = xla_tuple %v995, %v997
    %999 = xla_tuple %998
    %v1000 = vmul.f32 %v995, %v997
    %1001 = xla_tuple %v1000
    %s1002 = scalar_lea.vmem %s2, 536
    %1003 = vst [vmem:[%s1002] sm:$0xff] %v1000
    %s1004 = scalar_lea.vmem [#allocation0], 552
    %v1005 = vld [vmem:[%s1004] sm:$0xff]
    %s1006 = scalar_lea.vmem [#allocation2], 552
    %v1007 = vld [vmem:[%s1006] sm:$0xff]
    %1008 = xla_tuple %v1005, %v1007
    %1009 = xla_tuple %1008
    %v1010 = vmul.f32 %v1005, %v1007
    %1011 = xla_tuple %v1010
    %s1012 = scalar_lea.vmem %s2, 552
    %1013 = vst [vmem:[%s1012] sm:$0xff] %v1010
    %s1014 = scalar_lea.vmem [#allocation0], 568
    %v1015 = vld [vmem:[%s1014] sm:$0xff]
    %s1016 = scalar_lea.vmem [#allocation2], 568
    %v1017 = vld [vmem:[%s1016] sm:$0xff]
    %1018 = xla_tuple %v1015, %v1017
    %1019 = xla_tuple %1018
    %v1020 = vmul.f32 %v1015, %v1017
    %1021 = xla_tuple %v1020
    %s1022 = scalar_lea.vmem %s2, 568
    %1023 = vst [vmem:[%s1022] sm:$0xff] %v1020
    %s1024 = scalar_lea.vmem [#allocation0], 584
    %v1025 = vld [vmem:[%s1024] sm:$0xff]
    %s1026 = scalar_lea.vmem [#allocation2], 584
    %v1027 = vld [vmem:[%s1026] sm:$0xff]
    %1028 = xla_tuple %v1025, %v1027
    %1029 = xla_tuple %1028
    %v1030 = vmul.f32 %v1025, %v1027
    %1031 = xla_tuple %v1030
    %s1032 = scalar_lea.vmem %s2, 584
    %1033 = vst [vmem:[%s1032] sm:$0xff] %v1030
    %s1034 = scalar_lea.vmem [#allocation0], 600
    %v1035 = vld [vmem:[%s1034] sm:$0xff]
    %s1036 = scalar_lea.vmem [#allocation2], 600
    %v1037 = vld [vmem:[%s1036] sm:$0xff]
    %1038 = xla_tuple %v1035, %v1037
    %1039 = xla_tuple %1038
    %v1040 = vmul.f32 %v1035, %v1037
    %1041 = xla_tuple %v1040
    %s1042 = scalar_lea.vmem %s2, 600
    %1043 = vst [vmem:[%s1042] sm:$0xff] %v1040
    %s1044 = scalar_lea.vmem [#allocation0], 616
    %v1045 = vld [vmem:[%s1044] sm:$0xff]
    %s1046 = scalar_lea.vmem [#allocation2], 616
    %v1047 = vld [vmem:[%s1046] sm:$0xff]
    %1048 = xla_tuple %v1045, %v1047
    %1049 = xla_tuple %1048
    %v1050 = vmul.f32 %v1045, %v1047
    %1051 = xla_tuple %v1050
    %s1052 = scalar_lea.vmem %s2, 616
    %1053 = vst [vmem:[%s1052] sm:$0xff] %v1050
    %s1054 = scalar_lea.vmem [#allocation0], 632
    %v1055 = vld [vmem:[%s1054] sm:$0xff]
    %s1056 = scalar_lea.vmem [#allocation2], 632
    %v1057 = vld [vmem:[%s1056] sm:$0xff]
    %1058 = xla_tuple %v1055, %v1057
    %1059 = xla_tuple %1058
    %v1060 = vmul.f32 %v1055, %v1057
    %1061 = xla_tuple %v1060
    %s1062 = scalar_lea.vmem %s2, 632
    %1063 = vst [vmem:[%s1062] sm:$0xff] %v1060
    %s1064 = scalar_lea.vmem [#allocation0], 648
    %v1065 = vld [vmem:[%s1064] sm:$0xff]
    %s1066 = scalar_lea.vmem [#allocation2], 648
    %v1067 = vld [vmem:[%s1066] sm:$0xff]
    %1068 = xla_tuple %v1065, %v1067
    %1069 = xla_tuple %1068
    %v1070 = vmul.f32 %v1065, %v1067
    %1071 = xla_tuple %v1070
    %s1072 = scalar_lea.vmem %s2, 648
    %1073 = vst [vmem:[%s1072] sm:$0xff] %v1070
    %s1074 = scalar_lea.vmem [#allocation0], 664
    %v1075 = vld [vmem:[%s1074] sm:$0xff]
    %s1076 = scalar_lea.vmem [#allocation2], 664
    %v1077 = vld [vmem:[%s1076] sm:$0xff]
    %1078 = xla_tuple %v1075, %v1077
    %1079 = xla_tuple %1078
    %v1080 = vmul.f32 %v1075, %v1077
    %1081 = xla_tuple %v1080
    %s1082 = scalar_lea.vmem %s2, 664
    %1083 = vst [vmem:[%s1082] sm:$0xff] %v1080
    %s1084 = scalar_lea.vmem [#allocation0], 680
    %v1085 = vld [vmem:[%s1084] sm:$0xff]
    %s1086 = scalar_lea.vmem [#allocation2], 680
    %v1087 = vld [vmem:[%s1086] sm:$0xff]
    %1088 = xla_tuple %v1085, %v1087
    %1089 = xla_tuple %1088
    %v1090 = vmul.f32 %v1085, %v1087
    %1091 = xla_tuple %v1090
    %s1092 = scalar_lea.vmem %s2, 680
    %1093 = vst [vmem:[%s1092] sm:$0xff] %v1090
    %s1094 = scalar_lea.vmem [#allocation0], 696
    %v1095 = vld [vmem:[%s1094] sm:$0xff]
    %s1096 = scalar_lea.vmem [#allocation2], 696
    %v1097 = vld [vmem:[%s1096] sm:$0xff]
    %1098 = xla_tuple %v1095, %v1097
    %1099 = xla_tuple %1098
    %v1100 = vmul.f32 %v1095, %v1097
    %1101 = xla_tuple %v1100
    %s1102 = scalar_lea.vmem %s2, 696
    %1103 = vst [vmem:[%s1102] sm:$0xff] %v1100
    %s1104 = scalar_lea.vmem [#allocation0], 712
    %v1105 = vld [vmem:[%s1104] sm:$0xff]
    %s1106 = scalar_lea.vmem [#allocation2], 712
    %v1107 = vld [vmem:[%s1106] sm:$0xff]
    %1108 = xla_tuple %v1105, %v1107
    %1109 = xla_tuple %1108
    %v1110 = vmul.f32 %v1105, %v1107
    %1111 = xla_tuple %v1110
    %s1112 = scalar_lea.vmem %s2, 712
    %1113 = vst [vmem:[%s1112] sm:$0xff] %v1110
    %s1114 = scalar_lea.vmem [#allocation0], 728
    %v1115 = vld [vmem:[%s1114] sm:$0xff]
    %s1116 = scalar_lea.vmem [#allocation2], 728
    %v1117 = vld [vmem:[%s1116] sm:$0xff]
    %1118 = xla_tuple %v1115, %v1117
    %1119 = xla_tuple %1118
    %v1120 = vmul.f32 %v1115, %v1117
    %1121 = xla_tuple %v1120
    %s1122 = scalar_lea.vmem %s2, 728
    %1123 = vst [vmem:[%s1122] sm:$0xff] %v1120
    %s1124 = scalar_lea.vmem [#allocation0], 744
    %v1125 = vld [vmem:[%s1124] sm:$0xff]
    %s1126 = scalar_lea.vmem [#allocation2], 744
    %v1127 = vld [vmem:[%s1126] sm:$0xff]
    %1128 = xla_tuple %v1125, %v1127
    %1129 = xla_tuple %1128
    %v1130 = vmul.f32 %v1125, %v1127
    %1131 = xla_tuple %v1130
    %s1132 = scalar_lea.vmem %s2, 744
    %1133 = vst [vmem:[%s1132] sm:$0xff] %v1130
    %s1134 = scalar_lea.vmem [#allocation0], 760
    %v1135 = vld [vmem:[%s1134] sm:$0xff]
    %s1136 = scalar_lea.vmem [#allocation2], 760
    %v1137 = vld [vmem:[%s1136] sm:$0xff]
    %1138 = xla_tuple %v1135, %v1137
    %1139 = xla_tuple %1138
    %v1140 = vmul.f32 %v1135, %v1137
    %1141 = xla_tuple %v1140
    %s1142 = scalar_lea.vmem %s2, 760
    %1143 = vst [vmem:[%s1142] sm:$0xff] %v1140
    %s1144 = scalar_lea.vmem [#allocation0], 776
    %v1145 = vld [vmem:[%s1144] sm:$0xff]
    %s1146 = scalar_lea.vmem [#allocation2], 776
    %v1147 = vld [vmem:[%s1146] sm:$0xff]
    %1148 = xla_tuple %v1145, %v1147
    %1149 = xla_tuple %1148
    %v1150 = vmul.f32 %v1145, %v1147
    %1151 = xla_tuple %v1150
    %s1152 = scalar_lea.vmem %s2, 776
    %1153 = vst [vmem:[%s1152] sm:$0xff] %v1150
    %s1154 = scalar_lea.vmem [#allocation0], 792
    %v1155 = vld [vmem:[%s1154] sm:$0xff]
    %s1156 = scalar_lea.vmem [#allocation2], 792
    %v1157 = vld [vmem:[%s1156] sm:$0xff]
    %1158 = xla_tuple %v1155, %v1157
    %1159 = xla_tuple %1158
    %v1160 = vmul.f32 %v1155, %v1157
    %1161 = xla_tuple %v1160
    %s1162 = scalar_lea.vmem %s2, 792
    %1163 = vst [vmem:[%s1162] sm:$0xff] %v1160
    %s1164 = scalar_lea.vmem [#allocation0], 808
    %v1165 = vld [vmem:[%s1164] sm:$0xff]
    %s1166 = scalar_lea.vmem [#allocation2], 808
    %v1167 = vld [vmem:[%s1166] sm:$0xff]
    %1168 = xla_tuple %v1165, %v1167
    %1169 = xla_tuple %1168
    %v1170 = vmul.f32 %v1165, %v1167
    %1171 = xla_tuple %v1170
    %s1172 = scalar_lea.vmem %s2, 808
    %1173 = vst [vmem:[%s1172] sm:$0xff] %v1170
    %s1174 = scalar_lea.vmem [#allocation0], 824
    %v1175 = vld [vmem:[%s1174] sm:$0xff]
    %s1176 = scalar_lea.vmem [#allocation2], 824
    %v1177 = vld [vmem:[%s1176] sm:$0xff]
    %1178 = xla_tuple %v1175, %v1177
    %1179 = xla_tuple %1178
    %v1180 = vmul.f32 %v1175, %v1177
    %1181 = xla_tuple %v1180
    %s1182 = scalar_lea.vmem %s2, 824
    %1183 = vst [vmem:[%s1182] sm:$0xff] %v1180
    %s1184 = scalar_lea.vmem [#allocation0], 840
    %v1185 = vld [vmem:[%s1184] sm:$0xff]
    %s1186 = scalar_lea.vmem [#allocation2], 840
    %v1187 = vld [vmem:[%s1186] sm:$0xff]
    %1188 = xla_tuple %v1185, %v1187
    %1189 = xla_tuple %1188
    %v1190 = vmul.f32 %v1185, %v1187
    %1191 = xla_tuple %v1190
    %s1192 = scalar_lea.vmem %s2, 840
    %1193 = vst [vmem:[%s1192] sm:$0xff] %v1190
    %s1194 = scalar_lea.vmem [#allocation0], 856
    %v1195 = vld [vmem:[%s1194] sm:$0xff]
    %s1196 = scalar_lea.vmem [#allocation2], 856
    %v1197 = vld [vmem:[%s1196] sm:$0xff]
    %1198 = xla_tuple %v1195, %v1197
    %1199 = xla_tuple %1198
    %v1200 = vmul.f32 %v1195, %v1197
    %1201 = xla_tuple %v1200
    %s1202 = scalar_lea.vmem %s2, 856
    %1203 = vst [vmem:[%s1202] sm:$0xff] %v1200
    %s1204 = scalar_lea.vmem [#allocation0], 872
    %v1205 = vld [vmem:[%s1204] sm:$0xff]
    %s1206 = scalar_lea.vmem [#allocation2], 872
    %v1207 = vld [vmem:[%s1206] sm:$0xff]
    %1208 = xla_tuple %v1205, %v1207
    %1209 = xla_tuple %1208
    %v1210 = vmul.f32 %v1205, %v1207
    %1211 = xla_tuple %v1210
    %s1212 = scalar_lea.vmem %s2, 872
    %1213 = vst [vmem:[%s1212] sm:$0xff] %v1210
    %s1214 = scalar_lea.vmem [#allocation0], 888
    %v1215 = vld [vmem:[%s1214] sm:$0xff]
    %s1216 = scalar_lea.vmem [#allocation2], 888
    %v1217 = vld [vmem:[%s1216] sm:$0xff]
    %1218 = xla_tuple %v1215, %v1217
    %1219 = xla_tuple %1218
    %v1220 = vmul.f32 %v1215, %v1217
    %1221 = xla_tuple %v1220
    %s1222 = scalar_lea.vmem %s2, 888
    %1223 = vst [vmem:[%s1222] sm:$0xff] %v1220
    %s1224 = scalar_lea.vmem [#allocation0], 904
    %v1225 = vld [vmem:[%s1224] sm:$0xff]
    %s1226 = scalar_lea.vmem [#allocation2], 904
    %v1227 = vld [vmem:[%s1226] sm:$0xff]
    %1228 = xla_tuple %v1225, %v1227
    %1229 = xla_tuple %1228
    %v1230 = vmul.f32 %v1225, %v1227
    %1231 = xla_tuple %v1230
    %s1232 = scalar_lea.vmem %s2, 904
    %1233 = vst [vmem:[%s1232] sm:$0xff] %v1230
    %s1234 = scalar_lea.vmem [#allocation0], 920
    %v1235 = vld [vmem:[%s1234] sm:$0xff]
    %s1236 = scalar_lea.vmem [#allocation2], 920
    %v1237 = vld [vmem:[%s1236] sm:$0xff]
    %1238 = xla_tuple %v1235, %v1237
    %1239 = xla_tuple %1238
    %v1240 = vmul.f32 %v1235, %v1237
    %1241 = xla_tuple %v1240
    %s1242 = scalar_lea.vmem %s2, 920
    %1243 = vst [vmem:[%s1242] sm:$0xff] %v1240
    %s1244 = scalar_lea.vmem [#allocation0], 936
    %v1245 = vld [vmem:[%s1244] sm:$0xff]
    %s1246 = scalar_lea.vmem [#allocation2], 936
    %v1247 = vld [vmem:[%s1246] sm:$0xff]
    %1248 = xla_tuple %v1245, %v1247
    %1249 = xla_tuple %1248
    %v1250 = vmul.f32 %v1245, %v1247
    %1251 = xla_tuple %v1250
    %s1252 = scalar_lea.vmem %s2, 936
    %1253 = vst [vmem:[%s1252] sm:$0xff] %v1250
    %s1254 = scalar_lea.vmem [#allocation0], 952
    %v1255 = vld [vmem:[%s1254] sm:$0xff]
    %s1256 = scalar_lea.vmem [#allocation2], 952
    %v1257 = vld [vmem:[%s1256] sm:$0xff]
    %1258 = xla_tuple %v1255, %v1257
    %1259 = xla_tuple %1258
    %v1260 = vmul.f32 %v1255, %v1257
    %1261 = xla_tuple %v1260
    %s1262 = scalar_lea.vmem %s2, 952
    %1263 = vst [vmem:[%s1262] sm:$0xff] %v1260
    %s1264 = scalar_lea.vmem [#allocation0], 968
    %v1265 = vld [vmem:[%s1264] sm:$0xff]
    %s1266 = scalar_lea.vmem [#allocation2], 968
    %v1267 = vld [vmem:[%s1266] sm:$0xff]
    %1268 = xla_tuple %v1265, %v1267
    %1269 = xla_tuple %1268
    %v1270 = vmul.f32 %v1265, %v1267
    %1271 = xla_tuple %v1270
    %s1272 = scalar_lea.vmem %s2, 968
    %1273 = vst [vmem:[%s1272] sm:$0xff] %v1270
    %s1274 = scalar_lea.vmem [#allocation0], 984
    %v1275 = vld [vmem:[%s1274] sm:$0xff]
    %s1276 = scalar_lea.vmem [#allocation2], 984
    %v1277 = vld [vmem:[%s1276] sm:$0xff]
    %1278 = xla_tuple %v1275, %v1277
    %1279 = xla_tuple %1278
    %v1280 = vmul.f32 %v1275, %v1277
    %1281 = xla_tuple %v1280
    %s1282 = scalar_lea.vmem %s2, 984
    %1283 = vst [vmem:[%s1282] sm:$0xff] %v1280
    %s1284 = scalar_lea.vmem [#allocation0], 1000
    %v1285 = vld [vmem:[%s1284] sm:$0xff]
    %s1286 = scalar_lea.vmem [#allocation2], 1000
    %v1287 = vld [vmem:[%s1286] sm:$0xff]
    %1288 = xla_tuple %v1285, %v1287
    %1289 = xla_tuple %1288
    %v1290 = vmul.f32 %v1285, %v1287
    %1291 = xla_tuple %v1290
    %s1292 = scalar_lea.vmem %s2, 1000
    %1293 = vst [vmem:[%s1292] sm:$0xff] %v1290
    %s1294 = scalar_lea.vmem [#allocation0], 1016
    %v1295 = vld [vmem:[%s1294] sm:$0xff]
    %s1296 = scalar_lea.vmem [#allocation2], 1016
    %v1297 = vld [vmem:[%s1296] sm:$0xff]
    %1298 = xla_tuple %v1295, %v1297
    %1299 = xla_tuple %1298
    %v1300 = vmul.f32 %v1295, %v1297
    %1301 = xla_tuple %v1300
    %s1302 = scalar_lea.vmem %s2, 1016
    %1303 = vst [vmem:[%s1302] sm:$0xff] %v1300
    %1304 = vsyncpa [#allocation1], 1
    %1305 = vsyncpa [#allocation3], 1

// kernel: ginn_autoencoder_global_forward.1
$region0: #{ginn_autoencoder_global_forward.1}
  #allocation0 [shape = 'u32[]', space=smem, size = 0x4, offset = 0x4, fixed_abs, tag = 'smem constant byte address 0x4 - core index']
  #allocation1 [shape = 'u32[144,128]{1,0:T(1,128)}', space=vmem, size = 0x12000, scoped, tag = 'internal scratch']
  #allocation2 [shape = 'bf16[512,32]{1,0:T(16,128)(2,1)}', space=vmem, size = 0x20000, scoped, tag = 'scratch operand']
  #allocation3 [shape = 'bf16[512,16]{1,0:T(16,128)(2,1)}', space=vmem, size = 0x20000, scoped, tag = 'scratch operand']
  #allocation4 [shape = 'bf16[512,32]{1,0:T(16,128)(2,1)}', space=vmem, size = 0x20000, scoped, tag = 'scratch operand']
  #allocation5 [shape = 'bf16[512,16]{1,0:T(16,128)(2,1)}', space=vmem, size = 0x20000, scoped, tag = 'scratch operand']
  #allocation6 [shape = 'f32[512,16]{1,0:T(8,128)}', space=vmem, size = 0x40000, scoped, tag = 'scratch operand']
  %s0 = inlined_call_operand.vmem [shape: f32[4096,16], index: 0, kind: input, shape index: {}]
  %s1 = inlined_call_operand.vmem [shape: f32[4096,16], index: 1, kind: input, shape index: {}]
  %s2 = inlined_call_operand.vmem [shape: f32[64,64,64], index: 2, kind: input, shape index: {}]
  %s3 = inlined_call_operand.vmem [shape: f32[64,64,64], index: 3, kind: input, shape index: {}]
  %s4 = inlined_call_operand.vmem [shape: f32[4096,2], index: 4, kind: input, shape index: {}]
  %s5 = inlined_call_operand.vmem [shape: f32[16,48], index: 5, kind: input, shape index: {}]
  %s6 = inlined_call_operand.vmem [shape: f32[48,16], index: 6, kind: input, shape index: {}]
  %s7 = inlined_call_operand.vmem [shape: f32[2,48], index: 7, kind: input, shape index: {}]
  %s8 = inlined_call_operand.vmem [shape: f32[4096,16], index: 8, kind: output, shape index: {}]
  %s9 = sld [smem:[#allocation0]]
  $region65: #{ginn_autoencoder_global_forward.1} parent=0
    _
  %s11 = ssub.s32 1, %s9
  %s12 = scalar_select 0, %s11, %s9
  loop: start=0, step=1, limit=10
  $region2: #{ginn_autoencoder_global_forward.1} parent=0 // loop_pre_header
    _
  $region3: #{ginn_autoencoder_global_forward.1} parent=0 // loop_header
    %s14 = sphi 0, %s18
    %p15 = scmp.ge.s32.totalorder %s14, 10
    %s24 = sphi 0, %s26
    %s27 = sphi 0, %s24
    %s28 = sphi 0, %s27
    %s44 = sphi 0, %s28
    %s50 = sphi 0, %s52
    %s53 = sphi 0, %s50
    %s54 = sphi 0, %s53
    %s70 = sphi 0, %s54
    %s76 = sphi 0, %s78
    %s79 = sphi 0, %s76
    %s80 = sphi 0, %s79
    %s96 = sphi 0, %s80
    %s102 = sphi 0, %s104
    %s105 = sphi 0, %s102
    %s106 = sphi 0, %s105
    %s122 = sphi 0, %s106
    %s128 = sphi 0, %s130
    %s131 = sphi 0, %s128
    %s132 = sphi 0, %s131
    %s148 = sphi 0, %s132
    %s152 = sphi 0, %s152
    %s154 = sphi 0, %s152
    %s155 = sphi 0, %s154
    %s169 = sphi 0, %s155
    %s173 = sphi 0, %s173
    %s175 = sphi 0, %s173
    %s176 = sphi 0, %s175
    %s190 = sphi 0, %s176
    %s194 = sphi 0, %s194
    %s196 = sphi 0, %s194
    %s197 = sphi 0, %s196
    %s211 = sphi 0, %s197
    %s217 = sphi 0, %s219
    %s220 = sphi 0, %s217
    %s221 = sphi 0, %s220
    %s237 = sphi 0, %s221
  $region4: #{ginn_autoencoder_global_forward.1} parent=0 // loop_header_branch
    %17 = sbr.rel (%p15) target = $region8
  $region5: #{ginn_autoencoder_global_forward.1} parent=0 // loop_body
    %s19 = ssub.s32 %s14, 1
    %s20 = ssub.s32 %s14, 2
    %s21 = sadd.s32 %s14, 1
    %s22 = ssub.s32 %s14, %s21
    %p23 = scmp.eq.s32.totalorder %s22, 0
    %s25 = sadd.s32 %s24, 1
    %s26 = scalar_select %p23, %s24, %s25
    %p29 = pneg %p23
    %p30 = scmp.eq.s32.totalorder %s14, 7
    %p31 = por %p29, %p30
    %p32 = scmp.ne.s32.totalorder %s24, %s27
    %p33 = scmp.eq.s32.totalorder %s14, 0
    %p34 = por %p32, %p33
    %p35 = scmp.ne.s32.totalorder %s24, %s27
    %p36 = scmp.eq.s32.totalorder %s19, 7
    %p37 = por %p35, %p36
    %p38 = scmp.ne.s32.totalorder %s27, %s28
    %p39 = scmp.eq.s32.totalorder %s19, 0
    %p40 = por %p38, %p39
    %p41 = scmp.ne.s32.totalorder %s27, %s28
    %p42 = scmp.eq.s32.totalorder %s20, 7
    %p43 = por %p41, %p42
    %p45 = scmp.ne.s32.totalorder %s28, %s44
    %p46 = scmp.eq.s32.totalorder %s20, 0
    %p47 = por %p45, %p46
    %s48 = ssub.s32 %s14, %s21
    %p49 = scmp.eq.s32.totalorder %s48, 0
    %s51 = sadd.s32 %s50, 1
    %s52 = scalar_select %p49, %s50, %s51
    %p55 = pneg %p49
    %p56 = scmp.eq.s32.totalorder %s14, 7
    %p57 = por %p55, %p56
    %p58 = scmp.ne.s32.totalorder %s50, %s53
    %p59 = scmp.eq.s32.totalorder %s14, 0
    %p60 = por %p58, %p59
    %p61 = scmp.ne.s32.totalorder %s50, %s53
    %p62 = scmp.eq.s32.totalorder %s19, 7
    %p63 = por %p61, %p62
    %p64 = scmp.ne.s32.totalorder %s53, %s54
    %p65 = scmp.eq.s32.totalorder %s19, 0
    %p66 = por %p64, %p65
    %p67 = scmp.ne.s32.totalorder %s53, %s54
    %p68 = scmp.eq.s32.totalorder %s20, 7
    %p69 = por %p67, %p68
    %p71 = scmp.ne.s32.totalorder %s54, %s70
    %p72 = scmp.eq.s32.totalorder %s20, 0
    %p73 = por %p71, %p72
    %s74 = ssub.s32 %s14, %s21
    %p75 = scmp.eq.s32.totalorder %s74, 0
    %s77 = sadd.s32 %s76, 1
    %s78 = scalar_select %p75, %s76, %s77
    %p81 = pneg %p75
    %p82 = scmp.eq.s32.totalorder %s14, 7
    %p83 = por %p81, %p82
    %p84 = scmp.ne.s32.totalorder %s76, %s79
    %p85 = scmp.eq.s32.totalorder %s14, 0
    %p86 = por %p84, %p85
    %p87 = scmp.ne.s32.totalorder %s76, %s79
    %p88 = scmp.eq.s32.totalorder %s19, 7
    %p89 = por %p87, %p88
    %p90 = scmp.ne.s32.totalorder %s79, %s80
    %p91 = scmp.eq.s32.totalorder %s19, 0
    %p92 = por %p90, %p91
    %p93 = scmp.ne.s32.totalorder %s79, %s80
    %p94 = scmp.eq.s32.totalorder %s20, 7
    %p95 = por %p93, %p94
    %p97 = scmp.ne.s32.totalorder %s80, %s96
    %p98 = scmp.eq.s32.totalorder %s20, 0
    %p99 = por %p97, %p98
    %s100 = ssub.s32 %s14, %s21
    %p101 = scmp.eq.s32.totalorder %s100, 0
    %s103 = sadd.s32 %s102, 1
    %s104 = scalar_select %p101, %s102, %s103
    %p107 = pneg %p101
    %p108 = scmp.eq.s32.totalorder %s14, 7
    %p109 = por %p107, %p108
    %p110 = scmp.ne.s32.totalorder %s102, %s105
    %p111 = scmp.eq.s32.totalorder %s14, 0
    %p112 = por %p110, %p111
    %p113 = scmp.ne.s32.totalorder %s102, %s105
    %p114 = scmp.eq.s32.totalorder %s19, 7
    %p115 = por %p113, %p114
    %p116 = scmp.ne.s32.totalorder %s105, %s106
    %p117 = scmp.eq.s32.totalorder %s19, 0
    %p118 = por %p116, %p117
    %p119 = scmp.ne.s32.totalorder %s105, %s106
    %p120 = scmp.eq.s32.totalorder %s20, 7
    %p121 = por %p119, %p120
    %p123 = scmp.ne.s32.totalorder %s106, %s122
    %p124 = scmp.eq.s32.totalorder %s20, 0
    %p125 = por %p123, %p124
    %s126 = ssub.s32 %s14, %s21
    %p127 = scmp.eq.s32.totalorder %s126, 0
    %s129 = sadd.s32 %s128, 1
    %s130 = scalar_select %p127, %s128, %s129
    %p133 = pneg %p127
    %p134 = scmp.eq.s32.totalorder %s14, 7
    %p135 = por %p133, %p134
    %p136 = scmp.ne.s32.totalorder %s128, %s131
    %p137 = scmp.eq.s32.totalorder %s14, 0
    %p138 = por %p136, %p137
    %p139 = scmp.ne.s32.totalorder %s128, %s131
    %p140 = scmp.eq.s32.totalorder %s19, 7
    %p141 = por %p139, %p140
    %p142 = scmp.ne.s32.totalorder %s131, %s132
    %p143 = scmp.eq.s32.totalorder %s19, 0
    %p144 = por %p142, %p143
    %p145 = scmp.ne.s32.totalorder %s131, %s132
    %p146 = scmp.eq.s32.totalorder %s20, 7
    %p147 = por %p145, %p146
    %p149 = scmp.ne.s32.totalorder %s132, %s148
    %p150 = scmp.eq.s32.totalorder %s20, 0
    %p151 = por %p149, %p150
    %s153 = sadd.s32 %s152, 1
    %p156 = scmp.eq.s32.totalorder %s14, 7
    %p157 = scmp.ne.s32.totalorder %s152, %s154
    %p158 = scmp.eq.s32.totalorder %s14, 0
    %p159 = por %p157, %p158
    %p160 = scmp.ne.s32.totalorder %s152, %s154
    %p161 = scmp.eq.s32.totalorder %s19, 7
    %p162 = por %p160, %p161
    %p163 = scmp.ne.s32.totalorder %s154, %s155
    %p164 = scmp.eq.s32.totalorder %s19, 0
    %p165 = por %p163, %p164
    %p166 = scmp.ne.s32.totalorder %s154, %s155
    %p167 = scmp.eq.s32.totalorder %s20, 7
    %p168 = por %p166, %p167
    %p170 = scmp.ne.s32.totalorder %s155, %s169
    %p171 = scmp.eq.s32.totalorder %s20, 0
    %p172 = por %p170, %p171
    %s174 = sadd.s32 %s173, 1
    %p177 = scmp.eq.s32.totalorder %s14, 7
    %p178 = scmp.ne.s32.totalorder %s173, %s175
    %p179 = scmp.eq.s32.totalorder %s14, 0
    %p180 = por %p178, %p179
    %p181 = scmp.ne.s32.totalorder %s173, %s175
    %p182 = scmp.eq.s32.totalorder %s19, 7
    %p183 = por %p181, %p182
    %p184 = scmp.ne.s32.totalorder %s175, %s176
    %p185 = scmp.eq.s32.totalorder %s19, 0
    %p186 = por %p184, %p185
    %p187 = scmp.ne.s32.totalorder %s175, %s176
    %p188 = scmp.eq.s32.totalorder %s20, 7
    %p189 = por %p187, %p188
    %p191 = scmp.ne.s32.totalorder %s176, %s190
    %p192 = scmp.eq.s32.totalorder %s20, 0
    %p193 = por %p191, %p192
    %s195 = sadd.s32 %s194, 1
    %p198 = scmp.eq.s32.totalorder %s14, 7
    %p199 = scmp.ne.s32.totalorder %s194, %s196
    %p200 = scmp.eq.s32.totalorder %s14, 0
    %p201 = por %p199, %p200
    %p202 = scmp.ne.s32.totalorder %s194, %s196
    %p203 = scmp.eq.s32.totalorder %s19, 7
    %p204 = por %p202, %p203
    %p205 = scmp.ne.s32.totalorder %s196, %s197
    %p206 = scmp.eq.s32.totalorder %s19, 0
    %p207 = por %p205, %p206
    %p208 = scmp.ne.s32.totalorder %s196, %s197
    %p209 = scmp.eq.s32.totalorder %s20, 7
    %p210 = por %p208, %p209
    %p212 = scmp.ne.s32.totalorder %s197, %s211
    %p213 = scmp.eq.s32.totalorder %s20, 0
    %p214 = por %p212, %p213
    %s215 = ssub.s32 %s14, %s21
    %p216 = scmp.eq.s32.totalorder %s215, 0
    %s218 = sadd.s32 %s217, 1
    %s219 = scalar_select %p216, %s217, %s218
    %p222 = pneg %p216
    %p223 = scmp.eq.s32.totalorder %s14, 7
    %p224 = por %p222, %p223
    %p225 = scmp.ne.s32.totalorder %s217, %s220
    %p226 = scmp.eq.s32.totalorder %s14, 0
    %p227 = por %p225, %p226
    %p228 = scmp.ne.s32.totalorder %s217, %s220
    %p229 = scmp.eq.s32.totalorder %s19, 7
    %p230 = por %p228, %p229
    %p231 = scmp.ne.s32.totalorder %s220, %s221
    %p232 = scmp.eq.s32.totalorder %s19, 0
    %p233 = por %p231, %p232
    %p234 = scmp.ne.s32.totalorder %s220, %s221
    %p235 = scmp.eq.s32.totalorder %s20, 7
    %p236 = por %p234, %p235
    %p238 = scmp.ne.s32.totalorder %s221, %s237
    %p239 = scmp.eq.s32.totalorder %s20, 0
    %p240 = por %p238, %p239
    %p241 = scmp.le.s32.totalorder 1, %s14
    %p242 = scmp.lt.s32.totalorder %s14, 9
    %p243 = pnand %p241, %p242
    %p244 = pneg %p243
    // Predicated region
    $region9: #{ginn_autoencoder_global_forward.1} parent=5 // pred_check
      _
    $region10: #{ginn_autoencoder_global_forward.1} parent=5 // pred_check_branch
      %246 = sbr.rel (%p243) target = $region12
    $region11: #{ginn_autoencoder_global_forward.1} parent=5 // pred_region
      %s247 = ssub.s32 %s14, 1
      // Predicated region
      $region13: #{ginn_autoencoder_global_forward.1} parent=11 // pred_check
        %p248 = pneg %p165
      $region14: #{ginn_autoencoder_global_forward.1} parent=11 // pred_check_branch
        %250 = sbr.rel (%p248) target = $region16
      $region15: #{ginn_autoencoder_global_forward.1} parent=11 // pred_region
        _
      $region16: #{ginn_autoencoder_global_forward.1} parent=11 // pred_fallthru
        _
      // Predicated region
      $region17: #{ginn_autoencoder_global_forward.1} parent=11 // pred_check
        %p251 = pneg %p186
      $region18: #{ginn_autoencoder_global_forward.1} parent=11 // pred_check_branch
        %253 = sbr.rel (%p251) target = $region20
      $region19: #{ginn_autoencoder_global_forward.1} parent=11 // pred_region
        _
      $region20: #{ginn_autoencoder_global_forward.1} parent=11 // pred_fallthru
        _
      // Predicated region
      $region21: #{ginn_autoencoder_global_forward.1} parent=11 // pred_check
        %p254 = pneg %p207
      $region22: #{ginn_autoencoder_global_forward.1} parent=11 // pred_check_branch
        %256 = sbr.rel (%p254) target = $region24
      $region23: #{ginn_autoencoder_global_forward.1} parent=11 // pred_region
        _
      $region24: #{ginn_autoencoder_global_forward.1} parent=11 // pred_fallthru
        _
    $region12: #{ginn_autoencoder_global_forward.1} parent=5 // pred_fallthru
      _
    %p257 = scmp.lt.s32.totalorder %s14, 8
    // Predicated region
    $region25: #{ginn_autoencoder_global_forward.1} parent=5 // pred_check
      %p258 = pneg %p257
    $region26: #{ginn_autoencoder_global_forward.1} parent=5 // pred_check_branch
      %260 = sbr.rel (%p258) target = $region28
    $region27: #{ginn_autoencoder_global_forward.1} parent=5 // pred_region
      // Predicated region
      $region29: #{ginn_autoencoder_global_forward.1} parent=27 // pred_check
        %p261 = pneg %p34
      $region30: #{ginn_autoencoder_global_forward.1} parent=27 // pred_check_branch
        %263 = sbr.rel (%p261) target = $region32
      $region31: #{ginn_autoencoder_global_forward.1} parent=27 // pred_region
        %s264 = smul.u32 64, %s14
        %p265 = scmp.lt.s32.totalorder %s264, 511
        %s266 = scalar_select %p265, %s264, 511
        %s267 = smul.addr %s266, 8
        %s268 = scalar_lea.vmem %s0, %s267
        %s269 = smul.u32 64, %s14
      $region32: #{ginn_autoencoder_global_forward.1} parent=27 // pred_fallthru
        _
      // Predicated region
      $region33: #{ginn_autoencoder_global_forward.1} parent=27 // pred_check
        %p270 = pneg %p60
      $region34: #{ginn_autoencoder_global_forward.1} parent=27 // pred_check_branch
        %272 = sbr.rel (%p270) target = $region36
      $region35: #{ginn_autoencoder_global_forward.1} parent=27 // pred_region
        %s273 = smul.u32 64, %s14
        %p274 = scmp.lt.s32.totalorder %s273, 511
        %s275 = scalar_select %p274, %s273, 511
        %s276 = smul.addr %s275, 8
        %s277 = scalar_lea.vmem %s1, %s276
        %s278 = smul.u32 64, %s14
      $region36: #{ginn_autoencoder_global_forward.1} parent=27 // pred_fallthru
        _
      // Predicated region
      $region37: #{ginn_autoencoder_global_forward.1} parent=27 // pred_check
        %p279 = pneg %p86
      $region38: #{ginn_autoencoder_global_forward.1} parent=27 // pred_check_branch
        %281 = sbr.rel (%p279) target = $region40
      $region39: #{ginn_autoencoder_global_forward.1} parent=27 // pred_region
        %s282 = smul.u32 8, %s14
        %p283 = scmp.lt.s32.totalorder %s282, 63
        %s284 = scalar_select %p283, %s282, 63
        %s285 = smul.addr %s284, 8
        %s286 = smul.addr %s285, 8
        %s287 = scalar_lea.vmem %s2, %s286
        %s288 = smul.u32 8, %s14
      $region40: #{ginn_autoencoder_global_forward.1} parent=27 // pred_fallthru
        _
      // Predicated region
      $region41: #{ginn_autoencoder_global_forward.1} parent=27 // pred_check
        %p289 = pneg %p112
      $region42: #{ginn_autoencoder_global_forward.1} parent=27 // pred_check_branch
        %291 = sbr.rel (%p289) target = $region44
      $region43: #{ginn_autoencoder_global_forward.1} parent=27 // pred_region
        %s292 = smul.u32 8, %s14
        %p293 = scmp.lt.s32.totalorder %s292, 63
        %s294 = scalar_select %p293, %s292, 63
        %s295 = smul.addr %s294, 8
        %s296 = smul.addr %s295, 8
        %s297 = scalar_lea.vmem %s3, %s296
        %s298 = smul.u32 8, %s14
      $region44: #{ginn_autoencoder_global_forward.1} parent=27 // pred_fallthru
        _
      // Predicated region
      $region45: #{ginn_autoencoder_global_forward.1} parent=27 // pred_check
        %p299 = pneg %p138
      $region46: #{ginn_autoencoder_global_forward.1} parent=27 // pred_check_branch
        %301 = sbr.rel (%p299) target = $region48
      $region47: #{ginn_autoencoder_global_forward.1} parent=27 // pred_region
        %s302 = smul.u32 64, %s14
        %p303 = scmp.lt.s32.totalorder %s302, 511
        %s304 = scalar_select %p303, %s302, 511
        %s305 = smul.addr %s304, 8
        %s306 = scalar_lea.vmem %s4, %s305
        %s307 = smul.u32 64, %s14
      $region48: #{ginn_autoencoder_global_forward.1} parent=27 // pred_fallthru
        _
    $region28: #{ginn_autoencoder_global_forward.1} parent=5 // pred_fallthru
      _
    %p308 = scmp.le.s32.totalorder 1, %s14
    %p309 = scmp.lt.s32.totalorder %s14, 9
    %p310 = pnand %p308, %p309
    %p311 = pneg %p310
    // Predicated region
    $region49: #{ginn_autoencoder_global_forward.1} parent=5 // pred_check
      _
    $region50: #{ginn_autoencoder_global_forward.1} parent=5 // pred_check_branch
      %313 = sbr.rel (%p310) target = $region52
    $region51: #{ginn_autoencoder_global_forward.1} parent=5 // pred_region
      %s314 = ssub.s32 %s14, 1
      %s315 = smul.u32 64, %s19
      %p316 = scmp.lt.s32.totalorder %s315, 511
      %s317 = scalar_select %p316, %s315, 511
      %s318 = smul.addr %s317, 8
      %s319 = scalar_lea.vmem %s0, %s318
      %p320 = pneg %p40
      %p321 = pneg %p37
      %s322 = smul.u32 64, %s19
      %p323 = scmp.lt.s32.totalorder %s322, 511
      %s324 = scalar_select %p323, %s322, 511
      %s325 = smul.addr %s324, 8
      %s326 = scalar_lea.vmem %s1, %s325
      %p327 = pneg %p66
      %p328 = pneg %p63
      %s329 = smul.u32 8, %s19
      %p330 = scmp.lt.s32.totalorder %s329, 63
      %s331 = scalar_select %p330, %s329, 63
      %s332 = smul.addr %s331, 8
      %s333 = smul.addr %s332, 8
      %s334 = scalar_lea.vmem %s2, %s333
      %p335 = pneg %p92
      %p336 = pneg %p89
      %s337 = smul.u32 8, %s19
      %p338 = scmp.lt.s32.totalorder %s337, 63
      %s339 = scalar_select %p338, %s337, 63
      %s340 = smul.addr %s339, 8
      %s341 = smul.addr %s340, 8
      %s342 = scalar_lea.vmem %s3, %s341
      %p343 = pneg %p118
      %p344 = pneg %p115
      %s345 = smul.u32 64, %s19
      %p346 = scmp.lt.s32.totalorder %s345, 511
      %s347 = scalar_select %p346, %s345, 511
      %s348 = smul.addr %s347, 8
      %s349 = scalar_lea.vmem %s4, %s348
      %p350 = pneg %p144
      %p351 = pneg %p141
      %p352 = pneg %p165
      %p353 = pneg %p162
      %p354 = pneg %p186
      %p355 = pneg %p183
      %p356 = pneg %p207
      %p357 = pneg %p204
      %p358 = pneg %p233
      %p359 = pneg %p230
      %s360 = smul.u32 64, %s19
      %p361 = scmp.lt.s32.totalorder %s360, 511
      %s362 = scalar_select %p361, %s360, 511
      %s363 = smul.addr %s362, 8
      %s364 = scalar_lea.vmem %s8, %s363
      %s365 = smul.u32 64, %s19
      %p366 = scmp.lt.s32.totalorder %s365, 511
      %s367 = scalar_select %p366, %s365, 511
      %s368 = smul.addr %s367, 8
      %s369 = scalar_lea.vmem %s0, %s368
      %s370 = smul.u32 64, %s19
      %s371 = smul.u32 64, %s19
      %p372 = scmp.lt.s32.totalorder %s371, 511
      %s373 = scalar_select %p372, %s371, 511
      %s374 = smul.addr %s373, 8
      %s375 = scalar_lea.vmem %s1, %s374
      %s376 = smul.u32 64, %s19
      %s377 = smul.u32 8, %s19
      %p378 = scmp.lt.s32.totalorder %s377, 63
      %s379 = scalar_select %p378, %s377, 63
      %s380 = smul.addr %s379, 8
      %s381 = smul.addr %s380, 8
      %s382 = scalar_lea.vmem %s2, %s381
      %s383 = smul.u32 8, %s19
      %s384 = smul.u32 8, %s19
      %p385 = scmp.lt.s32.totalorder %s384, 63
      %s386 = scalar_select %p385, %s384, 63
      %s387 = smul.addr %s386, 8
      %s388 = smul.addr %s387, 8
      %s389 = scalar_lea.vmem %s3, %s388
      %s390 = smul.u32 8, %s19
      %s391 = smul.u32 64, %s19
      %p392 = scmp.lt.s32.totalorder %s391, 511
      %s393 = scalar_select %p392, %s391, 511
      %s394 = smul.addr %s393, 8
      %s395 = scalar_lea.vmem %s4, %s394
      %s396 = smul.u32 64, %s19
      %s397 = smul.u32 64, %s19
      %p398 = scmp.lt.s32.totalorder %s397, 511
      %s399 = scalar_select %p398, %s397, 511
      %s400 = smul.addr %s399, 8
      %s401 = scalar_lea.vmem %s8, %s400
      %s402 = smul.u32 64, %s19
      %v404 = vld [vmem:[%s5] sm:$0xff]
      %v405 = vld [vmem:[%s5 + $0x8] sm:$0xff]
      %v406 = vpack.c.bf16 %v405, %v404
      %v407 = vld [vmem:[%s6] sm:$0xff]
      %v408 = vld [vmem:[%s6 + $0x8] sm:$0xff]
      %v409 = vld [vmem:[%s6 + $0x10] sm:$0xff]
      %v410 = vld [vmem:[%s6 + $0x18] sm:$0xff]
      %v411 = vpack.c.bf16 %v408, %v407
      %v412 = vpack.c.bf16 %v410, %v409
      %v413 = vld [vmem:[%s6 + $0x20] sm:$0xff]
      %v414 = vld [vmem:[%s6 + $0x28] sm:$0xff]
      %v415 = vpack.c.bf16 %v414, %v413
      %v416 = vld [vmem:[%s7] sm:$0x1]
      %v417 = vld [vmem:[%s7 + $0x1] sm:$0x1]
      %v418 = vld [vmem:[%s395] sm:$0xff]
      %v419 = vld [vmem:[%s395 + $0x8] sm:$0xff]
      %v420 = vld [vmem:[%s395 + $0x10] sm:$0xff]
      %v421 = vld [vmem:[%s395 + $0x18] sm:$0xff]
      %v422 = vld [vmem:[%s395 + $0x20] sm:$0xff]
      %v423 = vld [vmem:[%s395 + $0x28] sm:$0xff]
      %v424 = vld [vmem:[%s395 + $0x30] sm:$0xff]
      %v425 = vld [vmem:[%s395 + $0x38] sm:$0xff]
      %v426 = vld [vmem:[%s395 + $0x40] sm:$0xff]
      %v427 = vld [vmem:[%s395 + $0x48] sm:$0xff]
      %v428 = vld [vmem:[%s395 + $0x50] sm:$0xff]
      %v429 = vld [vmem:[%s395 + $0x58] sm:$0xff]
      %v430 = vld [vmem:[%s395 + $0x60] sm:$0xff]
      %v431 = vld [vmem:[%s395 + $0x68] sm:$0xff]
      %v432 = vld [vmem:[%s395 + $0x70] sm:$0xff]
      %v433 = vld [vmem:[%s395 + $0x78] sm:$0xff]
      %v434 = vld [vmem:[%s395 + $0x80] sm:$0xff]
      %v435 = vld [vmem:[%s395 + $0x88] sm:$0xff]
      %v436 = vld [vmem:[%s395 + $0x90] sm:$0xff]
      %v437 = vld [vmem:[%s395 + $0x98] sm:$0xff]
      %v438 = vld [vmem:[%s395 + $0xa0] sm:$0xff]
      %v439 = vld [vmem:[%s395 + $0xa8] sm:$0xff]
      %v440 = vld [vmem:[%s395 + $0xb0] sm:$0xff]
      %v441 = vld [vmem:[%s395 + $0xb8] sm:$0xff]
      %v442 = vld [vmem:[%s395 + $0xc0] sm:$0xff]
      %v443 = vld [vmem:[%s395 + $0xc8] sm:$0xff]
      %v444 = vld [vmem:[%s395 + $0xd0] sm:$0xff]
      %v445 = vld [vmem:[%s395 + $0xd8] sm:$0xff]
      %v446 = vld [vmem:[%s395 + $0xe0] sm:$0xff]
      %v447 = vld [vmem:[%s395 + $0xe8] sm:$0xff]
      %v448 = vld [vmem:[%s395 + $0xf0] sm:$0xff]
      %v449 = vld [vmem:[%s395 + $0xf8] sm:$0xff]
      %v450 = vld [vmem:[%s395 + $0x100] sm:$0xff]
      %v451 = vld [vmem:[%s395 + $0x108] sm:$0xff]
      %v452 = vld [vmem:[%s395 + $0x110] sm:$0xff]
      %v453 = vld [vmem:[%s395 + $0x118] sm:$0xff]
      %v454 = vld [vmem:[%s395 + $0x120] sm:$0xff]
      %v455 = vld [vmem:[%s395 + $0x128] sm:$0xff]
      %v456 = vld [vmem:[%s395 + $0x130] sm:$0xff]
      %v457 = vld [vmem:[%s395 + $0x138] sm:$0xff]
      %v458 = vld [vmem:[%s395 + $0x140] sm:$0xff]
      %v459 = vld [vmem:[%s395 + $0x148] sm:$0xff]
      %v460 = vld [vmem:[%s395 + $0x150] sm:$0xff]
      %v461 = vld [vmem:[%s395 + $0x158] sm:$0xff]
      %v462 = vld [vmem:[%s395 + $0x160] sm:$0xff]
      %v463 = vld [vmem:[%s395 + $0x168] sm:$0xff]
      %v464 = vld [vmem:[%s395 + $0x170] sm:$0xff]
      %v465 = vld [vmem:[%s395 + $0x178] sm:$0xff]
      %v466 = vld [vmem:[%s395 + $0x180] sm:$0xff]
      %v467 = vld [vmem:[%s395 + $0x188] sm:$0xff]
      %v468 = vld [vmem:[%s395 + $0x190] sm:$0xff]
      %v469 = vld [vmem:[%s395 + $0x198] sm:$0xff]
      %v470 = vld [vmem:[%s395 + $0x1a0] sm:$0xff]
      %v471 = vld [vmem:[%s395 + $0x1a8] sm:$0xff]
      %v472 = vld [vmem:[%s395 + $0x1b0] sm:$0xff]
      %v473 = vld [vmem:[%s395 + $0x1b8] sm:$0xff]
      %v474 = vld [vmem:[%s395 + $0x1c0] sm:$0xff]
      %v475 = vld [vmem:[%s395 + $0x1c8] sm:$0xff]
      %v476 = vld [vmem:[%s395 + $0x1d0] sm:$0xff]
      %v477 = vld [vmem:[%s395 + $0x1d8] sm:$0xff]
      %v478 = vld [vmem:[%s395 + $0x1e0] sm:$0xff]
      %v479 = vld [vmem:[%s395 + $0x1e8] sm:$0xff]
      %v480 = vld [vmem:[%s395 + $0x1f0] sm:$0xff]
      %v481 = vld [vmem:[%s395 + $0x1f8] sm:$0xff]
      %v482 = vld [vmem:[%s369] sm:$0xff]
      %v483 = vld [vmem:[%s369 + $0x8] sm:$0xff]
      %v484 = vld [vmem:[%s369 + $0x10] sm:$0xff]
      %v485 = vld [vmem:[%s369 + $0x18] sm:$0xff]
      %v486 = vld [vmem:[%s369 + $0x20] sm:$0xff]
      %v487 = vld [vmem:[%s369 + $0x28] sm:$0xff]
      %v488 = vld [vmem:[%s369 + $0x30] sm:$0xff]
      %v489 = vld [vmem:[%s369 + $0x38] sm:$0xff]
      %v490 = vld [vmem:[%s369 + $0x40] sm:$0xff]
      %v491 = vld [vmem:[%s369 + $0x48] sm:$0xff]
      %v492 = vld [vmem:[%s369 + $0x50] sm:$0xff]
      %v493 = vld [vmem:[%s369 + $0x58] sm:$0xff]
      %v494 = vld [vmem:[%s369 + $0x60] sm:$0xff]
      %v495 = vld [vmem:[%s369 + $0x68] sm:$0xff]
      %v496 = vld [vmem:[%s369 + $0x70] sm:$0xff]
      %v497 = vld [vmem:[%s369 + $0x78] sm:$0xff]
      %v498 = vld [vmem:[%s369 + $0x80] sm:$0xff]
      %v499 = vld [vmem:[%s369 + $0x88] sm:$0xff]
      %v500 = vld [vmem:[%s369 + $0x90] sm:$0xff]
      %v501 = vld [vmem:[%s369 + $0x98] sm:$0xff]
      %v502 = vld [vmem:[%s369 + $0xa0] sm:$0xff]
      %v503 = vld [vmem:[%s369 + $0xa8] sm:$0xff]
      %v504 = vld [vmem:[%s369 + $0xb0] sm:$0xff]
      %v505 = vld [vmem:[%s369 + $0xb8] sm:$0xff]
      %v506 = vld [vmem:[%s369 + $0xc0] sm:$0xff]
      %v507 = vld [vmem:[%s369 + $0xc8] sm:$0xff]
      %v508 = vld [vmem:[%s369 + $0xd0] sm:$0xff]
      %v509 = vld [vmem:[%s369 + $0xd8] sm:$0xff]
      %v510 = vld [vmem:[%s369 + $0xe0] sm:$0xff]
      %v511 = vld [vmem:[%s369 + $0xe8] sm:$0xff]
      %v512 = vld [vmem:[%s369 + $0xf0] sm:$0xff]
      %v513 = vld [vmem:[%s369 + $0xf8] sm:$0xff]
      %v514 = vld [vmem:[%s369 + $0x100] sm:$0xff]
      %v515 = vld [vmem:[%s369 + $0x108] sm:$0xff]
      %v516 = vld [vmem:[%s369 + $0x110] sm:$0xff]
      %v517 = vld [vmem:[%s369 + $0x118] sm:$0xff]
      %v518 = vld [vmem:[%s369 + $0x120] sm:$0xff]
      %v519 = vld [vmem:[%s369 + $0x128] sm:$0xff]
      %v520 = vld [vmem:[%s369 + $0x130] sm:$0xff]
      %v521 = vld [vmem:[%s369 + $0x138] sm:$0xff]
      %v522 = vld [vmem:[%s369 + $0x140] sm:$0xff]
      %v523 = vld [vmem:[%s369 + $0x148] sm:$0xff]
      %v524 = vld [vmem:[%s369 + $0x150] sm:$0xff]
      %v525 = vld [vmem:[%s369 + $0x158] sm:$0xff]
      %v526 = vld [vmem:[%s369 + $0x160] sm:$0xff]
      %v527 = vld [vmem:[%s369 + $0x168] sm:$0xff]
      %v528 = vld [vmem:[%s369 + $0x170] sm:$0xff]
      %v529 = vld [vmem:[%s369 + $0x178] sm:$0xff]
      %v530 = vld [vmem:[%s369 + $0x180] sm:$0xff]
      %v531 = vld [vmem:[%s369 + $0x188] sm:$0xff]
      %v532 = vld [vmem:[%s369 + $0x190] sm:$0xff]
      %v533 = vld [vmem:[%s369 + $0x198] sm:$0xff]
      %v534 = vld [vmem:[%s369 + $0x1a0] sm:$0xff]
      %v535 = vld [vmem:[%s369 + $0x1a8] sm:$0xff]
      %v536 = vld [vmem:[%s369 + $0x1b0] sm:$0xff]
      %v537 = vld [vmem:[%s369 + $0x1b8] sm:$0xff]
      %v538 = vld [vmem:[%s369 + $0x1c0] sm:$0xff]
      %v539 = vld [vmem:[%s369 + $0x1c8] sm:$0xff]
      %v540 = vld [vmem:[%s369 + $0x1d0] sm:$0xff]
      %v541 = vld [vmem:[%s369 + $0x1d8] sm:$0xff]
      %v542 = vld [vmem:[%s369 + $0x1e0] sm:$0xff]
      %v543 = vld [vmem:[%s369 + $0x1e8] sm:$0xff]
      %v544 = vld [vmem:[%s369 + $0x1f0] sm:$0xff]
      %v545 = vld [vmem:[%s369 + $0x1f8] sm:$0xff]
      %v546 = vpack.c.bf16 %v483, %v482
      %v547 = vpack.c.bf16 %v485, %v484
      %v548 = vpack.c.bf16 %v487, %v486
      %v549 = vpack.c.bf16 %v489, %v488
      %v550 = vpack.c.bf16 %v491, %v490
      %v551 = vpack.c.bf16 %v493, %v492
      %v552 = vpack.c.bf16 %v495, %v494
      %v553 = vpack.c.bf16 %v497, %v496
      %v554 = vpack.c.bf16 %v499, %v498
      %v555 = vpack.c.bf16 %v501, %v500
      %v556 = vpack.c.bf16 %v503, %v502
      %v557 = vpack.c.bf16 %v505, %v504
      %v558 = vpack.c.bf16 %v507, %v506
      %v559 = vpack.c.bf16 %v509, %v508
      %v560 = vpack.c.bf16 %v511, %v510
      %v561 = vpack.c.bf16 %v513, %v512
      %v562 = vpack.c.bf16 %v515, %v514
      %v563 = vpack.c.bf16 %v517, %v516
      %v564 = vpack.c.bf16 %v519, %v518
      %v565 = vpack.c.bf16 %v521, %v520
      %v566 = vpack.c.bf16 %v523, %v522
      %v567 = vpack.c.bf16 %v525, %v524
      %v568 = vpack.c.bf16 %v527, %v526
      %v569 = vpack.c.bf16 %v529, %v528
      %v570 = vpack.c.bf16 %v531, %v530
      %v571 = vpack.c.bf16 %v533, %v532
      %v572 = vpack.c.bf16 %v535, %v534
      %v573 = vpack.c.bf16 %v537, %v536
      %v574 = vpack.c.bf16 %v539, %v538
      %v575 = vpack.c.bf16 %v541, %v540
      %v576 = vpack.c.bf16 %v543, %v542
      %v577 = vpack.c.bf16 %v545, %v544
      %vm578 = vcmask 130048
      %v580 = vsel %vm578, %v546, 0
      %v583 = vsel %vm578, %v547, 0
      %v586 = vsel %vm578, %v548, 0
      %v589 = vsel %vm578, %v549, 0
      %v592 = vsel %vm578, %v550, 0
      %v595 = vsel %vm578, %v551, 0
      %v598 = vsel %vm578, %v552, 0
      %v601 = vsel %vm578, %v553, 0
      %v604 = vsel %vm578, %v554, 0
      %v607 = vsel %vm578, %v555, 0
      %v610 = vsel %vm578, %v556, 0
      %v613 = vsel %vm578, %v557, 0
      %v616 = vsel %vm578, %v558, 0
      %v619 = vsel %vm578, %v559, 0
      %v622 = vsel %vm578, %v560, 0
      %v625 = vsel %vm578, %v561, 0
      %v628 = vsel %vm578, %v562, 0
      %v631 = vsel %vm578, %v563, 0
      %v634 = vsel %vm578, %v564, 0
      %v637 = vsel %vm578, %v565, 0
      %v640 = vsel %vm578, %v566, 0
      %v643 = vsel %vm578, %v567, 0
      %v646 = vsel %vm578, %v568, 0
      %v649 = vsel %vm578, %v569, 0
      %v652 = vsel %vm578, %v570, 0
      %v655 = vsel %vm578, %v571, 0
      %v658 = vsel %vm578, %v572, 0
      %v661 = vsel %vm578, %v573, 0
      %v664 = vsel %vm578, %v574, 0
      %v667 = vsel %vm578, %v575, 0
      %v670 = vsel %vm578, %v576, 0
      %v673 = vsel %vm578, %v577, 0
      %675 = vmatprep.subr.bf16.mxu0 0
      %676 = vmatpush1.bf16.msra.mxu0 %v406
      %677 = vmatprep.subr.bf16.mxu0 0
      %678 = vmatpush1.bf16.msra.mxu0 0
      %679 = vmatprep.subr.bf16.mxu0 0
      %680 = vmatpush1.bf16.msra.mxu0 0
      %681 = vmatprep.subr.bf16.mxu0 0
      %682 = vmatpush1.bf16.msra.mxu0 0
      %683 = vmatprep.subr.bf16.mxu0 0
      %684 = vmatpush1.bf16.msra.mxu0 0
      %685 = vmatprep.subr.bf16.mxu0 0
      %686 = vmatpush1.bf16.msra.mxu0 0
      %687 = vmatprep.subr.bf16.mxu0 0
      %688 = vmatpush1.bf16.msra.mxu0 0
      %689 = vmatprep.subr.bf16.mxu0 0
      %690 = vmatpush1.bf16.msra.mxu0 0
      %691 = vmatprep.subr.bf16.mxu0 0
      %692 = vmatpush1.bf16.msra.mxu0 0
      %693 = vmatprep.subr.bf16.mxu0 0
      %694 = vmatpush1.bf16.msra.mxu0 0
      %695 = vmatprep.subr.bf16.mxu0 0
      %696 = vmatpush1.bf16.msra.mxu0 0
      %697 = vmatprep.subr.bf16.mxu0 0
      %698 = vmatpush1.bf16.msra.mxu0 0
      %699 = vmatprep.subr.bf16.mxu0 0
      %700 = vmatpush1.bf16.msra.mxu0 0
      %701 = vmatprep.subr.bf16.mxu0 0
      %702 = vmatpush1.bf16.msra.mxu0 0
      %703 = vmatprep.subr.bf16.mxu0 0
      %704 = vmatpush1.bf16.msra.mxu0 0
      %705 = vmatprep.subr.bf16.mxu0 0
      %706 = vmatpush1.bf16.msra.mxu0 0
      %707 = vmatprep.mubr.bf16.mxu0 0
      %708 = vmatmul.mubr.bf16.gmra.mrb[0].mxu0 %v580
      %v709 = vpop.f32.mrb[0].mxu0
      %v710 = vadd.f32 0.0, %v709
      %v711 = vpop.f32.mrb[0].mxu0
      %v712 = vpop.f32.mrb[0].mxu0
      %v713 = vadd.f32 0.0, %v712
      %v714 = vpop.f32.mrb[0].mxu0
      %715 = vmatprep.mubr.bf16.mxu0 0
      %716 = vmatmul.mubr.bf16.gmra.mrb[0].mxu0 %v583
      %v717 = vpop.f32.mrb[0].mxu0
      %v718 = vadd.f32 0.0, %v717
      %v719 = vpop.f32.mrb[0].mxu0
      %v720 = vpop.f32.mrb[0].mxu0
      %v721 = vadd.f32 0.0, %v720
      %v722 = vpop.f32.mrb[0].mxu0
      %723 = vmatprep.mubr.bf16.mxu0 0
      %724 = vmatmul.mubr.bf16.gmra.mrb[0].mxu0 %v586
      %v725 = vpop.f32.mrb[0].mxu0
      %v726 = vadd.f32 0.0, %v725
      %v727 = vpop.f32.mrb[0].mxu0
      %v728 = vpop.f32.mrb[0].mxu0
      %v729 = vadd.f32 0.0, %v728
      %v730 = vpop.f32.mrb[0].mxu0
      %731 = vmatprep.mubr.bf16.mxu0 0
      %732 = vmatmul.mubr.bf16.gmra.mrb[0].mxu0 %v589
      %v733 = vpop.f32.mrb[0].mxu0
      %v734 = vadd.f32 0.0, %v733
      %v735 = vpop.f32.mrb[0].mxu0
      %v736 = vpop.f32.mrb[0].mxu0
      %v737 = vadd.f32 0.0, %v736
      %v738 = vpop.f32.mrb[0].mxu0
      %739 = vmatprep.mubr.bf16.mxu0 0
      %740 = vmatmul.mubr.bf16.gmra.mrb[0].mxu0 %v592
      %v741 = vpop.f32.mrb[0].mxu0
      %v742 = vadd.f32 0.0, %v741
      %v743 = vpop.f32.mrb[0].mxu0
      %v744 = vpop.f32.mrb[0].mxu0
      %v745 = vadd.f32 0.0, %v744
      %v746 = vpop.f32.mrb[0].mxu0
      %747 = vmatprep.mubr.bf16.mxu0 0
      %748 = vmatmul.mubr.bf16.gmra.mrb[0].mxu0 %v595
      %v749 = vpop.f32.mrb[0].mxu0
      %v750 = vadd.f32 0.0, %v749
      %v751 = vpop.f32.mrb[0].mxu0
      %v752 = vpop.f32.mrb[0].mxu0
      %v753 = vadd.f32 0.0, %v752
      %v754 = vpop.f32.mrb[0].mxu0
      %755 = vmatprep.mubr.bf16.mxu0 0
      %756 = vmatmul.mubr.bf16.gmra.mrb[0].mxu0 %v598
      %v757 = vpop.f32.mrb[0].mxu0
      %v758 = vadd.f32 0.0, %v757
      %v759 = vpop.f32.mrb[0].mxu0
      %v760 = vpop.f32.mrb[0].mxu0
      %v761 = vadd.f32 0.0, %v760
      %v762 = vpop.f32.mrb[0].mxu0
      %763 = vmatprep.mubr.bf16.mxu0 0
      %764 = vmatmul.mubr.bf16.gmra.mrb[0].mxu0 %v601
      %v765 = vpop.f32.mrb[0].mxu0
      %v766 = vadd.f32 0.0, %v765
      %v767 = vpop.f32.mrb[0].mxu0
      %v768 = vpop.f32.mrb[0].mxu0
      %v769 = vadd.f32 0.0, %v768
      %v770 = vpop.f32.mrb[0].mxu0
      %771 = vmatprep.mubr.bf16.mxu0 0
      %772 = vmatmul.mubr.bf16.gmra.mrb[0].mxu0 %v604
      %v773 = vpop.f32.mrb[0].mxu0
      %v774 = vadd.f32 0.0, %v773
      %v775 = vpop.f32.mrb[0].mxu0
      %v776 = vpop.f32.mrb[0].mxu0
      %v777 = vadd.f32 0.0, %v776
      %v778 = vpop.f32.mrb[0].mxu0
      %779 = vmatprep.mubr.bf16.mxu0 0
      %780 = vmatmul.mubr.bf16.gmra.mrb[0].mxu0 %v607
      %v781 = vpop.f32.mrb[0].mxu0
      %v782 = vadd.f32 0.0, %v781
      %v783 = vpop.f32.mrb[0].mxu0
      %v784 = vpop.f32.mrb[0].mxu0
      %v785 = vadd.f32 0.0, %v784
      %v786 = vpop.f32.mrb[0].mxu0
      %787 = vmatprep.mubr.bf16.mxu0 0
      %788 = vmatmul.mubr.bf16.gmra.mrb[0].mxu0 %v610
      %v789 = vpop.f32.mrb[0].mxu0
      %v790 = vadd.f32 0.0, %v789
      %v791 = vpop.f32.mrb[0].mxu0
      %v792 = vpop.f32.mrb[0].mxu0
      %v793 = vadd.f32 0.0, %v792
      %v794 = vpop.f32.mrb[0].mxu0
      %795 = vmatprep.mubr.bf16.mxu0 0
      %796 = vmatmul.mubr.bf16.gmra.mrb[0].mxu0 %v613
      %v797 = vpop.f32.mrb[0].mxu0
      %v798 = vadd.f32 0.0, %v797
      %v799 = vpop.f32.mrb[0].mxu0
      %v800 = vpop.f32.mrb[0].mxu0
      %v801 = vadd.f32 0.0, %v800
      %v802 = vpop.f32.mrb[0].mxu0
      %803 = vmatprep.mubr.bf16.mxu0 0
      %804 = vmatmul.mubr.bf16.gmra.mrb[0].mxu0 %v616
      %v805 = vpop.f32.mrb[0].mxu0
      %v806 = vadd.f32 0.0, %v805
      %v807 = vpop.f32.mrb[0].mxu0
      %v808 = vpop.f32.mrb[0].mxu0
      %v809 = vadd.f32 0.0, %v808
      %v810 = vpop.f32.mrb[0].mxu0
      %811 = vmatprep.mubr.bf16.mxu0 0
      %812 = vmatmul.mubr.bf16.gmra.mrb[0].mxu0 %v619
      %v813 = vpop.f32.mrb[0].mxu0
      %v814 = vadd.f32 0.0, %v813
      %v815 = vpop.f32.mrb[0].mxu0
      %v816 = vpop.f32.mrb[0].mxu0
      %v817 = vadd.f32 0.0, %v816
      %v818 = vpop.f32.mrb[0].mxu0
      %819 = vmatprep.mubr.bf16.mxu0 0
      %820 = vmatmul.mubr.bf16.gmra.mrb[0].mxu0 %v622
      %v821 = vpop.f32.mrb[0].mxu0
      %v822 = vadd.f32 0.0, %v821
      %v823 = vpop.f32.mrb[0].mxu0
      %v824 = vpop.f32.mrb[0].mxu0
      %v825 = vadd.f32 0.0, %v824
      %v826 = vpop.f32.mrb[0].mxu0
      %827 = vmatprep.mubr.bf16.mxu0 0
      %828 = vmatmul.mubr.bf16.gmra.mrb[0].mxu0 %v625
      %v829 = vpop.f32.mrb[0].mxu0
      %v830 = vadd.f32 0.0, %v829
      %v831 = vpop.f32.mrb[0].mxu0
      %v832 = vpop.f32.mrb[0].mxu0
      %v833 = vadd.f32 0.0, %v832
      %v834 = vpop.f32.mrb[0].mxu0
      %835 = vmatprep.mubr.bf16.mxu0 0
      %836 = vmatmul.mubr.bf16.gmra.mrb[0].mxu0 %v628
      %v837 = vpop.f32.mrb[0].mxu0
      %v838 = vadd.f32 0.0, %v837
      %v839 = vpop.f32.mrb[0].mxu0
      %v840 = vpop.f32.mrb[0].mxu0
      %v841 = vadd.f32 0.0, %v840
      %v842 = vpop.f32.mrb[0].mxu0
      %843 = vmatprep.mubr.bf16.mxu0 0
      %844 = vmatmul.mubr.bf16.gmra.mrb[0].mxu0 %v631
      %v845 = vpop.f32.mrb[0].mxu0
      %v846 = vadd.f32 0.0, %v845
      %v847 = vpop.f32.mrb[0].mxu0
      %v848 = vpop.f32.mrb[0].mxu0
      %v849 = vadd.f32 0.0, %v848
      %v850 = vpop.f32.mrb[0].mxu0
      %851 = vmatprep.mubr.bf16.mxu0 0
      %852 = vmatmul.mubr.bf16.gmra.mrb[0].mxu0 %v634
      %v853 = vpop.f32.mrb[0].mxu0
      %v854 = vadd.f32 0.0, %v853
      %v855 = vpop.f32.mrb[0].mxu0
      %v856 = vpop.f32.mrb[0].mxu0
      %v857 = vadd.f32 0.0, %v856
      %v858 = vpop.f32.mrb[0].mxu0
      %859 = vmatprep.mubr.bf16.mxu0 0
      %860 = vmatmul.mubr.bf16.gmra.mrb[0].mxu0 %v637
      %v861 = vpop.f32.mrb[0].mxu0
      %v862 = vadd.f32 0.0, %v861
      %v863 = vpop.f32.mrb[0].mxu0
      %v864 = vpop.f32.mrb[0].mxu0
      %v865 = vadd.f32 0.0, %v864
      %v866 = vpop.f32.mrb[0].mxu0
      %867 = vmatprep.mubr.bf16.mxu0 0
      %868 = vmatmul.mubr.bf16.gmra.mrb[0].mxu0 %v640
      %v869 = vpop.f32.mrb[0].mxu0
      %v870 = vadd.f32 0.0, %v869
      %v871 = vpop.f32.mrb[0].mxu0
      %v872 = vpop.f32.mrb[0].mxu0
      %v873 = vadd.f32 0.0, %v872
      %v874 = vpop.f32.mrb[0].mxu0
      %875 = vmatprep.mubr.bf16.mxu0 0
      %876 = vmatmul.mubr.bf16.gmra.mrb[0].mxu0 %v643
      %v877 = vpop.f32.mrb[0].mxu0
      %v878 = vadd.f32 0.0, %v877
      %v879 = vpop.f32.mrb[0].mxu0
      %v880 = vpop.f32.mrb[0].mxu0
      %v881 = vadd.f32 0.0, %v880
      %v882 = vpop.f32.mrb[0].mxu0
      %883 = vmatprep.mubr.bf16.mxu0 0
      %884 = vmatmul.mubr.bf16.gmra.mrb[0].mxu0 %v646
      %v885 = vpop.f32.mrb[0].mxu0
      %v886 = vadd.f32 0.0, %v885
      %v887 = vpop.f32.mrb[0].mxu0
      %v888 = vpop.f32.mrb[0].mxu0
      %v889 = vadd.f32 0.0, %v888
      %v890 = vpop.f32.mrb[0].mxu0
      %891 = vmatprep.mubr.bf16.mxu0 0
      %892 = vmatmul.mubr.bf16.gmra.mrb[0].mxu0 %v649
      %v893 = vpop.f32.mrb[0].mxu0
      %v894 = vadd.f32 0.0, %v893
      %v895 = vpop.f32.mrb[0].mxu0
      %v896 = vpop.f32.mrb[0].mxu0
      %v897 = vadd.f32 0.0, %v896
      %v898 = vpop.f32.mrb[0].mxu0
      %899 = vmatprep.mubr.bf16.mxu0 0
      %900 = vmatmul.mubr.bf16.gmra.mrb[0].mxu0 %v652
      %v901 = vpop.f32.mrb[0].mxu0
      %v902 = vadd.f32 0.0, %v901
      %v903 = vpop.f32.mrb[0].mxu0
      %v904 = vpop.f32.mrb[0].mxu0
      %v905 = vadd.f32 0.0, %v904
      %v906 = vpop.f32.mrb[0].mxu0
      %907 = vmatprep.mubr.bf16.mxu0 0
      %908 = vmatmul.mubr.bf16.gmra.mrb[0].mxu0 %v655
      %v909 = vpop.f32.mrb[0].mxu0
      %v910 = vadd.f32 0.0, %v909
      %v911 = vpop.f32.mrb[0].mxu0
      %v912 = vpop.f32.mrb[0].mxu0
      %v913 = vadd.f32 0.0, %v912
      %v914 = vpop.f32.mrb[0].mxu0
      %915 = vmatprep.mubr.bf16.mxu0 0
      %916 = vmatmul.mubr.bf16.gmra.mrb[0].mxu0 %v658
      %v917 = vpop.f32.mrb[0].mxu0
      %v918 = vadd.f32 0.0, %v917
      %v919 = vpop.f32.mrb[0].mxu0
      %v920 = vpop.f32.mrb[0].mxu0
      %v921 = vadd.f32 0.0, %v920
      %v922 = vpop.f32.mrb[0].mxu0
      %923 = vmatprep.mubr.bf16.mxu0 0
      %924 = vmatmul.mubr.bf16.gmra.mrb[0].mxu0 %v661
      %v925 = vpop.f32.mrb[0].mxu0
      %v926 = vadd.f32 0.0, %v925
      %v927 = vpop.f32.mrb[0].mxu0
      %v928 = vpop.f32.mrb[0].mxu0
      %v929 = vadd.f32 0.0, %v928
      %v930 = vpop.f32.mrb[0].mxu0
      %931 = vmatprep.mubr.bf16.mxu0 0
      %932 = vmatmul.mubr.bf16.gmra.mrb[0].mxu0 %v664
      %v933 = vpop.f32.mrb[0].mxu0
      %v934 = vadd.f32 0.0, %v933
      %v935 = vpop.f32.mrb[0].mxu0
      %v936 = vpop.f32.mrb[0].mxu0
      %v937 = vadd.f32 0.0, %v936
      %v938 = vpop.f32.mrb[0].mxu0
      %939 = vmatprep.mubr.bf16.mxu0 0
      %940 = vmatmul.mubr.bf16.gmra.mrb[0].mxu0 %v667
      %v941 = vpop.f32.mrb[0].mxu0
      %v942 = vadd.f32 0.0, %v941
      %v943 = vpop.f32.mrb[0].mxu0
      %v944 = vpop.f32.mrb[0].mxu0
      %v945 = vadd.f32 0.0, %v944
      %v946 = vpop.f32.mrb[0].mxu0
      %947 = vmatprep.mubr.bf16.mxu0 0
      %948 = vmatmul.mubr.bf16.gmra.mrb[0].mxu0 %v670
      %v949 = vpop.f32.mrb[0].mxu0
      %v950 = vadd.f32 0.0, %v949
      %v951 = vpop.f32.mrb[0].mxu0
      %v952 = vpop.f32.mrb[0].mxu0
      %v953 = vadd.f32 0.0, %v952
      %v954 = vpop.f32.mrb[0].mxu0
      %955 = vmatprep.mubr.bf16.mxu0 0
      %956 = vmatmul.mubr.bf16.gmra.mrb[0].mxu0 %v673
      %v957 = vpop.f32.mrb[0].mxu0
      %v958 = vadd.f32 0.0, %v957
      %v959 = vpop.f32.mrb[0].mxu0
      %v960 = vpop.f32.mrb[0].mxu0
      %v961 = vadd.f32 0.0, %v960
      %v962 = vpop.f32.mrb[0].mxu0
      %963 = vdwg.mxu0
      %965 = vset.pattern.permute.xlu0 0
      %966 = vperm.xlu0 %965, %v418
      %v967 = vpop.permute.xlu0 %966
      %970 = vset.pattern.permute.xlu0 0
      %971 = vperm.xlu0 %970, %v419
      %v972 = vpop.permute.xlu0 %971
      %975 = vset.pattern.permute.xlu0 0
      %976 = vperm.xlu0 %975, %v420
      %v977 = vpop.permute.xlu0 %976
      %980 = vset.pattern.permute.xlu0 0
      %981 = vperm.xlu0 %980, %v421
      %v982 = vpop.permute.xlu0 %981
      %985 = vset.pattern.permute.xlu0 0
      %986 = vperm.xlu0 %985, %v422
      %v987 = vpop.permute.xlu0 %986
      %990 = vset.pattern.permute.xlu0 0
      %991 = vperm.xlu0 %990, %v423
      %v992 = vpop.permute.xlu0 %991
      %995 = vset.pattern.permute.xlu0 0
      %996 = vperm.xlu0 %995, %v424
      %v997 = vpop.permute.xlu0 %996
      %1000 = vset.pattern.permute.xlu0 0
      %1001 = vperm.xlu0 %1000, %v425
      %v1002 = vpop.permute.xlu0 %1001
      %1005 = vset.pattern.permute.xlu0 0
      %1006 = vperm.xlu0 %1005, %v426
      %v1007 = vpop.permute.xlu0 %1006
      %1010 = vset.pattern.permute.xlu0 0
      %1011 = vperm.xlu0 %1010, %v427
      %v1012 = vpop.permute.xlu0 %1011
      %1015 = vset.pattern.permute.xlu0 0
      %1016 = vperm.xlu0 %1015, %v428
      %v1017 = vpop.permute.xlu0 %1016
      %1020 = vset.pattern.permute.xlu0 0
      %1021 = vperm.xlu0 %1020, %v429
      %v1022 = vpop.permute.xlu0 %1021
      %1025 = vset.pattern.permute.xlu0 0
      %1026 = vperm.xlu0 %1025, %v430
      %v1027 = vpop.permute.xlu0 %1026
      %1030 = vset.pattern.permute.xlu0 0
      %1031 = vperm.xlu0 %1030, %v431
      %v1032 = vpop.permute.xlu0 %1031
      %1035 = vset.pattern.permute.xlu0 0
      %1036 = vperm.xlu0 %1035, %v432
      %v1037 = vpop.permute.xlu0 %1036
      %1040 = vset.pattern.permute.xlu0 0
      %1041 = vperm.xlu0 %1040, %v433
      %v1042 = vpop.permute.xlu0 %1041
      %1045 = vset.pattern.permute.xlu0 0
      %1046 = vperm.xlu0 %1045, %v434
      %v1047 = vpop.permute.xlu0 %1046
      %1050 = vset.pattern.permute.xlu0 0
      %1051 = vperm.xlu0 %1050, %v435
      %v1052 = vpop.permute.xlu0 %1051
      %1055 = vset.pattern.permute.xlu0 0
      %1056 = vperm.xlu0 %1055, %v436
      %v1057 = vpop.permute.xlu0 %1056
      %1060 = vset.pattern.permute.xlu0 0
      %1061 = vperm.xlu0 %1060, %v437
      %v1062 = vpop.permute.xlu0 %1061
      %1065 = vset.pattern.permute.xlu0 0
      %1066 = vperm.xlu0 %1065, %v438
      %v1067 = vpop.permute.xlu0 %1066
      %1070 = vset.pattern.permute.xlu0 0
      %1071 = vperm.xlu0 %1070, %v439
      %v1072 = vpop.permute.xlu0 %1071
      %1075 = vset.pattern.permute.xlu0 0
      %1076 = vperm.xlu0 %1075, %v440
      %v1077 = vpop.permute.xlu0 %1076
      %1080 = vset.pattern.permute.xlu0 0
      %1081 = vperm.xlu0 %1080, %v441
      %v1082 = vpop.permute.xlu0 %1081
      %1085 = vset.pattern.permute.xlu0 0
      %1086 = vperm.xlu0 %1085, %v442
      %v1087 = vpop.permute.xlu0 %1086
      %1090 = vset.pattern.permute.xlu0 0
      %1091 = vperm.xlu0 %1090, %v443
      %v1092 = vpop.permute.xlu0 %1091
      %1095 = vset.pattern.permute.xlu0 0
      %1096 = vperm.xlu0 %1095, %v444
      %v1097 = vpop.permute.xlu0 %1096
      %1100 = vset.pattern.permute.xlu0 0
      %1101 = vperm.xlu0 %1100, %v445
      %v1102 = vpop.permute.xlu0 %1101
      %1105 = vset.pattern.permute.xlu0 0
      %1106 = vperm.xlu0 %1105, %v446
      %v1107 = vpop.permute.xlu0 %1106
      %1110 = vset.pattern.permute.xlu0 0
      %1111 = vperm.xlu0 %1110, %v447
      %v1112 = vpop.permute.xlu0 %1111
      %1115 = vset.pattern.permute.xlu0 0
      %1116 = vperm.xlu0 %1115, %v448
      %v1117 = vpop.permute.xlu0 %1116
      %1120 = vset.pattern.permute.xlu0 0
      %1121 = vperm.xlu0 %1120, %v449
      %v1122 = vpop.permute.xlu0 %1121
      %1125 = vset.pattern.permute.xlu0 0
      %1126 = vperm.xlu0 %1125, %v450
      %v1127 = vpop.permute.xlu0 %1126
      %1130 = vset.pattern.permute.xlu0 0
      %1131 = vperm.xlu0 %1130, %v451
      %v1132 = vpop.permute.xlu0 %1131
      %1135 = vset.pattern.permute.xlu0 0
      %1136 = vperm.xlu0 %1135, %v452
      %v1137 = vpop.permute.xlu0 %1136
      %1140 = vset.pattern.permute.xlu0 0
      %1141 = vperm.xlu0 %1140, %v453
      %v1142 = vpop.permute.xlu0 %1141
      %1145 = vset.pattern.permute.xlu0 0
      %1146 = vperm.xlu0 %1145, %v454
      %v1147 = vpop.permute.xlu0 %1146
      %1150 = vset.pattern.permute.xlu0 0
      %1151 = vperm.xlu0 %1150, %v455
      %v1152 = vpop.permute.xlu0 %1151
      %1155 = vset.pattern.permute.xlu0 0
      %1156 = vperm.xlu0 %1155, %v456
      %v1157 = vpop.permute.xlu0 %1156
      %1160 = vset.pattern.permute.xlu0 0
      %1161 = vperm.xlu0 %1160, %v457
      %v1162 = vpop.permute.xlu0 %1161
      %1165 = vset.pattern.permute.xlu0 0
      %1166 = vperm.xlu0 %1165, %v458
      %v1167 = vpop.permute.xlu0 %1166
      %1170 = vset.pattern.permute.xlu0 0
      %1171 = vperm.xlu0 %1170, %v459
      %v1172 = vpop.permute.xlu0 %1171
      %1175 = vset.pattern.permute.xlu0 0
      %1176 = vperm.xlu0 %1175, %v460
      %v1177 = vpop.permute.xlu0 %1176
      %1180 = vset.pattern.permute.xlu0 0
      %1181 = vperm.xlu0 %1180, %v461
      %v1182 = vpop.permute.xlu0 %1181
      %1185 = vset.pattern.permute.xlu0 0
      %1186 = vperm.xlu0 %1185, %v462
      %v1187 = vpop.permute.xlu0 %1186
      %1190 = vset.pattern.permute.xlu0 0
      %1191 = vperm.xlu0 %1190, %v463
      %v1192 = vpop.permute.xlu0 %1191
      %1195 = vset.pattern.permute.xlu0 0
      %1196 = vperm.xlu0 %1195, %v464
      %v1197 = vpop.permute.xlu0 %1196
      %1200 = vset.pattern.permute.xlu0 0
      %1201 = vperm.xlu0 %1200, %v465
      %v1202 = vpop.permute.xlu0 %1201
      %1205 = vset.pattern.permute.xlu0 0
      %1206 = vperm.xlu0 %1205, %v466
      %v1207 = vpop.permute.xlu0 %1206
      %1210 = vset.pattern.permute.xlu0 0
      %1211 = vperm.xlu0 %1210, %v467
      %v1212 = vpop.permute.xlu0 %1211
      %1215 = vset.pattern.permute.xlu0 0
      %1216 = vperm.xlu0 %1215, %v468
      %v1217 = vpop.permute.xlu0 %1216
      %1220 = vset.pattern.permute.xlu0 0
      %1221 = vperm.xlu0 %1220, %v469
      %v1222 = vpop.permute.xlu0 %1221
      %1225 = vset.pattern.permute.xlu0 0
      %1226 = vperm.xlu0 %1225, %v470
      %v1227 = vpop.permute.xlu0 %1226
      %1230 = vset.pattern.permute.xlu0 0
      %1231 = vperm.xlu0 %1230, %v471
      %v1232 = vpop.permute.xlu0 %1231
      %1235 = vset.pattern.permute.xlu0 0
      %1236 = vperm.xlu0 %1235, %v472
      %v1237 = vpop.permute.xlu0 %1236
      %1240 = vset.pattern.permute.xlu0 0
      %1241 = vperm.xlu0 %1240, %v473
      %v1242 = vpop.permute.xlu0 %1241
      %1245 = vset.pattern.permute.xlu0 0
      %1246 = vperm.xlu0 %1245, %v474
      %v1247 = vpop.permute.xlu0 %1246
      %1250 = vset.pattern.permute.xlu0 0
      %1251 = vperm.xlu0 %1250, %v475
      %v1252 = vpop.permute.xlu0 %1251
      %1255 = vset.pattern.permute.xlu0 0
      %1256 = vperm.xlu0 %1255, %v476
      %v1257 = vpop.permute.xlu0 %1256
      %1260 = vset.pattern.permute.xlu0 0
      %1261 = vperm.xlu0 %1260, %v477
      %v1262 = vpop.permute.xlu0 %1261
      %1265 = vset.pattern.permute.xlu0 0
      %1266 = vperm.xlu0 %1265, %v478
      %v1267 = vpop.permute.xlu0 %1266
      %1270 = vset.pattern.permute.xlu0 0
      %1271 = vperm.xlu0 %1270, %v479
      %v1272 = vpop.permute.xlu0 %1271
      %1275 = vset.pattern.permute.xlu0 0
      %1276 = vperm.xlu0 %1275, %v480
      %v1277 = vpop.permute.xlu0 %1276
      %1280 = vset.pattern.permute.xlu0 0
      %1281 = vperm.xlu0 %1280, %v481
      %v1282 = vpop.permute.xlu0 %1281
      %v1284 = vmul.f32 %v710, %v967
      %v1285 = vmul.f32 %v713, %v972
      %v1286 = vmul.f32 %v718, %v977
      %v1287 = vmul.f32 %v721, %v982
      %v1288 = vmul.f32 %v726, %v987
      %v1289 = vmul.f32 %v729, %v992
      %v1290 = vmul.f32 %v734, %v997
      %v1291 = vmul.f32 %v737, %v1002
      %v1292 = vmul.f32 %v742, %v1007
      %v1293 = vmul.f32 %v745, %v1012
      %v1294 = vmul.f32 %v750, %v1017
      %v1295 = vmul.f32 %v753, %v1022
      %v1296 = vmul.f32 %v758, %v1027
      %v1297 = vmul.f32 %v761, %v1032
      %v1298 = vmul.f32 %v766, %v1037
      %v1299 = vmul.f32 %v769, %v1042
      %v1300 = vmul.f32 %v774, %v1047
      %v1301 = vmul.f32 %v777, %v1052
      %v1302 = vmul.f32 %v782, %v1057
      %v1303 = vmul.f32 %v785, %v1062
      %v1304 = vmul.f32 %v790, %v1067
      %v1305 = vmul.f32 %v793, %v1072
      %v1306 = vmul.f32 %v798, %v1077
      %v1307 = vmul.f32 %v801, %v1082
      %v1308 = vmul.f32 %v806, %v1087
      %v1309 = vmul.f32 %v809, %v1092
      %v1310 = vmul.f32 %v814, %v1097
      %v1311 = vmul.f32 %v817, %v1102
      %v1312 = vmul.f32 %v822, %v1107
      %v1313 = vmul.f32 %v825, %v1112
      %v1314 = vmul.f32 %v830, %v1117
      %v1315 = vmul.f32 %v833, %v1122
      %v1316 = vmul.f32 %v838, %v1127
      %v1317 = vmul.f32 %v841, %v1132
      %v1318 = vmul.f32 %v846, %v1137
      %v1319 = vmul.f32 %v849, %v1142
      %v1320 = vmul.f32 %v854, %v1147
      %v1321 = vmul.f32 %v857, %v1152
      %v1322 = vmul.f32 %v862, %v1157
      %v1323 = vmul.f32 %v865, %v1162
      %v1324 = vmul.f32 %v870, %v1167
      %v1325 = vmul.f32 %v873, %v1172
      %v1326 = vmul.f32 %v878, %v1177
      %v1327 = vmul.f32 %v881, %v1182
      %v1328 = vmul.f32 %v886, %v1187
      %v1329 = vmul.f32 %v889, %v1192
      %v1330 = vmul.f32 %v894, %v1197
      %v1331 = vmul.f32 %v897, %v1202
      %v1332 = vmul.f32 %v902, %v1207
      %v1333 = vmul.f32 %v905, %v1212
      %v1334 = vmul.f32 %v910, %v1217
      %v1335 = vmul.f32 %v913, %v1222
      %v1336 = vmul.f32 %v918, %v1227
      %v1337 = vmul.f32 %v921, %v1232
      %v1338 = vmul.f32 %v926, %v1237
      %v1339 = vmul.f32 %v929, %v1242
      %v1340 = vmul.f32 %v934, %v1247
      %v1341 = vmul.f32 %v937, %v1252
      %v1342 = vmul.f32 %v942, %v1257
      %v1343 = vmul.f32 %v945, %v1262
      %v1344 = vmul.f32 %v950, %v1267
      %v1345 = vmul.f32 %v953, %v1272
      %v1346 = vmul.f32 %v958, %v1277
      %v1347 = vmul.f32 %v961, %v1282
      %v1348 = vpack.c.bf16 %v1285, %v1284
      %v1349 = vpack.c.bf16 %v1287, %v1286
      %v1350 = vpack.c.bf16 %v1289, %v1288
      %v1351 = vpack.c.bf16 %v1291, %v1290
      %v1352 = vpack.c.bf16 %v1293, %v1292
      %v1353 = vpack.c.bf16 %v1295, %v1294
      %v1354 = vpack.c.bf16 %v1297, %v1296
      %v1355 = vpack.c.bf16 %v1299, %v1298
      %v1356 = vpack.c.bf16 %v1301, %v1300
      %v1357 = vpack.c.bf16 %v1303, %v1302
      %v1358 = vpack.c.bf16 %v1305, %v1304
      %v1359 = vpack.c.bf16 %v1307, %v1306
      %v1360 = vpack.c.bf16 %v1309, %v1308
      %v1361 = vpack.c.bf16 %v1311, %v1310
      %v1362 = vpack.c.bf16 %v1313, %v1312
      %v1363 = vpack.c.bf16 %v1315, %v1314
      %v1364 = vpack.c.bf16 %v1317, %v1316
      %v1365 = vpack.c.bf16 %v1319, %v1318
      %v1366 = vpack.c.bf16 %v1321, %v1320
      %v1367 = vpack.c.bf16 %v1323, %v1322
      %v1368 = vpack.c.bf16 %v1325, %v1324
      %v1369 = vpack.c.bf16 %v1327, %v1326
      %v1370 = vpack.c.bf16 %v1329, %v1328
      %v1371 = vpack.c.bf16 %v1331, %v1330
      %v1372 = vpack.c.bf16 %v1333, %v1332
      %v1373 = vpack.c.bf16 %v1335, %v1334
      %v1374 = vpack.c.bf16 %v1337, %v1336
      %v1375 = vpack.c.bf16 %v1339, %v1338
      %v1376 = vpack.c.bf16 %v1341, %v1340
      %v1377 = vpack.c.bf16 %v1343, %v1342
      %v1378 = vpack.c.bf16 %v1345, %v1344
      %v1379 = vpack.c.bf16 %v1347, %v1346
      %vm1380 = vcmask 261120
      %1381 = vst.msk [vmem:[#allocation2] sm:$0xff] %vm1380, %v1348
      %1382 = vst.msk [vmem:[#allocation2 + $0x8] sm:$0xff] %vm1380, %v1349
      %1383 = vst.msk [vmem:[#allocation2 + $0x10] sm:$0xff] %vm1380, %v1350
      %1384 = vst.msk [vmem:[#allocation2 + $0x18] sm:$0xff] %vm1380, %v1351
      %1385 = vst.msk [vmem:[#allocation2 + $0x20] sm:$0xff] %vm1380, %v1352
      %1386 = vst.msk [vmem:[#allocation2 + $0x28] sm:$0xff] %vm1380, %v1353
      %1387 = vst.msk [vmem:[#allocation2 + $0x30] sm:$0xff] %vm1380, %v1354
      %1388 = vst.msk [vmem:[#allocation2 + $0x38] sm:$0xff] %vm1380, %v1355
      %1389 = vst.msk [vmem:[#allocation2 + $0x40] sm:$0xff] %vm1380, %v1356
      %1390 = vst.msk [vmem:[#allocation2 + $0x48] sm:$0xff] %vm1380, %v1357
      %1391 = vst.msk [vmem:[#allocation2 + $0x50] sm:$0xff] %vm1380, %v1358
      %1392 = vst.msk [vmem:[#allocation2 + $0x58] sm:$0xff] %vm1380, %v1359
      %1393 = vst.msk [vmem:[#allocation2 + $0x60] sm:$0xff] %vm1380, %v1360
      %1394 = vst.msk [vmem:[#allocation2 + $0x68] sm:$0xff] %vm1380, %v1361
      %1395 = vst.msk [vmem:[#allocation2 + $0x70] sm:$0xff] %vm1380, %v1362
      %1396 = vst.msk [vmem:[#allocation2 + $0x78] sm:$0xff] %vm1380, %v1363
      %1397 = vst.msk [vmem:[#allocation2 + $0x80] sm:$0xff] %vm1380, %v1364
      %1398 = vst.msk [vmem:[#allocation2 + $0x88] sm:$0xff] %vm1380, %v1365
      %1399 = vst.msk [vmem:[#allocation2 + $0x90] sm:$0xff] %vm1380, %v1366
      %1400 = vst.msk [vmem:[#allocation2 + $0x98] sm:$0xff] %vm1380, %v1367
      %1401 = vst.msk [vmem:[#allocation2 + $0xa0] sm:$0xff] %vm1380, %v1368
      %1402 = vst.msk [vmem:[#allocation2 + $0xa8] sm:$0xff] %vm1380, %v1369
      %1403 = vst.msk [vmem:[#allocation2 + $0xb0] sm:$0xff] %vm1380, %v1370
      %1404 = vst.msk [vmem:[#allocation2 + $0xb8] sm:$0xff] %vm1380, %v1371
      %1405 = vst.msk [vmem:[#allocation2 + $0xc0] sm:$0xff] %vm1380, %v1372
      %1406 = vst.msk [vmem:[#allocation2 + $0xc8] sm:$0xff] %vm1380, %v1373
      %1407 = vst.msk [vmem:[#allocation2 + $0xd0] sm:$0xff] %vm1380, %v1374
      %1408 = vst.msk [vmem:[#allocation2 + $0xd8] sm:$0xff] %vm1380, %v1375
      %1409 = vst.msk [vmem:[#allocation2 + $0xe0] sm:$0xff] %vm1380, %v1376
      %1410 = vst.msk [vmem:[#allocation2 + $0xe8] sm:$0xff] %vm1380, %v1377
      %1411 = vst.msk [vmem:[#allocation2 + $0xf0] sm:$0xff] %vm1380, %v1378
      %1412 = vst.msk [vmem:[#allocation2 + $0xf8] sm:$0xff] %vm1380, %v1379
      %1413 = vset.pattern.permute.xlu0 1
      %1414 = vperm.xlu0 %1413, %v418
      %v1415 = vpop.permute.xlu0 %1414
      %1417 = vset.pattern.permute.xlu0 1
      %1418 = vperm.xlu0 %1417, %v419
      %v1419 = vpop.permute.xlu0 %1418
      %1421 = vset.pattern.permute.xlu0 1
      %1422 = vperm.xlu0 %1421, %v420
      %v1423 = vpop.permute.xlu0 %1422
      %1425 = vset.pattern.permute.xlu0 1
      %1426 = vperm.xlu0 %1425, %v421
      %v1427 = vpop.permute.xlu0 %1426
      %1429 = vset.pattern.permute.xlu0 1
      %1430 = vperm.xlu0 %1429, %v422
      %v1431 = vpop.permute.xlu0 %1430
      %1433 = vset.pattern.permute.xlu0 1
      %1434 = vperm.xlu0 %1433, %v423
      %v1435 = vpop.permute.xlu0 %1434
      %1437 = vset.pattern.permute.xlu0 1
      %1438 = vperm.xlu0 %1437, %v424
      %v1439 = vpop.permute.xlu0 %1438
      %1441 = vset.pattern.permute.xlu0 1
      %1442 = vperm.xlu0 %1441, %v425
      %v1443 = vpop.permute.xlu0 %1442
      %1445 = vset.pattern.permute.xlu0 1
      %1446 = vperm.xlu0 %1445, %v426
      %v1447 = vpop.permute.xlu0 %1446
      %1449 = vset.pattern.permute.xlu0 1
      %1450 = vperm.xlu0 %1449, %v427
      %v1451 = vpop.permute.xlu0 %1450
      %1453 = vset.pattern.permute.xlu0 1
      %1454 = vperm.xlu0 %1453, %v428
      %v1455 = vpop.permute.xlu0 %1454
      %1457 = vset.pattern.permute.xlu0 1
      %1458 = vperm.xlu0 %1457, %v429
      %v1459 = vpop.permute.xlu0 %1458
      %1461 = vset.pattern.permute.xlu0 1
      %1462 = vperm.xlu0 %1461, %v430
      %v1463 = vpop.permute.xlu0 %1462
      %1465 = vset.pattern.permute.xlu0 1
      %1466 = vperm.xlu0 %1465, %v431
      %v1467 = vpop.permute.xlu0 %1466
      %1469 = vset.pattern.permute.xlu0 1
      %1470 = vperm.xlu0 %1469, %v432
      %v1471 = vpop.permute.xlu0 %1470
      %1473 = vset.pattern.permute.xlu0 1
      %1474 = vperm.xlu0 %1473, %v433
      %v1475 = vpop.permute.xlu0 %1474
      %1477 = vset.pattern.permute.xlu0 1
      %1478 = vperm.xlu0 %1477, %v434
      %v1479 = vpop.permute.xlu0 %1478
      %1481 = vset.pattern.permute.xlu0 1
      %1482 = vperm.xlu0 %1481, %v435
      %v1483 = vpop.permute.xlu0 %1482
      %1485 = vset.pattern.permute.xlu0 1
      %1486 = vperm.xlu0 %1485, %v436
      %v1487 = vpop.permute.xlu0 %1486
      %1489 = vset.pattern.permute.xlu0 1
      %1490 = vperm.xlu0 %1489, %v437
      %v1491 = vpop.permute.xlu0 %1490
      %1493 = vset.pattern.permute.xlu0 1
      %1494 = vperm.xlu0 %1493, %v438
      %v1495 = vpop.permute.xlu0 %1494
      %1497 = vset.pattern.permute.xlu0 1
      %1498 = vperm.xlu0 %1497, %v439
      %v1499 = vpop.permute.xlu0 %1498
      %1501 = vset.pattern.permute.xlu0 1
      %1502 = vperm.xlu0 %1501, %v440
      %v1503 = vpop.permute.xlu0 %1502
      %1505 = vset.pattern.permute.xlu0 1
      %1506 = vperm.xlu0 %1505, %v441
      %v1507 = vpop.permute.xlu0 %1506
      %1509 = vset.pattern.permute.xlu0 1
      %1510 = vperm.xlu0 %1509, %v442
      %v1511 = vpop.permute.xlu0 %1510
      %1513 = vset.pattern.permute.xlu0 1
      %1514 = vperm.xlu0 %1513, %v443
      %v1515 = vpop.permute.xlu0 %1514
      %1517 = vset.pattern.permute.xlu0 1
      %1518 = vperm.xlu0 %1517, %v444
      %v1519 = vpop.permute.xlu0 %1518
      %1521 = vset.pattern.permute.xlu0 1
      %1522 = vperm.xlu0 %1521, %v445
      %v1523 = vpop.permute.xlu0 %1522
      %1525 = vset.pattern.permute.xlu0 1
      %1526 = vperm.xlu0 %1525, %v446
      %v1527 = vpop.permute.xlu0 %1526
      %1529 = vset.pattern.permute.xlu0 1
      %1530 = vperm.xlu0 %1529, %v447
      %v1531 = vpop.permute.xlu0 %1530
      %1533 = vset.pattern.permute.xlu0 1
      %1534 = vperm.xlu0 %1533, %v448
      %v1535 = vpop.permute.xlu0 %1534
      %1537 = vset.pattern.permute.xlu0 1
      %1538 = vperm.xlu0 %1537, %v449
      %v1539 = vpop.permute.xlu0 %1538
      %1541 = vset.pattern.permute.xlu0 1
      %1542 = vperm.xlu0 %1541, %v450
      %v1543 = vpop.permute.xlu0 %1542
      %1545 = vset.pattern.permute.xlu0 1
      %1546 = vperm.xlu0 %1545, %v451
      %v1547 = vpop.permute.xlu0 %1546
      %1549 = vset.pattern.permute.xlu0 1
      %1550 = vperm.xlu0 %1549, %v452
      %v1551 = vpop.permute.xlu0 %1550
      %1553 = vset.pattern.permute.xlu0 1
      %1554 = vperm.xlu0 %1553, %v453
      %v1555 = vpop.permute.xlu0 %1554
      %1557 = vset.pattern.permute.xlu0 1
      %1558 = vperm.xlu0 %1557, %v454
      %v1559 = vpop.permute.xlu0 %1558
      %1561 = vset.pattern.permute.xlu0 1
      %1562 = vperm.xlu0 %1561, %v455
      %v1563 = vpop.permute.xlu0 %1562
      %1565 = vset.pattern.permute.xlu0 1
      %1566 = vperm.xlu0 %1565, %v456
      %v1567 = vpop.permute.xlu0 %1566
      %1569 = vset.pattern.permute.xlu0 1
      %1570 = vperm.xlu0 %1569, %v457
      %v1571 = vpop.permute.xlu0 %1570
      %1573 = vset.pattern.permute.xlu0 1
      %1574 = vperm.xlu0 %1573, %v458
      %v1575 = vpop.permute.xlu0 %1574
      %1577 = vset.pattern.permute.xlu0 1
      %1578 = vperm.xlu0 %1577, %v459
      %v1579 = vpop.permute.xlu0 %1578
      %1581 = vset.pattern.permute.xlu0 1
      %1582 = vperm.xlu0 %1581, %v460
      %v1583 = vpop.permute.xlu0 %1582
      %1585 = vset.pattern.permute.xlu0 1
      %1586 = vperm.xlu0 %1585, %v461
      %v1587 = vpop.permute.xlu0 %1586
      %1589 = vset.pattern.permute.xlu0 1
      %1590 = vperm.xlu0 %1589, %v462
      %v1591 = vpop.permute.xlu0 %1590
      %1593 = vset.pattern.permute.xlu0 1
      %1594 = vperm.xlu0 %1593, %v463
      %v1595 = vpop.permute.xlu0 %1594
      %1597 = vset.pattern.permute.xlu0 1
      %1598 = vperm.xlu0 %1597, %v464
      %v1599 = vpop.permute.xlu0 %1598
      %1601 = vset.pattern.permute.xlu0 1
      %1602 = vperm.xlu0 %1601, %v465
      %v1603 = vpop.permute.xlu0 %1602
      %1605 = vset.pattern.permute.xlu0 1
      %1606 = vperm.xlu0 %1605, %v466
      %v1607 = vpop.permute.xlu0 %1606
      %1609 = vset.pattern.permute.xlu0 1
      %1610 = vperm.xlu0 %1609, %v467
      %v1611 = vpop.permute.xlu0 %1610
      %1613 = vset.pattern.permute.xlu0 1
      %1614 = vperm.xlu0 %1613, %v468
      %v1615 = vpop.permute.xlu0 %1614
      %1617 = vset.pattern.permute.xlu0 1
      %1618 = vperm.xlu0 %1617, %v469
      %v1619 = vpop.permute.xlu0 %1618
      %1621 = vset.pattern.permute.xlu0 1
      %1622 = vperm.xlu0 %1621, %v470
      %v1623 = vpop.permute.xlu0 %1622
      %1625 = vset.pattern.permute.xlu0 1
      %1626 = vperm.xlu0 %1625, %v471
      %v1627 = vpop.permute.xlu0 %1626
      %1629 = vset.pattern.permute.xlu0 1
      %1630 = vperm.xlu0 %1629, %v472
      %v1631 = vpop.permute.xlu0 %1630
      %1633 = vset.pattern.permute.xlu0 1
      %1634 = vperm.xlu0 %1633, %v473
      %v1635 = vpop.permute.xlu0 %1634
      %1637 = vset.pattern.permute.xlu0 1
      %1638 = vperm.xlu0 %1637, %v474
      %v1639 = vpop.permute.xlu0 %1638
      %1641 = vset.pattern.permute.xlu0 1
      %1642 = vperm.xlu0 %1641, %v475
      %v1643 = vpop.permute.xlu0 %1642
      %1645 = vset.pattern.permute.xlu0 1
      %1646 = vperm.xlu0 %1645, %v476
      %v1647 = vpop.permute.xlu0 %1646
      %1649 = vset.pattern.permute.xlu0 1
      %1650 = vperm.xlu0 %1649, %v477
      %v1651 = vpop.permute.xlu0 %1650
      %1653 = vset.pattern.permute.xlu0 1
      %1654 = vperm.xlu0 %1653, %v478
      %v1655 = vpop.permute.xlu0 %1654
      %1657 = vset.pattern.permute.xlu0 1
      %1658 = vperm.xlu0 %1657, %v479
      %v1659 = vpop.permute.xlu0 %1658
      %1661 = vset.pattern.permute.xlu0 1
      %1662 = vperm.xlu0 %1661, %v480
      %v1663 = vpop.permute.xlu0 %1662
      %1665 = vset.pattern.permute.xlu0 1
      %1666 = vperm.xlu0 %1665, %v481
      %v1667 = vpop.permute.xlu0 %1666
      %v1669 = vmul.f32 %v710, %v1415
      %v1670 = vmul.f32 %v713, %v1419
      %v1671 = vmul.f32 %v718, %v1423
      %v1672 = vmul.f32 %v721, %v1427
      %v1673 = vmul.f32 %v726, %v1431
      %v1674 = vmul.f32 %v729, %v1435
      %v1675 = vmul.f32 %v734, %v1439
      %v1676 = vmul.f32 %v737, %v1443
      %v1677 = vmul.f32 %v742, %v1447
      %v1678 = vmul.f32 %v745, %v1451
      %v1679 = vmul.f32 %v750, %v1455
      %v1680 = vmul.f32 %v753, %v1459
      %v1681 = vmul.f32 %v758, %v1463
      %v1682 = vmul.f32 %v761, %v1467
      %v1683 = vmul.f32 %v766, %v1471
      %v1684 = vmul.f32 %v769, %v1475
      %v1685 = vmul.f32 %v774, %v1479
      %v1686 = vmul.f32 %v777, %v1483
      %v1687 = vmul.f32 %v782, %v1487
      %v1688 = vmul.f32 %v785, %v1491
      %v1689 = vmul.f32 %v790, %v1495
      %v1690 = vmul.f32 %v793, %v1499
      %v1691 = vmul.f32 %v798, %v1503
      %v1692 = vmul.f32 %v801, %v1507
      %v1693 = vmul.f32 %v806, %v1511
      %v1694 = vmul.f32 %v809, %v1515
      %v1695 = vmul.f32 %v814, %v1519
      %v1696 = vmul.f32 %v817, %v1523
      %v1697 = vmul.f32 %v822, %v1527
      %v1698 = vmul.f32 %v825, %v1531
      %v1699 = vmul.f32 %v830, %v1535
      %v1700 = vmul.f32 %v833, %v1539
      %v1701 = vmul.f32 %v838, %v1543
      %v1702 = vmul.f32 %v841, %v1547
      %v1703 = vmul.f32 %v846, %v1551
      %v1704 = vmul.f32 %v849, %v1555
      %v1705 = vmul.f32 %v854, %v1559
      %v1706 = vmul.f32 %v857, %v1563
      %v1707 = vmul.f32 %v862, %v1567
      %v1708 = vmul.f32 %v865, %v1571
      %v1709 = vmul.f32 %v870, %v1575
      %v1710 = vmul.f32 %v873, %v1579
      %v1711 = vmul.f32 %v878, %v1583
      %v1712 = vmul.f32 %v881, %v1587
      %v1713 = vmul.f32 %v886, %v1591
      %v1714 = vmul.f32 %v889, %v1595
      %v1715 = vmul.f32 %v894, %v1599
      %v1716 = vmul.f32 %v897, %v1603
      %v1717 = vmul.f32 %v902, %v1607
      %v1718 = vmul.f32 %v905, %v1611
      %v1719 = vmul.f32 %v910, %v1615
      %v1720 = vmul.f32 %v913, %v1619
      %v1721 = vmul.f32 %v918, %v1623
      %v1722 = vmul.f32 %v921, %v1627
      %v1723 = vmul.f32 %v926, %v1631
      %v1724 = vmul.f32 %v929, %v1635
      %v1725 = vmul.f32 %v934, %v1639
      %v1726 = vmul.f32 %v937, %v1643
      %v1727 = vmul.f32 %v942, %v1647
      %v1728 = vmul.f32 %v945, %v1651
      %v1729 = vmul.f32 %v950, %v1655
      %v1730 = vmul.f32 %v953, %v1659
      %v1731 = vmul.f32 %v958, %v1663
      %v1732 = vmul.f32 %v961, %v1667
      %v1733 = vpack.c.bf16 %v1670, %v1669
      %v1734 = vpack.c.bf16 %v1672, %v1671
      %v1735 = vpack.c.bf16 %v1674, %v1673
      %v1736 = vpack.c.bf16 %v1676, %v1675
      %v1737 = vpack.c.bf16 %v1678, %v1677
      %v1738 = vpack.c.bf16 %v1680, %v1679
      %v1739 = vpack.c.bf16 %v1682, %v1681
      %v1740 = vpack.c.bf16 %v1684, %v1683
      %v1741 = vpack.c.bf16 %v1686, %v1685
      %v1742 = vpack.c.bf16 %v1688, %v1687
      %v1743 = vpack.c.bf16 %v1690, %v1689
      %v1744 = vpack.c.bf16 %v1692, %v1691
      %v1745 = vpack.c.bf16 %v1694, %v1693
      %v1746 = vpack.c.bf16 %v1696, %v1695
      %v1747 = vpack.c.bf16 %v1698, %v1697
      %v1748 = vpack.c.bf16 %v1700, %v1699
      %v1749 = vpack.c.bf16 %v1702, %v1701
      %v1750 = vpack.c.bf16 %v1704, %v1703
      %v1751 = vpack.c.bf16 %v1706, %v1705
      %v1752 = vpack.c.bf16 %v1708, %v1707
      %v1753 = vpack.c.bf16 %v1710, %v1709
      %v1754 = vpack.c.bf16 %v1712, %v1711
      %v1755 = vpack.c.bf16 %v1714, %v1713
      %v1756 = vpack.c.bf16 %v1716, %v1715
      %v1757 = vpack.c.bf16 %v1718, %v1717
      %v1758 = vpack.c.bf16 %v1720, %v1719
      %v1759 = vpack.c.bf16 %v1722, %v1721
      %v1760 = vpack.c.bf16 %v1724, %v1723
      %v1761 = vpack.c.bf16 %v1726, %v1725
      %v1762 = vpack.c.bf16 %v1728, %v1727
      %v1763 = vpack.c.bf16 %v1730, %v1729
      %v1764 = vpack.c.bf16 %v1732, %v1731
      %1797 = vrot.lane.b32.xlu0 %v1733, 96
      %v1798 = vpop.permute.xlu0 %1797
      %1799 = vrot.lane.b32.xlu0 %v1734, 96
      %v1800 = vpop.permute.xlu0 %1799
      %1801 = vrot.lane.b32.xlu0 %v1735, 96
      %v1802 = vpop.permute.xlu0 %1801
      %1803 = vrot.lane.b32.xlu0 %v1736, 96
      %v1804 = vpop.permute.xlu0 %1803
      %1805 = vrot.lane.b32.xlu0 %v1737, 96
      %v1806 = vpop.permute.xlu0 %1805
      %1807 = vrot.lane.b32.xlu0 %v1738, 96
      %v1808 = vpop.permute.xlu0 %1807
      %1809 = vrot.lane.b32.xlu0 %v1739, 96
      %v1810 = vpop.permute.xlu0 %1809
      %1811 = vrot.lane.b32.xlu0 %v1740, 96
      %v1812 = vpop.permute.xlu0 %1811
      %1813 = vrot.lane.b32.xlu0 %v1741, 96
      %v1814 = vpop.permute.xlu0 %1813
      %1815 = vrot.lane.b32.xlu0 %v1742, 96
      %v1816 = vpop.permute.xlu0 %1815
      %1817 = vrot.lane.b32.xlu0 %v1743, 96
      %v1818 = vpop.permute.xlu0 %1817
      %1819 = vrot.lane.b32.xlu0 %v1744, 96
      %v1820 = vpop.permute.xlu0 %1819
      %1821 = vrot.lane.b32.xlu0 %v1745, 96
      %v1822 = vpop.permute.xlu0 %1821
      %1823 = vrot.lane.b32.xlu0 %v1746, 96
      %v1824 = vpop.permute.xlu0 %1823
      %1825 = vrot.lane.b32.xlu0 %v1747, 96
      %v1826 = vpop.permute.xlu0 %1825
      %1827 = vrot.lane.b32.xlu0 %v1748, 96
      %v1828 = vpop.permute.xlu0 %1827
      %1829 = vrot.lane.b32.xlu0 %v1749, 96
      %v1830 = vpop.permute.xlu0 %1829
      %1831 = vrot.lane.b32.xlu0 %v1750, 96
      %v1832 = vpop.permute.xlu0 %1831
      %1833 = vrot.lane.b32.xlu0 %v1751, 96
      %v1834 = vpop.permute.xlu0 %1833
      %1835 = vrot.lane.b32.xlu0 %v1752, 96
      %v1836 = vpop.permute.xlu0 %1835
      %1837 = vrot.lane.b32.xlu0 %v1753, 96
      %v1838 = vpop.permute.xlu0 %1837
      %1839 = vrot.lane.b32.xlu0 %v1754, 96
      %v1840 = vpop.permute.xlu0 %1839
      %1841 = vrot.lane.b32.xlu0 %v1755, 96
      %v1842 = vpop.permute.xlu0 %1841
      %1843 = vrot.lane.b32.xlu0 %v1756, 96
      %v1844 = vpop.permute.xlu0 %1843
      %1845 = vrot.lane.b32.xlu0 %v1757, 96
      %v1846 = vpop.permute.xlu0 %1845
      %1847 = vrot.lane.b32.xlu0 %v1758, 96
      %v1848 = vpop.permute.xlu0 %1847
      %1849 = vrot.lane.b32.xlu0 %v1759, 96
      %v1850 = vpop.permute.xlu0 %1849
      %1851 = vrot.lane.b32.xlu0 %v1760, 96
      %v1852 = vpop.permute.xlu0 %1851
      %1853 = vrot.lane.b32.xlu0 %v1761, 96
      %v1854 = vpop.permute.xlu0 %1853
      %1855 = vrot.lane.b32.xlu0 %v1762, 96
      %v1856 = vpop.permute.xlu0 %1855
      %1857 = vrot.lane.b32.xlu0 %v1763, 96
      %v1858 = vpop.permute.xlu0 %1857
      %1859 = vrot.lane.b32.xlu0 %v1764, 96
      %v1860 = vpop.permute.xlu0 %1859
      %1893 = vst.msk [vmem:[#allocation3] sm:$0xff] %vm578, %v1798
      %1894 = vst.msk [vmem:[#allocation3 + $0x8] sm:$0xff] %vm578, %v1800
      %1895 = vst.msk [vmem:[#allocation3 + $0x10] sm:$0xff] %vm578, %v1802
      %1896 = vst.msk [vmem:[#allocation3 + $0x18] sm:$0xff] %vm578, %v1804
      %1897 = vst.msk [vmem:[#allocation3 + $0x20] sm:$0xff] %vm578, %v1806
      %1898 = vst.msk [vmem:[#allocation3 + $0x28] sm:$0xff] %vm578, %v1808
      %1899 = vst.msk [vmem:[#allocation3 + $0x30] sm:$0xff] %vm578, %v1810
      %1900 = vst.msk [vmem:[#allocation3 + $0x38] sm:$0xff] %vm578, %v1812
      %1901 = vst.msk [vmem:[#allocation3 + $0x40] sm:$0xff] %vm578, %v1814
      %1902 = vst.msk [vmem:[#allocation3 + $0x48] sm:$0xff] %vm578, %v1816
      %1903 = vst.msk [vmem:[#allocation3 + $0x50] sm:$0xff] %vm578, %v1818
      %1904 = vst.msk [vmem:[#allocation3 + $0x58] sm:$0xff] %vm578, %v1820
      %1905 = vst.msk [vmem:[#allocation3 + $0x60] sm:$0xff] %vm578, %v1822
      %1906 = vst.msk [vmem:[#allocation3 + $0x68] sm:$0xff] %vm578, %v1824
      %1907 = vst.msk [vmem:[#allocation3 + $0x70] sm:$0xff] %vm578, %v1826
      %1908 = vst.msk [vmem:[#allocation3 + $0x78] sm:$0xff] %vm578, %v1828
      %1909 = vst.msk [vmem:[#allocation3 + $0x80] sm:$0xff] %vm578, %v1830
      %1910 = vst.msk [vmem:[#allocation3 + $0x88] sm:$0xff] %vm578, %v1832
      %1911 = vst.msk [vmem:[#allocation3 + $0x90] sm:$0xff] %vm578, %v1834
      %1912 = vst.msk [vmem:[#allocation3 + $0x98] sm:$0xff] %vm578, %v1836
      %1913 = vst.msk [vmem:[#allocation3 + $0xa0] sm:$0xff] %vm578, %v1838
      %1914 = vst.msk [vmem:[#allocation3 + $0xa8] sm:$0xff] %vm578, %v1840
      %1915 = vst.msk [vmem:[#allocation3 + $0xb0] sm:$0xff] %vm578, %v1842
      %1916 = vst.msk [vmem:[#allocation3 + $0xb8] sm:$0xff] %vm578, %v1844
      %1917 = vst.msk [vmem:[#allocation3 + $0xc0] sm:$0xff] %vm578, %v1846
      %1918 = vst.msk [vmem:[#allocation3 + $0xc8] sm:$0xff] %vm578, %v1848
      %1919 = vst.msk [vmem:[#allocation3 + $0xd0] sm:$0xff] %vm578, %v1850
      %1920 = vst.msk [vmem:[#allocation3 + $0xd8] sm:$0xff] %vm578, %v1852
      %1921 = vst.msk [vmem:[#allocation3 + $0xe0] sm:$0xff] %vm578, %v1854
      %1922 = vst.msk [vmem:[#allocation3 + $0xe8] sm:$0xff] %vm578, %v1856
      %1923 = vst.msk [vmem:[#allocation3 + $0xf0] sm:$0xff] %vm578, %v1858
      %1924 = vst.msk [vmem:[#allocation3 + $0xf8] sm:$0xff] %vm578, %v1860
      %v1925 = vld [vmem:[%s375] sm:$0xff]
      %v1926 = vld [vmem:[%s375 + $0x8] sm:$0xff]
      %v1927 = vld [vmem:[%s375 + $0x10] sm:$0xff]
      %v1928 = vld [vmem:[%s375 + $0x18] sm:$0xff]
      %v1929 = vld [vmem:[%s375 + $0x20] sm:$0xff]
      %v1930 = vld [vmem:[%s375 + $0x28] sm:$0xff]
      %v1931 = vld [vmem:[%s375 + $0x30] sm:$0xff]
      %v1932 = vld [vmem:[%s375 + $0x38] sm:$0xff]
      %v1933 = vld [vmem:[%s375 + $0x40] sm:$0xff]
      %v1934 = vld [vmem:[%s375 + $0x48] sm:$0xff]
      %v1935 = vld [vmem:[%s375 + $0x50] sm:$0xff]
      %v1936 = vld [vmem:[%s375 + $0x58] sm:$0xff]
      %v1937 = vld [vmem:[%s375 + $0x60] sm:$0xff]
      %v1938 = vld [vmem:[%s375 + $0x68] sm:$0xff]
      %v1939 = vld [vmem:[%s375 + $0x70] sm:$0xff]
      %v1940 = vld [vmem:[%s375 + $0x78] sm:$0xff]
      %v1941 = vld [vmem:[%s375 + $0x80] sm:$0xff]
      %v1942 = vld [vmem:[%s375 + $0x88] sm:$0xff]
      %v1943 = vld [vmem:[%s375 + $0x90] sm:$0xff]
      %v1944 = vld [vmem:[%s375 + $0x98] sm:$0xff]
      %v1945 = vld [vmem:[%s375 + $0xa0] sm:$0xff]
      %v1946 = vld [vmem:[%s375 + $0xa8] sm:$0xff]
      %v1947 = vld [vmem:[%s375 + $0xb0] sm:$0xff]
      %v1948 = vld [vmem:[%s375 + $0xb8] sm:$0xff]
      %v1949 = vld [vmem:[%s375 + $0xc0] sm:$0xff]
      %v1950 = vld [vmem:[%s375 + $0xc8] sm:$0xff]
      %v1951 = vld [vmem:[%s375 + $0xd0] sm:$0xff]
      %v1952 = vld [vmem:[%s375 + $0xd8] sm:$0xff]
      %v1953 = vld [vmem:[%s375 + $0xe0] sm:$0xff]
      %v1954 = vld [vmem:[%s375 + $0xe8] sm:$0xff]
      %v1955 = vld [vmem:[%s375 + $0xf0] sm:$0xff]
      %v1956 = vld [vmem:[%s375 + $0xf8] sm:$0xff]
      %v1957 = vld [vmem:[%s375 + $0x100] sm:$0xff]
      %v1958 = vld [vmem:[%s375 + $0x108] sm:$0xff]
      %v1959 = vld [vmem:[%s375 + $0x110] sm:$0xff]
      %v1960 = vld [vmem:[%s375 + $0x118] sm:$0xff]
      %v1961 = vld [vmem:[%s375 + $0x120] sm:$0xff]
      %v1962 = vld [vmem:[%s375 + $0x128] sm:$0xff]
      %v1963 = vld [vmem:[%s375 + $0x130] sm:$0xff]
      %v1964 = vld [vmem:[%s375 + $0x138] sm:$0xff]
      %v1965 = vld [vmem:[%s375 + $0x140] sm:$0xff]
      %v1966 = vld [vmem:[%s375 + $0x148] sm:$0xff]
      %v1967 = vld [vmem:[%s375 + $0x150] sm:$0xff]
      %v1968 = vld [vmem:[%s375 + $0x158] sm:$0xff]
      %v1969 = vld [vmem:[%s375 + $0x160] sm:$0xff]
      %v1970 = vld [vmem:[%s375 + $0x168] sm:$0xff]
      %v1971 = vld [vmem:[%s375 + $0x170] sm:$0xff]
      %v1972 = vld [vmem:[%s375 + $0x178] sm:$0xff]
      %v1973 = vld [vmem:[%s375 + $0x180] sm:$0xff]
      %v1974 = vld [vmem:[%s375 + $0x188] sm:$0xff]
      %v1975 = vld [vmem:[%s375 + $0x190] sm:$0xff]
      %v1976 = vld [vmem:[%s375 + $0x198] sm:$0xff]
      %v1977 = vld [vmem:[%s375 + $0x1a0] sm:$0xff]
      %v1978 = vld [vmem:[%s375 + $0x1a8] sm:$0xff]
      %v1979 = vld [vmem:[%s375 + $0x1b0] sm:$0xff]
      %v1980 = vld [vmem:[%s375 + $0x1b8] sm:$0xff]
      %v1981 = vld [vmem:[%s375 + $0x1c0] sm:$0xff]
      %v1982 = vld [vmem:[%s375 + $0x1c8] sm:$0xff]
      %v1983 = vld [vmem:[%s375 + $0x1d0] sm:$0xff]
      %v1984 = vld [vmem:[%s375 + $0x1d8] sm:$0xff]
      %v1985 = vld [vmem:[%s375 + $0x1e0] sm:$0xff]
      %v1986 = vld [vmem:[%s375 + $0x1e8] sm:$0xff]
      %v1987 = vld [vmem:[%s375 + $0x1f0] sm:$0xff]
      %v1988 = vld [vmem:[%s375 + $0x1f8] sm:$0xff]
      %v1989 = vpack.c.bf16 %v1926, %v1925
      %v1990 = vpack.c.bf16 %v1928, %v1927
      %v1991 = vpack.c.bf16 %v1930, %v1929
      %v1992 = vpack.c.bf16 %v1932, %v1931
      %v1993 = vpack.c.bf16 %v1934, %v1933
      %v1994 = vpack.c.bf16 %v1936, %v1935
      %v1995 = vpack.c.bf16 %v1938, %v1937
      %v1996 = vpack.c.bf16 %v1940, %v1939
      %v1997 = vpack.c.bf16 %v1942, %v1941
      %v1998 = vpack.c.bf16 %v1944, %v1943
      %v1999 = vpack.c.bf16 %v1946, %v1945
      %v2000 = vpack.c.bf16 %v1948, %v1947
      %v2001 = vpack.c.bf16 %v1950, %v1949
      %v2002 = vpack.c.bf16 %v1952, %v1951
      %v2003 = vpack.c.bf16 %v1954, %v1953
      %v2004 = vpack.c.bf16 %v1956, %v1955
      %v2005 = vpack.c.bf16 %v1958, %v1957
      %v2006 = vpack.c.bf16 %v1960, %v1959
      %v2007 = vpack.c.bf16 %v1962, %v1961
      %v2008 = vpack.c.bf16 %v1964, %v1963
      %v2009 = vpack.c.bf16 %v1966, %v1965
      %v2010 = vpack.c.bf16 %v1968, %v1967
      %v2011 = vpack.c.bf16 %v1970, %v1969
      %v2012 = vpack.c.bf16 %v1972, %v1971
      %v2013 = vpack.c.bf16 %v1974, %v1973
      %v2014 = vpack.c.bf16 %v1976, %v1975
      %v2015 = vpack.c.bf16 %v1978, %v1977
      %v2016 = vpack.c.bf16 %v1980, %v1979
      %v2017 = vpack.c.bf16 %v1982, %v1981
      %v2018 = vpack.c.bf16 %v1984, %v1983
      %v2019 = vpack.c.bf16 %v1986, %v1985
      %v2020 = vpack.c.bf16 %v1988, %v1987
      %v2021 = vlaneseq
      %v2022 = vshrl.u32 %v2021, 7
      %v2023 = vsub.s32 0, %v2022
      %v2024 = vrot.slane %v417, %v2023
      %v2026 = vsel %vm578, %v1989, 0
      %v2029 = vsel %vm578, %v1990, 0
      %v2032 = vsel %vm578, %v1991, 0
      %v2035 = vsel %vm578, %v1992, 0
      %v2038 = vsel %vm578, %v1993, 0
      %v2041 = vsel %vm578, %v1994, 0
      %v2044 = vsel %vm578, %v1995, 0
      %v2047 = vsel %vm578, %v1996, 0
      %v2050 = vsel %vm578, %v1997, 0
      %v2053 = vsel %vm578, %v1998, 0
      %v2056 = vsel %vm578, %v1999, 0
      %v2059 = vsel %vm578, %v2000, 0
      %v2062 = vsel %vm578, %v2001, 0
      %v2065 = vsel %vm578, %v2002, 0
      %v2068 = vsel %vm578, %v2003, 0
      %v2071 = vsel %vm578, %v2004, 0
      %v2074 = vsel %vm578, %v2005, 0
      %v2077 = vsel %vm578, %v2006, 0
      %v2080 = vsel %vm578, %v2007, 0
      %v2083 = vsel %vm578, %v2008, 0
      %v2086 = vsel %vm578, %v2009, 0
      %v2089 = vsel %vm578, %v2010, 0
      %v2092 = vsel %vm578, %v2011, 0
      %v2095 = vsel %vm578, %v2012, 0
      %v2098 = vsel %vm578, %v2013, 0
      %v2101 = vsel %vm578, %v2014, 0
      %v2104 = vsel %vm578, %v2015, 0
      %v2107 = vsel %vm578, %v2016, 0
      %v2110 = vsel %vm578, %v2017, 0
      %v2113 = vsel %vm578, %v2018, 0
      %v2116 = vsel %vm578, %v2019, 0
      %v2119 = vsel %vm578, %v2020, 0
      %2121 = vmatprep.subr.bf16.mxu0 0
      %2122 = vmatpush1.bf16.msra.mxu0 %v415
      %2123 = vmatprep.subr.bf16.mxu0 0
      %2124 = vmatpush1.bf16.msra.mxu0 0
      %2125 = vmatprep.subr.bf16.mxu0 0
      %2126 = vmatpush1.bf16.msra.mxu0 0
      %2127 = vmatprep.subr.bf16.mxu0 0
      %2128 = vmatpush1.bf16.msra.mxu0 0
      %2129 = vmatprep.subr.bf16.mxu0 0
      %2130 = vmatpush1.bf16.msra.mxu0 0
      %2131 = vmatprep.subr.bf16.mxu0 0
      %2132 = vmatpush1.bf16.msra.mxu0 0
      %2133 = vmatprep.subr.bf16.mxu0 0
      %2134 = vmatpush1.bf16.msra.mxu0 0
      %2135 = vmatprep.subr.bf16.mxu0 0
      %2136 = vmatpush1.bf16.msra.mxu0 0
      %2137 = vmatprep.subr.bf16.mxu0 0
      %2138 = vmatpush1.bf16.msra.mxu0 0
      %2139 = vmatprep.subr.bf16.mxu0 0
      %2140 = vmatpush1.bf16.msra.mxu0 0
      %2141 = vmatprep.subr.bf16.mxu0 0
      %2142 = vmatpush1.bf16.msra.mxu0 0
      %2143 = vmatprep.subr.bf16.mxu0 0
      %2144 = vmatpush1.bf16.msra.mxu0 0
      %2145 = vmatprep.subr.bf16.mxu0 0
      %2146 = vmatpush1.bf16.msra.mxu0 0
      %2147 = vmatprep.subr.bf16.mxu0 0
      %2148 = vmatpush1.bf16.msra.mxu0 0
      %2149 = vmatprep.subr.bf16.mxu0 0
      %2150 = vmatpush1.bf16.msra.mxu0 0
      %2151 = vmatprep.subr.bf16.mxu0 0
      %2152 = vmatpush1.bf16.msra.mxu0 0
      %2153 = vmatprep.mubr.bf16.mxu0 0
      %2154 = vmatmul.mubr.bf16.gmra.mrb[0].mxu0 %v2026
      %v2155 = vpop.f32.mrb[0].mxu0
      %v2156 = vadd.f32 %v2024, %v2155
      %v2157 = vpop.f32.mrb[0].mxu0
      %v2158 = vpop.f32.mrb[0].mxu0
      %v2159 = vadd.f32 %v2024, %v2158
      %v2160 = vpop.f32.mrb[0].mxu0
      %2161 = vmatprep.mubr.bf16.mxu0 0
      %2162 = vmatmul.mubr.bf16.gmra.mrb[0].mxu0 %v2029
      %v2163 = vpop.f32.mrb[0].mxu0
      %v2164 = vadd.f32 %v2024, %v2163
      %v2165 = vpop.f32.mrb[0].mxu0
      %v2166 = vpop.f32.mrb[0].mxu0
      %v2167 = vadd.f32 %v2024, %v2166
      %v2168 = vpop.f32.mrb[0].mxu0
      %2169 = vmatprep.mubr.bf16.mxu0 0
      %2170 = vmatmul.mubr.bf16.gmra.mrb[0].mxu0 %v2032
      %v2171 = vpop.f32.mrb[0].mxu0
      %v2172 = vadd.f32 %v2024, %v2171
      %v2173 = vpop.f32.mrb[0].mxu0
      %v2174 = vpop.f32.mrb[0].mxu0
      %v2175 = vadd.f32 %v2024, %v2174
      %v2176 = vpop.f32.mrb[0].mxu0
      %2177 = vmatprep.mubr.bf16.mxu0 0
      %2178 = vmatmul.mubr.bf16.gmra.mrb[0].mxu0 %v2035
      %v2179 = vpop.f32.mrb[0].mxu0
      %v2180 = vadd.f32 %v2024, %v2179
      %v2181 = vpop.f32.mrb[0].mxu0
      %v2182 = vpop.f32.mrb[0].mxu0
      %v2183 = vadd.f32 %v2024, %v2182
      %v2184 = vpop.f32.mrb[0].mxu0
      %2185 = vmatprep.mubr.bf16.mxu0 0
      %2186 = vmatmul.mubr.bf16.gmra.mrb[0].mxu0 %v2038
      %v2187 = vpop.f32.mrb[0].mxu0
      %v2188 = vadd.f32 %v2024, %v2187
      %v2189 = vpop.f32.mrb[0].mxu0
      %v2190 = vpop.f32.mrb[0].mxu0
      %v2191 = vadd.f32 %v2024, %v2190
      %v2192 = vpop.f32.mrb[0].mxu0
      %2193 = vmatprep.mubr.bf16.mxu0 0
      %2194 = vmatmul.mubr.bf16.gmra.mrb[0].mxu0 %v2041
      %v2195 = vpop.f32.mrb[0].mxu0
      %v2196 = vadd.f32 %v2024, %v2195
      %v2197 = vpop.f32.mrb[0].mxu0
      %v2198 = vpop.f32.mrb[0].mxu0
      %v2199 = vadd.f32 %v2024, %v2198
      %v2200 = vpop.f32.mrb[0].mxu0
      %2201 = vmatprep.mubr.bf16.mxu0 0
      %2202 = vmatmul.mubr.bf16.gmra.mrb[0].mxu0 %v2044
      %v2203 = vpop.f32.mrb[0].mxu0
      %v2204 = vadd.f32 %v2024, %v2203
      %v2205 = vpop.f32.mrb[0].mxu0
      %v2206 = vpop.f32.mrb[0].mxu0
      %v2207 = vadd.f32 %v2024, %v2206
      %v2208 = vpop.f32.mrb[0].mxu0
      %2209 = vmatprep.mubr.bf16.mxu0 0
      %2210 = vmatmul.mubr.bf16.gmra.mrb[0].mxu0 %v2047
      %v2211 = vpop.f32.mrb[0].mxu0
      %v2212 = vadd.f32 %v2024, %v2211
      %v2213 = vpop.f32.mrb[0].mxu0
      %v2214 = vpop.f32.mrb[0].mxu0
      %v2215 = vadd.f32 %v2024, %v2214
      %v2216 = vpop.f32.mrb[0].mxu0
      %2217 = vmatprep.mubr.bf16.mxu0 0
      %2218 = vmatmul.mubr.bf16.gmra.mrb[0].mxu0 %v2050
      %v2219 = vpop.f32.mrb[0].mxu0
      %v2220 = vadd.f32 %v2024, %v2219
      %v2221 = vpop.f32.mrb[0].mxu0
      %v2222 = vpop.f32.mrb[0].mxu0
      %v2223 = vadd.f32 %v2024, %v2222
      %v2224 = vpop.f32.mrb[0].mxu0
      %2225 = vmatprep.mubr.bf16.mxu0 0
      %2226 = vmatmul.mubr.bf16.gmra.mrb[0].mxu0 %v2053
      %v2227 = vpop.f32.mrb[0].mxu0
      %v2228 = vadd.f32 %v2024, %v2227
      %v2229 = vpop.f32.mrb[0].mxu0
      %v2230 = vpop.f32.mrb[0].mxu0
      %v2231 = vadd.f32 %v2024, %v2230
      %v2232 = vpop.f32.mrb[0].mxu0
      %2233 = vmatprep.mubr.bf16.mxu0 0
      %2234 = vmatmul.mubr.bf16.gmra.mrb[0].mxu0 %v2056
      %v2235 = vpop.f32.mrb[0].mxu0
      %v2236 = vadd.f32 %v2024, %v2235
      %v2237 = vpop.f32.mrb[0].mxu0
      %v2238 = vpop.f32.mrb[0].mxu0
      %v2239 = vadd.f32 %v2024, %v2238
      %v2240 = vpop.f32.mrb[0].mxu0
      %2241 = vmatprep.mubr.bf16.mxu0 0
      %2242 = vmatmul.mubr.bf16.gmra.mrb[0].mxu0 %v2059
      %v2243 = vpop.f32.mrb[0].mxu0
      %v2244 = vadd.f32 %v2024, %v2243
      %v2245 = vpop.f32.mrb[0].mxu0
      %v2246 = vpop.f32.mrb[0].mxu0
      %v2247 = vadd.f32 %v2024, %v2246
      %v2248 = vpop.f32.mrb[0].mxu0
      %2249 = vmatprep.mubr.bf16.mxu0 0
      %2250 = vmatmul.mubr.bf16.gmra.mrb[0].mxu0 %v2062
      %v2251 = vpop.f32.mrb[0].mxu0
      %v2252 = vadd.f32 %v2024, %v2251
      %v2253 = vpop.f32.mrb[0].mxu0
      %v2254 = vpop.f32.mrb[0].mxu0
      %v2255 = vadd.f32 %v2024, %v2254
      %v2256 = vpop.f32.mrb[0].mxu0
      %2257 = vmatprep.mubr.bf16.mxu0 0
      %2258 = vmatmul.mubr.bf16.gmra.mrb[0].mxu0 %v2065
      %v2259 = vpop.f32.mrb[0].mxu0
      %v2260 = vadd.f32 %v2024, %v2259
      %v2261 = vpop.f32.mrb[0].mxu0
      %v2262 = vpop.f32.mrb[0].mxu0
      %v2263 = vadd.f32 %v2024, %v2262
      %v2264 = vpop.f32.mrb[0].mxu0
      %2265 = vmatprep.mubr.bf16.mxu0 0
      %2266 = vmatmul.mubr.bf16.gmra.mrb[0].mxu0 %v2068
      %v2267 = vpop.f32.mrb[0].mxu0
      %v2268 = vadd.f32 %v2024, %v2267
      %v2269 = vpop.f32.mrb[0].mxu0
      %v2270 = vpop.f32.mrb[0].mxu0
      %v2271 = vadd.f32 %v2024, %v2270
      %v2272 = vpop.f32.mrb[0].mxu0
      %2273 = vmatprep.mubr.bf16.mxu0 0
      %2274 = vmatmul.mubr.bf16.gmra.mrb[0].mxu0 %v2071
      %v2275 = vpop.f32.mrb[0].mxu0
      %v2276 = vadd.f32 %v2024, %v2275
      %v2277 = vpop.f32.mrb[0].mxu0
      %v2278 = vpop.f32.mrb[0].mxu0
      %v2279 = vadd.f32 %v2024, %v2278
      %v2280 = vpop.f32.mrb[0].mxu0
      %2281 = vmatprep.mubr.bf16.mxu0 0
      %2282 = vmatmul.mubr.bf16.gmra.mrb[0].mxu0 %v2074
      %v2283 = vpop.f32.mrb[0].mxu0
      %v2284 = vadd.f32 %v2024, %v2283
      %v2285 = vpop.f32.mrb[0].mxu0
      %v2286 = vpop.f32.mrb[0].mxu0
      %v2287 = vadd.f32 %v2024, %v2286
      %v2288 = vpop.f32.mrb[0].mxu0
      %2289 = vmatprep.mubr.bf16.mxu0 0
      %2290 = vmatmul.mubr.bf16.gmra.mrb[0].mxu0 %v2077
      %v2291 = vpop.f32.mrb[0].mxu0
      %v2292 = vadd.f32 %v2024, %v2291
      %v2293 = vpop.f32.mrb[0].mxu0
      %v2294 = vpop.f32.mrb[0].mxu0
      %v2295 = vadd.f32 %v2024, %v2294
      %v2296 = vpop.f32.mrb[0].mxu0
      %2297 = vmatprep.mubr.bf16.mxu0 0
      %2298 = vmatmul.mubr.bf16.gmra.mrb[0].mxu0 %v2080
      %v2299 = vpop.f32.mrb[0].mxu0
      %v2300 = vadd.f32 %v2024, %v2299
      %v2301 = vpop.f32.mrb[0].mxu0
      %v2302 = vpop.f32.mrb[0].mxu0
      %v2303 = vadd.f32 %v2024, %v2302
      %v2304 = vpop.f32.mrb[0].mxu0
      %2305 = vmatprep.mubr.bf16.mxu0 0
      %2306 = vmatmul.mubr.bf16.gmra.mrb[0].mxu0 %v2083
      %v2307 = vpop.f32.mrb[0].mxu0
      %v2308 = vadd.f32 %v2024, %v2307
      %v2309 = vpop.f32.mrb[0].mxu0
      %v2310 = vpop.f32.mrb[0].mxu0
      %v2311 = vadd.f32 %v2024, %v2310
      %v2312 = vpop.f32.mrb[0].mxu0
      %2313 = vmatprep.mubr.bf16.mxu0 0
      %2314 = vmatmul.mubr.bf16.gmra.mrb[0].mxu0 %v2086
      %v2315 = vpop.f32.mrb[0].mxu0
      %v2316 = vadd.f32 %v2024, %v2315
      %v2317 = vpop.f32.mrb[0].mxu0
      %v2318 = vpop.f32.mrb[0].mxu0
      %v2319 = vadd.f32 %v2024, %v2318
      %v2320 = vpop.f32.mrb[0].mxu0
      %2321 = vmatprep.mubr.bf16.mxu0 0
      %2322 = vmatmul.mubr.bf16.gmra.mrb[0].mxu0 %v2089
      %v2323 = vpop.f32.mrb[0].mxu0
      %v2324 = vadd.f32 %v2024, %v2323
      %v2325 = vpop.f32.mrb[0].mxu0
      %v2326 = vpop.f32.mrb[0].mxu0
      %v2327 = vadd.f32 %v2024, %v2326
      %v2328 = vpop.f32.mrb[0].mxu0
      %2329 = vmatprep.mubr.bf16.mxu0 0
      %2330 = vmatmul.mubr.bf16.gmra.mrb[0].mxu0 %v2092
      %v2331 = vpop.f32.mrb[0].mxu0
      %v2332 = vadd.f32 %v2024, %v2331
      %v2333 = vpop.f32.mrb[0].mxu0
      %v2334 = vpop.f32.mrb[0].mxu0
      %v2335 = vadd.f32 %v2024, %v2334
      %v2336 = vpop.f32.mrb[0].mxu0
      %2337 = vmatprep.mubr.bf16.mxu0 0
      %2338 = vmatmul.mubr.bf16.gmra.mrb[0].mxu0 %v2095
      %v2339 = vpop.f32.mrb[0].mxu0
      %v2340 = vadd.f32 %v2024, %v2339
      %v2341 = vpop.f32.mrb[0].mxu0
      %v2342 = vpop.f32.mrb[0].mxu0
      %v2343 = vadd.f32 %v2024, %v2342
      %v2344 = vpop.f32.mrb[0].mxu0
      %2345 = vmatprep.mubr.bf16.mxu0 0
      %2346 = vmatmul.mubr.bf16.gmra.mrb[0].mxu0 %v2098
      %v2347 = vpop.f32.mrb[0].mxu0
      %v2348 = vadd.f32 %v2024, %v2347
      %v2349 = vpop.f32.mrb[0].mxu0
      %v2350 = vpop.f32.mrb[0].mxu0
      %v2351 = vadd.f32 %v2024, %v2350
      %v2352 = vpop.f32.mrb[0].mxu0
      %2353 = vmatprep.mubr.bf16.mxu0 0
      %2354 = vmatmul.mubr.bf16.gmra.mrb[0].mxu0 %v2101
      %v2355 = vpop.f32.mrb[0].mxu0
      %v2356 = vadd.f32 %v2024, %v2355
      %v2357 = vpop.f32.mrb[0].mxu0
      %v2358 = vpop.f32.mrb[0].mxu0
      %v2359 = vadd.f32 %v2024, %v2358
      %v2360 = vpop.f32.mrb[0].mxu0
      %2361 = vmatprep.mubr.bf16.mxu0 0
      %2362 = vmatmul.mubr.bf16.gmra.mrb[0].mxu0 %v2104
      %v2363 = vpop.f32.mrb[0].mxu0
      %v2364 = vadd.f32 %v2024, %v2363
      %v2365 = vpop.f32.mrb[0].mxu0
      %v2366 = vpop.f32.mrb[0].mxu0
      %v2367 = vadd.f32 %v2024, %v2366
      %v2368 = vpop.f32.mrb[0].mxu0
      %2369 = vmatprep.mubr.bf16.mxu0 0
      %2370 = vmatmul.mubr.bf16.gmra.mrb[0].mxu0 %v2107
      %v2371 = vpop.f32.mrb[0].mxu0
      %v2372 = vadd.f32 %v2024, %v2371
      %v2373 = vpop.f32.mrb[0].mxu0
      %v2374 = vpop.f32.mrb[0].mxu0
      %v2375 = vadd.f32 %v2024, %v2374
      %v2376 = vpop.f32.mrb[0].mxu0
      %2377 = vmatprep.mubr.bf16.mxu0 0
      %2378 = vmatmul.mubr.bf16.gmra.mrb[0].mxu0 %v2110
      %v2379 = vpop.f32.mrb[0].mxu0
      %v2380 = vadd.f32 %v2024, %v2379
      %v2381 = vpop.f32.mrb[0].mxu0
      %v2382 = vpop.f32.mrb[0].mxu0
      %v2383 = vadd.f32 %v2024, %v2382
      %v2384 = vpop.f32.mrb[0].mxu0
      %2385 = vmatprep.mubr.bf16.mxu0 0
      %2386 = vmatmul.mubr.bf16.gmra.mrb[0].mxu0 %v2113
      %v2387 = vpop.f32.mrb[0].mxu0
      %v2388 = vadd.f32 %v2024, %v2387
      %v2389 = vpop.f32.mrb[0].mxu0
      %v2390 = vpop.f32.mrb[0].mxu0
      %v2391 = vadd.f32 %v2024, %v2390
      %v2392 = vpop.f32.mrb[0].mxu0
      %2393 = vmatprep.mubr.bf16.mxu0 0
      %2394 = vmatmul.mubr.bf16.gmra.mrb[0].mxu0 %v2116
      %v2395 = vpop.f32.mrb[0].mxu0
      %v2396 = vadd.f32 %v2024, %v2395
      %v2397 = vpop.f32.mrb[0].mxu0
      %v2398 = vpop.f32.mrb[0].mxu0
      %v2399 = vadd.f32 %v2024, %v2398
      %v2400 = vpop.f32.mrb[0].mxu0
      %2401 = vmatprep.mubr.bf16.mxu0 0
      %2402 = vmatmul.mubr.bf16.gmra.mrb[0].mxu0 %v2119
      %v2403 = vpop.f32.mrb[0].mxu0
      %v2404 = vadd.f32 %v2024, %v2403
      %v2405 = vpop.f32.mrb[0].mxu0
      %v2406 = vpop.f32.mrb[0].mxu0
      %v2407 = vadd.f32 %v2024, %v2406
      %v2408 = vpop.f32.mrb[0].mxu0
      %2409 = vdwg.mxu0
      %2410 = vst.msk [vmem:[#allocation6] sm:$0xff] %vm578, %v2156
      %2411 = vst.msk [vmem:[#allocation6 + $0x8] sm:$0xff] %vm578, %v2159
      %2412 = vst.msk [vmem:[#allocation6 + $0x10] sm:$0xff] %vm578, %v2164
      %2413 = vst.msk [vmem:[#allocation6 + $0x18] sm:$0xff] %vm578, %v2167
      %2414 = vst.msk [vmem:[#allocation6 + $0x20] sm:$0xff] %vm578, %v2172
      %2415 = vst.msk [vmem:[#allocation6 + $0x28] sm:$0xff] %vm578, %v2175
      %2416 = vst.msk [vmem:[#allocation6 + $0x30] sm:$0xff] %vm578, %v2180
      %2417 = vst.msk [vmem:[#allocation6 + $0x38] sm:$0xff] %vm578, %v2183
      %2418 = vst.msk [vmem:[#allocation6 + $0x40] sm:$0xff] %vm578, %v2188
      %2419 = vst.msk [vmem:[#allocation6 + $0x48] sm:$0xff] %vm578, %v2191
      %2420 = vst.msk [vmem:[#allocation6 + $0x50] sm:$0xff] %vm578, %v2196
      %2421 = vst.msk [vmem:[#allocation6 + $0x58] sm:$0xff] %vm578, %v2199
      %2422 = vst.msk [vmem:[#allocation6 + $0x60] sm:$0xff] %vm578, %v2204
      %2423 = vst.msk [vmem:[#allocation6 + $0x68] sm:$0xff] %vm578, %v2207
      %2424 = vst.msk [vmem:[#allocation6 + $0x70] sm:$0xff] %vm578, %v2212
      %2425 = vst.msk [vmem:[#allocation6 + $0x78] sm:$0xff] %vm578, %v2215
      %2426 = vst.msk [vmem:[#allocation6 + $0x80] sm:$0xff] %vm578, %v2220
      %2427 = vst.msk [vmem:[#allocation6 + $0x88] sm:$0xff] %vm578, %v2223
      %2428 = vst.msk [vmem:[#allocation6 + $0x90] sm:$0xff] %vm578, %v2228
      %2429 = vst.msk [vmem:[#allocation6 + $0x98] sm:$0xff] %vm578, %v2231
      %2430 = vst.msk [vmem:[#allocation6 + $0xa0] sm:$0xff] %vm578, %v2236
      %2431 = vst.msk [vmem:[#allocation6 + $0xa8] sm:$0xff] %vm578, %v2239
      %2432 = vst.msk [vmem:[#allocation6 + $0xb0] sm:$0xff] %vm578, %v2244
      %2433 = vst.msk [vmem:[#allocation6 + $0xb8] sm:$0xff] %vm578, %v2247
      %2434 = vst.msk [vmem:[#allocation6 + $0xc0] sm:$0xff] %vm578, %v2252
      %2435 = vst.msk [vmem:[#allocation6 + $0xc8] sm:$0xff] %vm578, %v2255
      %2436 = vst.msk [vmem:[#allocation6 + $0xd0] sm:$0xff] %vm578, %v2260
      %2437 = vst.msk [vmem:[#allocation6 + $0xd8] sm:$0xff] %vm578, %v2263
      %2438 = vst.msk [vmem:[#allocation6 + $0xe0] sm:$0xff] %vm578, %v2268
      %2439 = vst.msk [vmem:[#allocation6 + $0xe8] sm:$0xff] %vm578, %v2271
      %2440 = vst.msk [vmem:[#allocation6 + $0xf0] sm:$0xff] %vm578, %v2276
      %2441 = vst.msk [vmem:[#allocation6 + $0xf8] sm:$0xff] %vm578, %v2279
      %2442 = vst.msk [vmem:[#allocation6 + $0x100] sm:$0xff] %vm578, %v2284
      %2443 = vst.msk [vmem:[#allocation6 + $0x108] sm:$0xff] %vm578, %v2287
      %2444 = vst.msk [vmem:[#allocation6 + $0x110] sm:$0xff] %vm578, %v2292
      %2445 = vst.msk [vmem:[#allocation6 + $0x118] sm:$0xff] %vm578, %v2295
      %2446 = vst.msk [vmem:[#allocation6 + $0x120] sm:$0xff] %vm578, %v2300
      %2447 = vst.msk [vmem:[#allocation6 + $0x128] sm:$0xff] %vm578, %v2303
      %2448 = vst.msk [vmem:[#allocation6 + $0x130] sm:$0xff] %vm578, %v2308
      %2449 = vst.msk [vmem:[#allocation6 + $0x138] sm:$0xff] %vm578, %v2311
      %2450 = vst.msk [vmem:[#allocation6 + $0x140] sm:$0xff] %vm578, %v2316
      %2451 = vst.msk [vmem:[#allocation6 + $0x148] sm:$0xff] %vm578, %v2319
      %2452 = vst.msk [vmem:[#allocation6 + $0x150] sm:$0xff] %vm578, %v2324
      %2453 = vst.msk [vmem:[#allocation6 + $0x158] sm:$0xff] %vm578, %v2327
      %2454 = vst.msk [vmem:[#allocation6 + $0x160] sm:$0xff] %vm578, %v2332
      %2455 = vst.msk [vmem:[#allocation6 + $0x168] sm:$0xff] %vm578, %v2335
      %2456 = vst.msk [vmem:[#allocation6 + $0x170] sm:$0xff] %vm578, %v2340
      %2457 = vst.msk [vmem:[#allocation6 + $0x178] sm:$0xff] %vm578, %v2343
      %2458 = vst.msk [vmem:[#allocation6 + $0x180] sm:$0xff] %vm578, %v2348
      %2459 = vst.msk [vmem:[#allocation6 + $0x188] sm:$0xff] %vm578, %v2351
      %2460 = vst.msk [vmem:[#allocation6 + $0x190] sm:$0xff] %vm578, %v2356
      %2461 = vst.msk [vmem:[#allocation6 + $0x198] sm:$0xff] %vm578, %v2359
      %2462 = vst.msk [vmem:[#allocation6 + $0x1a0] sm:$0xff] %vm578, %v2364
      %2463 = vst.msk [vmem:[#allocation6 + $0x1a8] sm:$0xff] %vm578, %v2367
      %2464 = vst.msk [vmem:[#allocation6 + $0x1b0] sm:$0xff] %vm578, %v2372
      %2465 = vst.msk [vmem:[#allocation6 + $0x1b8] sm:$0xff] %vm578, %v2375
      %2466 = vst.msk [vmem:[#allocation6 + $0x1c0] sm:$0xff] %vm578, %v2380
      %2467 = vst.msk [vmem:[#allocation6 + $0x1c8] sm:$0xff] %vm578, %v2383
      %2468 = vst.msk [vmem:[#allocation6 + $0x1d0] sm:$0xff] %vm578, %v2388
      %2469 = vst.msk [vmem:[#allocation6 + $0x1d8] sm:$0xff] %vm578, %v2391
      %2470 = vst.msk [vmem:[#allocation6 + $0x1e0] sm:$0xff] %vm578, %v2396
      %2471 = vst.msk [vmem:[#allocation6 + $0x1e8] sm:$0xff] %vm578, %v2399
      %2472 = vst.msk [vmem:[#allocation6 + $0x1f0] sm:$0xff] %vm578, %v2404
      %2473 = vst.msk [vmem:[#allocation6 + $0x1f8] sm:$0xff] %vm578, %v2407
      %v2474 = vld [vmem:[%s395] sm:$0xff]
      %v2475 = vld [vmem:[%s395 + $0x8] sm:$0xff]
      %v2476 = vld [vmem:[%s395 + $0x10] sm:$0xff]
      %v2477 = vld [vmem:[%s395 + $0x18] sm:$0xff]
      %v2478 = vld [vmem:[%s395 + $0x20] sm:$0xff]
      %v2479 = vld [vmem:[%s395 + $0x28] sm:$0xff]
      %v2480 = vld [vmem:[%s395 + $0x30] sm:$0xff]
      %v2481 = vld [vmem:[%s395 + $0x38] sm:$0xff]
      %v2482 = vld [vmem:[%s382] sm:$0xff]
      %v2483 = vld [vmem:[%s382 + $0x8] sm:$0xff]
      %v2484 = vld [vmem:[%s382 + $0x10] sm:$0xff]
      %v2485 = vld [vmem:[%s382 + $0x18] sm:$0xff]
      %v2486 = vld [vmem:[%s382 + $0x20] sm:$0xff]
      %v2487 = vld [vmem:[%s382 + $0x28] sm:$0xff]
      %v2488 = vld [vmem:[%s382 + $0x30] sm:$0xff]
      %v2489 = vld [vmem:[%s382 + $0x38] sm:$0xff]
      %v2490 = vpack.c.bf16 %v2483, %v2482
      %v2491 = vpack.c.bf16 %v2485, %v2484
      %v2492 = vpack.c.bf16 %v2487, %v2486
      %v2493 = vpack.c.bf16 %v2489, %v2488
      %v2494 = vld [vmem:[#allocation2] sm:$0xff]
      %v2495 = vld [vmem:[#allocation2 + $0x8] sm:$0xff]
      %v2496 = vld [vmem:[#allocation2 + $0x10] sm:$0xff]
      %v2497 = vld [vmem:[#allocation2 + $0x18] sm:$0xff]
      %vm2498 = vcmask 523264
      %v2500 = vsel %vm2498, %v2490, 0
      %v2503 = vsel %vm2498, %v2491, 0
      %v2506 = vsel %vm2498, %v2492, 0
      %v2509 = vsel %vm2498, %v2493, 0
      %2511 = vmatprep.subr.bf16.mxu0 0
      %2512 = vmatpush1.bf16.msra.mxu0 %v2494
      %2513 = vmatprep.subr.bf16.mxu0 0
      %2514 = vmatpush1.bf16.msra.mxu0 %v2495
      %2515 = vmatprep.subr.bf16.mxu0 0
      %2516 = vmatpush1.bf16.msra.mxu0 %v2496
      %2517 = vmatprep.subr.bf16.mxu0 0
      %2518 = vmatpush1.bf16.msra.mxu0 %v2497
      %2519 = vmatprep.subr.bf16.mxu0 0
      %2520 = vmatpush1.bf16.msra.mxu0 0
      %2521 = vmatprep.subr.bf16.mxu0 0
      %2522 = vmatpush1.bf16.msra.mxu0 0
      %2523 = vmatprep.subr.bf16.mxu0 0
      %2524 = vmatpush1.bf16.msra.mxu0 0
      %2525 = vmatprep.subr.bf16.mxu0 0
      %2526 = vmatpush1.bf16.msra.mxu0 0
      %2527 = vmatprep.subr.bf16.mxu0 0
      %2528 = vmatpush1.bf16.msra.mxu0 0
      %2529 = vmatprep.subr.bf16.mxu0 0
      %2530 = vmatpush1.bf16.msra.mxu0 0
      %2531 = vmatprep.subr.bf16.mxu0 0
      %2532 = vmatpush1.bf16.msra.mxu0 0
      %2533 = vmatprep.subr.bf16.mxu0 0
      %2534 = vmatpush1.bf16.msra.mxu0 0
      %2535 = vmatprep.subr.bf16.mxu0 0
      %2536 = vmatpush1.bf16.msra.mxu0 0
      %2537 = vmatprep.subr.bf16.mxu0 0
      %2538 = vmatpush1.bf16.msra.mxu0 0
      %2539 = vmatprep.subr.bf16.mxu0 0
      %2540 = vmatpush1.bf16.msra.mxu0 0
      %2541 = vmatprep.subr.bf16.mxu0 0
      %2542 = vmatpush1.bf16.msra.mxu0 0
      %2543 = vmatprep.mubr.bf16.mxu0 0
      %2544 = vmatmul.mubr.bf16.gmra.mrb[0].mxu0 %v2500
      %v2545 = vpop.f32.mrb[0].mxu0
      %v2546 = vadd.f32 0.0, %v2545
      %v2547 = vpop.f32.mrb[0].mxu0
      %v2548 = vpop.f32.mrb[0].mxu0
      %v2549 = vadd.f32 0.0, %v2548
      %v2550 = vpop.f32.mrb[0].mxu0
      %2551 = vmatprep.mubr.bf16.mxu0 0
      %2552 = vmatmul.mubr.bf16.gmra.mrb[0].mxu0 %v2503
      %v2553 = vpop.f32.mrb[0].mxu0
      %v2554 = vadd.f32 0.0, %v2553
      %v2555 = vpop.f32.mrb[0].mxu0
      %v2556 = vpop.f32.mrb[0].mxu0
      %v2557 = vadd.f32 0.0, %v2556
      %v2558 = vpop.f32.mrb[0].mxu0
      %2559 = vmatprep.mubr.bf16.mxu0 0
      %2560 = vmatmul.mubr.bf16.gmra.mrb[0].mxu0 %v2506
      %v2561 = vpop.f32.mrb[0].mxu0
      %v2562 = vadd.f32 0.0, %v2561
      %v2563 = vpop.f32.mrb[0].mxu0
      %v2564 = vpop.f32.mrb[0].mxu0
      %v2565 = vadd.f32 0.0, %v2564
      %v2566 = vpop.f32.mrb[0].mxu0
      %2567 = vmatprep.mubr.bf16.mxu0 0
      %2568 = vmatmul.mubr.bf16.gmra.mrb[0].mxu0 %v2509
      %v2569 = vpop.f32.mrb[0].mxu0
      %v2570 = vadd.f32 0.0, %v2569
      %v2571 = vpop.f32.mrb[0].mxu0
      %v2572 = vpop.f32.mrb[0].mxu0
      %v2573 = vadd.f32 0.0, %v2572
      %v2574 = vpop.f32.mrb[0].mxu0
      %2575 = vdwg.mxu0
      %2577 = vset.pattern.permute.xlu0 0
      %2578 = vperm.xlu0 %2577, %v2474
      %v2579 = vpop.permute.xlu0 %2578
      %2582 = vset.pattern.permute.xlu0 0
      %2583 = vperm.xlu0 %2582, %v2475
      %v2584 = vpop.permute.xlu0 %2583
      %2587 = vset.pattern.permute.xlu0 0
      %2588 = vperm.xlu0 %2587, %v2476
      %v2589 = vpop.permute.xlu0 %2588
      %2592 = vset.pattern.permute.xlu0 0
      %2593 = vperm.xlu0 %2592, %v2477
      %v2594 = vpop.permute.xlu0 %2593
      %2597 = vset.pattern.permute.xlu0 0
      %2598 = vperm.xlu0 %2597, %v2478
      %v2599 = vpop.permute.xlu0 %2598
      %2602 = vset.pattern.permute.xlu0 0
      %2603 = vperm.xlu0 %2602, %v2479
      %v2604 = vpop.permute.xlu0 %2603
      %2607 = vset.pattern.permute.xlu0 0
      %2608 = vperm.xlu0 %2607, %v2480
      %v2609 = vpop.permute.xlu0 %2608
      %2612 = vset.pattern.permute.xlu0 0
      %2613 = vperm.xlu0 %2612, %v2481
      %v2614 = vpop.permute.xlu0 %2613
      %v2616 = vmul.f32 %v2546, %v2579
      %v2617 = vmul.f32 %v2549, %v2584
      %v2618 = vmul.f32 %v2554, %v2589
      %v2619 = vmul.f32 %v2557, %v2594
      %v2620 = vmul.f32 %v2562, %v2599
      %v2621 = vmul.f32 %v2565, %v2604
      %v2622 = vmul.f32 %v2570, %v2609
      %v2623 = vmul.f32 %v2573, %v2614
      %v2624 = vlaneseq
      %v2625 = vshrl.u32 %v2624, 7
      %v2626 = vsub.s32 0, %v2625
      %v2627 = vrot.slane %v416, %v2626
      %v2628 = vadd.f32 %v2616, %v2627
      %v2629 = vadd.f32 %v2617, %v2627
      %v2630 = vadd.f32 %v2618, %v2627
      %v2631 = vadd.f32 %v2619, %v2627
      %v2632 = vadd.f32 %v2620, %v2627
      %v2633 = vadd.f32 %v2621, %v2627
      %v2634 = vadd.f32 %v2622, %v2627
      %v2635 = vadd.f32 %v2623, %v2627
      %v2636 = vmax.f32 %v2628, 0.0
      %v2637 = vmax.f32 %v2629, 0.0
      %v2638 = vmax.f32 %v2630, 0.0
      %v2639 = vmax.f32 %v2631, 0.0
      %v2640 = vmax.f32 %v2632, 0.0
      %v2641 = vmax.f32 %v2633, 0.0
      %v2642 = vmax.f32 %v2634, 0.0
      %v2643 = vmax.f32 %v2635, 0.0
      %v2644 = vmul.f32 %v2636, %v2579
      %v2645 = vmul.f32 %v2637, %v2584
      %v2646 = vmul.f32 %v2638, %v2589
      %v2647 = vmul.f32 %v2639, %v2594
      %v2648 = vmul.f32 %v2640, %v2599
      %v2649 = vmul.f32 %v2641, %v2604
      %v2650 = vmul.f32 %v2642, %v2609
      %v2651 = vmul.f32 %v2643, %v2614
      %v2652 = vpack.c.bf16 %v2645, %v2644
      %v2653 = vpack.c.bf16 %v2647, %v2646
      %v2654 = vpack.c.bf16 %v2649, %v2648
      %v2655 = vpack.c.bf16 %v2651, %v2650
      %2656 = vst.msk [vmem:[#allocation4] sm:$0xff] %vm1380, %v2652
      %2657 = vst.msk [vmem:[#allocation4 + $0x8] sm:$0xff] %vm1380, %v2653
      %2658 = vst.msk [vmem:[#allocation4 + $0x10] sm:$0xff] %vm1380, %v2654
      %2659 = vst.msk [vmem:[#allocation4 + $0x18] sm:$0xff] %vm1380, %v2655
      %v2660 = vld [vmem:[%s395 + $0x40] sm:$0xff]
      %v2661 = vld [vmem:[%s395 + $0x48] sm:$0xff]
      %v2662 = vld [vmem:[%s395 + $0x50] sm:$0xff]
      %v2663 = vld [vmem:[%s395 + $0x58] sm:$0xff]
      %v2664 = vld [vmem:[%s395 + $0x60] sm:$0xff]
      %v2665 = vld [vmem:[%s395 + $0x68] sm:$0xff]
      %v2666 = vld [vmem:[%s395 + $0x70] sm:$0xff]
      %v2667 = vld [vmem:[%s395 + $0x78] sm:$0xff]
      %s2668 = scalar_lea.vmem %s382, 64
      %v2669 = vld [vmem:[%s2668] sm:$0xff]
      %v2670 = vld [vmem:[%s2668 + $0x8] sm:$0xff]
      %v2671 = vld [vmem:[%s2668 + $0x10] sm:$0xff]
      %v2672 = vld [vmem:[%s2668 + $0x18] sm:$0xff]
      %v2673 = vld [vmem:[%s2668 + $0x20] sm:$0xff]
      %v2674 = vld [vmem:[%s2668 + $0x28] sm:$0xff]
      %v2675 = vld [vmem:[%s2668 + $0x30] sm:$0xff]
      %v2676 = vld [vmem:[%s2668 + $0x38] sm:$0xff]
      %v2677 = vpack.c.bf16 %v2670, %v2669
      %v2678 = vpack.c.bf16 %v2672, %v2671
      %v2679 = vpack.c.bf16 %v2674, %v2673
      %v2680 = vpack.c.bf16 %v2676, %v2675
      %v2681 = vld [vmem:[#allocation2 + $0x20] sm:$0xff]
      %v2682 = vld [vmem:[#allocation2 + $0x28] sm:$0xff]
      %v2683 = vld [vmem:[#allocation2 + $0x30] sm:$0xff]
      %v2684 = vld [vmem:[#allocation2 + $0x38] sm:$0xff]
      %v2686 = vsel %vm2498, %v2677, 0
      %v2689 = vsel %vm2498, %v2678, 0
      %v2692 = vsel %vm2498, %v2679, 0
      %v2695 = vsel %vm2498, %v2680, 0
      %2697 = vmatprep.subr.bf16.mxu0 0
      %2698 = vmatpush1.bf16.msra.mxu0 %v2681
      %2699 = vmatprep.subr.bf16.mxu0 0
      %2700 = vmatpush1.bf16.msra.mxu0 %v2682
      %2701 = vmatprep.subr.bf16.mxu0 0
      %2702 = vmatpush1.bf16.msra.mxu0 %v2683
      %2703 = vmatprep.subr.bf16.mxu0 0
      %2704 = vmatpush1.bf16.msra.mxu0 %v2684
      %2705 = vmatprep.subr.bf16.mxu0 0
      %2706 = vmatpush1.bf16.msra.mxu0 0
      %2707 = vmatprep.subr.bf16.mxu0 0
      %2708 = vmatpush1.bf16.msra.mxu0 0
      %2709 = vmatprep.subr.bf16.mxu0 0
      %2710 = vmatpush1.bf16.msra.mxu0 0
      %2711 = vmatprep.subr.bf16.mxu0 0
      %2712 = vmatpush1.bf16.msra.mxu0 0
      %2713 = vmatprep.subr.bf16.mxu0 0
      %2714 = vmatpush1.bf16.msra.mxu0 0
      %2715 = vmatprep.subr.bf16.mxu0 0
      %2716 = vmatpush1.bf16.msra.mxu0 0
      %2717 = vmatprep.subr.bf16.mxu0 0
      %2718 = vmatpush1.bf16.msra.mxu0 0
      %2719 = vmatprep.subr.bf16.mxu0 0
      %2720 = vmatpush1.bf16.msra.mxu0 0
      %2721 = vmatprep.subr.bf16.mxu0 0
      %2722 = vmatpush1.bf16.msra.mxu0 0
      %2723 = vmatprep.subr.bf16.mxu0 0
      %2724 = vmatpush1.bf16.msra.mxu0 0
      %2725 = vmatprep.subr.bf16.mxu0 0
      %2726 = vmatpush1.bf16.msra.mxu0 0
      %2727 = vmatprep.subr.bf16.mxu0 0
      %2728 = vmatpush1.bf16.msra.mxu0 0
      %2729 = vmatprep.mubr.bf16.mxu0 0
      %2730 = vmatmul.mubr.bf16.gmra.mrb[0].mxu0 %v2686
      %v2731 = vpop.f32.mrb[0].mxu0
      %v2732 = vadd.f32 0.0, %v2731
      %v2733 = vpop.f32.mrb[0].mxu0
      %v2734 = vpop.f32.mrb[0].mxu0
      %v2735 = vadd.f32 0.0, %v2734
      %v2736 = vpop.f32.mrb[0].mxu0
      %2737 = vmatprep.mubr.bf16.mxu0 0
      %2738 = vmatmul.mubr.bf16.gmra.mrb[0].mxu0 %v2689
      %v2739 = vpop.f32.mrb[0].mxu0
      %v2740 = vadd.f32 0.0, %v2739
      %v2741 = vpop.f32.mrb[0].mxu0
      %v2742 = vpop.f32.mrb[0].mxu0
      %v2743 = vadd.f32 0.0, %v2742
      %v2744 = vpop.f32.mrb[0].mxu0
      %2745 = vmatprep.mubr.bf16.mxu0 0
      %2746 = vmatmul.mubr.bf16.gmra.mrb[0].mxu0 %v2692
      %v2747 = vpop.f32.mrb[0].mxu0
      %v2748 = vadd.f32 0.0, %v2747
      %v2749 = vpop.f32.mrb[0].mxu0
      %v2750 = vpop.f32.mrb[0].mxu0
      %v2751 = vadd.f32 0.0, %v2750
      %v2752 = vpop.f32.mrb[0].mxu0
      %2753 = vmatprep.mubr.bf16.mxu0 0
      %2754 = vmatmul.mubr.bf16.gmra.mrb[0].mxu0 %v2695
      %v2755 = vpop.f32.mrb[0].mxu0
      %v2756 = vadd.f32 0.0, %v2755
      %v2757 = vpop.f32.mrb[0].mxu0
      %v2758 = vpop.f32.mrb[0].mxu0
      %v2759 = vadd.f32 0.0, %v2758
      %v2760 = vpop.f32.mrb[0].mxu0
      %2761 = vdwg.mxu0
      %2763 = vset.pattern.permute.xlu0 0
      %2764 = vperm.xlu0 %2763, %v2660
      %v2765 = vpop.permute.xlu0 %2764
      %2768 = vset.pattern.permute.xlu0 0
      %2769 = vperm.xlu0 %2768, %v2661
      %v2770 = vpop.permute.xlu0 %2769
      %2773 = vset.pattern.permute.xlu0 0
      %2774 = vperm.xlu0 %2773, %v2662
      %v2775 = vpop.permute.xlu0 %2774
      %2778 = vset.pattern.permute.xlu0 0
      %2779 = vperm.xlu0 %2778, %v2663
      %v2780 = vpop.permute.xlu0 %2779
      %2783 = vset.pattern.permute.xlu0 0
      %2784 = vperm.xlu0 %2783, %v2664
      %v2785 = vpop.permute.xlu0 %2784
      %2788 = vset.pattern.permute.xlu0 0
      %2789 = vperm.xlu0 %2788, %v2665
      %v2790 = vpop.permute.xlu0 %2789
      %2793 = vset.pattern.permute.xlu0 0
      %2794 = vperm.xlu0 %2793, %v2666
      %v2795 = vpop.permute.xlu0 %2794
      %2798 = vset.pattern.permute.xlu0 0
      %2799 = vperm.xlu0 %2798, %v2667
      %v2800 = vpop.permute.xlu0 %2799
      %v2802 = vmul.f32 %v2732, %v2765
      %v2803 = vmul.f32 %v2735, %v2770
      %v2804 = vmul.f32 %v2740, %v2775
      %v2805 = vmul.f32 %v2743, %v2780
      %v2806 = vmul.f32 %v2748, %v2785
      %v2807 = vmul.f32 %v2751, %v2790
      %v2808 = vmul.f32 %v2756, %v2795
      %v2809 = vmul.f32 %v2759, %v2800
      %v2810 = vadd.f32 %v2802, %v2627
      %v2811 = vadd.f32 %v2803, %v2627
      %v2812 = vadd.f32 %v2804, %v2627
      %v2813 = vadd.f32 %v2805, %v2627
      %v2814 = vadd.f32 %v2806, %v2627
      %v2815 = vadd.f32 %v2807, %v2627
      %v2816 = vadd.f32 %v2808, %v2627
      %v2817 = vadd.f32 %v2809, %v2627
      %v2818 = vmax.f32 %v2810, 0.0
      %v2819 = vmax.f32 %v2811, 0.0
      %v2820 = vmax.f32 %v2812, 0.0
      %v2821 = vmax.f32 %v2813, 0.0
      %v2822 = vmax.f32 %v2814, 0.0
      %v2823 = vmax.f32 %v2815, 0.0
      %v2824 = vmax.f32 %v2816, 0.0
      %v2825 = vmax.f32 %v2817, 0.0
      %v2826 = vmul.f32 %v2818, %v2765
      %v2827 = vmul.f32 %v2819, %v2770
      %v2828 = vmul.f32 %v2820, %v2775
      %v2829 = vmul.f32 %v2821, %v2780
      %v2830 = vmul.f32 %v2822, %v2785
      %v2831 = vmul.f32 %v2823, %v2790
      %v2832 = vmul.f32 %v2824, %v2795
      %v2833 = vmul.f32 %v2825, %v2800
      %v2834 = vpack.c.bf16 %v2827, %v2826
      %v2835 = vpack.c.bf16 %v2829, %v2828
      %v2836 = vpack.c.bf16 %v2831, %v2830
      %v2837 = vpack.c.bf16 %v2833, %v2832
      %2838 = vst.msk [vmem:[#allocation4 + $0x20] sm:$0xff] %vm1380, %v2834
      %2839 = vst.msk [vmem:[#allocation4 + $0x28] sm:$0xff] %vm1380, %v2835
      %2840 = vst.msk [vmem:[#allocation4 + $0x30] sm:$0xff] %vm1380, %v2836
      %2841 = vst.msk [vmem:[#allocation4 + $0x38] sm:$0xff] %vm1380, %v2837
      %v2842 = vld [vmem:[%s395 + $0x80] sm:$0xff]
      %v2843 = vld [vmem:[%s395 + $0x88] sm:$0xff]
      %v2844 = vld [vmem:[%s395 + $0x90] sm:$0xff]
      %v2845 = vld [vmem:[%s395 + $0x98] sm:$0xff]
      %v2846 = vld [vmem:[%s395 + $0xa0] sm:$0xff]
      %v2847 = vld [vmem:[%s395 + $0xa8] sm:$0xff]
      %v2848 = vld [vmem:[%s395 + $0xb0] sm:$0xff]
      %v2849 = vld [vmem:[%s395 + $0xb8] sm:$0xff]
      %s2850 = scalar_lea.vmem %s382, 128
      %v2851 = vld [vmem:[%s2850] sm:$0xff]
      %v2852 = vld [vmem:[%s2850 + $0x8] sm:$0xff]
      %v2853 = vld [vmem:[%s2850 + $0x10] sm:$0xff]
      %v2854 = vld [vmem:[%s2850 + $0x18] sm:$0xff]
      %v2855 = vld [vmem:[%s2850 + $0x20] sm:$0xff]
      %v2856 = vld [vmem:[%s2850 + $0x28] sm:$0xff]
      %v2857 = vld [vmem:[%s2850 + $0x30] sm:$0xff]
      %v2858 = vld [vmem:[%s2850 + $0x38] sm:$0xff]
      %v2859 = vpack.c.bf16 %v2852, %v2851
      %v2860 = vpack.c.bf16 %v2854, %v2853
      %v2861 = vpack.c.bf16 %v2856, %v2855
      %v2862 = vpack.c.bf16 %v2858, %v2857
      %v2863 = vld [vmem:[#allocation2 + $0x40] sm:$0xff]
      %v2864 = vld [vmem:[#allocation2 + $0x48] sm:$0xff]
      %v2865 = vld [vmem:[#allocation2 + $0x50] sm:$0xff]
      %v2866 = vld [vmem:[#allocation2 + $0x58] sm:$0xff]
      %v2868 = vsel %vm2498, %v2859, 0
      %v2871 = vsel %vm2498, %v2860, 0
      %v2874 = vsel %vm2498, %v2861, 0
      %v2877 = vsel %vm2498, %v2862, 0
      %2879 = vmatprep.subr.bf16.mxu0 0
      %2880 = vmatpush1.bf16.msra.mxu0 %v2863
      %2881 = vmatprep.subr.bf16.mxu0 0
      %2882 = vmatpush1.bf16.msra.mxu0 %v2864
      %2883 = vmatprep.subr.bf16.mxu0 0
      %2884 = vmatpush1.bf16.msra.mxu0 %v2865
      %2885 = vmatprep.subr.bf16.mxu0 0
      %2886 = vmatpush1.bf16.msra.mxu0 %v2866
      %2887 = vmatprep.subr.bf16.mxu0 0
      %2888 = vmatpush1.bf16.msra.mxu0 0
      %2889 = vmatprep.subr.bf16.mxu0 0
      %2890 = vmatpush1.bf16.msra.mxu0 0
      %2891 = vmatprep.subr.bf16.mxu0 0
      %2892 = vmatpush1.bf16.msra.mxu0 0
      %2893 = vmatprep.subr.bf16.mxu0 0
      %2894 = vmatpush1.bf16.msra.mxu0 0
      %2895 = vmatprep.subr.bf16.mxu0 0
      %2896 = vmatpush1.bf16.msra.mxu0 0
      %2897 = vmatprep.subr.bf16.mxu0 0
      %2898 = vmatpush1.bf16.msra.mxu0 0
      %2899 = vmatprep.subr.bf16.mxu0 0
      %2900 = vmatpush1.bf16.msra.mxu0 0
      %2901 = vmatprep.subr.bf16.mxu0 0
      %2902 = vmatpush1.bf16.msra.mxu0 0
      %2903 = vmatprep.subr.bf16.mxu0 0
      %2904 = vmatpush1.bf16.msra.mxu0 0
      %2905 = vmatprep.subr.bf16.mxu0 0
      %2906 = vmatpush1.bf16.msra.mxu0 0
      %2907 = vmatprep.subr.bf16.mxu0 0
      %2908 = vmatpush1.bf16.msra.mxu0 0
      %2909 = vmatprep.subr.bf16.mxu0 0
      %2910 = vmatpush1.bf16.msra.mxu0 0
      %2911 = vmatprep.mubr.bf16.mxu0 0
      %2912 = vmatmul.mubr.bf16.gmra.mrb[0].mxu0 %v2868
      %v2913 = vpop.f32.mrb[0].mxu0
      %v2914 = vadd.f32 0.0, %v2913
      %v2915 = vpop.f32.mrb[0].mxu0
      %v2916 = vpop.f32.mrb[0].mxu0
      %v2917 = vadd.f32 0.0, %v2916
      %v2918 = vpop.f32.mrb[0].mxu0
      %2919 = vmatprep.mubr.bf16.mxu0 0
      %2920 = vmatmul.mubr.bf16.gmra.mrb[0].mxu0 %v2871
      %v2921 = vpop.f32.mrb[0].mxu0
      %v2922 = vadd.f32 0.0, %v2921
      %v2923 = vpop.f32.mrb[0].mxu0
      %v2924 = vpop.f32.mrb[0].mxu0
      %v2925 = vadd.f32 0.0, %v2924
      %v2926 = vpop.f32.mrb[0].mxu0
      %2927 = vmatprep.mubr.bf16.mxu0 0
      %2928 = vmatmul.mubr.bf16.gmra.mrb[0].mxu0 %v2874
      %v2929 = vpop.f32.mrb[0].mxu0
      %v2930 = vadd.f32 0.0, %v2929
      %v2931 = vpop.f32.mrb[0].mxu0
      %v2932 = vpop.f32.mrb[0].mxu0
      %v2933 = vadd.f32 0.0, %v2932
      %v2934 = vpop.f32.mrb[0].mxu0
      %2935 = vmatprep.mubr.bf16.mxu0 0
      %2936 = vmatmul.mubr.bf16.gmra.mrb[0].mxu0 %v2877
      %v2937 = vpop.f32.mrb[0].mxu0
      %v2938 = vadd.f32 0.0, %v2937
      %v2939 = vpop.f32.mrb[0].mxu0
      %v2940 = vpop.f32.mrb[0].mxu0
      %v2941 = vadd.f32 0.0, %v2940
      %v2942 = vpop.f32.mrb[0].mxu0
      %2943 = vdwg.mxu0
      %2945 = vset.pattern.permute.xlu0 0
      %2946 = vperm.xlu0 %2945, %v2842
      %v2947 = vpop.permute.xlu0 %2946
      %2950 = vset.pattern.permute.xlu0 0
      %2951 = vperm.xlu0 %2950, %v2843
      %v2952 = vpop.permute.xlu0 %2951
      %2955 = vset.pattern.permute.xlu0 0
      %2956 = vperm.xlu0 %2955, %v2844
      %v2957 = vpop.permute.xlu0 %2956
      %2960 = vset.pattern.permute.xlu0 0
      %2961 = vperm.xlu0 %2960, %v2845
      %v2962 = vpop.permute.xlu0 %2961
      %2965 = vset.pattern.permute.xlu0 0
      %2966 = vperm.xlu0 %2965, %v2846
      %v2967 = vpop.permute.xlu0 %2966
      %2970 = vset.pattern.permute.xlu0 0
      %2971 = vperm.xlu0 %2970, %v2847
      %v2972 = vpop.permute.xlu0 %2971
      %2975 = vset.pattern.permute.xlu0 0
      %2976 = vperm.xlu0 %2975, %v2848
      %v2977 = vpop.permute.xlu0 %2976
      %2980 = vset.pattern.permute.xlu0 0
      %2981 = vperm.xlu0 %2980, %v2849
      %v2982 = vpop.permute.xlu0 %2981
      %v2984 = vmul.f32 %v2914, %v2947
      %v2985 = vmul.f32 %v2917, %v2952
      %v2986 = vmul.f32 %v2922, %v2957
      %v2987 = vmul.f32 %v2925, %v2962
      %v2988 = vmul.f32 %v2930, %v2967
      %v2989 = vmul.f32 %v2933, %v2972
      %v2990 = vmul.f32 %v2938, %v2977
      %v2991 = vmul.f32 %v2941, %v2982
      %v2992 = vadd.f32 %v2984, %v2627
      %v2993 = vadd.f32 %v2985, %v2627
      %v2994 = vadd.f32 %v2986, %v2627
      %v2995 = vadd.f32 %v2987, %v2627
      %v2996 = vadd.f32 %v2988, %v2627
      %v2997 = vadd.f32 %v2989, %v2627
      %v2998 = vadd.f32 %v2990, %v2627
      %v2999 = vadd.f32 %v2991, %v2627
      %v3000 = vmax.f32 %v2992, 0.0
      %v3001 = vmax.f32 %v2993, 0.0
      %v3002 = vmax.f32 %v2994, 0.0
      %v3003 = vmax.f32 %v2995, 0.0
      %v3004 = vmax.f32 %v2996, 0.0
      %v3005 = vmax.f32 %v2997, 0.0
      %v3006 = vmax.f32 %v2998, 0.0
      %v3007 = vmax.f32 %v2999, 0.0
      %v3008 = vmul.f32 %v3000, %v2947
      %v3009 = vmul.f32 %v3001, %v2952
      %v3010 = vmul.f32 %v3002, %v2957
      %v3011 = vmul.f32 %v3003, %v2962
      %v3012 = vmul.f32 %v3004, %v2967
      %v3013 = vmul.f32 %v3005, %v2972
      %v3014 = vmul.f32 %v3006, %v2977
      %v3015 = vmul.f32 %v3007, %v2982
      %v3016 = vpack.c.bf16 %v3009, %v3008
      %v3017 = vpack.c.bf16 %v3011, %v3010
      %v3018 = vpack.c.bf16 %v3013, %v3012
      %v3019 = vpack.c.bf16 %v3015, %v3014
      %3020 = vst.msk [vmem:[#allocation4 + $0x40] sm:$0xff] %vm1380, %v3016
      %3021 = vst.msk [vmem:[#allocation4 + $0x48] sm:$0xff] %vm1380, %v3017
      %3022 = vst.msk [vmem:[#allocation4 + $0x50] sm:$0xff] %vm1380, %v3018
      %3023 = vst.msk [vmem:[#allocation4 + $0x58] sm:$0xff] %vm1380, %v3019
      %v3024 = vld [vmem:[%s395 + $0xc0] sm:$0xff]
      %v3025 = vld [vmem:[%s395 + $0xc8] sm:$0xff]
      %v3026 = vld [vmem:[%s395 + $0xd0] sm:$0xff]
      %v3027 = vld [vmem:[%s395 + $0xd8] sm:$0xff]
      %v3028 = vld [vmem:[%s395 + $0xe0] sm:$0xff]
      %v3029 = vld [vmem:[%s395 + $0xe8] sm:$0xff]
      %v3030 = vld [vmem:[%s395 + $0xf0] sm:$0xff]
      %v3031 = vld [vmem:[%s395 + $0xf8] sm:$0xff]
      %s3032 = scalar_lea.vmem %s382, 192
      %v3033 = vld [vmem:[%s3032] sm:$0xff]
      %v3034 = vld [vmem:[%s3032 + $0x8] sm:$0xff]
      %v3035 = vld [vmem:[%s3032 + $0x10] sm:$0xff]
      %v3036 = vld [vmem:[%s3032 + $0x18] sm:$0xff]
      %v3037 = vld [vmem:[%s3032 + $0x20] sm:$0xff]
      %v3038 = vld [vmem:[%s3032 + $0x28] sm:$0xff]
      %v3039 = vld [vmem:[%s3032 + $0x30] sm:$0xff]
      %v3040 = vld [vmem:[%s3032 + $0x38] sm:$0xff]
      %v3041 = vpack.c.bf16 %v3034, %v3033
      %v3042 = vpack.c.bf16 %v3036, %v3035
      %v3043 = vpack.c.bf16 %v3038, %v3037
      %v3044 = vpack.c.bf16 %v3040, %v3039
      %v3045 = vld [vmem:[#allocation2 + $0x60] sm:$0xff]
      %v3046 = vld [vmem:[#allocation2 + $0x68] sm:$0xff]
      %v3047 = vld [vmem:[#allocation2 + $0x70] sm:$0xff]
      %v3048 = vld [vmem:[#allocation2 + $0x78] sm:$0xff]
      %v3050 = vsel %vm2498, %v3041, 0
      %v3053 = vsel %vm2498, %v3042, 0
      %v3056 = vsel %vm2498, %v3043, 0
      %v3059 = vsel %vm2498, %v3044, 0
      %3061 = vmatprep.subr.bf16.mxu0 0
      %3062 = vmatpush1.bf16.msra.mxu0 %v3045
      %3063 = vmatprep.subr.bf16.mxu0 0
      %3064 = vmatpush1.bf16.msra.mxu0 %v3046
      %3065 = vmatprep.subr.bf16.mxu0 0
      %3066 = vmatpush1.bf16.msra.mxu0 %v3047
      %3067 = vmatprep.subr.bf16.mxu0 0
      %3068 = vmatpush1.bf16.msra.mxu0 %v3048
      %3069 = vmatprep.subr.bf16.mxu0 0
      %3070 = vmatpush1.bf16.msra.mxu0 0
      %3071 = vmatprep.subr.bf16.mxu0 0
      %3072 = vmatpush1.bf16.msra.mxu0 0
      %3073 = vmatprep.subr.bf16.mxu0 0
      %3074 = vmatpush1.bf16.msra.mxu0 0
      %3075 = vmatprep.subr.bf16.mxu0 0
      %3076 = vmatpush1.bf16.msra.mxu0 0
      %3077 = vmatprep.subr.bf16.mxu0 0
      %3078 = vmatpush1.bf16.msra.mxu0 0
      %3079 = vmatprep.subr.bf16.mxu0 0
      %3080 = vmatpush1.bf16.msra.mxu0 0
      %3081 = vmatprep.subr.bf16.mxu0 0
      %3082 = vmatpush1.bf16.msra.mxu0 0
      %3083 = vmatprep.subr.bf16.mxu0 0
      %3084 = vmatpush1.bf16.msra.mxu0 0
      %3085 = vmatprep.subr.bf16.mxu0 0
      %3086 = vmatpush1.bf16.msra.mxu0 0
      %3087 = vmatprep.subr.bf16.mxu0 0
      %3088 = vmatpush1.bf16.msra.mxu0 0
      %3089 = vmatprep.subr.bf16.mxu0 0
      %3090 = vmatpush1.bf16.msra.mxu0 0
      %3091 = vmatprep.subr.bf16.mxu0 0
      %3092 = vmatpush1.bf16.msra.mxu0 0
      %3093 = vmatprep.mubr.bf16.mxu0 0
      %3094 = vmatmul.mubr.bf16.gmra.mrb[0].mxu0 %v3050
      %v3095 = vpop.f32.mrb[0].mxu0
      %v3096 = vadd.f32 0.0, %v3095
      %v3097 = vpop.f32.mrb[0].mxu0
      %v3098 = vpop.f32.mrb[0].mxu0
      %v3099 = vadd.f32 0.0, %v3098
      %v3100 = vpop.f32.mrb[0].mxu0
      %3101 = vmatprep.mubr.bf16.mxu0 0
      %3102 = vmatmul.mubr.bf16.gmra.mrb[0].mxu0 %v3053
      %v3103 = vpop.f32.mrb[0].mxu0
      %v3104 = vadd.f32 0.0, %v3103
      %v3105 = vpop.f32.mrb[0].mxu0
      %v3106 = vpop.f32.mrb[0].mxu0
      %v3107 = vadd.f32 0.0, %v3106
      %v3108 = vpop.f32.mrb[0].mxu0
      %3109 = vmatprep.mubr.bf16.mxu0 0
      %3110 = vmatmul.mubr.bf16.gmra.mrb[0].mxu0 %v3056
      %v3111 = vpop.f32.mrb[0].mxu0
      %v3112 = vadd.f32 0.0, %v3111
      %v3113 = vpop.f32.mrb[0].mxu0
      %v3114 = vpop.f32.mrb[0].mxu0
      %v3115 = vadd.f32 0.0, %v3114
      %v3116 = vpop.f32.mrb[0].mxu0
      %3117 = vmatprep.mubr.bf16.mxu0 0
      %3118 = vmatmul.mubr.bf16.gmra.mrb[0].mxu0 %v3059
      %v3119 = vpop.f32.mrb[0].mxu0
      %v3120 = vadd.f32 0.0, %v3119
      %v3121 = vpop.f32.mrb[0].mxu0
      %v3122 = vpop.f32.mrb[0].mxu0
      %v3123 = vadd.f32 0.0, %v3122
      %v3124 = vpop.f32.mrb[0].mxu0
      %3125 = vdwg.mxu0
      %3127 = vset.pattern.permute.xlu0 0
      %3128 = vperm.xlu0 %3127, %v3024
      %v3129 = vpop.permute.xlu0 %3128
      %3132 = vset.pattern.permute.xlu0 0
      %3133 = vperm.xlu0 %3132, %v3025
      %v3134 = vpop.permute.xlu0 %3133
      %3137 = vset.pattern.permute.xlu0 0
      %3138 = vperm.xlu0 %3137, %v3026
      %v3139 = vpop.permute.xlu0 %3138
      %3142 = vset.pattern.permute.xlu0 0
      %3143 = vperm.xlu0 %3142, %v3027
      %v3144 = vpop.permute.xlu0 %3143
      %3147 = vset.pattern.permute.xlu0 0
      %3148 = vperm.xlu0 %3147, %v3028
      %v3149 = vpop.permute.xlu0 %3148
      %3152 = vset.pattern.permute.xlu0 0
      %3153 = vperm.xlu0 %3152, %v3029
      %v3154 = vpop.permute.xlu0 %3153
      %3157 = vset.pattern.permute.xlu0 0
      %3158 = vperm.xlu0 %3157, %v3030
      %v3159 = vpop.permute.xlu0 %3158
      %3162 = vset.pattern.permute.xlu0 0
      %3163 = vperm.xlu0 %3162, %v3031
      %v3164 = vpop.permute.xlu0 %3163
      %v3166 = vmul.f32 %v3096, %v3129
      %v3167 = vmul.f32 %v3099, %v3134
      %v3168 = vmul.f32 %v3104, %v3139
      %v3169 = vmul.f32 %v3107, %v3144
      %v3170 = vmul.f32 %v3112, %v3149
      %v3171 = vmul.f32 %v3115, %v3154
      %v3172 = vmul.f32 %v3120, %v3159
      %v3173 = vmul.f32 %v3123, %v3164
      %v3174 = vadd.f32 %v3166, %v2627
      %v3175 = vadd.f32 %v3167, %v2627
      %v3176 = vadd.f32 %v3168, %v2627
      %v3177 = vadd.f32 %v3169, %v2627
      %v3178 = vadd.f32 %v3170, %v2627
      %v3179 = vadd.f32 %v3171, %v2627
      %v3180 = vadd.f32 %v3172, %v2627
      %v3181 = vadd.f32 %v3173, %v2627
      %v3182 = vmax.f32 %v3174, 0.0
      %v3183 = vmax.f32 %v3175, 0.0
      %v3184 = vmax.f32 %v3176, 0.0
      %v3185 = vmax.f32 %v3177, 0.0
      %v3186 = vmax.f32 %v3178, 0.0
      %v3187 = vmax.f32 %v3179, 0.0
      %v3188 = vmax.f32 %v3180, 0.0
      %v3189 = vmax.f32 %v3181, 0.0
      %v3190 = vmul.f32 %v3182, %v3129
      %v3191 = vmul.f32 %v3183, %v3134
      %v3192 = vmul.f32 %v3184, %v3139
      %v3193 = vmul.f32 %v3185, %v3144
      %v3194 = vmul.f32 %v3186, %v3149
      %v3195 = vmul.f32 %v3187, %v3154
      %v3196 = vmul.f32 %v3188, %v3159
      %v3197 = vmul.f32 %v3189, %v3164
      %v3198 = vpack.c.bf16 %v3191, %v3190
      %v3199 = vpack.c.bf16 %v3193, %v3192
      %v3200 = vpack.c.bf16 %v3195, %v3194
      %v3201 = vpack.c.bf16 %v3197, %v3196
      %3202 = vst.msk [vmem:[#allocation4 + $0x60] sm:$0xff] %vm1380, %v3198
      %3203 = vst.msk [vmem:[#allocation4 + $0x68] sm:$0xff] %vm1380, %v3199
      %3204 = vst.msk [vmem:[#allocation4 + $0x70] sm:$0xff] %vm1380, %v3200
      %3205 = vst.msk [vmem:[#allocation4 + $0x78] sm:$0xff] %vm1380, %v3201
      %v3206 = vld [vmem:[%s395 + $0x100] sm:$0xff]
      %v3207 = vld [vmem:[%s395 + $0x108] sm:$0xff]
      %v3208 = vld [vmem:[%s395 + $0x110] sm:$0xff]
      %v3209 = vld [vmem:[%s395 + $0x118] sm:$0xff]
      %v3210 = vld [vmem:[%s395 + $0x120] sm:$0xff]
      %v3211 = vld [vmem:[%s395 + $0x128] sm:$0xff]
      %v3212 = vld [vmem:[%s395 + $0x130] sm:$0xff]
      %v3213 = vld [vmem:[%s395 + $0x138] sm:$0xff]
      %s3214 = scalar_lea.vmem %s382, 256
      %v3215 = vld [vmem:[%s3214] sm:$0xff]
      %v3216 = vld [vmem:[%s3214 + $0x8] sm:$0xff]
      %v3217 = vld [vmem:[%s3214 + $0x10] sm:$0xff]
      %v3218 = vld [vmem:[%s3214 + $0x18] sm:$0xff]
      %v3219 = vld [vmem:[%s3214 + $0x20] sm:$0xff]
      %v3220 = vld [vmem:[%s3214 + $0x28] sm:$0xff]
      %v3221 = vld [vmem:[%s3214 + $0x30] sm:$0xff]
      %v3222 = vld [vmem:[%s3214 + $0x38] sm:$0xff]
      %v3223 = vpack.c.bf16 %v3216, %v3215
      %v3224 = vpack.c.bf16 %v3218, %v3217
      %v3225 = vpack.c.bf16 %v3220, %v3219
      %v3226 = vpack.c.bf16 %v3222, %v3221
      %v3227 = vld [vmem:[#allocation2 + $0x80] sm:$0xff]
      %v3228 = vld [vmem:[#allocation2 + $0x88] sm:$0xff]
      %v3229 = vld [vmem:[#allocation2 + $0x90] sm:$0xff]
      %v3230 = vld [vmem:[#allocation2 + $0x98] sm:$0xff]
      %v3232 = vsel %vm2498, %v3223, 0
      %v3235 = vsel %vm2498, %v3224, 0
      %v3238 = vsel %vm2498, %v3225, 0
      %v3241 = vsel %vm2498, %v3226, 0
      %3243 = vmatprep.subr.bf16.mxu0 0
      %3244 = vmatpush1.bf16.msra.mxu0 %v3227
      %3245 = vmatprep.subr.bf16.mxu0 0
      %3246 = vmatpush1.bf16.msra.mxu0 %v3228
      %3247 = vmatprep.subr.bf16.mxu0 0
      %3248 = vmatpush1.bf16.msra.mxu0 %v3229
      %3249 = vmatprep.subr.bf16.mxu0 0
      %3250 = vmatpush1.bf16.msra.mxu0 %v3230
      %3251 = vmatprep.subr.bf16.mxu0 0
      %3252 = vmatpush1.bf16.msra.mxu0 0
      %3253 = vmatprep.subr.bf16.mxu0 0
      %3254 = vmatpush1.bf16.msra.mxu0 0
      %3255 = vmatprep.subr.bf16.mxu0 0
      %3256 = vmatpush1.bf16.msra.mxu0 0
      %3257 = vmatprep.subr.bf16.mxu0 0
      %3258 = vmatpush1.bf16.msra.mxu0 0
      %3259 = vmatprep.subr.bf16.mxu0 0
      %3260 = vmatpush1.bf16.msra.mxu0 0
      %3261 = vmatprep.subr.bf16.mxu0 0
      %3262 = vmatpush1.bf16.msra.mxu0 0
      %3263 = vmatprep.subr.bf16.mxu0 0
      %3264 = vmatpush1.bf16.msra.mxu0 0
      %3265 = vmatprep.subr.bf16.mxu0 0
      %3266 = vmatpush1.bf16.msra.mxu0 0
      %3267 = vmatprep.subr.bf16.mxu0 0
      %3268 = vmatpush1.bf16.msra.mxu0 0
      %3269 = vmatprep.subr.bf16.mxu0 0
      %3270 = vmatpush1.bf16.msra.mxu0 0
      %3271 = vmatprep.subr.bf16.mxu0 0
      %3272 = vmatpush1.bf16.msra.mxu0 0
      %3273 = vmatprep.subr.bf16.mxu0 0
      %3274 = vmatpush1.bf16.msra.mxu0 0
      %3275 = vmatprep.mubr.bf16.mxu0 0
      %3276 = vmatmul.mubr.bf16.gmra.mrb[0].mxu0 %v3232
      %v3277 = vpop.f32.mrb[0].mxu0
      %v3278 = vadd.f32 0.0, %v3277
      %v3279 = vpop.f32.mrb[0].mxu0
      %v3280 = vpop.f32.mrb[0].mxu0
      %v3281 = vadd.f32 0.0, %v3280
      %v3282 = vpop.f32.mrb[0].mxu0
      %3283 = vmatprep.mubr.bf16.mxu0 0
      %3284 = vmatmul.mubr.bf16.gmra.mrb[0].mxu0 %v3235
      %v3285 = vpop.f32.mrb[0].mxu0
      %v3286 = vadd.f32 0.0, %v3285
      %v3287 = vpop.f32.mrb[0].mxu0
      %v3288 = vpop.f32.mrb[0].mxu0
      %v3289 = vadd.f32 0.0, %v3288
      %v3290 = vpop.f32.mrb[0].mxu0
      %3291 = vmatprep.mubr.bf16.mxu0 0
      %3292 = vmatmul.mubr.bf16.gmra.mrb[0].mxu0 %v3238
      %v3293 = vpop.f32.mrb[0].mxu0
      %v3294 = vadd.f32 0.0, %v3293
      %v3295 = vpop.f32.mrb[0].mxu0
      %v3296 = vpop.f32.mrb[0].mxu0
      %v3297 = vadd.f32 0.0, %v3296
      %v3298 = vpop.f32.mrb[0].mxu0
      %3299 = vmatprep.mubr.bf16.mxu0 0
      %3300 = vmatmul.mubr.bf16.gmra.mrb[0].mxu0 %v3241
      %v3301 = vpop.f32.mrb[0].mxu0
      %v3302 = vadd.f32 0.0, %v3301
      %v3303 = vpop.f32.mrb[0].mxu0
      %v3304 = vpop.f32.mrb[0].mxu0
      %v3305 = vadd.f32 0.0, %v3304
      %v3306 = vpop.f32.mrb[0].mxu0
      %3307 = vdwg.mxu0
      %3309 = vset.pattern.permute.xlu0 0
      %3310 = vperm.xlu0 %3309, %v3206
      %v3311 = vpop.permute.xlu0 %3310
      %3314 = vset.pattern.permute.xlu0 0
      %3315 = vperm.xlu0 %3314, %v3207
      %v3316 = vpop.permute.xlu0 %3315
      %3319 = vset.pattern.permute.xlu0 0
      %3320 = vperm.xlu0 %3319, %v3208
      %v3321 = vpop.permute.xlu0 %3320
      %3324 = vset.pattern.permute.xlu0 0
      %3325 = vperm.xlu0 %3324, %v3209
      %v3326 = vpop.permute.xlu0 %3325
      %3329 = vset.pattern.permute.xlu0 0
      %3330 = vperm.xlu0 %3329, %v3210
      %v3331 = vpop.permute.xlu0 %3330
      %3334 = vset.pattern.permute.xlu0 0
      %3335 = vperm.xlu0 %3334, %v3211
      %v3336 = vpop.permute.xlu0 %3335
      %3339 = vset.pattern.permute.xlu0 0
      %3340 = vperm.xlu0 %3339, %v3212
      %v3341 = vpop.permute.xlu0 %3340
      %3344 = vset.pattern.permute.xlu0 0
      %3345 = vperm.xlu0 %3344, %v3213
      %v3346 = vpop.permute.xlu0 %3345
      %v3348 = vmul.f32 %v3278, %v3311
      %v3349 = vmul.f32 %v3281, %v3316
      %v3350 = vmul.f32 %v3286, %v3321
      %v3351 = vmul.f32 %v3289, %v3326
      %v3352 = vmul.f32 %v3294, %v3331
      %v3353 = vmul.f32 %v3297, %v3336
      %v3354 = vmul.f32 %v3302, %v3341
      %v3355 = vmul.f32 %v3305, %v3346
      %v3356 = vadd.f32 %v3348, %v2627
      %v3357 = vadd.f32 %v3349, %v2627
      %v3358 = vadd.f32 %v3350, %v2627
      %v3359 = vadd.f32 %v3351, %v2627
      %v3360 = vadd.f32 %v3352, %v2627
      %v3361 = vadd.f32 %v3353, %v2627
      %v3362 = vadd.f32 %v3354, %v2627
      %v3363 = vadd.f32 %v3355, %v2627
      %v3364 = vmax.f32 %v3356, 0.0
      %v3365 = vmax.f32 %v3357, 0.0
      %v3366 = vmax.f32 %v3358, 0.0
      %v3367 = vmax.f32 %v3359, 0.0
      %v3368 = vmax.f32 %v3360, 0.0
      %v3369 = vmax.f32 %v3361, 0.0
      %v3370 = vmax.f32 %v3362, 0.0
      %v3371 = vmax.f32 %v3363, 0.0
      %v3372 = vmul.f32 %v3364, %v3311
      %v3373 = vmul.f32 %v3365, %v3316
      %v3374 = vmul.f32 %v3366, %v3321
      %v3375 = vmul.f32 %v3367, %v3326
      %v3376 = vmul.f32 %v3368, %v3331
      %v3377 = vmul.f32 %v3369, %v3336
      %v3378 = vmul.f32 %v3370, %v3341
      %v3379 = vmul.f32 %v3371, %v3346
      %v3380 = vpack.c.bf16 %v3373, %v3372
      %v3381 = vpack.c.bf16 %v3375, %v3374
      %v3382 = vpack.c.bf16 %v3377, %v3376
      %v3383 = vpack.c.bf16 %v3379, %v3378
      %3384 = vst.msk [vmem:[#allocation4 + $0x80] sm:$0xff] %vm1380, %v3380
      %3385 = vst.msk [vmem:[#allocation4 + $0x88] sm:$0xff] %vm1380, %v3381
      %3386 = vst.msk [vmem:[#allocation4 + $0x90] sm:$0xff] %vm1380, %v3382
      %3387 = vst.msk [vmem:[#allocation4 + $0x98] sm:$0xff] %vm1380, %v3383
      %v3388 = vld [vmem:[%s395 + $0x140] sm:$0xff]
      %v3389 = vld [vmem:[%s395 + $0x148] sm:$0xff]
      %v3390 = vld [vmem:[%s395 + $0x150] sm:$0xff]
      %v3391 = vld [vmem:[%s395 + $0x158] sm:$0xff]
      %v3392 = vld [vmem:[%s395 + $0x160] sm:$0xff]
      %v3393 = vld [vmem:[%s395 + $0x168] sm:$0xff]
      %v3394 = vld [vmem:[%s395 + $0x170] sm:$0xff]
      %v3395 = vld [vmem:[%s395 + $0x178] sm:$0xff]
      %s3396 = scalar_lea.vmem %s382, 320
      %v3397 = vld [vmem:[%s3396] sm:$0xff]
      %v3398 = vld [vmem:[%s3396 + $0x8] sm:$0xff]
      %v3399 = vld [vmem:[%s3396 + $0x10] sm:$0xff]
      %v3400 = vld [vmem:[%s3396 + $0x18] sm:$0xff]
      %v3401 = vld [vmem:[%s3396 + $0x20] sm:$0xff]
      %v3402 = vld [vmem:[%s3396 + $0x28] sm:$0xff]
      %v3403 = vld [vmem:[%s3396 + $0x30] sm:$0xff]
      %v3404 = vld [vmem:[%s3396 + $0x38] sm:$0xff]
      %v3405 = vpack.c.bf16 %v3398, %v3397
      %v3406 = vpack.c.bf16 %v3400, %v3399
      %v3407 = vpack.c.bf16 %v3402, %v3401
      %v3408 = vpack.c.bf16 %v3404, %v3403
      %v3409 = vld [vmem:[#allocation2 + $0xa0] sm:$0xff]
      %v3410 = vld [vmem:[#allocation2 + $0xa8] sm:$0xff]
      %v3411 = vld [vmem:[#allocation2 + $0xb0] sm:$0xff]
      %v3412 = vld [vmem:[#allocation2 + $0xb8] sm:$0xff]
      %v3414 = vsel %vm2498, %v3405, 0
      %v3417 = vsel %vm2498, %v3406, 0
      %v3420 = vsel %vm2498, %v3407, 0
      %v3423 = vsel %vm2498, %v3408, 0
      %3425 = vmatprep.subr.bf16.mxu0 0
      %3426 = vmatpush1.bf16.msra.mxu0 %v3409
      %3427 = vmatprep.subr.bf16.mxu0 0
      %3428 = vmatpush1.bf16.msra.mxu0 %v3410
      %3429 = vmatprep.subr.bf16.mxu0 0
      %3430 = vmatpush1.bf16.msra.mxu0 %v3411
      %3431 = vmatprep.subr.bf16.mxu0 0
      %3432 = vmatpush1.bf16.msra.mxu0 %v3412
      %3433 = vmatprep.subr.bf16.mxu0 0
      %3434 = vmatpush1.bf16.msra.mxu0 0
      %3435 = vmatprep.subr.bf16.mxu0 0
      %3436 = vmatpush1.bf16.msra.mxu0 0
      %3437 = vmatprep.subr.bf16.mxu0 0
      %3438 = vmatpush1.bf16.msra.mxu0 0
      %3439 = vmatprep.subr.bf16.mxu0 0
      %3440 = vmatpush1.bf16.msra.mxu0 0
      %3441 = vmatprep.subr.bf16.mxu0 0
      %3442 = vmatpush1.bf16.msra.mxu0 0
      %3443 = vmatprep.subr.bf16.mxu0 0
      %3444 = vmatpush1.bf16.msra.mxu0 0
      %3445 = vmatprep.subr.bf16.mxu0 0
      %3446 = vmatpush1.bf16.msra.mxu0 0
      %3447 = vmatprep.subr.bf16.mxu0 0
      %3448 = vmatpush1.bf16.msra.mxu0 0
      %3449 = vmatprep.subr.bf16.mxu0 0
      %3450 = vmatpush1.bf16.msra.mxu0 0
      %3451 = vmatprep.subr.bf16.mxu0 0
      %3452 = vmatpush1.bf16.msra.mxu0 0
      %3453 = vmatprep.subr.bf16.mxu0 0
      %3454 = vmatpush1.bf16.msra.mxu0 0
      %3455 = vmatprep.subr.bf16.mxu0 0
      %3456 = vmatpush1.bf16.msra.mxu0 0
      %3457 = vmatprep.mubr.bf16.mxu0 0
      %3458 = vmatmul.mubr.bf16.gmra.mrb[0].mxu0 %v3414
      %v3459 = vpop.f32.mrb[0].mxu0
      %v3460 = vadd.f32 0.0, %v3459
      %v3461 = vpop.f32.mrb[0].mxu0
      %v3462 = vpop.f32.mrb[0].mxu0
      %v3463 = vadd.f32 0.0, %v3462
      %v3464 = vpop.f32.mrb[0].mxu0
      %3465 = vmatprep.mubr.bf16.mxu0 0
      %3466 = vmatmul.mubr.bf16.gmra.mrb[0].mxu0 %v3417
      %v3467 = vpop.f32.mrb[0].mxu0
      %v3468 = vadd.f32 0.0, %v3467
      %v3469 = vpop.f32.mrb[0].mxu0
      %v3470 = vpop.f32.mrb[0].mxu0
      %v3471 = vadd.f32 0.0, %v3470
      %v3472 = vpop.f32.mrb[0].mxu0
      %3473 = vmatprep.mubr.bf16.mxu0 0
      %3474 = vmatmul.mubr.bf16.gmra.mrb[0].mxu0 %v3420
      %v3475 = vpop.f32.mrb[0].mxu0
      %v3476 = vadd.f32 0.0, %v3475
      %v3477 = vpop.f32.mrb[0].mxu0
      %v3478 = vpop.f32.mrb[0].mxu0
      %v3479 = vadd.f32 0.0, %v3478
      %v3480 = vpop.f32.mrb[0].mxu0
      %3481 = vmatprep.mubr.bf16.mxu0 0
      %3482 = vmatmul.mubr.bf16.gmra.mrb[0].mxu0 %v3423
      %v3483 = vpop.f32.mrb[0].mxu0
      %v3484 = vadd.f32 0.0, %v3483
      %v3485 = vpop.f32.mrb[0].mxu0
      %v3486 = vpop.f32.mrb[0].mxu0
      %v3487 = vadd.f32 0.0, %v3486
      %v3488 = vpop.f32.mrb[0].mxu0
      %3489 = vdwg.mxu0
      %3491 = vset.pattern.permute.xlu0 0
      %3492 = vperm.xlu0 %3491, %v3388
      %v3493 = vpop.permute.xlu0 %3492
      %3496 = vset.pattern.permute.xlu0 0
      %3497 = vperm.xlu0 %3496, %v3389
      %v3498 = vpop.permute.xlu0 %3497
      %3501 = vset.pattern.permute.xlu0 0
      %3502 = vperm.xlu0 %3501, %v3390
      %v3503 = vpop.permute.xlu0 %3502
      %3506 = vset.pattern.permute.xlu0 0
      %3507 = vperm.xlu0 %3506, %v3391
      %v3508 = vpop.permute.xlu0 %3507
      %3511 = vset.pattern.permute.xlu0 0
      %3512 = vperm.xlu0 %3511, %v3392
      %v3513 = vpop.permute.xlu0 %3512
      %3516 = vset.pattern.permute.xlu0 0
      %3517 = vperm.xlu0 %3516, %v3393
      %v3518 = vpop.permute.xlu0 %3517
      %3521 = vset.pattern.permute.xlu0 0
      %3522 = vperm.xlu0 %3521, %v3394
      %v3523 = vpop.permute.xlu0 %3522
      %3526 = vset.pattern.permute.xlu0 0
      %3527 = vperm.xlu0 %3526, %v3395
      %v3528 = vpop.permute.xlu0 %3527
      %v3530 = vmul.f32 %v3460, %v3493
      %v3531 = vmul.f32 %v3463, %v3498
      %v3532 = vmul.f32 %v3468, %v3503
      %v3533 = vmul.f32 %v3471, %v3508
      %v3534 = vmul.f32 %v3476, %v3513
      %v3535 = vmul.f32 %v3479, %v3518
      %v3536 = vmul.f32 %v3484, %v3523
      %v3537 = vmul.f32 %v3487, %v3528
      %v3538 = vadd.f32 %v3530, %v2627
      %v3539 = vadd.f32 %v3531, %v2627
      %v3540 = vadd.f32 %v3532, %v2627
      %v3541 = vadd.f32 %v3533, %v2627
      %v3542 = vadd.f32 %v3534, %v2627
      %v3543 = vadd.f32 %v3535, %v2627
      %v3544 = vadd.f32 %v3536, %v2627
      %v3545 = vadd.f32 %v3537, %v2627
      %v3546 = vmax.f32 %v3538, 0.0
      %v3547 = vmax.f32 %v3539, 0.0
      %v3548 = vmax.f32 %v3540, 0.0
      %v3549 = vmax.f32 %v3541, 0.0
      %v3550 = vmax.f32 %v3542, 0.0
      %v3551 = vmax.f32 %v3543, 0.0
      %v3552 = vmax.f32 %v3544, 0.0
      %v3553 = vmax.f32 %v3545, 0.0
      %v3554 = vmul.f32 %v3546, %v3493
      %v3555 = vmul.f32 %v3547, %v3498
      %v3556 = vmul.f32 %v3548, %v3503
      %v3557 = vmul.f32 %v3549, %v3508
      %v3558 = vmul.f32 %v3550, %v3513
      %v3559 = vmul.f32 %v3551, %v3518
      %v3560 = vmul.f32 %v3552, %v3523
      %v3561 = vmul.f32 %v3553, %v3528
      %v3562 = vpack.c.bf16 %v3555, %v3554
      %v3563 = vpack.c.bf16 %v3557, %v3556
      %v3564 = vpack.c.bf16 %v3559, %v3558
      %v3565 = vpack.c.bf16 %v3561, %v3560
      %3566 = vst.msk [vmem:[#allocation4 + $0xa0] sm:$0xff] %vm1380, %v3562
      %3567 = vst.msk [vmem:[#allocation4 + $0xa8] sm:$0xff] %vm1380, %v3563
      %3568 = vst.msk [vmem:[#allocation4 + $0xb0] sm:$0xff] %vm1380, %v3564
      %3569 = vst.msk [vmem:[#allocation4 + $0xb8] sm:$0xff] %vm1380, %v3565
      %v3570 = vld [vmem:[%s395 + $0x180] sm:$0xff]
      %v3571 = vld [vmem:[%s395 + $0x188] sm:$0xff]
      %v3572 = vld [vmem:[%s395 + $0x190] sm:$0xff]
      %v3573 = vld [vmem:[%s395 + $0x198] sm:$0xff]
      %v3574 = vld [vmem:[%s395 + $0x1a0] sm:$0xff]
      %v3575 = vld [vmem:[%s395 + $0x1a8] sm:$0xff]
      %v3576 = vld [vmem:[%s395 + $0x1b0] sm:$0xff]
      %v3577 = vld [vmem:[%s395 + $0x1b8] sm:$0xff]
      %s3578 = scalar_lea.vmem %s382, 384
      %v3579 = vld [vmem:[%s3578] sm:$0xff]
      %v3580 = vld [vmem:[%s3578 + $0x8] sm:$0xff]
      %v3581 = vld [vmem:[%s3578 + $0x10] sm:$0xff]
      %v3582 = vld [vmem:[%s3578 + $0x18] sm:$0xff]
      %v3583 = vld [vmem:[%s3578 + $0x20] sm:$0xff]
      %v3584 = vld [vmem:[%s3578 + $0x28] sm:$0xff]
      %v3585 = vld [vmem:[%s3578 + $0x30] sm:$0xff]
      %v3586 = vld [vmem:[%s3578 + $0x38] sm:$0xff]
      %v3587 = vpack.c.bf16 %v3580, %v3579
      %v3588 = vpack.c.bf16 %v3582, %v3581
      %v3589 = vpack.c.bf16 %v3584, %v3583
      %v3590 = vpack.c.bf16 %v3586, %v3585
      %v3591 = vld [vmem:[#allocation2 + $0xc0] sm:$0xff]
      %v3592 = vld [vmem:[#allocation2 + $0xc8] sm:$0xff]
      %v3593 = vld [vmem:[#allocation2 + $0xd0] sm:$0xff]
      %v3594 = vld [vmem:[#allocation2 + $0xd8] sm:$0xff]
      %v3596 = vsel %vm2498, %v3587, 0
      %v3599 = vsel %vm2498, %v3588, 0
      %v3602 = vsel %vm2498, %v3589, 0
      %v3605 = vsel %vm2498, %v3590, 0
      %3607 = vmatprep.subr.bf16.mxu0 0
      %3608 = vmatpush1.bf16.msra.mxu0 %v3591
      %3609 = vmatprep.subr.bf16.mxu0 0
      %3610 = vmatpush1.bf16.msra.mxu0 %v3592
      %3611 = vmatprep.subr.bf16.mxu0 0
      %3612 = vmatpush1.bf16.msra.mxu0 %v3593
      %3613 = vmatprep.subr.bf16.mxu0 0
      %3614 = vmatpush1.bf16.msra.mxu0 %v3594
      %3615 = vmatprep.subr.bf16.mxu0 0
      %3616 = vmatpush1.bf16.msra.mxu0 0
      %3617 = vmatprep.subr.bf16.mxu0 0
      %3618 = vmatpush1.bf16.msra.mxu0 0
      %3619 = vmatprep.subr.bf16.mxu0 0
      %3620 = vmatpush1.bf16.msra.mxu0 0
      %3621 = vmatprep.subr.bf16.mxu0 0
      %3622 = vmatpush1.bf16.msra.mxu0 0
      %3623 = vmatprep.subr.bf16.mxu0 0
      %3624 = vmatpush1.bf16.msra.mxu0 0
      %3625 = vmatprep.subr.bf16.mxu0 0
      %3626 = vmatpush1.bf16.msra.mxu0 0
      %3627 = vmatprep.subr.bf16.mxu0 0
      %3628 = vmatpush1.bf16.msra.mxu0 0
      %3629 = vmatprep.subr.bf16.mxu0 0
      %3630 = vmatpush1.bf16.msra.mxu0 0
      %3631 = vmatprep.subr.bf16.mxu0 0
      %3632 = vmatpush1.bf16.msra.mxu0 0
      %3633 = vmatprep.subr.bf16.mxu0 0
      %3634 = vmatpush1.bf16.msra.mxu0 0
      %3635 = vmatprep.subr.bf16.mxu0 0
      %3636 = vmatpush1.bf16.msra.mxu0 0
      %3637 = vmatprep.subr.bf16.mxu0 0
      %3638 = vmatpush1.bf16.msra.mxu0 0
      %3639 = vmatprep.mubr.bf16.mxu0 0
      %3640 = vmatmul.mubr.bf16.gmra.mrb[0].mxu0 %v3596
      %v3641 = vpop.f32.mrb[0].mxu0
      %v3642 = vadd.f32 0.0, %v3641
      %v3643 = vpop.f32.mrb[0].mxu0
      %v3644 = vpop.f32.mrb[0].mxu0
      %v3645 = vadd.f32 0.0, %v3644
      %v3646 = vpop.f32.mrb[0].mxu0
      %3647 = vmatprep.mubr.bf16.mxu0 0
      %3648 = vmatmul.mubr.bf16.gmra.mrb[0].mxu0 %v3599
      %v3649 = vpop.f32.mrb[0].mxu0
      %v3650 = vadd.f32 0.0, %v3649
      %v3651 = vpop.f32.mrb[0].mxu0
      %v3652 = vpop.f32.mrb[0].mxu0
      %v3653 = vadd.f32 0.0, %v3652
      %v3654 = vpop.f32.mrb[0].mxu0
      %3655 = vmatprep.mubr.bf16.mxu0 0
      %3656 = vmatmul.mubr.bf16.gmra.mrb[0].mxu0 %v3602
      %v3657 = vpop.f32.mrb[0].mxu0
      %v3658 = vadd.f32 0.0, %v3657
      %v3659 = vpop.f32.mrb[0].mxu0
      %v3660 = vpop.f32.mrb[0].mxu0
      %v3661 = vadd.f32 0.0, %v3660
      %v3662 = vpop.f32.mrb[0].mxu0
      %3663 = vmatprep.mubr.bf16.mxu0 0
      %3664 = vmatmul.mubr.bf16.gmra.mrb[0].mxu0 %v3605
      %v3665 = vpop.f32.mrb[0].mxu0
      %v3666 = vadd.f32 0.0, %v3665
      %v3667 = vpop.f32.mrb[0].mxu0
      %v3668 = vpop.f32.mrb[0].mxu0
      %v3669 = vadd.f32 0.0, %v3668
      %v3670 = vpop.f32.mrb[0].mxu0
      %3671 = vdwg.mxu0
      %3673 = vset.pattern.permute.xlu0 0
      %3674 = vperm.xlu0 %3673, %v3570
      %v3675 = vpop.permute.xlu0 %3674
      %3678 = vset.pattern.permute.xlu0 0
      %3679 = vperm.xlu0 %3678, %v3571
      %v3680 = vpop.permute.xlu0 %3679
      %3683 = vset.pattern.permute.xlu0 0
      %3684 = vperm.xlu0 %3683, %v3572
      %v3685 = vpop.permute.xlu0 %3684
      %3688 = vset.pattern.permute.xlu0 0
      %3689 = vperm.xlu0 %3688, %v3573
      %v3690 = vpop.permute.xlu0 %3689
      %3693 = vset.pattern.permute.xlu0 0
      %3694 = vperm.xlu0 %3693, %v3574
      %v3695 = vpop.permute.xlu0 %3694
      %3698 = vset.pattern.permute.xlu0 0
      %3699 = vperm.xlu0 %3698, %v3575
      %v3700 = vpop.permute.xlu0 %3699
      %3703 = vset.pattern.permute.xlu0 0
      %3704 = vperm.xlu0 %3703, %v3576
      %v3705 = vpop.permute.xlu0 %3704
      %3708 = vset.pattern.permute.xlu0 0
      %3709 = vperm.xlu0 %3708, %v3577
      %v3710 = vpop.permute.xlu0 %3709
      %v3712 = vmul.f32 %v3642, %v3675
      %v3713 = vmul.f32 %v3645, %v3680
      %v3714 = vmul.f32 %v3650, %v3685
      %v3715 = vmul.f32 %v3653, %v3690
      %v3716 = vmul.f32 %v3658, %v3695
      %v3717 = vmul.f32 %v3661, %v3700
      %v3718 = vmul.f32 %v3666, %v3705
      %v3719 = vmul.f32 %v3669, %v3710
      %v3720 = vadd.f32 %v3712, %v2627
      %v3721 = vadd.f32 %v3713, %v2627
      %v3722 = vadd.f32 %v3714, %v2627
      %v3723 = vadd.f32 %v3715, %v2627
      %v3724 = vadd.f32 %v3716, %v2627
      %v3725 = vadd.f32 %v3717, %v2627
      %v3726 = vadd.f32 %v3718, %v2627
      %v3727 = vadd.f32 %v3719, %v2627
      %v3728 = vmax.f32 %v3720, 0.0
      %v3729 = vmax.f32 %v3721, 0.0
      %v3730 = vmax.f32 %v3722, 0.0
      %v3731 = vmax.f32 %v3723, 0.0
      %v3732 = vmax.f32 %v3724, 0.0
      %v3733 = vmax.f32 %v3725, 0.0
      %v3734 = vmax.f32 %v3726, 0.0
      %v3735 = vmax.f32 %v3727, 0.0
      %v3736 = vmul.f32 %v3728, %v3675
      %v3737 = vmul.f32 %v3729, %v3680
      %v3738 = vmul.f32 %v3730, %v3685
      %v3739 = vmul.f32 %v3731, %v3690
      %v3740 = vmul.f32 %v3732, %v3695
      %v3741 = vmul.f32 %v3733, %v3700
      %v3742 = vmul.f32 %v3734, %v3705
      %v3743 = vmul.f32 %v3735, %v3710
      %v3744 = vpack.c.bf16 %v3737, %v3736
      %v3745 = vpack.c.bf16 %v3739, %v3738
      %v3746 = vpack.c.bf16 %v3741, %v3740
      %v3747 = vpack.c.bf16 %v3743, %v3742
      %3748 = vst.msk [vmem:[#allocation4 + $0xc0] sm:$0xff] %vm1380, %v3744
      %3749 = vst.msk [vmem:[#allocation4 + $0xc8] sm:$0xff] %vm1380, %v3745
      %3750 = vst.msk [vmem:[#allocation4 + $0xd0] sm:$0xff] %vm1380, %v3746
      %3751 = vst.msk [vmem:[#allocation4 + $0xd8] sm:$0xff] %vm1380, %v3747
      %v3752 = vld [vmem:[%s395 + $0x1c0] sm:$0xff]
      %v3753 = vld [vmem:[%s395 + $0x1c8] sm:$0xff]
      %v3754 = vld [vmem:[%s395 + $0x1d0] sm:$0xff]
      %v3755 = vld [vmem:[%s395 + $0x1d8] sm:$0xff]
      %v3756 = vld [vmem:[%s395 + $0x1e0] sm:$0xff]
      %v3757 = vld [vmem:[%s395 + $0x1e8] sm:$0xff]
      %v3758 = vld [vmem:[%s395 + $0x1f0] sm:$0xff]
      %v3759 = vld [vmem:[%s395 + $0x1f8] sm:$0xff]
      %s3760 = scalar_lea.vmem %s382, 448
      %v3761 = vld [vmem:[%s3760] sm:$0xff]
      %v3762 = vld [vmem:[%s3760 + $0x8] sm:$0xff]
      %v3763 = vld [vmem:[%s3760 + $0x10] sm:$0xff]
      %v3764 = vld [vmem:[%s3760 + $0x18] sm:$0xff]
      %v3765 = vld [vmem:[%s3760 + $0x20] sm:$0xff]
      %v3766 = vld [vmem:[%s3760 + $0x28] sm:$0xff]
      %v3767 = vld [vmem:[%s3760 + $0x30] sm:$0xff]
      %v3768 = vld [vmem:[%s3760 + $0x38] sm:$0xff]
      %v3769 = vpack.c.bf16 %v3762, %v3761
      %v3770 = vpack.c.bf16 %v3764, %v3763
      %v3771 = vpack.c.bf16 %v3766, %v3765
      %v3772 = vpack.c.bf16 %v3768, %v3767
      %v3773 = vld [vmem:[#allocation2 + $0xe0] sm:$0xff]
      %v3774 = vld [vmem:[#allocation2 + $0xe8] sm:$0xff]
      %v3775 = vld [vmem:[#allocation2 + $0xf0] sm:$0xff]
      %v3776 = vld [vmem:[#allocation2 + $0xf8] sm:$0xff]
      %v3778 = vsel %vm2498, %v3769, 0
      %v3781 = vsel %vm2498, %v3770, 0
      %v3784 = vsel %vm2498, %v3771, 0
      %v3787 = vsel %vm2498, %v3772, 0
      %3789 = vmatprep.subr.bf16.mxu0 0
      %3790 = vmatpush1.bf16.msra.mxu0 %v3773
      %3791 = vmatprep.subr.bf16.mxu0 0
      %3792 = vmatpush1.bf16.msra.mxu0 %v3774
      %3793 = vmatprep.subr.bf16.mxu0 0
      %3794 = vmatpush1.bf16.msra.mxu0 %v3775
      %3795 = vmatprep.subr.bf16.mxu0 0
      %3796 = vmatpush1.bf16.msra.mxu0 %v3776
      %3797 = vmatprep.subr.bf16.mxu0 0
      %3798 = vmatpush1.bf16.msra.mxu0 0
      %3799 = vmatprep.subr.bf16.mxu0 0
      %3800 = vmatpush1.bf16.msra.mxu0 0
      %3801 = vmatprep.subr.bf16.mxu0 0
      %3802 = vmatpush1.bf16.msra.mxu0 0
      %3803 = vmatprep.subr.bf16.mxu0 0
      %3804 = vmatpush1.bf16.msra.mxu0 0
      %3805 = vmatprep.subr.bf16.mxu0 0
      %3806 = vmatpush1.bf16.msra.mxu0 0
      %3807 = vmatprep.subr.bf16.mxu0 0
      %3808 = vmatpush1.bf16.msra.mxu0 0
      %3809 = vmatprep.subr.bf16.mxu0 0
      %3810 = vmatpush1.bf16.msra.mxu0 0
      %3811 = vmatprep.subr.bf16.mxu0 0
      %3812 = vmatpush1.bf16.msra.mxu0 0
      %3813 = vmatprep.subr.bf16.mxu0 0
      %3814 = vmatpush1.bf16.msra.mxu0 0
      %3815 = vmatprep.subr.bf16.mxu0 0
      %3816 = vmatpush1.bf16.msra.mxu0 0
      %3817 = vmatprep.subr.bf16.mxu0 0
      %3818 = vmatpush1.bf16.msra.mxu0 0
      %3819 = vmatprep.subr.bf16.mxu0 0
      %3820 = vmatpush1.bf16.msra.mxu0 0
      %3821 = vmatprep.mubr.bf16.mxu0 0
      %3822 = vmatmul.mubr.bf16.gmra.mrb[0].mxu0 %v3778
      %v3823 = vpop.f32.mrb[0].mxu0
      %v3824 = vadd.f32 0.0, %v3823
      %v3825 = vpop.f32.mrb[0].mxu0
      %v3826 = vpop.f32.mrb[0].mxu0
      %v3827 = vadd.f32 0.0, %v3826
      %v3828 = vpop.f32.mrb[0].mxu0
      %3829 = vmatprep.mubr.bf16.mxu0 0
      %3830 = vmatmul.mubr.bf16.gmra.mrb[0].mxu0 %v3781
      %v3831 = vpop.f32.mrb[0].mxu0
      %v3832 = vadd.f32 0.0, %v3831
      %v3833 = vpop.f32.mrb[0].mxu0
      %v3834 = vpop.f32.mrb[0].mxu0
      %v3835 = vadd.f32 0.0, %v3834
      %v3836 = vpop.f32.mrb[0].mxu0
      %3837 = vmatprep.mubr.bf16.mxu0 0
      %3838 = vmatmul.mubr.bf16.gmra.mrb[0].mxu0 %v3784
      %v3839 = vpop.f32.mrb[0].mxu0
      %v3840 = vadd.f32 0.0, %v3839
      %v3841 = vpop.f32.mrb[0].mxu0
      %v3842 = vpop.f32.mrb[0].mxu0
      %v3843 = vadd.f32 0.0, %v3842
      %v3844 = vpop.f32.mrb[0].mxu0
      %3845 = vmatprep.mubr.bf16.mxu0 0
      %3846 = vmatmul.mubr.bf16.gmra.mrb[0].mxu0 %v3787
      %v3847 = vpop.f32.mrb[0].mxu0
      %v3848 = vadd.f32 0.0, %v3847
      %v3849 = vpop.f32.mrb[0].mxu0
      %v3850 = vpop.f32.mrb[0].mxu0
      %v3851 = vadd.f32 0.0, %v3850
      %v3852 = vpop.f32.mrb[0].mxu0
      %3853 = vdwg.mxu0
      %3855 = vset.pattern.permute.xlu0 0
      %3856 = vperm.xlu0 %3855, %v3752
      %v3857 = vpop.permute.xlu0 %3856
      %3860 = vset.pattern.permute.xlu0 0
      %3861 = vperm.xlu0 %3860, %v3753
      %v3862 = vpop.permute.xlu0 %3861
      %3865 = vset.pattern.permute.xlu0 0
      %3866 = vperm.xlu0 %3865, %v3754
      %v3867 = vpop.permute.xlu0 %3866
      %3870 = vset.pattern.permute.xlu0 0
      %3871 = vperm.xlu0 %3870, %v3755
      %v3872 = vpop.permute.xlu0 %3871
      %3875 = vset.pattern.permute.xlu0 0
      %3876 = vperm.xlu0 %3875, %v3756
      %v3877 = vpop.permute.xlu0 %3876
      %3880 = vset.pattern.permute.xlu0 0
      %3881 = vperm.xlu0 %3880, %v3757
      %v3882 = vpop.permute.xlu0 %3881
      %3885 = vset.pattern.permute.xlu0 0
      %3886 = vperm.xlu0 %3885, %v3758
      %v3887 = vpop.permute.xlu0 %3886
      %3890 = vset.pattern.permute.xlu0 0
      %3891 = vperm.xlu0 %3890, %v3759
      %v3892 = vpop.permute.xlu0 %3891
      %v3894 = vmul.f32 %v3824, %v3857
      %v3895 = vmul.f32 %v3827, %v3862
      %v3896 = vmul.f32 %v3832, %v3867
      %v3897 = vmul.f32 %v3835, %v3872
      %v3898 = vmul.f32 %v3840, %v3877
      %v3899 = vmul.f32 %v3843, %v3882
      %v3900 = vmul.f32 %v3848, %v3887
      %v3901 = vmul.f32 %v3851, %v3892
      %v3902 = vadd.f32 %v3894, %v2627
      %v3903 = vadd.f32 %v3895, %v2627
      %v3904 = vadd.f32 %v3896, %v2627
      %v3905 = vadd.f32 %v3897, %v2627
      %v3906 = vadd.f32 %v3898, %v2627
      %v3907 = vadd.f32 %v3899, %v2627
      %v3908 = vadd.f32 %v3900, %v2627
      %v3909 = vadd.f32 %v3901, %v2627
      %v3910 = vmax.f32 %v3902, 0.0
      %v3911 = vmax.f32 %v3903, 0.0
      %v3912 = vmax.f32 %v3904, 0.0
      %v3913 = vmax.f32 %v3905, 0.0
      %v3914 = vmax.f32 %v3906, 0.0
      %v3915 = vmax.f32 %v3907, 0.0
      %v3916 = vmax.f32 %v3908, 0.0
      %v3917 = vmax.f32 %v3909, 0.0
      %v3918 = vmul.f32 %v3910, %v3857
      %v3919 = vmul.f32 %v3911, %v3862
      %v3920 = vmul.f32 %v3912, %v3867
      %v3921 = vmul.f32 %v3913, %v3872
      %v3922 = vmul.f32 %v3914, %v3877
      %v3923 = vmul.f32 %v3915, %v3882
      %v3924 = vmul.f32 %v3916, %v3887
      %v3925 = vmul.f32 %v3917, %v3892
      %v3926 = vpack.c.bf16 %v3919, %v3918
      %v3927 = vpack.c.bf16 %v3921, %v3920
      %v3928 = vpack.c.bf16 %v3923, %v3922
      %v3929 = vpack.c.bf16 %v3925, %v3924
      %3930 = vst.msk [vmem:[#allocation4 + $0xe0] sm:$0xff] %vm1380, %v3926
      %3931 = vst.msk [vmem:[#allocation4 + $0xe8] sm:$0xff] %vm1380, %v3927
      %3932 = vst.msk [vmem:[#allocation4 + $0xf0] sm:$0xff] %vm1380, %v3928
      %3933 = vst.msk [vmem:[#allocation4 + $0xf8] sm:$0xff] %vm1380, %v3929
      %v3934 = vld [vmem:[#allocation4] sm:$0xff]
      %v3935 = vld [vmem:[#allocation4 + $0x8] sm:$0xff]
      %v3936 = vld [vmem:[#allocation4 + $0x10] sm:$0xff]
      %v3937 = vld [vmem:[#allocation4 + $0x18] sm:$0xff]
      %v3938 = vld [vmem:[#allocation4 + $0x20] sm:$0xff]
      %v3939 = vld [vmem:[#allocation4 + $0x28] sm:$0xff]
      %v3940 = vld [vmem:[#allocation4 + $0x30] sm:$0xff]
      %v3941 = vld [vmem:[#allocation4 + $0x38] sm:$0xff]
      %v3942 = vld [vmem:[#allocation4 + $0x40] sm:$0xff]
      %v3943 = vld [vmem:[#allocation4 + $0x48] sm:$0xff]
      %v3944 = vld [vmem:[#allocation4 + $0x50] sm:$0xff]
      %v3945 = vld [vmem:[#allocation4 + $0x58] sm:$0xff]
      %v3946 = vld [vmem:[#allocation4 + $0x60] sm:$0xff]
      %v3947 = vld [vmem:[#allocation4 + $0x68] sm:$0xff]
      %v3948 = vld [vmem:[#allocation4 + $0x70] sm:$0xff]
      %v3949 = vld [vmem:[#allocation4 + $0x78] sm:$0xff]
      %v3950 = vld [vmem:[#allocation4 + $0x80] sm:$0xff]
      %v3951 = vld [vmem:[#allocation4 + $0x88] sm:$0xff]
      %v3952 = vld [vmem:[#allocation4 + $0x90] sm:$0xff]
      %v3953 = vld [vmem:[#allocation4 + $0x98] sm:$0xff]
      %v3954 = vld [vmem:[#allocation4 + $0xa0] sm:$0xff]
      %v3955 = vld [vmem:[#allocation4 + $0xa8] sm:$0xff]
      %v3956 = vld [vmem:[#allocation4 + $0xb0] sm:$0xff]
      %v3957 = vld [vmem:[#allocation4 + $0xb8] sm:$0xff]
      %v3958 = vld [vmem:[#allocation4 + $0xc0] sm:$0xff]
      %v3959 = vld [vmem:[#allocation4 + $0xc8] sm:$0xff]
      %v3960 = vld [vmem:[#allocation4 + $0xd0] sm:$0xff]
      %v3961 = vld [vmem:[#allocation4 + $0xd8] sm:$0xff]
      %v3962 = vld [vmem:[#allocation4 + $0xe0] sm:$0xff]
      %v3963 = vld [vmem:[#allocation4 + $0xe8] sm:$0xff]
      %v3964 = vld [vmem:[#allocation4 + $0xf0] sm:$0xff]
      %v3965 = vld [vmem:[#allocation4 + $0xf8] sm:$0xff]
      %v3967 = vsel %vm1380, %v3934, 0
      %v3970 = vsel %vm1380, %v3935, 0
      %v3973 = vsel %vm1380, %v3936, 0
      %v3976 = vsel %vm1380, %v3937, 0
      %v3979 = vsel %vm1380, %v3938, 0
      %v3982 = vsel %vm1380, %v3939, 0
      %v3985 = vsel %vm1380, %v3940, 0
      %v3988 = vsel %vm1380, %v3941, 0
      %v3991 = vsel %vm1380, %v3942, 0
      %v3994 = vsel %vm1380, %v3943, 0
      %v3997 = vsel %vm1380, %v3944, 0
      %v4000 = vsel %vm1380, %v3945, 0
      %v4003 = vsel %vm1380, %v3946, 0
      %v4006 = vsel %vm1380, %v3947, 0
      %v4009 = vsel %vm1380, %v3948, 0
      %v4012 = vsel %vm1380, %v3949, 0
      %v4015 = vsel %vm1380, %v3950, 0
      %v4018 = vsel %vm1380, %v3951, 0
      %v4021 = vsel %vm1380, %v3952, 0
      %v4024 = vsel %vm1380, %v3953, 0
      %v4027 = vsel %vm1380, %v3954, 0
      %v4030 = vsel %vm1380, %v3955, 0
      %v4033 = vsel %vm1380, %v3956, 0
      %v4036 = vsel %vm1380, %v3957, 0
      %v4039 = vsel %vm1380, %v3958, 0
      %v4042 = vsel %vm1380, %v3959, 0
      %v4045 = vsel %vm1380, %v3960, 0
      %v4048 = vsel %vm1380, %v3961, 0
      %v4051 = vsel %vm1380, %v3962, 0
      %v4054 = vsel %vm1380, %v3963, 0
      %v4057 = vsel %vm1380, %v3964, 0
      %v4060 = vsel %vm1380, %v3965, 0
      %4062 = vmatprep.subr.bf16.mxu0 0
      %4063 = vmatpush1.bf16.msra.mxu0 %v411
      %4064 = vmatprep.subr.bf16.mxu0 0
      %4065 = vmatpush1.bf16.msra.mxu0 %v412
      %4066 = vmatprep.subr.bf16.mxu0 0
      %4067 = vmatpush1.bf16.msra.mxu0 0
      %4068 = vmatprep.subr.bf16.mxu0 0
      %4069 = vmatpush1.bf16.msra.mxu0 0
      %4070 = vmatprep.subr.bf16.mxu0 0
      %4071 = vmatpush1.bf16.msra.mxu0 0
      %4072 = vmatprep.subr.bf16.mxu0 0
      %4073 = vmatpush1.bf16.msra.mxu0 0
      %4074 = vmatprep.subr.bf16.mxu0 0
      %4075 = vmatpush1.bf16.msra.mxu0 0
      %4076 = vmatprep.subr.bf16.mxu0 0
      %4077 = vmatpush1.bf16.msra.mxu0 0
      %4078 = vmatprep.subr.bf16.mxu0 0
      %4079 = vmatpush1.bf16.msra.mxu0 0
      %4080 = vmatprep.subr.bf16.mxu0 0
      %4081 = vmatpush1.bf16.msra.mxu0 0
      %4082 = vmatprep.subr.bf16.mxu0 0
      %4083 = vmatpush1.bf16.msra.mxu0 0
      %4084 = vmatprep.subr.bf16.mxu0 0
      %4085 = vmatpush1.bf16.msra.mxu0 0
      %4086 = vmatprep.subr.bf16.mxu0 0
      %4087 = vmatpush1.bf16.msra.mxu0 0
      %4088 = vmatprep.subr.bf16.mxu0 0
      %4089 = vmatpush1.bf16.msra.mxu0 0
      %4090 = vmatprep.subr.bf16.mxu0 0
      %4091 = vmatpush1.bf16.msra.mxu0 0
      %4092 = vmatprep.subr.bf16.mxu0 0
      %4093 = vmatpush1.bf16.msra.mxu0 0
      %4094 = vmatprep.mubr.bf16.mxu0 0
      %4095 = vmatmul.mubr.bf16.gmra.mrb[0].mxu0 %v3967
      %v4096 = vpop.f32.mrb[0].mxu0
      %v4097 = vadd.f32 0.0, %v4096
      %v4098 = vpop.f32.mrb[0].mxu0
      %v4099 = vpop.f32.mrb[0].mxu0
      %v4100 = vadd.f32 0.0, %v4099
      %v4101 = vpop.f32.mrb[0].mxu0
      %4102 = vmatprep.mubr.bf16.mxu0 0
      %4103 = vmatmul.mubr.bf16.gmra.mrb[0].mxu0 %v3970
      %v4104 = vpop.f32.mrb[0].mxu0
      %v4105 = vadd.f32 0.0, %v4104
      %v4106 = vpop.f32.mrb[0].mxu0
      %v4107 = vpop.f32.mrb[0].mxu0
      %v4108 = vadd.f32 0.0, %v4107
      %v4109 = vpop.f32.mrb[0].mxu0
      %4110 = vmatprep.mubr.bf16.mxu0 0
      %4111 = vmatmul.mubr.bf16.gmra.mrb[0].mxu0 %v3973
      %v4112 = vpop.f32.mrb[0].mxu0
      %v4113 = vadd.f32 0.0, %v4112
      %v4114 = vpop.f32.mrb[0].mxu0
      %v4115 = vpop.f32.mrb[0].mxu0
      %v4116 = vadd.f32 0.0, %v4115
      %v4117 = vpop.f32.mrb[0].mxu0
      %4118 = vmatprep.mubr.bf16.mxu0 0
      %4119 = vmatmul.mubr.bf16.gmra.mrb[0].mxu0 %v3976
      %v4120 = vpop.f32.mrb[0].mxu0
      %v4121 = vadd.f32 0.0, %v4120
      %v4122 = vpop.f32.mrb[0].mxu0
      %v4123 = vpop.f32.mrb[0].mxu0
      %v4124 = vadd.f32 0.0, %v4123
      %v4125 = vpop.f32.mrb[0].mxu0
      %4126 = vmatprep.mubr.bf16.mxu0 0
      %4127 = vmatmul.mubr.bf16.gmra.mrb[0].mxu0 %v3979
      %v4128 = vpop.f32.mrb[0].mxu0
      %v4129 = vadd.f32 0.0, %v4128
      %v4130 = vpop.f32.mrb[0].mxu0
      %v4131 = vpop.f32.mrb[0].mxu0
      %v4132 = vadd.f32 0.0, %v4131
      %v4133 = vpop.f32.mrb[0].mxu0
      %4134 = vmatprep.mubr.bf16.mxu0 0
      %4135 = vmatmul.mubr.bf16.gmra.mrb[0].mxu0 %v3982
      %v4136 = vpop.f32.mrb[0].mxu0
      %v4137 = vadd.f32 0.0, %v4136
      %v4138 = vpop.f32.mrb[0].mxu0
      %v4139 = vpop.f32.mrb[0].mxu0
      %v4140 = vadd.f32 0.0, %v4139
      %v4141 = vpop.f32.mrb[0].mxu0
      %4142 = vmatprep.mubr.bf16.mxu0 0
      %4143 = vmatmul.mubr.bf16.gmra.mrb[0].mxu0 %v3985
      %v4144 = vpop.f32.mrb[0].mxu0
      %v4145 = vadd.f32 0.0, %v4144
      %v4146 = vpop.f32.mrb[0].mxu0
      %v4147 = vpop.f32.mrb[0].mxu0
      %v4148 = vadd.f32 0.0, %v4147
      %v4149 = vpop.f32.mrb[0].mxu0
      %4150 = vmatprep.mubr.bf16.mxu0 0
      %4151 = vmatmul.mubr.bf16.gmra.mrb[0].mxu0 %v3988
      %v4152 = vpop.f32.mrb[0].mxu0
      %v4153 = vadd.f32 0.0, %v4152
      %v4154 = vpop.f32.mrb[0].mxu0
      %v4155 = vpop.f32.mrb[0].mxu0
      %v4156 = vadd.f32 0.0, %v4155
      %v4157 = vpop.f32.mrb[0].mxu0
      %4158 = vmatprep.mubr.bf16.mxu0 0
      %4159 = vmatmul.mubr.bf16.gmra.mrb[0].mxu0 %v3991
      %v4160 = vpop.f32.mrb[0].mxu0
      %v4161 = vadd.f32 0.0, %v4160
      %v4162 = vpop.f32.mrb[0].mxu0
      %v4163 = vpop.f32.mrb[0].mxu0
      %v4164 = vadd.f32 0.0, %v4163
      %v4165 = vpop.f32.mrb[0].mxu0
      %4166 = vmatprep.mubr.bf16.mxu0 0
      %4167 = vmatmul.mubr.bf16.gmra.mrb[0].mxu0 %v3994
      %v4168 = vpop.f32.mrb[0].mxu0
      %v4169 = vadd.f32 0.0, %v4168
      %v4170 = vpop.f32.mrb[0].mxu0
      %v4171 = vpop.f32.mrb[0].mxu0
      %v4172 = vadd.f32 0.0, %v4171
      %v4173 = vpop.f32.mrb[0].mxu0
      %4174 = vmatprep.mubr.bf16.mxu0 0
      %4175 = vmatmul.mubr.bf16.gmra.mrb[0].mxu0 %v3997
      %v4176 = vpop.f32.mrb[0].mxu0
      %v4177 = vadd.f32 0.0, %v4176
      %v4178 = vpop.f32.mrb[0].mxu0
      %v4179 = vpop.f32.mrb[0].mxu0
      %v4180 = vadd.f32 0.0, %v4179
      %v4181 = vpop.f32.mrb[0].mxu0
      %4182 = vmatprep.mubr.bf16.mxu0 0
      %4183 = vmatmul.mubr.bf16.gmra.mrb[0].mxu0 %v4000
      %v4184 = vpop.f32.mrb[0].mxu0
      %v4185 = vadd.f32 0.0, %v4184
      %v4186 = vpop.f32.mrb[0].mxu0
      %v4187 = vpop.f32.mrb[0].mxu0
      %v4188 = vadd.f32 0.0, %v4187
      %v4189 = vpop.f32.mrb[0].mxu0
      %4190 = vmatprep.mubr.bf16.mxu0 0
      %4191 = vmatmul.mubr.bf16.gmra.mrb[0].mxu0 %v4003
      %v4192 = vpop.f32.mrb[0].mxu0
      %v4193 = vadd.f32 0.0, %v4192
      %v4194 = vpop.f32.mrb[0].mxu0
      %v4195 = vpop.f32.mrb[0].mxu0
      %v4196 = vadd.f32 0.0, %v4195
      %v4197 = vpop.f32.mrb[0].mxu0
      %4198 = vmatprep.mubr.bf16.mxu0 0
      %4199 = vmatmul.mubr.bf16.gmra.mrb[0].mxu0 %v4006
      %v4200 = vpop.f32.mrb[0].mxu0
      %v4201 = vadd.f32 0.0, %v4200
      %v4202 = vpop.f32.mrb[0].mxu0
      %v4203 = vpop.f32.mrb[0].mxu0
      %v4204 = vadd.f32 0.0, %v4203
      %v4205 = vpop.f32.mrb[0].mxu0
      %4206 = vmatprep.mubr.bf16.mxu0 0
      %4207 = vmatmul.mubr.bf16.gmra.mrb[0].mxu0 %v4009
      %v4208 = vpop.f32.mrb[0].mxu0
      %v4209 = vadd.f32 0.0, %v4208
      %v4210 = vpop.f32.mrb[0].mxu0
      %v4211 = vpop.f32.mrb[0].mxu0
      %v4212 = vadd.f32 0.0, %v4211
      %v4213 = vpop.f32.mrb[0].mxu0
      %4214 = vmatprep.mubr.bf16.mxu0 0
      %4215 = vmatmul.mubr.bf16.gmra.mrb[0].mxu0 %v4012
      %v4216 = vpop.f32.mrb[0].mxu0
      %v4217 = vadd.f32 0.0, %v4216
      %v4218 = vpop.f32.mrb[0].mxu0
      %v4219 = vpop.f32.mrb[0].mxu0
      %v4220 = vadd.f32 0.0, %v4219
      %v4221 = vpop.f32.mrb[0].mxu0
      %4222 = vmatprep.mubr.bf16.mxu0 0
      %4223 = vmatmul.mubr.bf16.gmra.mrb[0].mxu0 %v4015
      %v4224 = vpop.f32.mrb[0].mxu0
      %v4225 = vadd.f32 0.0, %v4224
      %v4226 = vpop.f32.mrb[0].mxu0
      %v4227 = vpop.f32.mrb[0].mxu0
      %v4228 = vadd.f32 0.0, %v4227
      %v4229 = vpop.f32.mrb[0].mxu0
      %4230 = vmatprep.mubr.bf16.mxu0 0
      %4231 = vmatmul.mubr.bf16.gmra.mrb[0].mxu0 %v4018
      %v4232 = vpop.f32.mrb[0].mxu0
      %v4233 = vadd.f32 0.0, %v4232
      %v4234 = vpop.f32.mrb[0].mxu0
      %v4235 = vpop.f32.mrb[0].mxu0
      %v4236 = vadd.f32 0.0, %v4235
      %v4237 = vpop.f32.mrb[0].mxu0
      %4238 = vmatprep.mubr.bf16.mxu0 0
      %4239 = vmatmul.mubr.bf16.gmra.mrb[0].mxu0 %v4021
      %v4240 = vpop.f32.mrb[0].mxu0
      %v4241 = vadd.f32 0.0, %v4240
      %v4242 = vpop.f32.mrb[0].mxu0
      %v4243 = vpop.f32.mrb[0].mxu0
      %v4244 = vadd.f32 0.0, %v4243
      %v4245 = vpop.f32.mrb[0].mxu0
      %4246 = vmatprep.mubr.bf16.mxu0 0
      %4247 = vmatmul.mubr.bf16.gmra.mrb[0].mxu0 %v4024
      %v4248 = vpop.f32.mrb[0].mxu0
      %v4249 = vadd.f32 0.0, %v4248
      %v4250 = vpop.f32.mrb[0].mxu0
      %v4251 = vpop.f32.mrb[0].mxu0
      %v4252 = vadd.f32 0.0, %v4251
      %v4253 = vpop.f32.mrb[0].mxu0
      %4254 = vmatprep.mubr.bf16.mxu0 0
      %4255 = vmatmul.mubr.bf16.gmra.mrb[0].mxu0 %v4027
      %v4256 = vpop.f32.mrb[0].mxu0
      %v4257 = vadd.f32 0.0, %v4256
      %v4258 = vpop.f32.mrb[0].mxu0
      %v4259 = vpop.f32.mrb[0].mxu0
      %v4260 = vadd.f32 0.0, %v4259
      %v4261 = vpop.f32.mrb[0].mxu0
      %4262 = vmatprep.mubr.bf16.mxu0 0
      %4263 = vmatmul.mubr.bf16.gmra.mrb[0].mxu0 %v4030
      %v4264 = vpop.f32.mrb[0].mxu0
      %v4265 = vadd.f32 0.0, %v4264
      %v4266 = vpop.f32.mrb[0].mxu0
      %v4267 = vpop.f32.mrb[0].mxu0
      %v4268 = vadd.f32 0.0, %v4267
      %v4269 = vpop.f32.mrb[0].mxu0
      %4270 = vmatprep.mubr.bf16.mxu0 0
      %4271 = vmatmul.mubr.bf16.gmra.mrb[0].mxu0 %v4033
      %v4272 = vpop.f32.mrb[0].mxu0
      %v4273 = vadd.f32 0.0, %v4272
      %v4274 = vpop.f32.mrb[0].mxu0
      %v4275 = vpop.f32.mrb[0].mxu0
      %v4276 = vadd.f32 0.0, %v4275
      %v4277 = vpop.f32.mrb[0].mxu0
      %4278 = vmatprep.mubr.bf16.mxu0 0
      %4279 = vmatmul.mubr.bf16.gmra.mrb[0].mxu0 %v4036
      %v4280 = vpop.f32.mrb[0].mxu0
      %v4281 = vadd.f32 0.0, %v4280
      %v4282 = vpop.f32.mrb[0].mxu0
      %v4283 = vpop.f32.mrb[0].mxu0
      %v4284 = vadd.f32 0.0, %v4283
      %v4285 = vpop.f32.mrb[0].mxu0
      %4286 = vmatprep.mubr.bf16.mxu0 0
      %4287 = vmatmul.mubr.bf16.gmra.mrb[0].mxu0 %v4039
      %v4288 = vpop.f32.mrb[0].mxu0
      %v4289 = vadd.f32 0.0, %v4288
      %v4290 = vpop.f32.mrb[0].mxu0
      %v4291 = vpop.f32.mrb[0].mxu0
      %v4292 = vadd.f32 0.0, %v4291
      %v4293 = vpop.f32.mrb[0].mxu0
      %4294 = vmatprep.mubr.bf16.mxu0 0
      %4295 = vmatmul.mubr.bf16.gmra.mrb[0].mxu0 %v4042
      %v4296 = vpop.f32.mrb[0].mxu0
      %v4297 = vadd.f32 0.0, %v4296
      %v4298 = vpop.f32.mrb[0].mxu0
      %v4299 = vpop.f32.mrb[0].mxu0
      %v4300 = vadd.f32 0.0, %v4299
      %v4301 = vpop.f32.mrb[0].mxu0
      %4302 = vmatprep.mubr.bf16.mxu0 0
      %4303 = vmatmul.mubr.bf16.gmra.mrb[0].mxu0 %v4045
      %v4304 = vpop.f32.mrb[0].mxu0
      %v4305 = vadd.f32 0.0, %v4304
      %v4306 = vpop.f32.mrb[0].mxu0
      %v4307 = vpop.f32.mrb[0].mxu0
      %v4308 = vadd.f32 0.0, %v4307
      %v4309 = vpop.f32.mrb[0].mxu0
      %4310 = vmatprep.mubr.bf16.mxu0 0
      %4311 = vmatmul.mubr.bf16.gmra.mrb[0].mxu0 %v4048
      %v4312 = vpop.f32.mrb[0].mxu0
      %v4313 = vadd.f32 0.0, %v4312
      %v4314 = vpop.f32.mrb[0].mxu0
      %v4315 = vpop.f32.mrb[0].mxu0
      %v4316 = vadd.f32 0.0, %v4315
      %v4317 = vpop.f32.mrb[0].mxu0
      %4318 = vmatprep.mubr.bf16.mxu0 0
      %4319 = vmatmul.mubr.bf16.gmra.mrb[0].mxu0 %v4051
      %v4320 = vpop.f32.mrb[0].mxu0
      %v4321 = vadd.f32 0.0, %v4320
      %v4322 = vpop.f32.mrb[0].mxu0
      %v4323 = vpop.f32.mrb[0].mxu0
      %v4324 = vadd.f32 0.0, %v4323
      %v4325 = vpop.f32.mrb[0].mxu0
      %4326 = vmatprep.mubr.bf16.mxu0 0
      %4327 = vmatmul.mubr.bf16.gmra.mrb[0].mxu0 %v4054
      %v4328 = vpop.f32.mrb[0].mxu0
      %v4329 = vadd.f32 0.0, %v4328
      %v4330 = vpop.f32.mrb[0].mxu0
      %v4331 = vpop.f32.mrb[0].mxu0
      %v4332 = vadd.f32 0.0, %v4331
      %v4333 = vpop.f32.mrb[0].mxu0
      %4334 = vmatprep.mubr.bf16.mxu0 0
      %4335 = vmatmul.mubr.bf16.gmra.mrb[0].mxu0 %v4057
      %v4336 = vpop.f32.mrb[0].mxu0
      %v4337 = vadd.f32 0.0, %v4336
      %v4338 = vpop.f32.mrb[0].mxu0
      %v4339 = vpop.f32.mrb[0].mxu0
      %v4340 = vadd.f32 0.0, %v4339
      %v4341 = vpop.f32.mrb[0].mxu0
      %4342 = vmatprep.mubr.bf16.mxu0 0
      %4343 = vmatmul.mubr.bf16.gmra.mrb[0].mxu0 %v4060
      %v4344 = vpop.f32.mrb[0].mxu0
      %v4345 = vadd.f32 0.0, %v4344
      %v4346 = vpop.f32.mrb[0].mxu0
      %v4347 = vpop.f32.mrb[0].mxu0
      %v4348 = vadd.f32 0.0, %v4347
      %v4349 = vpop.f32.mrb[0].mxu0
      %4350 = vdwg.mxu0
      %v4351 = vpack.c.bf16 %v4100, %v4097
      %v4352 = vpack.c.bf16 %v4108, %v4105
      %v4353 = vpack.c.bf16 %v4116, %v4113
      %v4354 = vpack.c.bf16 %v4124, %v4121
      %v4355 = vpack.c.bf16 %v4132, %v4129
      %v4356 = vpack.c.bf16 %v4140, %v4137
      %v4357 = vpack.c.bf16 %v4148, %v4145
      %v4358 = vpack.c.bf16 %v4156, %v4153
      %v4359 = vpack.c.bf16 %v4164, %v4161
      %v4360 = vpack.c.bf16 %v4172, %v4169
      %v4361 = vpack.c.bf16 %v4180, %v4177
      %v4362 = vpack.c.bf16 %v4188, %v4185
      %v4363 = vpack.c.bf16 %v4196, %v4193
      %v4364 = vpack.c.bf16 %v4204, %v4201
      %v4365 = vpack.c.bf16 %v4212, %v4209
      %v4366 = vpack.c.bf16 %v4220, %v4217
      %v4367 = vpack.c.bf16 %v4228, %v4225
      %v4368 = vpack.c.bf16 %v4236, %v4233
      %v4369 = vpack.c.bf16 %v4244, %v4241
      %v4370 = vpack.c.bf16 %v4252, %v4249
      %v4371 = vpack.c.bf16 %v4260, %v4257
      %v4372 = vpack.c.bf16 %v4268, %v4265
      %v4373 = vpack.c.bf16 %v4276, %v4273
      %v4374 = vpack.c.bf16 %v4284, %v4281
      %v4375 = vpack.c.bf16 %v4292, %v4289
      %v4376 = vpack.c.bf16 %v4300, %v4297
      %v4377 = vpack.c.bf16 %v4308, %v4305
      %v4378 = vpack.c.bf16 %v4316, %v4313
      %v4379 = vpack.c.bf16 %v4324, %v4321
      %v4380 = vpack.c.bf16 %v4332, %v4329
      %v4381 = vpack.c.bf16 %v4340, %v4337
      %v4382 = vpack.c.bf16 %v4348, %v4345
      %4383 = vst.msk [vmem:[#allocation5] sm:$0xff] %vm578, %v4351
      %4384 = vst.msk [vmem:[#allocation5 + $0x8] sm:$0xff] %vm578, %v4352
      %4385 = vst.msk [vmem:[#allocation5 + $0x10] sm:$0xff] %vm578, %v4353
      %4386 = vst.msk [vmem:[#allocation5 + $0x18] sm:$0xff] %vm578, %v4354
      %4387 = vst.msk [vmem:[#allocation5 + $0x20] sm:$0xff] %vm578, %v4355
      %4388 = vst.msk [vmem:[#allocation5 + $0x28] sm:$0xff] %vm578, %v4356
      %4389 = vst.msk [vmem:[#allocation5 + $0x30] sm:$0xff] %vm578, %v4357
      %4390 = vst.msk [vmem:[#allocation5 + $0x38] sm:$0xff] %vm578, %v4358
      %4391 = vst.msk [vmem:[#allocation5 + $0x40] sm:$0xff] %vm578, %v4359
      %4392 = vst.msk [vmem:[#allocation5 + $0x48] sm:$0xff] %vm578, %v4360
      %4393 = vst.msk [vmem:[#allocation5 + $0x50] sm:$0xff] %vm578, %v4361
      %4394 = vst.msk [vmem:[#allocation5 + $0x58] sm:$0xff] %vm578, %v4362
      %4395 = vst.msk [vmem:[#allocation5 + $0x60] sm:$0xff] %vm578, %v4363
      %4396 = vst.msk [vmem:[#allocation5 + $0x68] sm:$0xff] %vm578, %v4364
      %4397 = vst.msk [vmem:[#allocation5 + $0x70] sm:$0xff] %vm578, %v4365
      %4398 = vst.msk [vmem:[#allocation5 + $0x78] sm:$0xff] %vm578, %v4366
      %4399 = vst.msk [vmem:[#allocation5 + $0x80] sm:$0xff] %vm578, %v4367
      %4400 = vst.msk [vmem:[#allocation5 + $0x88] sm:$0xff] %vm578, %v4368
      %4401 = vst.msk [vmem:[#allocation5 + $0x90] sm:$0xff] %vm578, %v4369
      %4402 = vst.msk [vmem:[#allocation5 + $0x98] sm:$0xff] %vm578, %v4370
      %4403 = vst.msk [vmem:[#allocation5 + $0xa0] sm:$0xff] %vm578, %v4371
      %4404 = vst.msk [vmem:[#allocation5 + $0xa8] sm:$0xff] %vm578, %v4372
      %4405 = vst.msk [vmem:[#allocation5 + $0xb0] sm:$0xff] %vm578, %v4373
      %4406 = vst.msk [vmem:[#allocation5 + $0xb8] sm:$0xff] %vm578, %v4374
      %4407 = vst.msk [vmem:[#allocation5 + $0xc0] sm:$0xff] %vm578, %v4375
      %4408 = vst.msk [vmem:[#allocation5 + $0xc8] sm:$0xff] %vm578, %v4376
      %4409 = vst.msk [vmem:[#allocation5 + $0xd0] sm:$0xff] %vm578, %v4377
      %4410 = vst.msk [vmem:[#allocation5 + $0xd8] sm:$0xff] %vm578, %v4378
      %4411 = vst.msk [vmem:[#allocation5 + $0xe0] sm:$0xff] %vm578, %v4379
      %4412 = vst.msk [vmem:[#allocation5 + $0xe8] sm:$0xff] %vm578, %v4380
      %4413 = vst.msk [vmem:[#allocation5 + $0xf0] sm:$0xff] %vm578, %v4381
      %4414 = vst.msk [vmem:[#allocation5 + $0xf8] sm:$0xff] %vm578, %v4382
      %v4415 = vld [vmem:[%s395] sm:$0xff]
      %v4416 = vld [vmem:[%s395 + $0x8] sm:$0xff]
      %v4417 = vld [vmem:[%s395 + $0x10] sm:$0xff]
      %v4418 = vld [vmem:[%s395 + $0x18] sm:$0xff]
      %v4419 = vld [vmem:[%s395 + $0x20] sm:$0xff]
      %v4420 = vld [vmem:[%s395 + $0x28] sm:$0xff]
      %v4421 = vld [vmem:[%s395 + $0x30] sm:$0xff]
      %v4422 = vld [vmem:[%s395 + $0x38] sm:$0xff]
      %v4423 = vld [vmem:[%s382] sm:$0xff]
      %v4424 = vld [vmem:[%s382 + $0x8] sm:$0xff]
      %v4425 = vld [vmem:[%s382 + $0x10] sm:$0xff]
      %v4426 = vld [vmem:[%s382 + $0x18] sm:$0xff]
      %v4427 = vld [vmem:[%s382 + $0x20] sm:$0xff]
      %v4428 = vld [vmem:[%s382 + $0x28] sm:$0xff]
      %v4429 = vld [vmem:[%s382 + $0x30] sm:$0xff]
      %v4430 = vld [vmem:[%s382 + $0x38] sm:$0xff]
      %v4431 = vpack.c.bf16 %v4424, %v4423
      %v4432 = vpack.c.bf16 %v4426, %v4425
      %v4433 = vpack.c.bf16 %v4428, %v4427
      %v4434 = vpack.c.bf16 %v4430, %v4429
      %v4435 = vld [vmem:[%s389] sm:$0xff]
      %v4436 = vld [vmem:[%s389 + $0x8] sm:$0xff]
      %v4437 = vld [vmem:[%s389 + $0x10] sm:$0xff]
      %v4438 = vld [vmem:[%s389 + $0x18] sm:$0xff]
      %v4439 = vld [vmem:[%s389 + $0x20] sm:$0xff]
      %v4440 = vld [vmem:[%s389 + $0x28] sm:$0xff]
      %v4441 = vld [vmem:[%s389 + $0x30] sm:$0xff]
      %v4442 = vld [vmem:[%s389 + $0x38] sm:$0xff]
      %v4443 = vpack.c.bf16 %v4436, %v4435
      %v4444 = vpack.c.bf16 %v4438, %v4437
      %v4445 = vpack.c.bf16 %v4440, %v4439
      %v4446 = vpack.c.bf16 %v4442, %v4441
      %v4447 = vld [vmem:[#allocation5] sm:$0xff]
      %v4448 = vld [vmem:[#allocation5 + $0x8] sm:$0xff]
      %v4449 = vld [vmem:[#allocation5 + $0x10] sm:$0xff]
      %v4450 = vld [vmem:[#allocation5 + $0x18] sm:$0xff]
      %v4452 = vsel %vm2498, %v4431, 0
      %v4455 = vsel %vm2498, %v4432, 0
      %v4458 = vsel %vm2498, %v4433, 0
      %v4461 = vsel %vm2498, %v4434, 0
      %4463 = vmatprep.subr.bf16.mxu0 0
      %4464 = vmatpush1.bf16.msra.mxu0 %v4447
      %4465 = vmatprep.subr.bf16.mxu0 0
      %4466 = vmatpush1.bf16.msra.mxu0 %v4448
      %4467 = vmatprep.subr.bf16.mxu0 0
      %4468 = vmatpush1.bf16.msra.mxu0 %v4449
      %4469 = vmatprep.subr.bf16.mxu0 0
      %4470 = vmatpush1.bf16.msra.mxu0 %v4450
      %4471 = vmatprep.subr.bf16.mxu0 0
      %4472 = vmatpush1.bf16.msra.mxu0 0
      %4473 = vmatprep.subr.bf16.mxu0 0
      %4474 = vmatpush1.bf16.msra.mxu0 0
      %4475 = vmatprep.subr.bf16.mxu0 0
      %4476 = vmatpush1.bf16.msra.mxu0 0
      %4477 = vmatprep.subr.bf16.mxu0 0
      %4478 = vmatpush1.bf16.msra.mxu0 0
      %4479 = vmatprep.subr.bf16.mxu0 0
      %4480 = vmatpush1.bf16.msra.mxu0 0
      %4481 = vmatprep.subr.bf16.mxu0 0
      %4482 = vmatpush1.bf16.msra.mxu0 0
      %4483 = vmatprep.subr.bf16.mxu0 0
      %4484 = vmatpush1.bf16.msra.mxu0 0
      %4485 = vmatprep.subr.bf16.mxu0 0
      %4486 = vmatpush1.bf16.msra.mxu0 0
      %4487 = vmatprep.subr.bf16.mxu0 0
      %4488 = vmatpush1.bf16.msra.mxu0 0
      %4489 = vmatprep.subr.bf16.mxu0 0
      %4490 = vmatpush1.bf16.msra.mxu0 0
      %4491 = vmatprep.subr.bf16.mxu0 0
      %4492 = vmatpush1.bf16.msra.mxu0 0
      %4493 = vmatprep.subr.bf16.mxu0 0
      %4494 = vmatpush1.bf16.msra.mxu0 0
      %4495 = vmatprep.mubr.bf16.mxu0 0
      %4496 = vmatmul.mubr.bf16.gmra.mrb[0].mxu0 %v4452
      %v4497 = vpop.f32.mrb[0].mxu0
      %v4498 = vadd.f32 0.0, %v4497
      %v4499 = vpop.f32.mrb[0].mxu0
      %v4500 = vpop.f32.mrb[0].mxu0
      %v4501 = vadd.f32 0.0, %v4500
      %v4502 = vpop.f32.mrb[0].mxu0
      %4503 = vmatprep.mubr.bf16.mxu0 0
      %4504 = vmatmul.mubr.bf16.gmra.mrb[0].mxu0 %v4455
      %v4505 = vpop.f32.mrb[0].mxu0
      %v4506 = vadd.f32 0.0, %v4505
      %v4507 = vpop.f32.mrb[0].mxu0
      %v4508 = vpop.f32.mrb[0].mxu0
      %v4509 = vadd.f32 0.0, %v4508
      %v4510 = vpop.f32.mrb[0].mxu0
      %4511 = vmatprep.mubr.bf16.mxu0 0
      %4512 = vmatmul.mubr.bf16.gmra.mrb[0].mxu0 %v4458
      %v4513 = vpop.f32.mrb[0].mxu0
      %v4514 = vadd.f32 0.0, %v4513
      %v4515 = vpop.f32.mrb[0].mxu0
      %v4516 = vpop.f32.mrb[0].mxu0
      %v4517 = vadd.f32 0.0, %v4516
      %v4518 = vpop.f32.mrb[0].mxu0
      %4519 = vmatprep.mubr.bf16.mxu0 0
      %4520 = vmatmul.mubr.bf16.gmra.mrb[0].mxu0 %v4461
      %v4521 = vpop.f32.mrb[0].mxu0
      %v4522 = vadd.f32 0.0, %v4521
      %v4523 = vpop.f32.mrb[0].mxu0
      %v4524 = vpop.f32.mrb[0].mxu0
      %v4525 = vadd.f32 0.0, %v4524
      %v4526 = vpop.f32.mrb[0].mxu0
      %4527 = vdwg.mxu0
      %4529 = vset.pattern.permute.xlu0 0
      %4530 = vperm.xlu0 %4529, %v4415
      %v4531 = vpop.permute.xlu0 %4530
      %4534 = vset.pattern.permute.xlu0 0
      %4535 = vperm.xlu0 %4534, %v4416
      %v4536 = vpop.permute.xlu0 %4535
      %4539 = vset.pattern.permute.xlu0 0
      %4540 = vperm.xlu0 %4539, %v4417
      %v4541 = vpop.permute.xlu0 %4540
      %4544 = vset.pattern.permute.xlu0 0
      %4545 = vperm.xlu0 %4544, %v4418
      %v4546 = vpop.permute.xlu0 %4545
      %4549 = vset.pattern.permute.xlu0 0
      %4550 = vperm.xlu0 %4549, %v4419
      %v4551 = vpop.permute.xlu0 %4550
      %4554 = vset.pattern.permute.xlu0 0
      %4555 = vperm.xlu0 %4554, %v4420
      %v4556 = vpop.permute.xlu0 %4555
      %4559 = vset.pattern.permute.xlu0 0
      %4560 = vperm.xlu0 %4559, %v4421
      %v4561 = vpop.permute.xlu0 %4560
      %4564 = vset.pattern.permute.xlu0 0
      %4565 = vperm.xlu0 %4564, %v4422
      %v4566 = vpop.permute.xlu0 %4565
      %v4568 = vmul.f32 %v4498, %v4531
      %v4569 = vmul.f32 %v4501, %v4536
      %v4570 = vmul.f32 %v4506, %v4541
      %v4571 = vmul.f32 %v4509, %v4546
      %v4572 = vmul.f32 %v4514, %v4551
      %v4573 = vmul.f32 %v4517, %v4556
      %v4574 = vmul.f32 %v4522, %v4561
      %v4575 = vmul.f32 %v4525, %v4566
      %v4576 = vld [vmem:[#allocation3] sm:$0xff]
      %v4577 = vld [vmem:[#allocation3 + $0x8] sm:$0xff]
      %v4578 = vld [vmem:[#allocation3 + $0x10] sm:$0xff]
      %v4579 = vld [vmem:[#allocation3 + $0x18] sm:$0xff]
      %v4581 = vsel %vm2498, %v4443, 0
      %v4584 = vsel %vm2498, %v4444, 0
      %v4587 = vsel %vm2498, %v4445, 0
      %v4590 = vsel %vm2498, %v4446, 0
      %4592 = vmatprep.subr.bf16.mxu0 0
      %4593 = vmatpush1.bf16.msra.mxu0 %v4576
      %4594 = vmatprep.subr.bf16.mxu0 0
      %4595 = vmatpush1.bf16.msra.mxu0 %v4577
      %4596 = vmatprep.subr.bf16.mxu0 0
      %4597 = vmatpush1.bf16.msra.mxu0 %v4578
      %4598 = vmatprep.subr.bf16.mxu0 0
      %4599 = vmatpush1.bf16.msra.mxu0 %v4579
      %4600 = vmatprep.subr.bf16.mxu0 0
      %4601 = vmatpush1.bf16.msra.mxu0 0
      %4602 = vmatprep.subr.bf16.mxu0 0
      %4603 = vmatpush1.bf16.msra.mxu0 0
      %4604 = vmatprep.subr.bf16.mxu0 0
      %4605 = vmatpush1.bf16.msra.mxu0 0
      %4606 = vmatprep.subr.bf16.mxu0 0
      %4607 = vmatpush1.bf16.msra.mxu0 0
      %4608 = vmatprep.subr.bf16.mxu0 0
      %4609 = vmatpush1.bf16.msra.mxu0 0
      %4610 = vmatprep.subr.bf16.mxu0 0
      %4611 = vmatpush1.bf16.msra.mxu0 0
      %4612 = vmatprep.subr.bf16.mxu0 0
      %4613 = vmatpush1.bf16.msra.mxu0 0
      %4614 = vmatprep.subr.bf16.mxu0 0
      %4615 = vmatpush1.bf16.msra.mxu0 0
      %4616 = vmatprep.subr.bf16.mxu0 0
      %4617 = vmatpush1.bf16.msra.mxu0 0
      %4618 = vmatprep.subr.bf16.mxu0 0
      %4619 = vmatpush1.bf16.msra.mxu0 0
      %4620 = vmatprep.subr.bf16.mxu0 0
      %4621 = vmatpush1.bf16.msra.mxu0 0
      %4622 = vmatprep.subr.bf16.mxu0 0
      %4623 = vmatpush1.bf16.msra.mxu0 0
      %4624 = vmatprep.mubr.bf16.mxu0 0
      %4625 = vmatmul.mubr.bf16.gmra.mrb[0].mxu0 %v4581
      %v4626 = vpop.f32.mrb[0].mxu0
      %v4627 = vadd.f32 0.0, %v4626
      %v4628 = vpop.f32.mrb[0].mxu0
      %v4629 = vpop.f32.mrb[0].mxu0
      %v4630 = vadd.f32 0.0, %v4629
      %v4631 = vpop.f32.mrb[0].mxu0
      %4632 = vmatprep.mubr.bf16.mxu0 0
      %4633 = vmatmul.mubr.bf16.gmra.mrb[0].mxu0 %v4584
      %v4634 = vpop.f32.mrb[0].mxu0
      %v4635 = vadd.f32 0.0, %v4634
      %v4636 = vpop.f32.mrb[0].mxu0
      %v4637 = vpop.f32.mrb[0].mxu0
      %v4638 = vadd.f32 0.0, %v4637
      %v4639 = vpop.f32.mrb[0].mxu0
      %4640 = vmatprep.mubr.bf16.mxu0 0
      %4641 = vmatmul.mubr.bf16.gmra.mrb[0].mxu0 %v4587
      %v4642 = vpop.f32.mrb[0].mxu0
      %v4643 = vadd.f32 0.0, %v4642
      %v4644 = vpop.f32.mrb[0].mxu0
      %v4645 = vpop.f32.mrb[0].mxu0
      %v4646 = vadd.f32 0.0, %v4645
      %v4647 = vpop.f32.mrb[0].mxu0
      %4648 = vmatprep.mubr.bf16.mxu0 0
      %4649 = vmatmul.mubr.bf16.gmra.mrb[0].mxu0 %v4590
      %v4650 = vpop.f32.mrb[0].mxu0
      %v4651 = vadd.f32 0.0, %v4650
      %v4652 = vpop.f32.mrb[0].mxu0
      %v4653 = vpop.f32.mrb[0].mxu0
      %v4654 = vadd.f32 0.0, %v4653
      %v4655 = vpop.f32.mrb[0].mxu0
      %4656 = vdwg.mxu0
      %4657 = vset.pattern.permute.xlu0 1
      %4658 = vperm.xlu0 %4657, %v4415
      %v4659 = vpop.permute.xlu0 %4658
      %4661 = vset.pattern.permute.xlu0 1
      %4662 = vperm.xlu0 %4661, %v4416
      %v4663 = vpop.permute.xlu0 %4662
      %4665 = vset.pattern.permute.xlu0 1
      %4666 = vperm.xlu0 %4665, %v4417
      %v4667 = vpop.permute.xlu0 %4666
      %4669 = vset.pattern.permute.xlu0 1
      %4670 = vperm.xlu0 %4669, %v4418
      %v4671 = vpop.permute.xlu0 %4670
      %4673 = vset.pattern.permute.xlu0 1
      %4674 = vperm.xlu0 %4673, %v4419
      %v4675 = vpop.permute.xlu0 %4674
      %4677 = vset.pattern.permute.xlu0 1
      %4678 = vperm.xlu0 %4677, %v4420
      %v4679 = vpop.permute.xlu0 %4678
      %4681 = vset.pattern.permute.xlu0 1
      %4682 = vperm.xlu0 %4681, %v4421
      %v4683 = vpop.permute.xlu0 %4682
      %4685 = vset.pattern.permute.xlu0 1
      %4686 = vperm.xlu0 %4685, %v4422
      %v4687 = vpop.permute.xlu0 %4686
      %v4689 = vmul.f32 %v4627, %v4659
      %v4690 = vmul.f32 %v4630, %v4663
      %v4691 = vmul.f32 %v4635, %v4667
      %v4692 = vmul.f32 %v4638, %v4671
      %v4693 = vmul.f32 %v4643, %v4675
      %v4694 = vmul.f32 %v4646, %v4679
      %v4695 = vmul.f32 %v4651, %v4683
      %v4696 = vmul.f32 %v4654, %v4687
      %v4697 = vadd.f32 %v4568, %v4689
      %v4698 = vadd.f32 %v4569, %v4690
      %v4699 = vadd.f32 %v4570, %v4691
      %v4700 = vadd.f32 %v4571, %v4692
      %v4701 = vadd.f32 %v4572, %v4693
      %v4702 = vadd.f32 %v4573, %v4694
      %v4703 = vadd.f32 %v4574, %v4695
      %v4704 = vadd.f32 %v4575, %v4696
      %v4705 = vld [vmem:[#allocation6] sm:$0xff]
      %v4706 = vld [vmem:[#allocation6 + $0x8] sm:$0xff]
      %v4707 = vld [vmem:[#allocation6 + $0x10] sm:$0xff]
      %v4708 = vld [vmem:[#allocation6 + $0x18] sm:$0xff]
      %v4709 = vld [vmem:[#allocation6 + $0x20] sm:$0xff]
      %v4710 = vld [vmem:[#allocation6 + $0x28] sm:$0xff]
      %v4711 = vld [vmem:[#allocation6 + $0x30] sm:$0xff]
      %v4712 = vld [vmem:[#allocation6 + $0x38] sm:$0xff]
      %v4713 = vadd.f32 %v4697, %v4705
      %v4714 = vadd.f32 %v4698, %v4706
      %v4715 = vadd.f32 %v4699, %v4707
      %v4716 = vadd.f32 %v4700, %v4708
      %v4717 = vadd.f32 %v4701, %v4709
      %v4718 = vadd.f32 %v4702, %v4710
      %v4719 = vadd.f32 %v4703, %v4711
      %v4720 = vadd.f32 %v4704, %v4712
      %v4721 = vxor.u32 %v4713, 2147483648
      %v4722 = vxor.u32 %v4714, 2147483648
      %v4723 = vxor.u32 %v4715, 2147483648
      %v4724 = vxor.u32 %v4716, 2147483648
      %v4725 = vxor.u32 %v4717, 2147483648
      %v4726 = vxor.u32 %v4718, 2147483648
      %v4727 = vxor.u32 %v4719, 2147483648
      %v4728 = vxor.u32 %v4720, 2147483648
      %v4729 = vmul.f32 %v4721, 1.442695
      %v4730 = vpow.pop %v4729
      %v4731 = vmul.f32 %v4722, 1.442695
      %v4732 = vpow.pop %v4731
      %v4733 = vmul.f32 %v4723, 1.442695
      %v4734 = vpow.pop %v4733
      %v4735 = vmul.f32 %v4724, 1.442695
      %v4736 = vpow.pop %v4735
      %v4737 = vmul.f32 %v4725, 1.442695
      %v4738 = vpow.pop %v4737
      %v4739 = vmul.f32 %v4726, 1.442695
      %v4740 = vpow.pop %v4739
      %v4741 = vmul.f32 %v4727, 1.442695
      %v4742 = vpow.pop %v4741
      %v4743 = vmul.f32 %v4728, 1.442695
      %v4744 = vpow.pop %v4743
      %v4745 = vadd.f32 %v4730, 1.0
      %v4746 = vadd.f32 %v4732, 1.0
      %v4747 = vadd.f32 %v4734, 1.0
      %v4748 = vadd.f32 %v4736, 1.0
      %v4749 = vadd.f32 %v4738, 1.0
      %v4750 = vadd.f32 %v4740, 1.0
      %v4751 = vadd.f32 %v4742, 1.0
      %v4752 = vadd.f32 %v4744, 1.0
      %v4753 = vrcp.pop %v4745
      %v4754 = vmul.f32 1.0, %v4753
      %v4755 = vrcp.pop %v4746
      %v4756 = vmul.f32 1.0, %v4755
      %v4757 = vrcp.pop %v4747
      %v4758 = vmul.f32 1.0, %v4757
      %v4759 = vrcp.pop %v4748
      %v4760 = vmul.f32 1.0, %v4759
      %v4761 = vrcp.pop %v4749
      %v4762 = vmul.f32 1.0, %v4761
      %v4763 = vrcp.pop %v4750
      %v4764 = vmul.f32 1.0, %v4763
      %v4765 = vrcp.pop %v4751
      %v4766 = vmul.f32 1.0, %v4765
      %v4767 = vrcp.pop %v4752
      %v4768 = vmul.f32 1.0, %v4767
      %4769 = vst.msk [vmem:[%s401] sm:$0xff] %vm578, %v4754
      %4770 = vst.msk [vmem:[%s401 + $0x8] sm:$0xff] %vm578, %v4756
      %4771 = vst.msk [vmem:[%s401 + $0x10] sm:$0xff] %vm578, %v4758
      %4772 = vst.msk [vmem:[%s401 + $0x18] sm:$0xff] %vm578, %v4760
      %4773 = vst.msk [vmem:[%s401 + $0x20] sm:$0xff] %vm578, %v4762
      %4774 = vst.msk [vmem:[%s401 + $0x28] sm:$0xff] %vm578, %v4764
      %4775 = vst.msk [vmem:[%s401 + $0x30] sm:$0xff] %vm578, %v4766
      %4776 = vst.msk [vmem:[%s401 + $0x38] sm:$0xff] %vm578, %v4768
      %v4777 = vld [vmem:[%s395 + $0x40] sm:$0xff]
      %v4778 = vld [vmem:[%s395 + $0x48] sm:$0xff]
      %v4779 = vld [vmem:[%s395 + $0x50] sm:$0xff]
      %v4780 = vld [vmem:[%s395 + $0x58] sm:$0xff]
      %v4781 = vld [vmem:[%s395 + $0x60] sm:$0xff]
      %v4782 = vld [vmem:[%s395 + $0x68] sm:$0xff]
      %v4783 = vld [vmem:[%s395 + $0x70] sm:$0xff]
      %v4784 = vld [vmem:[%s395 + $0x78] sm:$0xff]
      %v4785 = vld [vmem:[%s2668] sm:$0xff]
      %v4786 = vld [vmem:[%s2668 + $0x8] sm:$0xff]
      %v4787 = vld [vmem:[%s2668 + $0x10] sm:$0xff]
      %v4788 = vld [vmem:[%s2668 + $0x18] sm:$0xff]
      %v4789 = vld [vmem:[%s2668 + $0x20] sm:$0xff]
      %v4790 = vld [vmem:[%s2668 + $0x28] sm:$0xff]
      %v4791 = vld [vmem:[%s2668 + $0x30] sm:$0xff]
      %v4792 = vld [vmem:[%s2668 + $0x38] sm:$0xff]
      %v4793 = vpack.c.bf16 %v4786, %v4785
      %v4794 = vpack.c.bf16 %v4788, %v4787
      %v4795 = vpack.c.bf16 %v4790, %v4789
      %v4796 = vpack.c.bf16 %v4792, %v4791
      %s4797 = scalar_lea.vmem %s389, 64
      %v4798 = vld [vmem:[%s4797] sm:$0xff]
      %v4799 = vld [vmem:[%s4797 + $0x8] sm:$0xff]
      %v4800 = vld [vmem:[%s4797 + $0x10] sm:$0xff]
      %v4801 = vld [vmem:[%s4797 + $0x18] sm:$0xff]
      %v4802 = vld [vmem:[%s4797 + $0x20] sm:$0xff]
      %v4803 = vld [vmem:[%s4797 + $0x28] sm:$0xff]
      %v4804 = vld [vmem:[%s4797 + $0x30] sm:$0xff]
      %v4805 = vld [vmem:[%s4797 + $0x38] sm:$0xff]
      %v4806 = vpack.c.bf16 %v4799, %v4798
      %v4807 = vpack.c.bf16 %v4801, %v4800
      %v4808 = vpack.c.bf16 %v4803, %v4802
      %v4809 = vpack.c.bf16 %v4805, %v4804
      %v4810 = vld [vmem:[#allocation5 + $0x20] sm:$0xff]
      %v4811 = vld [vmem:[#allocation5 + $0x28] sm:$0xff]
      %v4812 = vld [vmem:[#allocation5 + $0x30] sm:$0xff]
      %v4813 = vld [vmem:[#allocation5 + $0x38] sm:$0xff]
      %v4815 = vsel %vm2498, %v4793, 0
      %v4818 = vsel %vm2498, %v4794, 0
      %v4821 = vsel %vm2498, %v4795, 0
      %v4824 = vsel %vm2498, %v4796, 0
      %4826 = vmatprep.subr.bf16.mxu0 0
      %4827 = vmatpush1.bf16.msra.mxu0 %v4810
      %4828 = vmatprep.subr.bf16.mxu0 0
      %4829 = vmatpush1.bf16.msra.mxu0 %v4811
      %4830 = vmatprep.subr.bf16.mxu0 0
      %4831 = vmatpush1.bf16.msra.mxu0 %v4812
      %4832 = vmatprep.subr.bf16.mxu0 0
      %4833 = vmatpush1.bf16.msra.mxu0 %v4813
      %4834 = vmatprep.subr.bf16.mxu0 0
      %4835 = vmatpush1.bf16.msra.mxu0 0
      %4836 = vmatprep.subr.bf16.mxu0 0
      %4837 = vmatpush1.bf16.msra.mxu0 0
      %4838 = vmatprep.subr.bf16.mxu0 0
      %4839 = vmatpush1.bf16.msra.mxu0 0
      %4840 = vmatprep.subr.bf16.mxu0 0
      %4841 = vmatpush1.bf16.msra.mxu0 0
      %4842 = vmatprep.subr.bf16.mxu0 0
      %4843 = vmatpush1.bf16.msra.mxu0 0
      %4844 = vmatprep.subr.bf16.mxu0 0
      %4845 = vmatpush1.bf16.msra.mxu0 0
      %4846 = vmatprep.subr.bf16.mxu0 0
      %4847 = vmatpush1.bf16.msra.mxu0 0
      %4848 = vmatprep.subr.bf16.mxu0 0
      %4849 = vmatpush1.bf16.msra.mxu0 0
      %4850 = vmatprep.subr.bf16.mxu0 0
      %4851 = vmatpush1.bf16.msra.mxu0 0
      %4852 = vmatprep.subr.bf16.mxu0 0
      %4853 = vmatpush1.bf16.msra.mxu0 0
      %4854 = vmatprep.subr.bf16.mxu0 0
      %4855 = vmatpush1.bf16.msra.mxu0 0
      %4856 = vmatprep.subr.bf16.mxu0 0
      %4857 = vmatpush1.bf16.msra.mxu0 0
      %4858 = vmatprep.mubr.bf16.mxu0 0
      %4859 = vmatmul.mubr.bf16.gmra.mrb[0].mxu0 %v4815
      %v4860 = vpop.f32.mrb[0].mxu0
      %v4861 = vadd.f32 0.0, %v4860
      %v4862 = vpop.f32.mrb[0].mxu0
      %v4863 = vpop.f32.mrb[0].mxu0
      %v4864 = vadd.f32 0.0, %v4863
      %v4865 = vpop.f32.mrb[0].mxu0
      %4866 = vmatprep.mubr.bf16.mxu0 0
      %4867 = vmatmul.mubr.bf16.gmra.mrb[0].mxu0 %v4818
      %v4868 = vpop.f32.mrb[0].mxu0
      %v4869 = vadd.f32 0.0, %v4868
      %v4870 = vpop.f32.mrb[0].mxu0
      %v4871 = vpop.f32.mrb[0].mxu0
      %v4872 = vadd.f32 0.0, %v4871
      %v4873 = vpop.f32.mrb[0].mxu0
      %4874 = vmatprep.mubr.bf16.mxu0 0
      %4875 = vmatmul.mubr.bf16.gmra.mrb[0].mxu0 %v4821
      %v4876 = vpop.f32.mrb[0].mxu0
      %v4877 = vadd.f32 0.0, %v4876
      %v4878 = vpop.f32.mrb[0].mxu0
      %v4879 = vpop.f32.mrb[0].mxu0
      %v4880 = vadd.f32 0.0, %v4879
      %v4881 = vpop.f32.mrb[0].mxu0
      %4882 = vmatprep.mubr.bf16.mxu0 0
      %4883 = vmatmul.mubr.bf16.gmra.mrb[0].mxu0 %v4824
      %v4884 = vpop.f32.mrb[0].mxu0
      %v4885 = vadd.f32 0.0, %v4884
      %v4886 = vpop.f32.mrb[0].mxu0
      %v4887 = vpop.f32.mrb[0].mxu0
      %v4888 = vadd.f32 0.0, %v4887
      %v4889 = vpop.f32.mrb[0].mxu0
      %4890 = vdwg.mxu0
      %4892 = vset.pattern.permute.xlu0 0
      %4893 = vperm.xlu0 %4892, %v4777
      %v4894 = vpop.permute.xlu0 %4893
      %4897 = vset.pattern.permute.xlu0 0
      %4898 = vperm.xlu0 %4897, %v4778
      %v4899 = vpop.permute.xlu0 %4898
      %4902 = vset.pattern.permute.xlu0 0
      %4903 = vperm.xlu0 %4902, %v4779
      %v4904 = vpop.permute.xlu0 %4903
      %4907 = vset.pattern.permute.xlu0 0
      %4908 = vperm.xlu0 %4907, %v4780
      %v4909 = vpop.permute.xlu0 %4908
      %4912 = vset.pattern.permute.xlu0 0
      %4913 = vperm.xlu0 %4912, %v4781
      %v4914 = vpop.permute.xlu0 %4913
      %4917 = vset.pattern.permute.xlu0 0
      %4918 = vperm.xlu0 %4917, %v4782
      %v4919 = vpop.permute.xlu0 %4918
      %4922 = vset.pattern.permute.xlu0 0
      %4923 = vperm.xlu0 %4922, %v4783
      %v4924 = vpop.permute.xlu0 %4923
      %4927 = vset.pattern.permute.xlu0 0
      %4928 = vperm.xlu0 %4927, %v4784
      %v4929 = vpop.permute.xlu0 %4928
      %v4931 = vmul.f32 %v4861, %v4894
      %v4932 = vmul.f32 %v4864, %v4899
      %v4933 = vmul.f32 %v4869, %v4904
      %v4934 = vmul.f32 %v4872, %v4909
      %v4935 = vmul.f32 %v4877, %v4914
      %v4936 = vmul.f32 %v4880, %v4919
      %v4937 = vmul.f32 %v4885, %v4924
      %v4938 = vmul.f32 %v4888, %v4929
      %v4939 = vld [vmem:[#allocation3 + $0x20] sm:$0xff]
      %v4940 = vld [vmem:[#allocation3 + $0x28] sm:$0xff]
      %v4941 = vld [vmem:[#allocation3 + $0x30] sm:$0xff]
      %v4942 = vld [vmem:[#allocation3 + $0x38] sm:$0xff]
      %v4944 = vsel %vm2498, %v4806, 0
      %v4947 = vsel %vm2498, %v4807, 0
      %v4950 = vsel %vm2498, %v4808, 0
      %v4953 = vsel %vm2498, %v4809, 0
      %4955 = vmatprep.subr.bf16.mxu0 0
      %4956 = vmatpush1.bf16.msra.mxu0 %v4939
      %4957 = vmatprep.subr.bf16.mxu0 0
      %4958 = vmatpush1.bf16.msra.mxu0 %v4940
      %4959 = vmatprep.subr.bf16.mxu0 0
      %4960 = vmatpush1.bf16.msra.mxu0 %v4941
      %4961 = vmatprep.subr.bf16.mxu0 0
      %4962 = vmatpush1.bf16.msra.mxu0 %v4942
      %4963 = vmatprep.subr.bf16.mxu0 0
      %4964 = vmatpush1.bf16.msra.mxu0 0
      %4965 = vmatprep.subr.bf16.mxu0 0
      %4966 = vmatpush1.bf16.msra.mxu0 0
      %4967 = vmatprep.subr.bf16.mxu0 0
      %4968 = vmatpush1.bf16.msra.mxu0 0
      %4969 = vmatprep.subr.bf16.mxu0 0
      %4970 = vmatpush1.bf16.msra.mxu0 0
      %4971 = vmatprep.subr.bf16.mxu0 0
      %4972 = vmatpush1.bf16.msra.mxu0 0
      %4973 = vmatprep.subr.bf16.mxu0 0
      %4974 = vmatpush1.bf16.msra.mxu0 0
      %4975 = vmatprep.subr.bf16.mxu0 0
      %4976 = vmatpush1.bf16.msra.mxu0 0
      %4977 = vmatprep.subr.bf16.mxu0 0
      %4978 = vmatpush1.bf16.msra.mxu0 0
      %4979 = vmatprep.subr.bf16.mxu0 0
      %4980 = vmatpush1.bf16.msra.mxu0 0
      %4981 = vmatprep.subr.bf16.mxu0 0
      %4982 = vmatpush1.bf16.msra.mxu0 0
      %4983 = vmatprep.subr.bf16.mxu0 0
      %4984 = vmatpush1.bf16.msra.mxu0 0
      %4985 = vmatprep.subr.bf16.mxu0 0
      %4986 = vmatpush1.bf16.msra.mxu0 0
      %4987 = vmatprep.mubr.bf16.mxu0 0
      %4988 = vmatmul.mubr.bf16.gmra.mrb[0].mxu0 %v4944
      %v4989 = vpop.f32.mrb[0].mxu0
      %v4990 = vadd.f32 0.0, %v4989
      %v4991 = vpop.f32.mrb[0].mxu0
      %v4992 = vpop.f32.mrb[0].mxu0
      %v4993 = vadd.f32 0.0, %v4992
      %v4994 = vpop.f32.mrb[0].mxu0
      %4995 = vmatprep.mubr.bf16.mxu0 0
      %4996 = vmatmul.mubr.bf16.gmra.mrb[0].mxu0 %v4947
      %v4997 = vpop.f32.mrb[0].mxu0
      %v4998 = vadd.f32 0.0, %v4997
      %v4999 = vpop.f32.mrb[0].mxu0
      %v5000 = vpop.f32.mrb[0].mxu0
      %v5001 = vadd.f32 0.0, %v5000
      %v5002 = vpop.f32.mrb[0].mxu0
      %5003 = vmatprep.mubr.bf16.mxu0 0
      %5004 = vmatmul.mubr.bf16.gmra.mrb[0].mxu0 %v4950
      %v5005 = vpop.f32.mrb[0].mxu0
      %v5006 = vadd.f32 0.0, %v5005
      %v5007 = vpop.f32.mrb[0].mxu0
      %v5008 = vpop.f32.mrb[0].mxu0
      %v5009 = vadd.f32 0.0, %v5008
      %v5010 = vpop.f32.mrb[0].mxu0
      %5011 = vmatprep.mubr.bf16.mxu0 0
      %5012 = vmatmul.mubr.bf16.gmra.mrb[0].mxu0 %v4953
      %v5013 = vpop.f32.mrb[0].mxu0
      %v5014 = vadd.f32 0.0, %v5013
      %v5015 = vpop.f32.mrb[0].mxu0
      %v5016 = vpop.f32.mrb[0].mxu0
      %v5017 = vadd.f32 0.0, %v5016
      %v5018 = vpop.f32.mrb[0].mxu0
      %5019 = vdwg.mxu0
      %5020 = vset.pattern.permute.xlu0 1
      %5021 = vperm.xlu0 %5020, %v4777
      %v5022 = vpop.permute.xlu0 %5021
      %5024 = vset.pattern.permute.xlu0 1
      %5025 = vperm.xlu0 %5024, %v4778
      %v5026 = vpop.permute.xlu0 %5025
      %5028 = vset.pattern.permute.xlu0 1
      %5029 = vperm.xlu0 %5028, %v4779
      %v5030 = vpop.permute.xlu0 %5029
      %5032 = vset.pattern.permute.xlu0 1
      %5033 = vperm.xlu0 %5032, %v4780
      %v5034 = vpop.permute.xlu0 %5033
      %5036 = vset.pattern.permute.xlu0 1
      %5037 = vperm.xlu0 %5036, %v4781
      %v5038 = vpop.permute.xlu0 %5037
      %5040 = vset.pattern.permute.xlu0 1
      %5041 = vperm.xlu0 %5040, %v4782
      %v5042 = vpop.permute.xlu0 %5041
      %5044 = vset.pattern.permute.xlu0 1
      %5045 = vperm.xlu0 %5044, %v4783
      %v5046 = vpop.permute.xlu0 %5045
      %5048 = vset.pattern.permute.xlu0 1
      %5049 = vperm.xlu0 %5048, %v4784
      %v5050 = vpop.permute.xlu0 %5049
      %v5052 = vmul.f32 %v4990, %v5022
      %v5053 = vmul.f32 %v4993, %v5026
      %v5054 = vmul.f32 %v4998, %v5030
      %v5055 = vmul.f32 %v5001, %v5034
      %v5056 = vmul.f32 %v5006, %v5038
      %v5057 = vmul.f32 %v5009, %v5042
      %v5058 = vmul.f32 %v5014, %v5046
      %v5059 = vmul.f32 %v5017, %v5050
      %v5060 = vadd.f32 %v4931, %v5052
      %v5061 = vadd.f32 %v4932, %v5053
      %v5062 = vadd.f32 %v4933, %v5054
      %v5063 = vadd.f32 %v4934, %v5055
      %v5064 = vadd.f32 %v4935, %v5056
      %v5065 = vadd.f32 %v4936, %v5057
      %v5066 = vadd.f32 %v4937, %v5058
      %v5067 = vadd.f32 %v4938, %v5059
      %v5068 = vld [vmem:[#allocation6 + $0x40] sm:$0xff]
      %v5069 = vld [vmem:[#allocation6 + $0x48] sm:$0xff]
      %v5070 = vld [vmem:[#allocation6 + $0x50] sm:$0xff]
      %v5071 = vld [vmem:[#allocation6 + $0x58] sm:$0xff]
      %v5072 = vld [vmem:[#allocation6 + $0x60] sm:$0xff]
      %v5073 = vld [vmem:[#allocation6 + $0x68] sm:$0xff]
      %v5074 = vld [vmem:[#allocation6 + $0x70] sm:$0xff]
      %v5075 = vld [vmem:[#allocation6 + $0x78] sm:$0xff]
      %v5076 = vadd.f32 %v5060, %v5068
      %v5077 = vadd.f32 %v5061, %v5069
      %v5078 = vadd.f32 %v5062, %v5070
      %v5079 = vadd.f32 %v5063, %v5071
      %v5080 = vadd.f32 %v5064, %v5072
      %v5081 = vadd.f32 %v5065, %v5073
      %v5082 = vadd.f32 %v5066, %v5074
      %v5083 = vadd.f32 %v5067, %v5075
      %v5084 = vxor.u32 %v5076, 2147483648
      %v5085 = vxor.u32 %v5077, 2147483648
      %v5086 = vxor.u32 %v5078, 2147483648
      %v5087 = vxor.u32 %v5079, 2147483648
      %v5088 = vxor.u32 %v5080, 2147483648
      %v5089 = vxor.u32 %v5081, 2147483648
      %v5090 = vxor.u32 %v5082, 2147483648
      %v5091 = vxor.u32 %v5083, 2147483648
      %v5092 = vmul.f32 %v5084, 1.442695
      %v5093 = vpow.pop %v5092
      %v5094 = vmul.f32 %v5085, 1.442695
      %v5095 = vpow.pop %v5094
      %v5096 = vmul.f32 %v5086, 1.442695
      %v5097 = vpow.pop %v5096
      %v5098 = vmul.f32 %v5087, 1.442695
      %v5099 = vpow.pop %v5098
      %v5100 = vmul.f32 %v5088, 1.442695
      %v5101 = vpow.pop %v5100
      %v5102 = vmul.f32 %v5089, 1.442695
      %v5103 = vpow.pop %v5102
      %v5104 = vmul.f32 %v5090, 1.442695
      %v5105 = vpow.pop %v5104
      %v5106 = vmul.f32 %v5091, 1.442695
      %v5107 = vpow.pop %v5106
      %v5108 = vadd.f32 %v5093, 1.0
      %v5109 = vadd.f32 %v5095, 1.0
      %v5110 = vadd.f32 %v5097, 1.0
      %v5111 = vadd.f32 %v5099, 1.0
      %v5112 = vadd.f32 %v5101, 1.0
      %v5113 = vadd.f32 %v5103, 1.0
      %v5114 = vadd.f32 %v5105, 1.0
      %v5115 = vadd.f32 %v5107, 1.0
      %v5116 = vrcp.pop %v5108
      %v5117 = vmul.f32 1.0, %v5116
      %v5118 = vrcp.pop %v5109
      %v5119 = vmul.f32 1.0, %v5118
      %v5120 = vrcp.pop %v5110
      %v5121 = vmul.f32 1.0, %v5120
      %v5122 = vrcp.pop %v5111
      %v5123 = vmul.f32 1.0, %v5122
      %v5124 = vrcp.pop %v5112
      %v5125 = vmul.f32 1.0, %v5124
      %v5126 = vrcp.pop %v5113
      %v5127 = vmul.f32 1.0, %v5126
      %v5128 = vrcp.pop %v5114
      %v5129 = vmul.f32 1.0, %v5128
      %v5130 = vrcp.pop %v5115
      %v5131 = vmul.f32 1.0, %v5130
      %5132 = vst.msk [vmem:[%s401 + $0x40] sm:$0xff] %vm578, %v5117
      %5133 = vst.msk [vmem:[%s401 + $0x48] sm:$0xff] %vm578, %v5119
      %5134 = vst.msk [vmem:[%s401 + $0x50] sm:$0xff] %vm578, %v5121
      %5135 = vst.msk [vmem:[%s401 + $0x58] sm:$0xff] %vm578, %v5123
      %5136 = vst.msk [vmem:[%s401 + $0x60] sm:$0xff] %vm578, %v5125
      %5137 = vst.msk [vmem:[%s401 + $0x68] sm:$0xff] %vm578, %v5127
      %5138 = vst.msk [vmem:[%s401 + $0x70] sm:$0xff] %vm578, %v5129
      %5139 = vst.msk [vmem:[%s401 + $0x78] sm:$0xff] %vm578, %v5131
      %v5140 = vld [vmem:[%s395 + $0x80] sm:$0xff]
      %v5141 = vld [vmem:[%s395 + $0x88] sm:$0xff]
      %v5142 = vld [vmem:[%s395 + $0x90] sm:$0xff]
      %v5143 = vld [vmem:[%s395 + $0x98] sm:$0xff]
      %v5144 = vld [vmem:[%s395 + $0xa0] sm:$0xff]
      %v5145 = vld [vmem:[%s395 + $0xa8] sm:$0xff]
      %v5146 = vld [vmem:[%s395 + $0xb0] sm:$0xff]
      %v5147 = vld [vmem:[%s395 + $0xb8] sm:$0xff]
      %v5148 = vld [vmem:[%s2850] sm:$0xff]
      %v5149 = vld [vmem:[%s2850 + $0x8] sm:$0xff]
      %v5150 = vld [vmem:[%s2850 + $0x10] sm:$0xff]
      %v5151 = vld [vmem:[%s2850 + $0x18] sm:$0xff]
      %v5152 = vld [vmem:[%s2850 + $0x20] sm:$0xff]
      %v5153 = vld [vmem:[%s2850 + $0x28] sm:$0xff]
      %v5154 = vld [vmem:[%s2850 + $0x30] sm:$0xff]
      %v5155 = vld [vmem:[%s2850 + $0x38] sm:$0xff]
      %v5156 = vpack.c.bf16 %v5149, %v5148
      %v5157 = vpack.c.bf16 %v5151, %v5150
      %v5158 = vpack.c.bf16 %v5153, %v5152
      %v5159 = vpack.c.bf16 %v5155, %v5154
      %s5160 = scalar_lea.vmem %s389, 128
      %v5161 = vld [vmem:[%s5160] sm:$0xff]
      %v5162 = vld [vmem:[%s5160 + $0x8] sm:$0xff]
      %v5163 = vld [vmem:[%s5160 + $0x10] sm:$0xff]
      %v5164 = vld [vmem:[%s5160 + $0x18] sm:$0xff]
      %v5165 = vld [vmem:[%s5160 + $0x20] sm:$0xff]
      %v5166 = vld [vmem:[%s5160 + $0x28] sm:$0xff]
      %v5167 = vld [vmem:[%s5160 + $0x30] sm:$0xff]
      %v5168 = vld [vmem:[%s5160 + $0x38] sm:$0xff]
      %v5169 = vpack.c.bf16 %v5162, %v5161
      %v5170 = vpack.c.bf16 %v5164, %v5163
      %v5171 = vpack.c.bf16 %v5166, %v5165
      %v5172 = vpack.c.bf16 %v5168, %v5167
      %v5173 = vld [vmem:[#allocation5 + $0x40] sm:$0xff]
      %v5174 = vld [vmem:[#allocation5 + $0x48] sm:$0xff]
      %v5175 = vld [vmem:[#allocation5 + $0x50] sm:$0xff]
      %v5176 = vld [vmem:[#allocation5 + $0x58] sm:$0xff]
      %v5178 = vsel %vm2498, %v5156, 0
      %v5181 = vsel %vm2498, %v5157, 0
      %v5184 = vsel %vm2498, %v5158, 0
      %v5187 = vsel %vm2498, %v5159, 0
      %5189 = vmatprep.subr.bf16.mxu0 0
      %5190 = vmatpush1.bf16.msra.mxu0 %v5173
      %5191 = vmatprep.subr.bf16.mxu0 0
      %5192 = vmatpush1.bf16.msra.mxu0 %v5174
      %5193 = vmatprep.subr.bf16.mxu0 0
      %5194 = vmatpush1.bf16.msra.mxu0 %v5175
      %5195 = vmatprep.subr.bf16.mxu0 0
      %5196 = vmatpush1.bf16.msra.mxu0 %v5176
      %5197 = vmatprep.subr.bf16.mxu0 0
      %5198 = vmatpush1.bf16.msra.mxu0 0
      %5199 = vmatprep.subr.bf16.mxu0 0
      %5200 = vmatpush1.bf16.msra.mxu0 0
      %5201 = vmatprep.subr.bf16.mxu0 0
      %5202 = vmatpush1.bf16.msra.mxu0 0
      %5203 = vmatprep.subr.bf16.mxu0 0
      %5204 = vmatpush1.bf16.msra.mxu0 0
      %5205 = vmatprep.subr.bf16.mxu0 0
      %5206 = vmatpush1.bf16.msra.mxu0 0
      %5207 = vmatprep.subr.bf16.mxu0 0
      %5208 = vmatpush1.bf16.msra.mxu0 0
      %5209 = vmatprep.subr.bf16.mxu0 0
      %5210 = vmatpush1.bf16.msra.mxu0 0
      %5211 = vmatprep.subr.bf16.mxu0 0
      %5212 = vmatpush1.bf16.msra.mxu0 0
      %5213 = vmatprep.subr.bf16.mxu0 0
      %5214 = vmatpush1.bf16.msra.mxu0 0
      %5215 = vmatprep.subr.bf16.mxu0 0
      %5216 = vmatpush1.bf16.msra.mxu0 0
      %5217 = vmatprep.subr.bf16.mxu0 0
      %5218 = vmatpush1.bf16.msra.mxu0 0
      %5219 = vmatprep.subr.bf16.mxu0 0
      %5220 = vmatpush1.bf16.msra.mxu0 0
      %5221 = vmatprep.mubr.bf16.mxu0 0
      %5222 = vmatmul.mubr.bf16.gmra.mrb[0].mxu0 %v5178
      %v5223 = vpop.f32.mrb[0].mxu0
      %v5224 = vadd.f32 0.0, %v5223
      %v5225 = vpop.f32.mrb[0].mxu0
      %v5226 = vpop.f32.mrb[0].mxu0
      %v5227 = vadd.f32 0.0, %v5226
      %v5228 = vpop.f32.mrb[0].mxu0
      %5229 = vmatprep.mubr.bf16.mxu0 0
      %5230 = vmatmul.mubr.bf16.gmra.mrb[0].mxu0 %v5181
      %v5231 = vpop.f32.mrb[0].mxu0
      %v5232 = vadd.f32 0.0, %v5231
      %v5233 = vpop.f32.mrb[0].mxu0
      %v5234 = vpop.f32.mrb[0].mxu0
      %v5235 = vadd.f32 0.0, %v5234
      %v5236 = vpop.f32.mrb[0].mxu0
      %5237 = vmatprep.mubr.bf16.mxu0 0
      %5238 = vmatmul.mubr.bf16.gmra.mrb[0].mxu0 %v5184
      %v5239 = vpop.f32.mrb[0].mxu0
      %v5240 = vadd.f32 0.0, %v5239
      %v5241 = vpop.f32.mrb[0].mxu0
      %v5242 = vpop.f32.mrb[0].mxu0
      %v5243 = vadd.f32 0.0, %v5242
      %v5244 = vpop.f32.mrb[0].mxu0
      %5245 = vmatprep.mubr.bf16.mxu0 0
      %5246 = vmatmul.mubr.bf16.gmra.mrb[0].mxu0 %v5187
      %v5247 = vpop.f32.mrb[0].mxu0
      %v5248 = vadd.f32 0.0, %v5247
      %v5249 = vpop.f32.mrb[0].mxu0
      %v5250 = vpop.f32.mrb[0].mxu0
      %v5251 = vadd.f32 0.0, %v5250
      %v5252 = vpop.f32.mrb[0].mxu0
      %5253 = vdwg.mxu0
      %5255 = vset.pattern.permute.xlu0 0
      %5256 = vperm.xlu0 %5255, %v5140
      %v5257 = vpop.permute.xlu0 %5256
      %5260 = vset.pattern.permute.xlu0 0
      %5261 = vperm.xlu0 %5260, %v5141
      %v5262 = vpop.permute.xlu0 %5261
      %5265 = vset.pattern.permute.xlu0 0
      %5266 = vperm.xlu0 %5265, %v5142
      %v5267 = vpop.permute.xlu0 %5266
      %5270 = vset.pattern.permute.xlu0 0
      %5271 = vperm.xlu0 %5270, %v5143
      %v5272 = vpop.permute.xlu0 %5271
      %5275 = vset.pattern.permute.xlu0 0
      %5276 = vperm.xlu0 %5275, %v5144
      %v5277 = vpop.permute.xlu0 %5276
      %5280 = vset.pattern.permute.xlu0 0
      %5281 = vperm.xlu0 %5280, %v5145
      %v5282 = vpop.permute.xlu0 %5281
      %5285 = vset.pattern.permute.xlu0 0
      %5286 = vperm.xlu0 %5285, %v5146
      %v5287 = vpop.permute.xlu0 %5286
      %5290 = vset.pattern.permute.xlu0 0
      %5291 = vperm.xlu0 %5290, %v5147
      %v5292 = vpop.permute.xlu0 %5291
      %v5294 = vmul.f32 %v5224, %v5257
      %v5295 = vmul.f32 %v5227, %v5262
      %v5296 = vmul.f32 %v5232, %v5267
      %v5297 = vmul.f32 %v5235, %v5272
      %v5298 = vmul.f32 %v5240, %v5277
      %v5299 = vmul.f32 %v5243, %v5282
      %v5300 = vmul.f32 %v5248, %v5287
      %v5301 = vmul.f32 %v5251, %v5292
      %v5302 = vld [vmem:[#allocation3 + $0x40] sm:$0xff]
      %v5303 = vld [vmem:[#allocation3 + $0x48] sm:$0xff]
      %v5304 = vld [vmem:[#allocation3 + $0x50] sm:$0xff]
      %v5305 = vld [vmem:[#allocation3 + $0x58] sm:$0xff]
      %v5307 = vsel %vm2498, %v5169, 0
      %v5310 = vsel %vm2498, %v5170, 0
      %v5313 = vsel %vm2498, %v5171, 0
      %v5316 = vsel %vm2498, %v5172, 0
      %5318 = vmatprep.subr.bf16.mxu0 0
      %5319 = vmatpush1.bf16.msra.mxu0 %v5302
      %5320 = vmatprep.subr.bf16.mxu0 0
      %5321 = vmatpush1.bf16.msra.mxu0 %v5303
      %5322 = vmatprep.subr.bf16.mxu0 0
      %5323 = vmatpush1.bf16.msra.mxu0 %v5304
      %5324 = vmatprep.subr.bf16.mxu0 0
      %5325 = vmatpush1.bf16.msra.mxu0 %v5305
      %5326 = vmatprep.subr.bf16.mxu0 0
      %5327 = vmatpush1.bf16.msra.mxu0 0
      %5328 = vmatprep.subr.bf16.mxu0 0
      %5329 = vmatpush1.bf16.msra.mxu0 0
      %5330 = vmatprep.subr.bf16.mxu0 0
      %5331 = vmatpush1.bf16.msra.mxu0 0
      %5332 = vmatprep.subr.bf16.mxu0 0
      %5333 = vmatpush1.bf16.msra.mxu0 0
      %5334 = vmatprep.subr.bf16.mxu0 0
      %5335 = vmatpush1.bf16.msra.mxu0 0
      %5336 = vmatprep.subr.bf16.mxu0 0
      %5337 = vmatpush1.bf16.msra.mxu0 0
      %5338 = vmatprep.subr.bf16.mxu0 0
      %5339 = vmatpush1.bf16.msra.mxu0 0
      %5340 = vmatprep.subr.bf16.mxu0 0
      %5341 = vmatpush1.bf16.msra.mxu0 0
      %5342 = vmatprep.subr.bf16.mxu0 0
      %5343 = vmatpush1.bf16.msra.mxu0 0
      %5344 = vmatprep.subr.bf16.mxu0 0
      %5345 = vmatpush1.bf16.msra.mxu0 0
      %5346 = vmatprep.subr.bf16.mxu0 0
      %5347 = vmatpush1.bf16.msra.mxu0 0
      %5348 = vmatprep.subr.bf16.mxu0 0
      %5349 = vmatpush1.bf16.msra.mxu0 0
      %5350 = vmatprep.mubr.bf16.mxu0 0
      %5351 = vmatmul.mubr.bf16.gmra.mrb[0].mxu0 %v5307
      %v5352 = vpop.f32.mrb[0].mxu0
      %v5353 = vadd.f32 0.0, %v5352
      %v5354 = vpop.f32.mrb[0].mxu0
      %v5355 = vpop.f32.mrb[0].mxu0
      %v5356 = vadd.f32 0.0, %v5355
      %v5357 = vpop.f32.mrb[0].mxu0
      %5358 = vmatprep.mubr.bf16.mxu0 0
      %5359 = vmatmul.mubr.bf16.gmra.mrb[0].mxu0 %v5310
      %v5360 = vpop.f32.mrb[0].mxu0
      %v5361 = vadd.f32 0.0, %v5360
      %v5362 = vpop.f32.mrb[0].mxu0
      %v5363 = vpop.f32.mrb[0].mxu0
      %v5364 = vadd.f32 0.0, %v5363
      %v5365 = vpop.f32.mrb[0].mxu0
      %5366 = vmatprep.mubr.bf16.mxu0 0
      %5367 = vmatmul.mubr.bf16.gmra.mrb[0].mxu0 %v5313
      %v5368 = vpop.f32.mrb[0].mxu0
      %v5369 = vadd.f32 0.0, %v5368
      %v5370 = vpop.f32.mrb[0].mxu0
      %v5371 = vpop.f32.mrb[0].mxu0
      %v5372 = vadd.f32 0.0, %v5371
      %v5373 = vpop.f32.mrb[0].mxu0
      %5374 = vmatprep.mubr.bf16.mxu0 0
      %5375 = vmatmul.mubr.bf16.gmra.mrb[0].mxu0 %v5316
      %v5376 = vpop.f32.mrb[0].mxu0
      %v5377 = vadd.f32 0.0, %v5376
      %v5378 = vpop.f32.mrb[0].mxu0
      %v5379 = vpop.f32.mrb[0].mxu0
      %v5380 = vadd.f32 0.0, %v5379
      %v5381 = vpop.f32.mrb[0].mxu0
      %5382 = vdwg.mxu0
      %5383 = vset.pattern.permute.xlu0 1
      %5384 = vperm.xlu0 %5383, %v5140
      %v5385 = vpop.permute.xlu0 %5384
      %5387 = vset.pattern.permute.xlu0 1
      %5388 = vperm.xlu0 %5387, %v5141
      %v5389 = vpop.permute.xlu0 %5388
      %5391 = vset.pattern.permute.xlu0 1
      %5392 = vperm.xlu0 %5391, %v5142
      %v5393 = vpop.permute.xlu0 %5392
      %5395 = vset.pattern.permute.xlu0 1
      %5396 = vperm.xlu0 %5395, %v5143
      %v5397 = vpop.permute.xlu0 %5396
      %5399 = vset.pattern.permute.xlu0 1
      %5400 = vperm.xlu0 %5399, %v5144
      %v5401 = vpop.permute.xlu0 %5400
      %5403 = vset.pattern.permute.xlu0 1
      %5404 = vperm.xlu0 %5403, %v5145
      %v5405 = vpop.permute.xlu0 %5404
      %5407 = vset.pattern.permute.xlu0 1
      %5408 = vperm.xlu0 %5407, %v5146
      %v5409 = vpop.permute.xlu0 %5408
      %5411 = vset.pattern.permute.xlu0 1
      %5412 = vperm.xlu0 %5411, %v5147
      %v5413 = vpop.permute.xlu0 %5412
      %v5415 = vmul.f32 %v5353, %v5385
      %v5416 = vmul.f32 %v5356, %v5389
      %v5417 = vmul.f32 %v5361, %v5393
      %v5418 = vmul.f32 %v5364, %v5397
      %v5419 = vmul.f32 %v5369, %v5401
      %v5420 = vmul.f32 %v5372, %v5405
      %v5421 = vmul.f32 %v5377, %v5409
      %v5422 = vmul.f32 %v5380, %v5413
      %v5423 = vadd.f32 %v5294, %v5415
      %v5424 = vadd.f32 %v5295, %v5416
      %v5425 = vadd.f32 %v5296, %v5417
      %v5426 = vadd.f32 %v5297, %v5418
      %v5427 = vadd.f32 %v5298, %v5419
      %v5428 = vadd.f32 %v5299, %v5420
      %v5429 = vadd.f32 %v5300, %v5421
      %v5430 = vadd.f32 %v5301, %v5422
      %v5431 = vld [vmem:[#allocation6 + $0x80] sm:$0xff]
      %v5432 = vld [vmem:[#allocation6 + $0x88] sm:$0xff]
      %v5433 = vld [vmem:[#allocation6 + $0x90] sm:$0xff]
      %v5434 = vld [vmem:[#allocation6 + $0x98] sm:$0xff]
      %v5435 = vld [vmem:[#allocation6 + $0xa0] sm:$0xff]
      %v5436 = vld [vmem:[#allocation6 + $0xa8] sm:$0xff]
      %v5437 = vld [vmem:[#allocation6 + $0xb0] sm:$0xff]
      %v5438 = vld [vmem:[#allocation6 + $0xb8] sm:$0xff]
      %v5439 = vadd.f32 %v5423, %v5431
      %v5440 = vadd.f32 %v5424, %v5432
      %v5441 = vadd.f32 %v5425, %v5433
      %v5442 = vadd.f32 %v5426, %v5434
      %v5443 = vadd.f32 %v5427, %v5435
      %v5444 = vadd.f32 %v5428, %v5436
      %v5445 = vadd.f32 %v5429, %v5437
      %v5446 = vadd.f32 %v5430, %v5438
      %v5447 = vxor.u32 %v5439, 2147483648
      %v5448 = vxor.u32 %v5440, 2147483648
      %v5449 = vxor.u32 %v5441, 2147483648
      %v5450 = vxor.u32 %v5442, 2147483648
      %v5451 = vxor.u32 %v5443, 2147483648
      %v5452 = vxor.u32 %v5444, 2147483648
      %v5453 = vxor.u32 %v5445, 2147483648
      %v5454 = vxor.u32 %v5446, 2147483648
      %v5455 = vmul.f32 %v5447, 1.442695
      %v5456 = vpow.pop %v5455
      %v5457 = vmul.f32 %v5448, 1.442695
      %v5458 = vpow.pop %v5457
      %v5459 = vmul.f32 %v5449, 1.442695
      %v5460 = vpow.pop %v5459
      %v5461 = vmul.f32 %v5450, 1.442695
      %v5462 = vpow.pop %v5461
      %v5463 = vmul.f32 %v5451, 1.442695
      %v5464 = vpow.pop %v5463
      %v5465 = vmul.f32 %v5452, 1.442695
      %v5466 = vpow.pop %v5465
      %v5467 = vmul.f32 %v5453, 1.442695
      %v5468 = vpow.pop %v5467
      %v5469 = vmul.f32 %v5454, 1.442695
      %v5470 = vpow.pop %v5469
      %v5471 = vadd.f32 %v5456, 1.0
      %v5472 = vadd.f32 %v5458, 1.0
      %v5473 = vadd.f32 %v5460, 1.0
      %v5474 = vadd.f32 %v5462, 1.0
      %v5475 = vadd.f32 %v5464, 1.0
      %v5476 = vadd.f32 %v5466, 1.0
      %v5477 = vadd.f32 %v5468, 1.0
      %v5478 = vadd.f32 %v5470, 1.0
      %v5479 = vrcp.pop %v5471
      %v5480 = vmul.f32 1.0, %v5479
      %v5481 = vrcp.pop %v5472
      %v5482 = vmul.f32 1.0, %v5481
      %v5483 = vrcp.pop %v5473
      %v5484 = vmul.f32 1.0, %v5483
      %v5485 = vrcp.pop %v5474
      %v5486 = vmul.f32 1.0, %v5485
      %v5487 = vrcp.pop %v5475
      %v5488 = vmul.f32 1.0, %v5487
      %v5489 = vrcp.pop %v5476
      %v5490 = vmul.f32 1.0, %v5489
      %v5491 = vrcp.pop %v5477
      %v5492 = vmul.f32 1.0, %v5491
      %v5493 = vrcp.pop %v5478
      %v5494 = vmul.f32 1.0, %v5493
      %5495 = vst.msk [vmem:[%s401 + $0x80] sm:$0xff] %vm578, %v5480
      %5496 = vst.msk [vmem:[%s401 + $0x88] sm:$0xff] %vm578, %v5482
      %5497 = vst.msk [vmem:[%s401 + $0x90] sm:$0xff] %vm578, %v5484
      %5498 = vst.msk [vmem:[%s401 + $0x98] sm:$0xff] %vm578, %v5486
      %5499 = vst.msk [vmem:[%s401 + $0xa0] sm:$0xff] %vm578, %v5488
      %5500 = vst.msk [vmem:[%s401 + $0xa8] sm:$0xff] %vm578, %v5490
      %5501 = vst.msk [vmem:[%s401 + $0xb0] sm:$0xff] %vm578, %v5492
      %5502 = vst.msk [vmem:[%s401 + $0xb8] sm:$0xff] %vm578, %v5494
      %v5503 = vld [vmem:[%s395 + $0xc0] sm:$0xff]
      %v5504 = vld [vmem:[%s395 + $0xc8] sm:$0xff]
      %v5505 = vld [vmem:[%s395 + $0xd0] sm:$0xff]
      %v5506 = vld [vmem:[%s395 + $0xd8] sm:$0xff]
      %v5507 = vld [vmem:[%s395 + $0xe0] sm:$0xff]
      %v5508 = vld [vmem:[%s395 + $0xe8] sm:$0xff]
      %v5509 = vld [vmem:[%s395 + $0xf0] sm:$0xff]
      %v5510 = vld [vmem:[%s395 + $0xf8] sm:$0xff]
      %v5511 = vld [vmem:[%s3032] sm:$0xff]
      %v5512 = vld [vmem:[%s3032 + $0x8] sm:$0xff]
      %v5513 = vld [vmem:[%s3032 + $0x10] sm:$0xff]
      %v5514 = vld [vmem:[%s3032 + $0x18] sm:$0xff]
      %v5515 = vld [vmem:[%s3032 + $0x20] sm:$0xff]
      %v5516 = vld [vmem:[%s3032 + $0x28] sm:$0xff]
      %v5517 = vld [vmem:[%s3032 + $0x30] sm:$0xff]
      %v5518 = vld [vmem:[%s3032 + $0x38] sm:$0xff]
      %v5519 = vpack.c.bf16 %v5512, %v5511
      %v5520 = vpack.c.bf16 %v5514, %v5513
      %v5521 = vpack.c.bf16 %v5516, %v5515
      %v5522 = vpack.c.bf16 %v5518, %v5517
      %s5523 = scalar_lea.vmem %s389, 192
      %v5524 = vld [vmem:[%s5523] sm:$0xff]
      %v5525 = vld [vmem:[%s5523 + $0x8] sm:$0xff]
      %v5526 = vld [vmem:[%s5523 + $0x10] sm:$0xff]
      %v5527 = vld [vmem:[%s5523 + $0x18] sm:$0xff]
      %v5528 = vld [vmem:[%s5523 + $0x20] sm:$0xff]
      %v5529 = vld [vmem:[%s5523 + $0x28] sm:$0xff]
      %v5530 = vld [vmem:[%s5523 + $0x30] sm:$0xff]
      %v5531 = vld [vmem:[%s5523 + $0x38] sm:$0xff]
      %v5532 = vpack.c.bf16 %v5525, %v5524
      %v5533 = vpack.c.bf16 %v5527, %v5526
      %v5534 = vpack.c.bf16 %v5529, %v5528
      %v5535 = vpack.c.bf16 %v5531, %v5530
      %v5536 = vld [vmem:[#allocation5 + $0x60] sm:$0xff]
      %v5537 = vld [vmem:[#allocation5 + $0x68] sm:$0xff]
      %v5538 = vld [vmem:[#allocation5 + $0x70] sm:$0xff]
      %v5539 = vld [vmem:[#allocation5 + $0x78] sm:$0xff]
      %v5541 = vsel %vm2498, %v5519, 0
      %v5544 = vsel %vm2498, %v5520, 0
      %v5547 = vsel %vm2498, %v5521, 0
      %v5550 = vsel %vm2498, %v5522, 0
      %5552 = vmatprep.subr.bf16.mxu0 0
      %5553 = vmatpush1.bf16.msra.mxu0 %v5536
      %5554 = vmatprep.subr.bf16.mxu0 0
      %5555 = vmatpush1.bf16.msra.mxu0 %v5537
      %5556 = vmatprep.subr.bf16.mxu0 0
      %5557 = vmatpush1.bf16.msra.mxu0 %v5538
      %5558 = vmatprep.subr.bf16.mxu0 0
      %5559 = vmatpush1.bf16.msra.mxu0 %v5539
      %5560 = vmatprep.subr.bf16.mxu0 0
      %5561 = vmatpush1.bf16.msra.mxu0 0
      %5562 = vmatprep.subr.bf16.mxu0 0
      %5563 = vmatpush1.bf16.msra.mxu0 0
      %5564 = vmatprep.subr.bf16.mxu0 0
      %5565 = vmatpush1.bf16.msra.mxu0 0
      %5566 = vmatprep.subr.bf16.mxu0 0
      %5567 = vmatpush1.bf16.msra.mxu0 0
      %5568 = vmatprep.subr.bf16.mxu0 0
      %5569 = vmatpush1.bf16.msra.mxu0 0
      %5570 = vmatprep.subr.bf16.mxu0 0
      %5571 = vmatpush1.bf16.msra.mxu0 0
      %5572 = vmatprep.subr.bf16.mxu0 0
      %5573 = vmatpush1.bf16.msra.mxu0 0
      %5574 = vmatprep.subr.bf16.mxu0 0
      %5575 = vmatpush1.bf16.msra.mxu0 0
      %5576 = vmatprep.subr.bf16.mxu0 0
      %5577 = vmatpush1.bf16.msra.mxu0 0
      %5578 = vmatprep.subr.bf16.mxu0 0
      %5579 = vmatpush1.bf16.msra.mxu0 0
      %5580 = vmatprep.subr.bf16.mxu0 0
      %5581 = vmatpush1.bf16.msra.mxu0 0
      %5582 = vmatprep.subr.bf16.mxu0 0
      %5583 = vmatpush1.bf16.msra.mxu0 0
      %5584 = vmatprep.mubr.bf16.mxu0 0
      %5585 = vmatmul.mubr.bf16.gmra.mrb[0].mxu0 %v5541
      %v5586 = vpop.f32.mrb[0].mxu0
      %v5587 = vadd.f32 0.0, %v5586
      %v5588 = vpop.f32.mrb[0].mxu0
      %v5589 = vpop.f32.mrb[0].mxu0
      %v5590 = vadd.f32 0.0, %v5589
      %v5591 = vpop.f32.mrb[0].mxu0
      %5592 = vmatprep.mubr.bf16.mxu0 0
      %5593 = vmatmul.mubr.bf16.gmra.mrb[0].mxu0 %v5544
      %v5594 = vpop.f32.mrb[0].mxu0
      %v5595 = vadd.f32 0.0, %v5594
      %v5596 = vpop.f32.mrb[0].mxu0
      %v5597 = vpop.f32.mrb[0].mxu0
      %v5598 = vadd.f32 0.0, %v5597
      %v5599 = vpop.f32.mrb[0].mxu0
      %5600 = vmatprep.mubr.bf16.mxu0 0
      %5601 = vmatmul.mubr.bf16.gmra.mrb[0].mxu0 %v5547
      %v5602 = vpop.f32.mrb[0].mxu0
      %v5603 = vadd.f32 0.0, %v5602
      %v5604 = vpop.f32.mrb[0].mxu0
      %v5605 = vpop.f32.mrb[0].mxu0
      %v5606 = vadd.f32 0.0, %v5605
      %v5607 = vpop.f32.mrb[0].mxu0
      %5608 = vmatprep.mubr.bf16.mxu0 0
      %5609 = vmatmul.mubr.bf16.gmra.mrb[0].mxu0 %v5550
      %v5610 = vpop.f32.mrb[0].mxu0
      %v5611 = vadd.f32 0.0, %v5610
      %v5612 = vpop.f32.mrb[0].mxu0
      %v5613 = vpop.f32.mrb[0].mxu0
      %v5614 = vadd.f32 0.0, %v5613
      %v5615 = vpop.f32.mrb[0].mxu0
      %5616 = vdwg.mxu0
      %5618 = vset.pattern.permute.xlu0 0
      %5619 = vperm.xlu0 %5618, %v5503
      %v5620 = vpop.permute.xlu0 %5619
      %5623 = vset.pattern.permute.xlu0 0
      %5624 = vperm.xlu0 %5623, %v5504
      %v5625 = vpop.permute.xlu0 %5624
      %5628 = vset.pattern.permute.xlu0 0
      %5629 = vperm.xlu0 %5628, %v5505
      %v5630 = vpop.permute.xlu0 %5629
      %5633 = vset.pattern.permute.xlu0 0
      %5634 = vperm.xlu0 %5633, %v5506
      %v5635 = vpop.permute.xlu0 %5634
      %5638 = vset.pattern.permute.xlu0 0
      %5639 = vperm.xlu0 %5638, %v5507
      %v5640 = vpop.permute.xlu0 %5639
      %5643 = vset.pattern.permute.xlu0 0
      %5644 = vperm.xlu0 %5643, %v5508
      %v5645 = vpop.permute.xlu0 %5644
      %5648 = vset.pattern.permute.xlu0 0
      %5649 = vperm.xlu0 %5648, %v5509
      %v5650 = vpop.permute.xlu0 %5649
      %5653 = vset.pattern.permute.xlu0 0
      %5654 = vperm.xlu0 %5653, %v5510
      %v5655 = vpop.permute.xlu0 %5654
      %v5657 = vmul.f32 %v5587, %v5620
      %v5658 = vmul.f32 %v5590, %v5625
      %v5659 = vmul.f32 %v5595, %v5630
      %v5660 = vmul.f32 %v5598, %v5635
      %v5661 = vmul.f32 %v5603, %v5640
      %v5662 = vmul.f32 %v5606, %v5645
      %v5663 = vmul.f32 %v5611, %v5650
      %v5664 = vmul.f32 %v5614, %v5655
      %v5665 = vld [vmem:[#allocation3 + $0x60] sm:$0xff]
      %v5666 = vld [vmem:[#allocation3 + $0x68] sm:$0xff]
      %v5667 = vld [vmem:[#allocation3 + $0x70] sm:$0xff]
      %v5668 = vld [vmem:[#allocation3 + $0x78] sm:$0xff]
      %v5670 = vsel %vm2498, %v5532, 0
      %v5673 = vsel %vm2498, %v5533, 0
      %v5676 = vsel %vm2498, %v5534, 0
      %v5679 = vsel %vm2498, %v5535, 0
      %5681 = vmatprep.subr.bf16.mxu0 0
      %5682 = vmatpush1.bf16.msra.mxu0 %v5665
      %5683 = vmatprep.subr.bf16.mxu0 0
      %5684 = vmatpush1.bf16.msra.mxu0 %v5666
      %5685 = vmatprep.subr.bf16.mxu0 0
      %5686 = vmatpush1.bf16.msra.mxu0 %v5667
      %5687 = vmatprep.subr.bf16.mxu0 0
      %5688 = vmatpush1.bf16.msra.mxu0 %v5668
      %5689 = vmatprep.subr.bf16.mxu0 0
      %5690 = vmatpush1.bf16.msra.mxu0 0
      %5691 = vmatprep.subr.bf16.mxu0 0
      %5692 = vmatpush1.bf16.msra.mxu0 0
      %5693 = vmatprep.subr.bf16.mxu0 0
      %5694 = vmatpush1.bf16.msra.mxu0 0
      %5695 = vmatprep.subr.bf16.mxu0 0
      %5696 = vmatpush1.bf16.msra.mxu0 0
      %5697 = vmatprep.subr.bf16.mxu0 0
      %5698 = vmatpush1.bf16.msra.mxu0 0
      %5699 = vmatprep.subr.bf16.mxu0 0
      %5700 = vmatpush1.bf16.msra.mxu0 0
      %5701 = vmatprep.subr.bf16.mxu0 0
      %5702 = vmatpush1.bf16.msra.mxu0 0
      %5703 = vmatprep.subr.bf16.mxu0 0
      %5704 = vmatpush1.bf16.msra.mxu0 0
      %5705 = vmatprep.subr.bf16.mxu0 0
      %5706 = vmatpush1.bf16.msra.mxu0 0
      %5707 = vmatprep.subr.bf16.mxu0 0
      %5708 = vmatpush1.bf16.msra.mxu0 0
      %5709 = vmatprep.subr.bf16.mxu0 0
      %5710 = vmatpush1.bf16.msra.mxu0 0
      %5711 = vmatprep.subr.bf16.mxu0 0
      %5712 = vmatpush1.bf16.msra.mxu0 0
      %5713 = vmatprep.mubr.bf16.mxu0 0
      %5714 = vmatmul.mubr.bf16.gmra.mrb[0].mxu0 %v5670
      %v5715 = vpop.f32.mrb[0].mxu0
      %v5716 = vadd.f32 0.0, %v5715
      %v5717 = vpop.f32.mrb[0].mxu0
      %v5718 = vpop.f32.mrb[0].mxu0
      %v5719 = vadd.f32 0.0, %v5718
      %v5720 = vpop.f32.mrb[0].mxu0
      %5721 = vmatprep.mubr.bf16.mxu0 0
      %5722 = vmatmul.mubr.bf16.gmra.mrb[0].mxu0 %v5673
      %v5723 = vpop.f32.mrb[0].mxu0
      %v5724 = vadd.f32 0.0, %v5723
      %v5725 = vpop.f32.mrb[0].mxu0
      %v5726 = vpop.f32.mrb[0].mxu0
      %v5727 = vadd.f32 0.0, %v5726
      %v5728 = vpop.f32.mrb[0].mxu0
      %5729 = vmatprep.mubr.bf16.mxu0 0
      %5730 = vmatmul.mubr.bf16.gmra.mrb[0].mxu0 %v5676
      %v5731 = vpop.f32.mrb[0].mxu0
      %v5732 = vadd.f32 0.0, %v5731
      %v5733 = vpop.f32.mrb[0].mxu0
      %v5734 = vpop.f32.mrb[0].mxu0
      %v5735 = vadd.f32 0.0, %v5734
      %v5736 = vpop.f32.mrb[0].mxu0
      %5737 = vmatprep.mubr.bf16.mxu0 0
      %5738 = vmatmul.mubr.bf16.gmra.mrb[0].mxu0 %v5679
      %v5739 = vpop.f32.mrb[0].mxu0
      %v5740 = vadd.f32 0.0, %v5739
      %v5741 = vpop.f32.mrb[0].mxu0
      %v5742 = vpop.f32.mrb[0].mxu0
      %v5743 = vadd.f32 0.0, %v5742
      %v5744 = vpop.f32.mrb[0].mxu0
      %5745 = vdwg.mxu0
      %5746 = vset.pattern.permute.xlu0 1
      %5747 = vperm.xlu0 %5746, %v5503
      %v5748 = vpop.permute.xlu0 %5747
      %5750 = vset.pattern.permute.xlu0 1
      %5751 = vperm.xlu0 %5750, %v5504
      %v5752 = vpop.permute.xlu0 %5751
      %5754 = vset.pattern.permute.xlu0 1
      %5755 = vperm.xlu0 %5754, %v5505
      %v5756 = vpop.permute.xlu0 %5755
      %5758 = vset.pattern.permute.xlu0 1
      %5759 = vperm.xlu0 %5758, %v5506
      %v5760 = vpop.permute.xlu0 %5759
      %5762 = vset.pattern.permute.xlu0 1
      %5763 = vperm.xlu0 %5762, %v5507
      %v5764 = vpop.permute.xlu0 %5763
      %5766 = vset.pattern.permute.xlu0 1
      %5767 = vperm.xlu0 %5766, %v5508
      %v5768 = vpop.permute.xlu0 %5767
      %5770 = vset.pattern.permute.xlu0 1
      %5771 = vperm.xlu0 %5770, %v5509
      %v5772 = vpop.permute.xlu0 %5771
      %5774 = vset.pattern.permute.xlu0 1
      %5775 = vperm.xlu0 %5774, %v5510
      %v5776 = vpop.permute.xlu0 %5775
      %v5778 = vmul.f32 %v5716, %v5748
      %v5779 = vmul.f32 %v5719, %v5752
      %v5780 = vmul.f32 %v5724, %v5756
      %v5781 = vmul.f32 %v5727, %v5760
      %v5782 = vmul.f32 %v5732, %v5764
      %v5783 = vmul.f32 %v5735, %v5768
      %v5784 = vmul.f32 %v5740, %v5772
      %v5785 = vmul.f32 %v5743, %v5776
      %v5786 = vadd.f32 %v5657, %v5778
      %v5787 = vadd.f32 %v5658, %v5779
      %v5788 = vadd.f32 %v5659, %v5780
      %v5789 = vadd.f32 %v5660, %v5781
      %v5790 = vadd.f32 %v5661, %v5782
      %v5791 = vadd.f32 %v5662, %v5783
      %v5792 = vadd.f32 %v5663, %v5784
      %v5793 = vadd.f32 %v5664, %v5785
      %v5794 = vld [vmem:[#allocation6 + $0xc0] sm:$0xff]
      %v5795 = vld [vmem:[#allocation6 + $0xc8] sm:$0xff]
      %v5796 = vld [vmem:[#allocation6 + $0xd0] sm:$0xff]
      %v5797 = vld [vmem:[#allocation6 + $0xd8] sm:$0xff]
      %v5798 = vld [vmem:[#allocation6 + $0xe0] sm:$0xff]
      %v5799 = vld [vmem:[#allocation6 + $0xe8] sm:$0xff]
      %v5800 = vld [vmem:[#allocation6 + $0xf0] sm:$0xff]
      %v5801 = vld [vmem:[#allocation6 + $0xf8] sm:$0xff]
      %v5802 = vadd.f32 %v5786, %v5794
      %v5803 = vadd.f32 %v5787, %v5795
      %v5804 = vadd.f32 %v5788, %v5796
      %v5805 = vadd.f32 %v5789, %v5797
      %v5806 = vadd.f32 %v5790, %v5798
      %v5807 = vadd.f32 %v5791, %v5799
      %v5808 = vadd.f32 %v5792, %v5800
      %v5809 = vadd.f32 %v5793, %v5801
      %v5810 = vxor.u32 %v5802, 2147483648
      %v5811 = vxor.u32 %v5803, 2147483648
      %v5812 = vxor.u32 %v5804, 2147483648
      %v5813 = vxor.u32 %v5805, 2147483648
      %v5814 = vxor.u32 %v5806, 2147483648
      %v5815 = vxor.u32 %v5807, 2147483648
      %v5816 = vxor.u32 %v5808, 2147483648
      %v5817 = vxor.u32 %v5809, 2147483648
      %v5818 = vmul.f32 %v5810, 1.442695
      %v5819 = vpow.pop %v5818
      %v5820 = vmul.f32 %v5811, 1.442695
      %v5821 = vpow.pop %v5820
      %v5822 = vmul.f32 %v5812, 1.442695
      %v5823 = vpow.pop %v5822
      %v5824 = vmul.f32 %v5813, 1.442695
      %v5825 = vpow.pop %v5824
      %v5826 = vmul.f32 %v5814, 1.442695
      %v5827 = vpow.pop %v5826
      %v5828 = vmul.f32 %v5815, 1.442695
      %v5829 = vpow.pop %v5828
      %v5830 = vmul.f32 %v5816, 1.442695
      %v5831 = vpow.pop %v5830
      %v5832 = vmul.f32 %v5817, 1.442695
      %v5833 = vpow.pop %v5832
      %v5834 = vadd.f32 %v5819, 1.0
      %v5835 = vadd.f32 %v5821, 1.0
      %v5836 = vadd.f32 %v5823, 1.0
      %v5837 = vadd.f32 %v5825, 1.0
      %v5838 = vadd.f32 %v5827, 1.0
      %v5839 = vadd.f32 %v5829, 1.0
      %v5840 = vadd.f32 %v5831, 1.0
      %v5841 = vadd.f32 %v5833, 1.0
      %v5842 = vrcp.pop %v5834
      %v5843 = vmul.f32 1.0, %v5842
      %v5844 = vrcp.pop %v5835
      %v5845 = vmul.f32 1.0, %v5844
      %v5846 = vrcp.pop %v5836
      %v5847 = vmul.f32 1.0, %v5846
      %v5848 = vrcp.pop %v5837
      %v5849 = vmul.f32 1.0, %v5848
      %v5850 = vrcp.pop %v5838
      %v5851 = vmul.f32 1.0, %v5850
      %v5852 = vrcp.pop %v5839
      %v5853 = vmul.f32 1.0, %v5852
      %v5854 = vrcp.pop %v5840
      %v5855 = vmul.f32 1.0, %v5854
      %v5856 = vrcp.pop %v5841
      %v5857 = vmul.f32 1.0, %v5856
      %5858 = vst.msk [vmem:[%s401 + $0xc0] sm:$0xff] %vm578, %v5843
      %5859 = vst.msk [vmem:[%s401 + $0xc8] sm:$0xff] %vm578, %v5845
      %5860 = vst.msk [vmem:[%s401 + $0xd0] sm:$0xff] %vm578, %v5847
      %5861 = vst.msk [vmem:[%s401 + $0xd8] sm:$0xff] %vm578, %v5849
      %5862 = vst.msk [vmem:[%s401 + $0xe0] sm:$0xff] %vm578, %v5851
      %5863 = vst.msk [vmem:[%s401 + $0xe8] sm:$0xff] %vm578, %v5853
      %5864 = vst.msk [vmem:[%s401 + $0xf0] sm:$0xff] %vm578, %v5855
      %5865 = vst.msk [vmem:[%s401 + $0xf8] sm:$0xff] %vm578, %v5857
      %v5866 = vld [vmem:[%s395 + $0x100] sm:$0xff]
      %v5867 = vld [vmem:[%s395 + $0x108] sm:$0xff]
      %v5868 = vld [vmem:[%s395 + $0x110] sm:$0xff]
      %v5869 = vld [vmem:[%s395 + $0x118] sm:$0xff]
      %v5870 = vld [vmem:[%s395 + $0x120] sm:$0xff]
      %v5871 = vld [vmem:[%s395 + $0x128] sm:$0xff]
      %v5872 = vld [vmem:[%s395 + $0x130] sm:$0xff]
      %v5873 = vld [vmem:[%s395 + $0x138] sm:$0xff]
      %v5874 = vld [vmem:[%s3214] sm:$0xff]
      %v5875 = vld [vmem:[%s3214 + $0x8] sm:$0xff]
      %v5876 = vld [vmem:[%s3214 + $0x10] sm:$0xff]
      %v5877 = vld [vmem:[%s3214 + $0x18] sm:$0xff]
      %v5878 = vld [vmem:[%s3214 + $0x20] sm:$0xff]
      %v5879 = vld [vmem:[%s3214 + $0x28] sm:$0xff]
      %v5880 = vld [vmem:[%s3214 + $0x30] sm:$0xff]
      %v5881 = vld [vmem:[%s3214 + $0x38] sm:$0xff]
      %v5882 = vpack.c.bf16 %v5875, %v5874
      %v5883 = vpack.c.bf16 %v5877, %v5876
      %v5884 = vpack.c.bf16 %v5879, %v5878
      %v5885 = vpack.c.bf16 %v5881, %v5880
      %s5886 = scalar_lea.vmem %s389, 256
      %v5887 = vld [vmem:[%s5886] sm:$0xff]
      %v5888 = vld [vmem:[%s5886 + $0x8] sm:$0xff]
      %v5889 = vld [vmem:[%s5886 + $0x10] sm:$0xff]
      %v5890 = vld [vmem:[%s5886 + $0x18] sm:$0xff]
      %v5891 = vld [vmem:[%s5886 + $0x20] sm:$0xff]
      %v5892 = vld [vmem:[%s5886 + $0x28] sm:$0xff]
      %v5893 = vld [vmem:[%s5886 + $0x30] sm:$0xff]
      %v5894 = vld [vmem:[%s5886 + $0x38] sm:$0xff]
      %v5895 = vpack.c.bf16 %v5888, %v5887
      %v5896 = vpack.c.bf16 %v5890, %v5889
      %v5897 = vpack.c.bf16 %v5892, %v5891
      %v5898 = vpack.c.bf16 %v5894, %v5893
      %v5899 = vld [vmem:[#allocation5 + $0x80] sm:$0xff]
      %v5900 = vld [vmem:[#allocation5 + $0x88] sm:$0xff]
      %v5901 = vld [vmem:[#allocation5 + $0x90] sm:$0xff]
      %v5902 = vld [vmem:[#allocation5 + $0x98] sm:$0xff]
      %v5904 = vsel %vm2498, %v5882, 0
      %v5907 = vsel %vm2498, %v5883, 0
      %v5910 = vsel %vm2498, %v5884, 0
      %v5913 = vsel %vm2498, %v5885, 0
      %5915 = vmatprep.subr.bf16.mxu0 0
      %5916 = vmatpush1.bf16.msra.mxu0 %v5899
      %5917 = vmatprep.subr.bf16.mxu0 0
      %5918 = vmatpush1.bf16.msra.mxu0 %v5900
      %5919 = vmatprep.subr.bf16.mxu0 0
      %5920 = vmatpush1.bf16.msra.mxu0 %v5901
      %5921 = vmatprep.subr.bf16.mxu0 0
      %5922 = vmatpush1.bf16.msra.mxu0 %v5902
      %5923 = vmatprep.subr.bf16.mxu0 0
      %5924 = vmatpush1.bf16.msra.mxu0 0
      %5925 = vmatprep.subr.bf16.mxu0 0
      %5926 = vmatpush1.bf16.msra.mxu0 0
      %5927 = vmatprep.subr.bf16.mxu0 0
      %5928 = vmatpush1.bf16.msra.mxu0 0
      %5929 = vmatprep.subr.bf16.mxu0 0
      %5930 = vmatpush1.bf16.msra.mxu0 0
      %5931 = vmatprep.subr.bf16.mxu0 0
      %5932 = vmatpush1.bf16.msra.mxu0 0
      %5933 = vmatprep.subr.bf16.mxu0 0
      %5934 = vmatpush1.bf16.msra.mxu0 0
      %5935 = vmatprep.subr.bf16.mxu0 0
      %5936 = vmatpush1.bf16.msra.mxu0 0
      %5937 = vmatprep.subr.bf16.mxu0 0
      %5938 = vmatpush1.bf16.msra.mxu0 0
      %5939 = vmatprep.subr.bf16.mxu0 0
      %5940 = vmatpush1.bf16.msra.mxu0 0
      %5941 = vmatprep.subr.bf16.mxu0 0
      %5942 = vmatpush1.bf16.msra.mxu0 0
      %5943 = vmatprep.subr.bf16.mxu0 0
      %5944 = vmatpush1.bf16.msra.mxu0 0
      %5945 = vmatprep.subr.bf16.mxu0 0
      %5946 = vmatpush1.bf16.msra.mxu0 0
      %5947 = vmatprep.mubr.bf16.mxu0 0
      %5948 = vmatmul.mubr.bf16.gmra.mrb[0].mxu0 %v5904
      %v5949 = vpop.f32.mrb[0].mxu0
      %v5950 = vadd.f32 0.0, %v5949
      %v5951 = vpop.f32.mrb[0].mxu0
      %v5952 = vpop.f32.mrb[0].mxu0
      %v5953 = vadd.f32 0.0, %v5952
      %v5954 = vpop.f32.mrb[0].mxu0
      %5955 = vmatprep.mubr.bf16.mxu0 0
      %5956 = vmatmul.mubr.bf16.gmra.mrb[0].mxu0 %v5907
      %v5957 = vpop.f32.mrb[0].mxu0
      %v5958 = vadd.f32 0.0, %v5957
      %v5959 = vpop.f32.mrb[0].mxu0
      %v5960 = vpop.f32.mrb[0].mxu0
      %v5961 = vadd.f32 0.0, %v5960
      %v5962 = vpop.f32.mrb[0].mxu0
      %5963 = vmatprep.mubr.bf16.mxu0 0
      %5964 = vmatmul.mubr.bf16.gmra.mrb[0].mxu0 %v5910
      %v5965 = vpop.f32.mrb[0].mxu0
      %v5966 = vadd.f32 0.0, %v5965
      %v5967 = vpop.f32.mrb[0].mxu0
      %v5968 = vpop.f32.mrb[0].mxu0
      %v5969 = vadd.f32 0.0, %v5968
      %v5970 = vpop.f32.mrb[0].mxu0
      %5971 = vmatprep.mubr.bf16.mxu0 0
      %5972 = vmatmul.mubr.bf16.gmra.mrb[0].mxu0 %v5913
      %v5973 = vpop.f32.mrb[0].mxu0
      %v5974 = vadd.f32 0.0, %v5973
      %v5975 = vpop.f32.mrb[0].mxu0
      %v5976 = vpop.f32.mrb[0].mxu0
      %v5977 = vadd.f32 0.0, %v5976
      %v5978 = vpop.f32.mrb[0].mxu0
      %5979 = vdwg.mxu0
      %5981 = vset.pattern.permute.xlu0 0
      %5982 = vperm.xlu0 %5981, %v5866
      %v5983 = vpop.permute.xlu0 %5982
      %5986 = vset.pattern.permute.xlu0 0
      %5987 = vperm.xlu0 %5986, %v5867
      %v5988 = vpop.permute.xlu0 %5987
      %5991 = vset.pattern.permute.xlu0 0
      %5992 = vperm.xlu0 %5991, %v5868
      %v5993 = vpop.permute.xlu0 %5992
      %5996 = vset.pattern.permute.xlu0 0
      %5997 = vperm.xlu0 %5996, %v5869
      %v5998 = vpop.permute.xlu0 %5997
      %6001 = vset.pattern.permute.xlu0 0
      %6002 = vperm.xlu0 %6001, %v5870
      %v6003 = vpop.permute.xlu0 %6002
      %6006 = vset.pattern.permute.xlu0 0
      %6007 = vperm.xlu0 %6006, %v5871
      %v6008 = vpop.permute.xlu0 %6007
      %6011 = vset.pattern.permute.xlu0 0
      %6012 = vperm.xlu0 %6011, %v5872
      %v6013 = vpop.permute.xlu0 %6012
      %6016 = vset.pattern.permute.xlu0 0
      %6017 = vperm.xlu0 %6016, %v5873
      %v6018 = vpop.permute.xlu0 %6017
      %v6020 = vmul.f32 %v5950, %v5983
      %v6021 = vmul.f32 %v5953, %v5988
      %v6022 = vmul.f32 %v5958, %v5993
      %v6023 = vmul.f32 %v5961, %v5998
      %v6024 = vmul.f32 %v5966, %v6003
      %v6025 = vmul.f32 %v5969, %v6008
      %v6026 = vmul.f32 %v5974, %v6013
      %v6027 = vmul.f32 %v5977, %v6018
      %v6028 = vld [vmem:[#allocation3 + $0x80] sm:$0xff]
      %v6029 = vld [vmem:[#allocation3 + $0x88] sm:$0xff]
      %v6030 = vld [vmem:[#allocation3 + $0x90] sm:$0xff]
      %v6031 = vld [vmem:[#allocation3 + $0x98] sm:$0xff]
      %v6033 = vsel %vm2498, %v5895, 0
      %v6036 = vsel %vm2498, %v5896, 0
      %v6039 = vsel %vm2498, %v5897, 0
      %v6042 = vsel %vm2498, %v5898, 0
      %6044 = vmatprep.subr.bf16.mxu0 0
      %6045 = vmatpush1.bf16.msra.mxu0 %v6028
      %6046 = vmatprep.subr.bf16.mxu0 0
      %6047 = vmatpush1.bf16.msra.mxu0 %v6029
      %6048 = vmatprep.subr.bf16.mxu0 0
      %6049 = vmatpush1.bf16.msra.mxu0 %v6030
      %6050 = vmatprep.subr.bf16.mxu0 0
      %6051 = vmatpush1.bf16.msra.mxu0 %v6031
      %6052 = vmatprep.subr.bf16.mxu0 0
      %6053 = vmatpush1.bf16.msra.mxu0 0
      %6054 = vmatprep.subr.bf16.mxu0 0
      %6055 = vmatpush1.bf16.msra.mxu0 0
      %6056 = vmatprep.subr.bf16.mxu0 0
      %6057 = vmatpush1.bf16.msra.mxu0 0
      %6058 = vmatprep.subr.bf16.mxu0 0
      %6059 = vmatpush1.bf16.msra.mxu0 0
      %6060 = vmatprep.subr.bf16.mxu0 0
      %6061 = vmatpush1.bf16.msra.mxu0 0
      %6062 = vmatprep.subr.bf16.mxu0 0
      %6063 = vmatpush1.bf16.msra.mxu0 0
      %6064 = vmatprep.subr.bf16.mxu0 0
      %6065 = vmatpush1.bf16.msra.mxu0 0
      %6066 = vmatprep.subr.bf16.mxu0 0
      %6067 = vmatpush1.bf16.msra.mxu0 0
      %6068 = vmatprep.subr.bf16.mxu0 0
      %6069 = vmatpush1.bf16.msra.mxu0 0
      %6070 = vmatprep.subr.bf16.mxu0 0
      %6071 = vmatpush1.bf16.msra.mxu0 0
      %6072 = vmatprep.subr.bf16.mxu0 0
      %6073 = vmatpush1.bf16.msra.mxu0 0
      %6074 = vmatprep.subr.bf16.mxu0 0
      %6075 = vmatpush1.bf16.msra.mxu0 0
      %6076 = vmatprep.mubr.bf16.mxu0 0
      %6077 = vmatmul.mubr.bf16.gmra.mrb[0].mxu0 %v6033
      %v6078 = vpop.f32.mrb[0].mxu0
      %v6079 = vadd.f32 0.0, %v6078
      %v6080 = vpop.f32.mrb[0].mxu0
      %v6081 = vpop.f32.mrb[0].mxu0
      %v6082 = vadd.f32 0.0, %v6081
      %v6083 = vpop.f32.mrb[0].mxu0
      %6084 = vmatprep.mubr.bf16.mxu0 0
      %6085 = vmatmul.mubr.bf16.gmra.mrb[0].mxu0 %v6036
      %v6086 = vpop.f32.mrb[0].mxu0
      %v6087 = vadd.f32 0.0, %v6086
      %v6088 = vpop.f32.mrb[0].mxu0
      %v6089 = vpop.f32.mrb[0].mxu0
      %v6090 = vadd.f32 0.0, %v6089
      %v6091 = vpop.f32.mrb[0].mxu0
      %6092 = vmatprep.mubr.bf16.mxu0 0
      %6093 = vmatmul.mubr.bf16.gmra.mrb[0].mxu0 %v6039
      %v6094 = vpop.f32.mrb[0].mxu0
      %v6095 = vadd.f32 0.0, %v6094
      %v6096 = vpop.f32.mrb[0].mxu0
      %v6097 = vpop.f32.mrb[0].mxu0
      %v6098 = vadd.f32 0.0, %v6097
      %v6099 = vpop.f32.mrb[0].mxu0
      %6100 = vmatprep.mubr.bf16.mxu0 0
      %6101 = vmatmul.mubr.bf16.gmra.mrb[0].mxu0 %v6042
      %v6102 = vpop.f32.mrb[0].mxu0
      %v6103 = vadd.f32 0.0, %v6102
      %v6104 = vpop.f32.mrb[0].mxu0
      %v6105 = vpop.f32.mrb[0].mxu0
      %v6106 = vadd.f32 0.0, %v6105
      %v6107 = vpop.f32.mrb[0].mxu0
      %6108 = vdwg.mxu0
      %6109 = vset.pattern.permute.xlu0 1
      %6110 = vperm.xlu0 %6109, %v5866
      %v6111 = vpop.permute.xlu0 %6110
      %6113 = vset.pattern.permute.xlu0 1
      %6114 = vperm.xlu0 %6113, %v5867
      %v6115 = vpop.permute.xlu0 %6114
      %6117 = vset.pattern.permute.xlu0 1
      %6118 = vperm.xlu0 %6117, %v5868
      %v6119 = vpop.permute.xlu0 %6118
      %6121 = vset.pattern.permute.xlu0 1
      %6122 = vperm.xlu0 %6121, %v5869
      %v6123 = vpop.permute.xlu0 %6122
      %6125 = vset.pattern.permute.xlu0 1
      %6126 = vperm.xlu0 %6125, %v5870
      %v6127 = vpop.permute.xlu0 %6126
      %6129 = vset.pattern.permute.xlu0 1
      %6130 = vperm.xlu0 %6129, %v5871
      %v6131 = vpop.permute.xlu0 %6130
      %6133 = vset.pattern.permute.xlu0 1
      %6134 = vperm.xlu0 %6133, %v5872
      %v6135 = vpop.permute.xlu0 %6134
      %6137 = vset.pattern.permute.xlu0 1
      %6138 = vperm.xlu0 %6137, %v5873
      %v6139 = vpop.permute.xlu0 %6138
      %v6141 = vmul.f32 %v6079, %v6111
      %v6142 = vmul.f32 %v6082, %v6115
      %v6143 = vmul.f32 %v6087, %v6119
      %v6144 = vmul.f32 %v6090, %v6123
      %v6145 = vmul.f32 %v6095, %v6127
      %v6146 = vmul.f32 %v6098, %v6131
      %v6147 = vmul.f32 %v6103, %v6135
      %v6148 = vmul.f32 %v6106, %v6139
      %v6149 = vadd.f32 %v6020, %v6141
      %v6150 = vadd.f32 %v6021, %v6142
      %v6151 = vadd.f32 %v6022, %v6143
      %v6152 = vadd.f32 %v6023, %v6144
      %v6153 = vadd.f32 %v6024, %v6145
      %v6154 = vadd.f32 %v6025, %v6146
      %v6155 = vadd.f32 %v6026, %v6147
      %v6156 = vadd.f32 %v6027, %v6148
      %v6157 = vld [vmem:[#allocation6 + $0x100] sm:$0xff]
      %v6158 = vld [vmem:[#allocation6 + $0x108] sm:$0xff]
      %v6159 = vld [vmem:[#allocation6 + $0x110] sm:$0xff]
      %v6160 = vld [vmem:[#allocation6 + $0x118] sm:$0xff]
      %v6161 = vld [vmem:[#allocation6 + $0x120] sm:$0xff]
      %v6162 = vld [vmem:[#allocation6 + $0x128] sm:$0xff]
      %v6163 = vld [vmem:[#allocation6 + $0x130] sm:$0xff]
      %v6164 = vld [vmem:[#allocation6 + $0x138] sm:$0xff]
      %v6165 = vadd.f32 %v6149, %v6157
      %v6166 = vadd.f32 %v6150, %v6158
      %v6167 = vadd.f32 %v6151, %v6159
      %v6168 = vadd.f32 %v6152, %v6160
      %v6169 = vadd.f32 %v6153, %v6161
      %v6170 = vadd.f32 %v6154, %v6162
      %v6171 = vadd.f32 %v6155, %v6163
      %v6172 = vadd.f32 %v6156, %v6164
      %v6173 = vxor.u32 %v6165, 2147483648
      %v6174 = vxor.u32 %v6166, 2147483648
      %v6175 = vxor.u32 %v6167, 2147483648
      %v6176 = vxor.u32 %v6168, 2147483648
      %v6177 = vxor.u32 %v6169, 2147483648
      %v6178 = vxor.u32 %v6170, 2147483648
      %v6179 = vxor.u32 %v6171, 2147483648
      %v6180 = vxor.u32 %v6172, 2147483648
      %v6181 = vmul.f32 %v6173, 1.442695
      %v6182 = vpow.pop %v6181
      %v6183 = vmul.f32 %v6174, 1.442695
      %v6184 = vpow.pop %v6183
      %v6185 = vmul.f32 %v6175, 1.442695
      %v6186 = vpow.pop %v6185
      %v6187 = vmul.f32 %v6176, 1.442695
      %v6188 = vpow.pop %v6187
      %v6189 = vmul.f32 %v6177, 1.442695
      %v6190 = vpow.pop %v6189
      %v6191 = vmul.f32 %v6178, 1.442695
      %v6192 = vpow.pop %v6191
      %v6193 = vmul.f32 %v6179, 1.442695
      %v6194 = vpow.pop %v6193
      %v6195 = vmul.f32 %v6180, 1.442695
      %v6196 = vpow.pop %v6195
      %v6197 = vadd.f32 %v6182, 1.0
      %v6198 = vadd.f32 %v6184, 1.0
      %v6199 = vadd.f32 %v6186, 1.0
      %v6200 = vadd.f32 %v6188, 1.0
      %v6201 = vadd.f32 %v6190, 1.0
      %v6202 = vadd.f32 %v6192, 1.0
      %v6203 = vadd.f32 %v6194, 1.0
      %v6204 = vadd.f32 %v6196, 1.0
      %v6205 = vrcp.pop %v6197
      %v6206 = vmul.f32 1.0, %v6205
      %v6207 = vrcp.pop %v6198
      %v6208 = vmul.f32 1.0, %v6207
      %v6209 = vrcp.pop %v6199
      %v6210 = vmul.f32 1.0, %v6209
      %v6211 = vrcp.pop %v6200
      %v6212 = vmul.f32 1.0, %v6211
      %v6213 = vrcp.pop %v6201
      %v6214 = vmul.f32 1.0, %v6213
      %v6215 = vrcp.pop %v6202
      %v6216 = vmul.f32 1.0, %v6215
      %v6217 = vrcp.pop %v6203
      %v6218 = vmul.f32 1.0, %v6217
      %v6219 = vrcp.pop %v6204
      %v6220 = vmul.f32 1.0, %v6219
      %6221 = vst.msk [vmem:[%s401 + $0x100] sm:$0xff] %vm578, %v6206
      %6222 = vst.msk [vmem:[%s401 + $0x108] sm:$0xff] %vm578, %v6208
      %6223 = vst.msk [vmem:[%s401 + $0x110] sm:$0xff] %vm578, %v6210
      %6224 = vst.msk [vmem:[%s401 + $0x118] sm:$0xff] %vm578, %v6212
      %6225 = vst.msk [vmem:[%s401 + $0x120] sm:$0xff] %vm578, %v6214
      %6226 = vst.msk [vmem:[%s401 + $0x128] sm:$0xff] %vm578, %v6216
      %6227 = vst.msk [vmem:[%s401 + $0x130] sm:$0xff] %vm578, %v6218
      %6228 = vst.msk [vmem:[%s401 + $0x138] sm:$0xff] %vm578, %v6220
      %v6229 = vld [vmem:[%s395 + $0x140] sm:$0xff]
      %v6230 = vld [vmem:[%s395 + $0x148] sm:$0xff]
      %v6231 = vld [vmem:[%s395 + $0x150] sm:$0xff]
      %v6232 = vld [vmem:[%s395 + $0x158] sm:$0xff]
      %v6233 = vld [vmem:[%s395 + $0x160] sm:$0xff]
      %v6234 = vld [vmem:[%s395 + $0x168] sm:$0xff]
      %v6235 = vld [vmem:[%s395 + $0x170] sm:$0xff]
      %v6236 = vld [vmem:[%s395 + $0x178] sm:$0xff]
      %v6237 = vld [vmem:[%s3396] sm:$0xff]
      %v6238 = vld [vmem:[%s3396 + $0x8] sm:$0xff]
      %v6239 = vld [vmem:[%s3396 + $0x10] sm:$0xff]
      %v6240 = vld [vmem:[%s3396 + $0x18] sm:$0xff]
      %v6241 = vld [vmem:[%s3396 + $0x20] sm:$0xff]
      %v6242 = vld [vmem:[%s3396 + $0x28] sm:$0xff]
      %v6243 = vld [vmem:[%s3396 + $0x30] sm:$0xff]
      %v6244 = vld [vmem:[%s3396 + $0x38] sm:$0xff]
      %v6245 = vpack.c.bf16 %v6238, %v6237
      %v6246 = vpack.c.bf16 %v6240, %v6239
      %v6247 = vpack.c.bf16 %v6242, %v6241
      %v6248 = vpack.c.bf16 %v6244, %v6243
      %s6249 = scalar_lea.vmem %s389, 320
      %v6250 = vld [vmem:[%s6249] sm:$0xff]
      %v6251 = vld [vmem:[%s6249 + $0x8] sm:$0xff]
      %v6252 = vld [vmem:[%s6249 + $0x10] sm:$0xff]
      %v6253 = vld [vmem:[%s6249 + $0x18] sm:$0xff]
      %v6254 = vld [vmem:[%s6249 + $0x20] sm:$0xff]
      %v6255 = vld [vmem:[%s6249 + $0x28] sm:$0xff]
      %v6256 = vld [vmem:[%s6249 + $0x30] sm:$0xff]
      %v6257 = vld [vmem:[%s6249 + $0x38] sm:$0xff]
      %v6258 = vpack.c.bf16 %v6251, %v6250
      %v6259 = vpack.c.bf16 %v6253, %v6252
      %v6260 = vpack.c.bf16 %v6255, %v6254
      %v6261 = vpack.c.bf16 %v6257, %v6256
      %v6262 = vld [vmem:[#allocation5 + $0xa0] sm:$0xff]
      %v6263 = vld [vmem:[#allocation5 + $0xa8] sm:$0xff]
      %v6264 = vld [vmem:[#allocation5 + $0xb0] sm:$0xff]
      %v6265 = vld [vmem:[#allocation5 + $0xb8] sm:$0xff]
      %v6267 = vsel %vm2498, %v6245, 0
      %v6270 = vsel %vm2498, %v6246, 0
      %v6273 = vsel %vm2498, %v6247, 0
      %v6276 = vsel %vm2498, %v6248, 0
      %6278 = vmatprep.subr.bf16.mxu0 0
      %6279 = vmatpush1.bf16.msra.mxu0 %v6262
      %6280 = vmatprep.subr.bf16.mxu0 0
      %6281 = vmatpush1.bf16.msra.mxu0 %v6263
      %6282 = vmatprep.subr.bf16.mxu0 0
      %6283 = vmatpush1.bf16.msra.mxu0 %v6264
      %6284 = vmatprep.subr.bf16.mxu0 0
      %6285 = vmatpush1.bf16.msra.mxu0 %v6265
      %6286 = vmatprep.subr.bf16.mxu0 0
      %6287 = vmatpush1.bf16.msra.mxu0 0
      %6288 = vmatprep.subr.bf16.mxu0 0
      %6289 = vmatpush1.bf16.msra.mxu0 0
      %6290 = vmatprep.subr.bf16.mxu0 0
      %6291 = vmatpush1.bf16.msra.mxu0 0
      %6292 = vmatprep.subr.bf16.mxu0 0
      %6293 = vmatpush1.bf16.msra.mxu0 0
      %6294 = vmatprep.subr.bf16.mxu0 0
      %6295 = vmatpush1.bf16.msra.mxu0 0
      %6296 = vmatprep.subr.bf16.mxu0 0
      %6297 = vmatpush1.bf16.msra.mxu0 0
      %6298 = vmatprep.subr.bf16.mxu0 0
      %6299 = vmatpush1.bf16.msra.mxu0 0
      %6300 = vmatprep.subr.bf16.mxu0 0
      %6301 = vmatpush1.bf16.msra.mxu0 0
      %6302 = vmatprep.subr.bf16.mxu0 0
      %6303 = vmatpush1.bf16.msra.mxu0 0
      %6304 = vmatprep.subr.bf16.mxu0 0
      %6305 = vmatpush1.bf16.msra.mxu0 0
      %6306 = vmatprep.subr.bf16.mxu0 0
      %6307 = vmatpush1.bf16.msra.mxu0 0
      %6308 = vmatprep.subr.bf16.mxu0 0
      %6309 = vmatpush1.bf16.msra.mxu0 0
      %6310 = vmatprep.mubr.bf16.mxu0 0
      %6311 = vmatmul.mubr.bf16.gmra.mrb[0].mxu0 %v6267
      %v6312 = vpop.f32.mrb[0].mxu0
      %v6313 = vadd.f32 0.0, %v6312
      %v6314 = vpop.f32.mrb[0].mxu0
      %v6315 = vpop.f32.mrb[0].mxu0
      %v6316 = vadd.f32 0.0, %v6315
      %v6317 = vpop.f32.mrb[0].mxu0
      %6318 = vmatprep.mubr.bf16.mxu0 0
      %6319 = vmatmul.mubr.bf16.gmra.mrb[0].mxu0 %v6270
      %v6320 = vpop.f32.mrb[0].mxu0
      %v6321 = vadd.f32 0.0, %v6320
      %v6322 = vpop.f32.mrb[0].mxu0
      %v6323 = vpop.f32.mrb[0].mxu0
      %v6324 = vadd.f32 0.0, %v6323
      %v6325 = vpop.f32.mrb[0].mxu0
      %6326 = vmatprep.mubr.bf16.mxu0 0
      %6327 = vmatmul.mubr.bf16.gmra.mrb[0].mxu0 %v6273
      %v6328 = vpop.f32.mrb[0].mxu0
      %v6329 = vadd.f32 0.0, %v6328
      %v6330 = vpop.f32.mrb[0].mxu0
      %v6331 = vpop.f32.mrb[0].mxu0
      %v6332 = vadd.f32 0.0, %v6331
      %v6333 = vpop.f32.mrb[0].mxu0
      %6334 = vmatprep.mubr.bf16.mxu0 0
      %6335 = vmatmul.mubr.bf16.gmra.mrb[0].mxu0 %v6276
      %v6336 = vpop.f32.mrb[0].mxu0
      %v6337 = vadd.f32 0.0, %v6336
      %v6338 = vpop.f32.mrb[0].mxu0
      %v6339 = vpop.f32.mrb[0].mxu0
      %v6340 = vadd.f32 0.0, %v6339
      %v6341 = vpop.f32.mrb[0].mxu0
      %6342 = vdwg.mxu0
      %6344 = vset.pattern.permute.xlu0 0
      %6345 = vperm.xlu0 %6344, %v6229
      %v6346 = vpop.permute.xlu0 %6345
      %6349 = vset.pattern.permute.xlu0 0
      %6350 = vperm.xlu0 %6349, %v6230
      %v6351 = vpop.permute.xlu0 %6350
      %6354 = vset.pattern.permute.xlu0 0
      %6355 = vperm.xlu0 %6354, %v6231
      %v6356 = vpop.permute.xlu0 %6355
      %6359 = vset.pattern.permute.xlu0 0
      %6360 = vperm.xlu0 %6359, %v6232
      %v6361 = vpop.permute.xlu0 %6360
      %6364 = vset.pattern.permute.xlu0 0
      %6365 = vperm.xlu0 %6364, %v6233
      %v6366 = vpop.permute.xlu0 %6365
      %6369 = vset.pattern.permute.xlu0 0
      %6370 = vperm.xlu0 %6369, %v6234
      %v6371 = vpop.permute.xlu0 %6370
      %6374 = vset.pattern.permute.xlu0 0
      %6375 = vperm.xlu0 %6374, %v6235
      %v6376 = vpop.permute.xlu0 %6375
      %6379 = vset.pattern.permute.xlu0 0
      %6380 = vperm.xlu0 %6379, %v6236
      %v6381 = vpop.permute.xlu0 %6380
      %v6383 = vmul.f32 %v6313, %v6346
      %v6384 = vmul.f32 %v6316, %v6351
      %v6385 = vmul.f32 %v6321, %v6356
      %v6386 = vmul.f32 %v6324, %v6361
      %v6387 = vmul.f32 %v6329, %v6366
      %v6388 = vmul.f32 %v6332, %v6371
      %v6389 = vmul.f32 %v6337, %v6376
      %v6390 = vmul.f32 %v6340, %v6381
      %v6391 = vld [vmem:[#allocation3 + $0xa0] sm:$0xff]
      %v6392 = vld [vmem:[#allocation3 + $0xa8] sm:$0xff]
      %v6393 = vld [vmem:[#allocation3 + $0xb0] sm:$0xff]
      %v6394 = vld [vmem:[#allocation3 + $0xb8] sm:$0xff]
      %v6396 = vsel %vm2498, %v6258, 0
      %v6399 = vsel %vm2498, %v6259, 0
      %v6402 = vsel %vm2498, %v6260, 0
      %v6405 = vsel %vm2498, %v6261, 0
      %6407 = vmatprep.subr.bf16.mxu0 0
      %6408 = vmatpush1.bf16.msra.mxu0 %v6391
      %6409 = vmatprep.subr.bf16.mxu0 0
      %6410 = vmatpush1.bf16.msra.mxu0 %v6392
      %6411 = vmatprep.subr.bf16.mxu0 0
      %6412 = vmatpush1.bf16.msra.mxu0 %v6393
      %6413 = vmatprep.subr.bf16.mxu0 0
      %6414 = vmatpush1.bf16.msra.mxu0 %v6394
      %6415 = vmatprep.subr.bf16.mxu0 0
      %6416 = vmatpush1.bf16.msra.mxu0 0
      %6417 = vmatprep.subr.bf16.mxu0 0
      %6418 = vmatpush1.bf16.msra.mxu0 0
      %6419 = vmatprep.subr.bf16.mxu0 0
      %6420 = vmatpush1.bf16.msra.mxu0 0
      %6421 = vmatprep.subr.bf16.mxu0 0
      %6422 = vmatpush1.bf16.msra.mxu0 0
      %6423 = vmatprep.subr.bf16.mxu0 0
      %6424 = vmatpush1.bf16.msra.mxu0 0
      %6425 = vmatprep.subr.bf16.mxu0 0
      %6426 = vmatpush1.bf16.msra.mxu0 0
      %6427 = vmatprep.subr.bf16.mxu0 0
      %6428 = vmatpush1.bf16.msra.mxu0 0
      %6429 = vmatprep.subr.bf16.mxu0 0
      %6430 = vmatpush1.bf16.msra.mxu0 0
      %6431 = vmatprep.subr.bf16.mxu0 0
      %6432 = vmatpush1.bf16.msra.mxu0 0
      %6433 = vmatprep.subr.bf16.mxu0 0
      %6434 = vmatpush1.bf16.msra.mxu0 0
      %6435 = vmatprep.subr.bf16.mxu0 0
      %6436 = vmatpush1.bf16.msra.mxu0 0
      %6437 = vmatprep.subr.bf16.mxu0 0
      %6438 = vmatpush1.bf16.msra.mxu0 0
      %6439 = vmatprep.mubr.bf16.mxu0 0
      %6440 = vmatmul.mubr.bf16.gmra.mrb[0].mxu0 %v6396
      %v6441 = vpop.f32.mrb[0].mxu0
      %v6442 = vadd.f32 0.0, %v6441
      %v6443 = vpop.f32.mrb[0].mxu0
      %v6444 = vpop.f32.mrb[0].mxu0
      %v6445 = vadd.f32 0.0, %v6444
      %v6446 = vpop.f32.mrb[0].mxu0
      %6447 = vmatprep.mubr.bf16.mxu0 0
      %6448 = vmatmul.mubr.bf16.gmra.mrb[0].mxu0 %v6399
      %v6449 = vpop.f32.mrb[0].mxu0
      %v6450 = vadd.f32 0.0, %v6449
      %v6451 = vpop.f32.mrb[0].mxu0
      %v6452 = vpop.f32.mrb[0].mxu0
      %v6453 = vadd.f32 0.0, %v6452
      %v6454 = vpop.f32.mrb[0].mxu0
      %6455 = vmatprep.mubr.bf16.mxu0 0
      %6456 = vmatmul.mubr.bf16.gmra.mrb[0].mxu0 %v6402
      %v6457 = vpop.f32.mrb[0].mxu0
      %v6458 = vadd.f32 0.0, %v6457
      %v6459 = vpop.f32.mrb[0].mxu0
      %v6460 = vpop.f32.mrb[0].mxu0
      %v6461 = vadd.f32 0.0, %v6460
      %v6462 = vpop.f32.mrb[0].mxu0
      %6463 = vmatprep.mubr.bf16.mxu0 0
      %6464 = vmatmul.mubr.bf16.gmra.mrb[0].mxu0 %v6405
      %v6465 = vpop.f32.mrb[0].mxu0
      %v6466 = vadd.f32 0.0, %v6465
      %v6467 = vpop.f32.mrb[0].mxu0
      %v6468 = vpop.f32.mrb[0].mxu0
      %v6469 = vadd.f32 0.0, %v6468
      %v6470 = vpop.f32.mrb[0].mxu0
      %6471 = vdwg.mxu0
      %6472 = vset.pattern.permute.xlu0 1
      %6473 = vperm.xlu0 %6472, %v6229
      %v6474 = vpop.permute.xlu0 %6473
      %6476 = vset.pattern.permute.xlu0 1
      %6477 = vperm.xlu0 %6476, %v6230
      %v6478 = vpop.permute.xlu0 %6477
      %6480 = vset.pattern.permute.xlu0 1
      %6481 = vperm.xlu0 %6480, %v6231
      %v6482 = vpop.permute.xlu0 %6481
      %6484 = vset.pattern.permute.xlu0 1
      %6485 = vperm.xlu0 %6484, %v6232
      %v6486 = vpop.permute.xlu0 %6485
      %6488 = vset.pattern.permute.xlu0 1
      %6489 = vperm.xlu0 %6488, %v6233
      %v6490 = vpop.permute.xlu0 %6489
      %6492 = vset.pattern.permute.xlu0 1
      %6493 = vperm.xlu0 %6492, %v6234
      %v6494 = vpop.permute.xlu0 %6493
      %6496 = vset.pattern.permute.xlu0 1
      %6497 = vperm.xlu0 %6496, %v6235
      %v6498 = vpop.permute.xlu0 %6497
      %6500 = vset.pattern.permute.xlu0 1
      %6501 = vperm.xlu0 %6500, %v6236
      %v6502 = vpop.permute.xlu0 %6501
      %v6504 = vmul.f32 %v6442, %v6474
      %v6505 = vmul.f32 %v6445, %v6478
      %v6506 = vmul.f32 %v6450, %v6482
      %v6507 = vmul.f32 %v6453, %v6486
      %v6508 = vmul.f32 %v6458, %v6490
      %v6509 = vmul.f32 %v6461, %v6494
      %v6510 = vmul.f32 %v6466, %v6498
      %v6511 = vmul.f32 %v6469, %v6502
      %v6512 = vadd.f32 %v6383, %v6504
      %v6513 = vadd.f32 %v6384, %v6505
      %v6514 = vadd.f32 %v6385, %v6506
      %v6515 = vadd.f32 %v6386, %v6507
      %v6516 = vadd.f32 %v6387, %v6508
      %v6517 = vadd.f32 %v6388, %v6509
      %v6518 = vadd.f32 %v6389, %v6510
      %v6519 = vadd.f32 %v6390, %v6511
      %v6520 = vld [vmem:[#allocation6 + $0x140] sm:$0xff]
      %v6521 = vld [vmem:[#allocation6 + $0x148] sm:$0xff]
      %v6522 = vld [vmem:[#allocation6 + $0x150] sm:$0xff]
      %v6523 = vld [vmem:[#allocation6 + $0x158] sm:$0xff]
      %v6524 = vld [vmem:[#allocation6 + $0x160] sm:$0xff]
      %v6525 = vld [vmem:[#allocation6 + $0x168] sm:$0xff]
      %v6526 = vld [vmem:[#allocation6 + $0x170] sm:$0xff]
      %v6527 = vld [vmem:[#allocation6 + $0x178] sm:$0xff]
      %v6528 = vadd.f32 %v6512, %v6520
      %v6529 = vadd.f32 %v6513, %v6521
      %v6530 = vadd.f32 %v6514, %v6522
      %v6531 = vadd.f32 %v6515, %v6523
      %v6532 = vadd.f32 %v6516, %v6524
      %v6533 = vadd.f32 %v6517, %v6525
      %v6534 = vadd.f32 %v6518, %v6526
      %v6535 = vadd.f32 %v6519, %v6527
      %v6536 = vxor.u32 %v6528, 2147483648
      %v6537 = vxor.u32 %v6529, 2147483648
      %v6538 = vxor.u32 %v6530, 2147483648
      %v6539 = vxor.u32 %v6531, 2147483648
      %v6540 = vxor.u32 %v6532, 2147483648
      %v6541 = vxor.u32 %v6533, 2147483648
      %v6542 = vxor.u32 %v6534, 2147483648
      %v6543 = vxor.u32 %v6535, 2147483648
      %v6544 = vmul.f32 %v6536, 1.442695
      %v6545 = vpow.pop %v6544
      %v6546 = vmul.f32 %v6537, 1.442695
      %v6547 = vpow.pop %v6546
      %v6548 = vmul.f32 %v6538, 1.442695
      %v6549 = vpow.pop %v6548
      %v6550 = vmul.f32 %v6539, 1.442695
      %v6551 = vpow.pop %v6550
      %v6552 = vmul.f32 %v6540, 1.442695
      %v6553 = vpow.pop %v6552
      %v6554 = vmul.f32 %v6541, 1.442695
      %v6555 = vpow.pop %v6554
      %v6556 = vmul.f32 %v6542, 1.442695
      %v6557 = vpow.pop %v6556
      %v6558 = vmul.f32 %v6543, 1.442695
      %v6559 = vpow.pop %v6558
      %v6560 = vadd.f32 %v6545, 1.0
      %v6561 = vadd.f32 %v6547, 1.0
      %v6562 = vadd.f32 %v6549, 1.0
      %v6563 = vadd.f32 %v6551, 1.0
      %v6564 = vadd.f32 %v6553, 1.0
      %v6565 = vadd.f32 %v6555, 1.0
      %v6566 = vadd.f32 %v6557, 1.0
      %v6567 = vadd.f32 %v6559, 1.0
      %v6568 = vrcp.pop %v6560
      %v6569 = vmul.f32 1.0, %v6568
      %v6570 = vrcp.pop %v6561
      %v6571 = vmul.f32 1.0, %v6570
      %v6572 = vrcp.pop %v6562
      %v6573 = vmul.f32 1.0, %v6572
      %v6574 = vrcp.pop %v6563
      %v6575 = vmul.f32 1.0, %v6574
      %v6576 = vrcp.pop %v6564
      %v6577 = vmul.f32 1.0, %v6576
      %v6578 = vrcp.pop %v6565
      %v6579 = vmul.f32 1.0, %v6578
      %v6580 = vrcp.pop %v6566
      %v6581 = vmul.f32 1.0, %v6580
      %v6582 = vrcp.pop %v6567
      %v6583 = vmul.f32 1.0, %v6582
      %6584 = vst.msk [vmem:[%s401 + $0x140] sm:$0xff] %vm578, %v6569
      %6585 = vst.msk [vmem:[%s401 + $0x148] sm:$0xff] %vm578, %v6571
      %6586 = vst.msk [vmem:[%s401 + $0x150] sm:$0xff] %vm578, %v6573
      %6587 = vst.msk [vmem:[%s401 + $0x158] sm:$0xff] %vm578, %v6575
      %6588 = vst.msk [vmem:[%s401 + $0x160] sm:$0xff] %vm578, %v6577
      %6589 = vst.msk [vmem:[%s401 + $0x168] sm:$0xff] %vm578, %v6579
      %6590 = vst.msk [vmem:[%s401 + $0x170] sm:$0xff] %vm578, %v6581
      %6591 = vst.msk [vmem:[%s401 + $0x178] sm:$0xff] %vm578, %v6583
      %v6592 = vld [vmem:[%s395 + $0x180] sm:$0xff]
      %v6593 = vld [vmem:[%s395 + $0x188] sm:$0xff]
      %v6594 = vld [vmem:[%s395 + $0x190] sm:$0xff]
      %v6595 = vld [vmem:[%s395 + $0x198] sm:$0xff]
      %v6596 = vld [vmem:[%s395 + $0x1a0] sm:$0xff]
      %v6597 = vld [vmem:[%s395 + $0x1a8] sm:$0xff]
      %v6598 = vld [vmem:[%s395 + $0x1b0] sm:$0xff]
      %v6599 = vld [vmem:[%s395 + $0x1b8] sm:$0xff]
      %v6600 = vld [vmem:[%s3578] sm:$0xff]
      %v6601 = vld [vmem:[%s3578 + $0x8] sm:$0xff]
      %v6602 = vld [vmem:[%s3578 + $0x10] sm:$0xff]
      %v6603 = vld [vmem:[%s3578 + $0x18] sm:$0xff]
      %v6604 = vld [vmem:[%s3578 + $0x20] sm:$0xff]
      %v6605 = vld [vmem:[%s3578 + $0x28] sm:$0xff]
      %v6606 = vld [vmem:[%s3578 + $0x30] sm:$0xff]
      %v6607 = vld [vmem:[%s3578 + $0x38] sm:$0xff]
      %v6608 = vpack.c.bf16 %v6601, %v6600
      %v6609 = vpack.c.bf16 %v6603, %v6602
      %v6610 = vpack.c.bf16 %v6605, %v6604
      %v6611 = vpack.c.bf16 %v6607, %v6606
      %s6612 = scalar_lea.vmem %s389, 384
      %v6613 = vld [vmem:[%s6612] sm:$0xff]
      %v6614 = vld [vmem:[%s6612 + $0x8] sm:$0xff]
      %v6615 = vld [vmem:[%s6612 + $0x10] sm:$0xff]
      %v6616 = vld [vmem:[%s6612 + $0x18] sm:$0xff]
      %v6617 = vld [vmem:[%s6612 + $0x20] sm:$0xff]
      %v6618 = vld [vmem:[%s6612 + $0x28] sm:$0xff]
      %v6619 = vld [vmem:[%s6612 + $0x30] sm:$0xff]
      %v6620 = vld [vmem:[%s6612 + $0x38] sm:$0xff]
      %v6621 = vpack.c.bf16 %v6614, %v6613
      %v6622 = vpack.c.bf16 %v6616, %v6615
      %v6623 = vpack.c.bf16 %v6618, %v6617
      %v6624 = vpack.c.bf16 %v6620, %v6619
      %v6625 = vld [vmem:[#allocation5 + $0xc0] sm:$0xff]
      %v6626 = vld [vmem:[#allocation5 + $0xc8] sm:$0xff]
      %v6627 = vld [vmem:[#allocation5 + $0xd0] sm:$0xff]
      %v6628 = vld [vmem:[#allocation5 + $0xd8] sm:$0xff]
      %v6630 = vsel %vm2498, %v6608, 0
      %v6633 = vsel %vm2498, %v6609, 0
      %v6636 = vsel %vm2498, %v6610, 0
      %v6639 = vsel %vm2498, %v6611, 0
      %6641 = vmatprep.subr.bf16.mxu0 0
      %6642 = vmatpush1.bf16.msra.mxu0 %v6625
      %6643 = vmatprep.subr.bf16.mxu0 0
      %6644 = vmatpush1.bf16.msra.mxu0 %v6626
      %6645 = vmatprep.subr.bf16.mxu0 0
      %6646 = vmatpush1.bf16.msra.mxu0 %v6627
      %6647 = vmatprep.subr.bf16.mxu0 0
      %6648 = vmatpush1.bf16.msra.mxu0 %v6628
      %6649 = vmatprep.subr.bf16.mxu0 0
      %6650 = vmatpush1.bf16.msra.mxu0 0
      %6651 = vmatprep.subr.bf16.mxu0 0
      %6652 = vmatpush1.bf16.msra.mxu0 0
      %6653 = vmatprep.subr.bf16.mxu0 0
      %6654 = vmatpush1.bf16.msra.mxu0 0
      %6655 = vmatprep.subr.bf16.mxu0 0
      %6656 = vmatpush1.bf16.msra.mxu0 0
      %6657 = vmatprep.subr.bf16.mxu0 0
      %6658 = vmatpush1.bf16.msra.mxu0 0
      %6659 = vmatprep.subr.bf16.mxu0 0
      %6660 = vmatpush1.bf16.msra.mxu0 0
      %6661 = vmatprep.subr.bf16.mxu0 0
      %6662 = vmatpush1.bf16.msra.mxu0 0
      %6663 = vmatprep.subr.bf16.mxu0 0
      %6664 = vmatpush1.bf16.msra.mxu0 0
      %6665 = vmatprep.subr.bf16.mxu0 0
      %6666 = vmatpush1.bf16.msra.mxu0 0
      %6667 = vmatprep.subr.bf16.mxu0 0
      %6668 = vmatpush1.bf16.msra.mxu0 0
      %6669 = vmatprep.subr.bf16.mxu0 0
      %6670 = vmatpush1.bf16.msra.mxu0 0
      %6671 = vmatprep.subr.bf16.mxu0 0
      %6672 = vmatpush1.bf16.msra.mxu0 0
      %6673 = vmatprep.mubr.bf16.mxu0 0
      %6674 = vmatmul.mubr.bf16.gmra.mrb[0].mxu0 %v6630
      %v6675 = vpop.f32.mrb[0].mxu0
      %v6676 = vadd.f32 0.0, %v6675
      %v6677 = vpop.f32.mrb[0].mxu0
      %v6678 = vpop.f32.mrb[0].mxu0
      %v6679 = vadd.f32 0.0, %v6678
      %v6680 = vpop.f32.mrb[0].mxu0
      %6681 = vmatprep.mubr.bf16.mxu0 0
      %6682 = vmatmul.mubr.bf16.gmra.mrb[0].mxu0 %v6633
      %v6683 = vpop.f32.mrb[0].mxu0
      %v6684 = vadd.f32 0.0, %v6683
      %v6685 = vpop.f32.mrb[0].mxu0
      %v6686 = vpop.f32.mrb[0].mxu0
      %v6687 = vadd.f32 0.0, %v6686
      %v6688 = vpop.f32.mrb[0].mxu0
      %6689 = vmatprep.mubr.bf16.mxu0 0
      %6690 = vmatmul.mubr.bf16.gmra.mrb[0].mxu0 %v6636
      %v6691 = vpop.f32.mrb[0].mxu0
      %v6692 = vadd.f32 0.0, %v6691
      %v6693 = vpop.f32.mrb[0].mxu0
      %v6694 = vpop.f32.mrb[0].mxu0
      %v6695 = vadd.f32 0.0, %v6694
      %v6696 = vpop.f32.mrb[0].mxu0
      %6697 = vmatprep.mubr.bf16.mxu0 0
      %6698 = vmatmul.mubr.bf16.gmra.mrb[0].mxu0 %v6639
      %v6699 = vpop.f32.mrb[0].mxu0
      %v6700 = vadd.f32 0.0, %v6699
      %v6701 = vpop.f32.mrb[0].mxu0
      %v6702 = vpop.f32.mrb[0].mxu0
      %v6703 = vadd.f32 0.0, %v6702
      %v6704 = vpop.f32.mrb[0].mxu0
      %6705 = vdwg.mxu0
      %6707 = vset.pattern.permute.xlu0 0
      %6708 = vperm.xlu0 %6707, %v6592
      %v6709 = vpop.permute.xlu0 %6708
      %6712 = vset.pattern.permute.xlu0 0
      %6713 = vperm.xlu0 %6712, %v6593
      %v6714 = vpop.permute.xlu0 %6713
      %6717 = vset.pattern.permute.xlu0 0
      %6718 = vperm.xlu0 %6717, %v6594
      %v6719 = vpop.permute.xlu0 %6718
      %6722 = vset.pattern.permute.xlu0 0
      %6723 = vperm.xlu0 %6722, %v6595
      %v6724 = vpop.permute.xlu0 %6723
      %6727 = vset.pattern.permute.xlu0 0
      %6728 = vperm.xlu0 %6727, %v6596
      %v6729 = vpop.permute.xlu0 %6728
      %6732 = vset.pattern.permute.xlu0 0
      %6733 = vperm.xlu0 %6732, %v6597
      %v6734 = vpop.permute.xlu0 %6733
      %6737 = vset.pattern.permute.xlu0 0
      %6738 = vperm.xlu0 %6737, %v6598
      %v6739 = vpop.permute.xlu0 %6738
      %6742 = vset.pattern.permute.xlu0 0
      %6743 = vperm.xlu0 %6742, %v6599
      %v6744 = vpop.permute.xlu0 %6743
      %v6746 = vmul.f32 %v6676, %v6709
      %v6747 = vmul.f32 %v6679, %v6714
      %v6748 = vmul.f32 %v6684, %v6719
      %v6749 = vmul.f32 %v6687, %v6724
      %v6750 = vmul.f32 %v6692, %v6729
      %v6751 = vmul.f32 %v6695, %v6734
      %v6752 = vmul.f32 %v6700, %v6739
      %v6753 = vmul.f32 %v6703, %v6744
      %v6754 = vld [vmem:[#allocation3 + $0xc0] sm:$0xff]
      %v6755 = vld [vmem:[#allocation3 + $0xc8] sm:$0xff]
      %v6756 = vld [vmem:[#allocation3 + $0xd0] sm:$0xff]
      %v6757 = vld [vmem:[#allocation3 + $0xd8] sm:$0xff]
      %v6759 = vsel %vm2498, %v6621, 0
      %v6762 = vsel %vm2498, %v6622, 0
      %v6765 = vsel %vm2498, %v6623, 0
      %v6768 = vsel %vm2498, %v6624, 0
      %6770 = vmatprep.subr.bf16.mxu0 0
      %6771 = vmatpush1.bf16.msra.mxu0 %v6754
      %6772 = vmatprep.subr.bf16.mxu0 0
      %6773 = vmatpush1.bf16.msra.mxu0 %v6755
      %6774 = vmatprep.subr.bf16.mxu0 0
      %6775 = vmatpush1.bf16.msra.mxu0 %v6756
      %6776 = vmatprep.subr.bf16.mxu0 0
      %6777 = vmatpush1.bf16.msra.mxu0 %v6757
      %6778 = vmatprep.subr.bf16.mxu0 0
      %6779 = vmatpush1.bf16.msra.mxu0 0
      %6780 = vmatprep.subr.bf16.mxu0 0
      %6781 = vmatpush1.bf16.msra.mxu0 0
      %6782 = vmatprep.subr.bf16.mxu0 0
      %6783 = vmatpush1.bf16.msra.mxu0 0
      %6784 = vmatprep.subr.bf16.mxu0 0
      %6785 = vmatpush1.bf16.msra.mxu0 0
      %6786 = vmatprep.subr.bf16.mxu0 0
      %6787 = vmatpush1.bf16.msra.mxu0 0
      %6788 = vmatprep.subr.bf16.mxu0 0
      %6789 = vmatpush1.bf16.msra.mxu0 0
      %6790 = vmatprep.subr.bf16.mxu0 0
      %6791 = vmatpush1.bf16.msra.mxu0 0
      %6792 = vmatprep.subr.bf16.mxu0 0
      %6793 = vmatpush1.bf16.msra.mxu0 0
      %6794 = vmatprep.subr.bf16.mxu0 0
      %6795 = vmatpush1.bf16.msra.mxu0 0
      %6796 = vmatprep.subr.bf16.mxu0 0
      %6797 = vmatpush1.bf16.msra.mxu0 0
      %6798 = vmatprep.subr.bf16.mxu0 0
      %6799 = vmatpush1.bf16.msra.mxu0 0
      %6800 = vmatprep.subr.bf16.mxu0 0
      %6801 = vmatpush1.bf16.msra.mxu0 0
      %6802 = vmatprep.mubr.bf16.mxu0 0
      %6803 = vmatmul.mubr.bf16.gmra.mrb[0].mxu0 %v6759
      %v6804 = vpop.f32.mrb[0].mxu0
      %v6805 = vadd.f32 0.0, %v6804
      %v6806 = vpop.f32.mrb[0].mxu0
      %v6807 = vpop.f32.mrb[0].mxu0
      %v6808 = vadd.f32 0.0, %v6807
      %v6809 = vpop.f32.mrb[0].mxu0
      %6810 = vmatprep.mubr.bf16.mxu0 0
      %6811 = vmatmul.mubr.bf16.gmra.mrb[0].mxu0 %v6762
      %v6812 = vpop.f32.mrb[0].mxu0
      %v6813 = vadd.f32 0.0, %v6812
      %v6814 = vpop.f32.mrb[0].mxu0
      %v6815 = vpop.f32.mrb[0].mxu0
      %v6816 = vadd.f32 0.0, %v6815
      %v6817 = vpop.f32.mrb[0].mxu0
      %6818 = vmatprep.mubr.bf16.mxu0 0
      %6819 = vmatmul.mubr.bf16.gmra.mrb[0].mxu0 %v6765
      %v6820 = vpop.f32.mrb[0].mxu0
      %v6821 = vadd.f32 0.0, %v6820
      %v6822 = vpop.f32.mrb[0].mxu0
      %v6823 = vpop.f32.mrb[0].mxu0
      %v6824 = vadd.f32 0.0, %v6823
      %v6825 = vpop.f32.mrb[0].mxu0
      %6826 = vmatprep.mubr.bf16.mxu0 0
      %6827 = vmatmul.mubr.bf16.gmra.mrb[0].mxu0 %v6768
      %v6828 = vpop.f32.mrb[0].mxu0
      %v6829 = vadd.f32 0.0, %v6828
      %v6830 = vpop.f32.mrb[0].mxu0
      %v6831 = vpop.f32.mrb[0].mxu0
      %v6832 = vadd.f32 0.0, %v6831
      %v6833 = vpop.f32.mrb[0].mxu0
      %6834 = vdwg.mxu0
      %6835 = vset.pattern.permute.xlu0 1
      %6836 = vperm.xlu0 %6835, %v6592
      %v6837 = vpop.permute.xlu0 %6836
      %6839 = vset.pattern.permute.xlu0 1
      %6840 = vperm.xlu0 %6839, %v6593
      %v6841 = vpop.permute.xlu0 %6840
      %6843 = vset.pattern.permute.xlu0 1
      %6844 = vperm.xlu0 %6843, %v6594
      %v6845 = vpop.permute.xlu0 %6844
      %6847 = vset.pattern.permute.xlu0 1
      %6848 = vperm.xlu0 %6847, %v6595
      %v6849 = vpop.permute.xlu0 %6848
      %6851 = vset.pattern.permute.xlu0 1
      %6852 = vperm.xlu0 %6851, %v6596
      %v6853 = vpop.permute.xlu0 %6852
      %6855 = vset.pattern.permute.xlu0 1
      %6856 = vperm.xlu0 %6855, %v6597
      %v6857 = vpop.permute.xlu0 %6856
      %6859 = vset.pattern.permute.xlu0 1
      %6860 = vperm.xlu0 %6859, %v6598
      %v6861 = vpop.permute.xlu0 %6860
      %6863 = vset.pattern.permute.xlu0 1
      %6864 = vperm.xlu0 %6863, %v6599
      %v6865 = vpop.permute.xlu0 %6864
      %v6867 = vmul.f32 %v6805, %v6837
      %v6868 = vmul.f32 %v6808, %v6841
      %v6869 = vmul.f32 %v6813, %v6845
      %v6870 = vmul.f32 %v6816, %v6849
      %v6871 = vmul.f32 %v6821, %v6853
      %v6872 = vmul.f32 %v6824, %v6857
      %v6873 = vmul.f32 %v6829, %v6861
      %v6874 = vmul.f32 %v6832, %v6865
      %v6875 = vadd.f32 %v6746, %v6867
      %v6876 = vadd.f32 %v6747, %v6868
      %v6877 = vadd.f32 %v6748, %v6869
      %v6878 = vadd.f32 %v6749, %v6870
      %v6879 = vadd.f32 %v6750, %v6871
      %v6880 = vadd.f32 %v6751, %v6872
      %v6881 = vadd.f32 %v6752, %v6873
      %v6882 = vadd.f32 %v6753, %v6874
      %v6883 = vld [vmem:[#allocation6 + $0x180] sm:$0xff]
      %v6884 = vld [vmem:[#allocation6 + $0x188] sm:$0xff]
      %v6885 = vld [vmem:[#allocation6 + $0x190] sm:$0xff]
      %v6886 = vld [vmem:[#allocation6 + $0x198] sm:$0xff]
      %v6887 = vld [vmem:[#allocation6 + $0x1a0] sm:$0xff]
      %v6888 = vld [vmem:[#allocation6 + $0x1a8] sm:$0xff]
      %v6889 = vld [vmem:[#allocation6 + $0x1b0] sm:$0xff]
      %v6890 = vld [vmem:[#allocation6 + $0x1b8] sm:$0xff]
      %v6891 = vadd.f32 %v6875, %v6883
      %v6892 = vadd.f32 %v6876, %v6884
      %v6893 = vadd.f32 %v6877, %v6885
      %v6894 = vadd.f32 %v6878, %v6886
      %v6895 = vadd.f32 %v6879, %v6887
      %v6896 = vadd.f32 %v6880, %v6888
      %v6897 = vadd.f32 %v6881, %v6889
      %v6898 = vadd.f32 %v6882, %v6890
      %v6899 = vxor.u32 %v6891, 2147483648
      %v6900 = vxor.u32 %v6892, 2147483648
      %v6901 = vxor.u32 %v6893, 2147483648
      %v6902 = vxor.u32 %v6894, 2147483648
      %v6903 = vxor.u32 %v6895, 2147483648
      %v6904 = vxor.u32 %v6896, 2147483648
      %v6905 = vxor.u32 %v6897, 2147483648
      %v6906 = vxor.u32 %v6898, 2147483648
      %v6907 = vmul.f32 %v6899, 1.442695
      %v6908 = vpow.pop %v6907
      %v6909 = vmul.f32 %v6900, 1.442695
      %v6910 = vpow.pop %v6909
      %v6911 = vmul.f32 %v6901, 1.442695
      %v6912 = vpow.pop %v6911
      %v6913 = vmul.f32 %v6902, 1.442695
      %v6914 = vpow.pop %v6913
      %v6915 = vmul.f32 %v6903, 1.442695
      %v6916 = vpow.pop %v6915
      %v6917 = vmul.f32 %v6904, 1.442695
      %v6918 = vpow.pop %v6917
      %v6919 = vmul.f32 %v6905, 1.442695
      %v6920 = vpow.pop %v6919
      %v6921 = vmul.f32 %v6906, 1.442695
      %v6922 = vpow.pop %v6921
      %v6923 = vadd.f32 %v6908, 1.0
      %v6924 = vadd.f32 %v6910, 1.0
      %v6925 = vadd.f32 %v6912, 1.0
      %v6926 = vadd.f32 %v6914, 1.0
      %v6927 = vadd.f32 %v6916, 1.0
      %v6928 = vadd.f32 %v6918, 1.0
      %v6929 = vadd.f32 %v6920, 1.0
      %v6930 = vadd.f32 %v6922, 1.0
      %v6931 = vrcp.pop %v6923
      %v6932 = vmul.f32 1.0, %v6931
      %v6933 = vrcp.pop %v6924
      %v6934 = vmul.f32 1.0, %v6933
      %v6935 = vrcp.pop %v6925
      %v6936 = vmul.f32 1.0, %v6935
      %v6937 = vrcp.pop %v6926
      %v6938 = vmul.f32 1.0, %v6937
      %v6939 = vrcp.pop %v6927
      %v6940 = vmul.f32 1.0, %v6939
      %v6941 = vrcp.pop %v6928
      %v6942 = vmul.f32 1.0, %v6941
      %v6943 = vrcp.pop %v6929
      %v6944 = vmul.f32 1.0, %v6943
      %v6945 = vrcp.pop %v6930
      %v6946 = vmul.f32 1.0, %v6945
      %6947 = vst.msk [vmem:[%s401 + $0x180] sm:$0xff] %vm578, %v6932
      %6948 = vst.msk [vmem:[%s401 + $0x188] sm:$0xff] %vm578, %v6934
      %6949 = vst.msk [vmem:[%s401 + $0x190] sm:$0xff] %vm578, %v6936
      %6950 = vst.msk [vmem:[%s401 + $0x198] sm:$0xff] %vm578, %v6938
      %6951 = vst.msk [vmem:[%s401 + $0x1a0] sm:$0xff] %vm578, %v6940
      %6952 = vst.msk [vmem:[%s401 + $0x1a8] sm:$0xff] %vm578, %v6942
      %6953 = vst.msk [vmem:[%s401 + $0x1b0] sm:$0xff] %vm578, %v6944
      %6954 = vst.msk [vmem:[%s401 + $0x1b8] sm:$0xff] %vm578, %v6946
      %v6955 = vld [vmem:[%s395 + $0x1c0] sm:$0xff]
      %v6956 = vld [vmem:[%s395 + $0x1c8] sm:$0xff]
      %v6957 = vld [vmem:[%s395 + $0x1d0] sm:$0xff]
      %v6958 = vld [vmem:[%s395 + $0x1d8] sm:$0xff]
      %v6959 = vld [vmem:[%s395 + $0x1e0] sm:$0xff]
      %v6960 = vld [vmem:[%s395 + $0x1e8] sm:$0xff]
      %v6961 = vld [vmem:[%s395 + $0x1f0] sm:$0xff]
      %v6962 = vld [vmem:[%s395 + $0x1f8] sm:$0xff]
      %v6963 = vld [vmem:[%s3760] sm:$0xff]
      %v6964 = vld [vmem:[%s3760 + $0x8] sm:$0xff]
      %v6965 = vld [vmem:[%s3760 + $0x10] sm:$0xff]
      %v6966 = vld [vmem:[%s3760 + $0x18] sm:$0xff]
      %v6967 = vld [vmem:[%s3760 + $0x20] sm:$0xff]
      %v6968 = vld [vmem:[%s3760 + $0x28] sm:$0xff]
      %v6969 = vld [vmem:[%s3760 + $0x30] sm:$0xff]
      %v6970 = vld [vmem:[%s3760 + $0x38] sm:$0xff]
      %v6971 = vpack.c.bf16 %v6964, %v6963
      %v6972 = vpack.c.bf16 %v6966, %v6965
      %v6973 = vpack.c.bf16 %v6968, %v6967
      %v6974 = vpack.c.bf16 %v6970, %v6969
      %s6975 = scalar_lea.vmem %s389, 448
      %v6976 = vld [vmem:[%s6975] sm:$0xff]
      %v6977 = vld [vmem:[%s6975 + $0x8] sm:$0xff]
      %v6978 = vld [vmem:[%s6975 + $0x10] sm:$0xff]
      %v6979 = vld [vmem:[%s6975 + $0x18] sm:$0xff]
      %v6980 = vld [vmem:[%s6975 + $0x20] sm:$0xff]
      %v6981 = vld [vmem:[%s6975 + $0x28] sm:$0xff]
      %v6982 = vld [vmem:[%s6975 + $0x30] sm:$0xff]
      %v6983 = vld [vmem:[%s6975 + $0x38] sm:$0xff]
      %v6984 = vpack.c.bf16 %v6977, %v6976
      %v6985 = vpack.c.bf16 %v6979, %v6978
      %v6986 = vpack.c.bf16 %v6981, %v6980
      %v6987 = vpack.c.bf16 %v6983, %v6982
      %v6988 = vld [vmem:[#allocation5 + $0xe0] sm:$0xff]
      %v6989 = vld [vmem:[#allocation5 + $0xe8] sm:$0xff]
      %v6990 = vld [vmem:[#allocation5 + $0xf0] sm:$0xff]
      %v6991 = vld [vmem:[#allocation5 + $0xf8] sm:$0xff]
      %v6993 = vsel %vm2498, %v6971, 0
      %v6996 = vsel %vm2498, %v6972, 0
      %v6999 = vsel %vm2498, %v6973, 0
      %v7002 = vsel %vm2498, %v6974, 0
      %7004 = vmatprep.subr.bf16.mxu0 0
      %7005 = vmatpush1.bf16.msra.mxu0 %v6988
      %7006 = vmatprep.subr.bf16.mxu0 0
      %7007 = vmatpush1.bf16.msra.mxu0 %v6989
      %7008 = vmatprep.subr.bf16.mxu0 0
      %7009 = vmatpush1.bf16.msra.mxu0 %v6990
      %7010 = vmatprep.subr.bf16.mxu0 0
      %7011 = vmatpush1.bf16.msra.mxu0 %v6991
      %7012 = vmatprep.subr.bf16.mxu0 0
      %7013 = vmatpush1.bf16.msra.mxu0 0
      %7014 = vmatprep.subr.bf16.mxu0 0
      %7015 = vmatpush1.bf16.msra.mxu0 0
      %7016 = vmatprep.subr.bf16.mxu0 0
      %7017 = vmatpush1.bf16.msra.mxu0 0
      %7018 = vmatprep.subr.bf16.mxu0 0
      %7019 = vmatpush1.bf16.msra.mxu0 0
      %7020 = vmatprep.subr.bf16.mxu0 0
      %7021 = vmatpush1.bf16.msra.mxu0 0
      %7022 = vmatprep.subr.bf16.mxu0 0
      %7023 = vmatpush1.bf16.msra.mxu0 0
      %7024 = vmatprep.subr.bf16.mxu0 0
      %7025 = vmatpush1.bf16.msra.mxu0 0
      %7026 = vmatprep.subr.bf16.mxu0 0
      %7027 = vmatpush1.bf16.msra.mxu0 0
      %7028 = vmatprep.subr.bf16.mxu0 0
      %7029 = vmatpush1.bf16.msra.mxu0 0
      %7030 = vmatprep.subr.bf16.mxu0 0
      %7031 = vmatpush1.bf16.msra.mxu0 0
      %7032 = vmatprep.subr.bf16.mxu0 0
      %7033 = vmatpush1.bf16.msra.mxu0 0
      %7034 = vmatprep.subr.bf16.mxu0 0
      %7035 = vmatpush1.bf16.msra.mxu0 0
      %7036 = vmatprep.mubr.bf16.mxu0 0
      %7037 = vmatmul.mubr.bf16.gmra.mrb[0].mxu0 %v6993
      %v7038 = vpop.f32.mrb[0].mxu0
      %v7039 = vadd.f32 0.0, %v7038
      %v7040 = vpop.f32.mrb[0].mxu0
      %v7041 = vpop.f32.mrb[0].mxu0
      %v7042 = vadd.f32 0.0, %v7041
      %v7043 = vpop.f32.mrb[0].mxu0
      %7044 = vmatprep.mubr.bf16.mxu0 0
      %7045 = vmatmul.mubr.bf16.gmra.mrb[0].mxu0 %v6996
      %v7046 = vpop.f32.mrb[0].mxu0
      %v7047 = vadd.f32 0.0, %v7046
      %v7048 = vpop.f32.mrb[0].mxu0
      %v7049 = vpop.f32.mrb[0].mxu0
      %v7050 = vadd.f32 0.0, %v7049
      %v7051 = vpop.f32.mrb[0].mxu0
      %7052 = vmatprep.mubr.bf16.mxu0 0
      %7053 = vmatmul.mubr.bf16.gmra.mrb[0].mxu0 %v6999
      %v7054 = vpop.f32.mrb[0].mxu0
      %v7055 = vadd.f32 0.0, %v7054
      %v7056 = vpop.f32.mrb[0].mxu0
      %v7057 = vpop.f32.mrb[0].mxu0
      %v7058 = vadd.f32 0.0, %v7057
      %v7059 = vpop.f32.mrb[0].mxu0
      %7060 = vmatprep.mubr.bf16.mxu0 0
      %7061 = vmatmul.mubr.bf16.gmra.mrb[0].mxu0 %v7002
      %v7062 = vpop.f32.mrb[0].mxu0
      %v7063 = vadd.f32 0.0, %v7062
      %v7064 = vpop.f32.mrb[0].mxu0
      %v7065 = vpop.f32.mrb[0].mxu0
      %v7066 = vadd.f32 0.0, %v7065
      %v7067 = vpop.f32.mrb[0].mxu0
      %7068 = vdwg.mxu0
      %7070 = vset.pattern.permute.xlu0 0
      %7071 = vperm.xlu0 %7070, %v6955
      %v7072 = vpop.permute.xlu0 %7071
      %7075 = vset.pattern.permute.xlu0 0
      %7076 = vperm.xlu0 %7075, %v6956
      %v7077 = vpop.permute.xlu0 %7076
      %7080 = vset.pattern.permute.xlu0 0
      %7081 = vperm.xlu0 %7080, %v6957
      %v7082 = vpop.permute.xlu0 %7081
      %7085 = vset.pattern.permute.xlu0 0
      %7086 = vperm.xlu0 %7085, %v6958
      %v7087 = vpop.permute.xlu0 %7086
      %7090 = vset.pattern.permute.xlu0 0
      %7091 = vperm.xlu0 %7090, %v6959
      %v7092 = vpop.permute.xlu0 %7091
      %7095 = vset.pattern.permute.xlu0 0
      %7096 = vperm.xlu0 %7095, %v6960
      %v7097 = vpop.permute.xlu0 %7096
      %7100 = vset.pattern.permute.xlu0 0
      %7101 = vperm.xlu0 %7100, %v6961
      %v7102 = vpop.permute.xlu0 %7101
      %7105 = vset.pattern.permute.xlu0 0
      %7106 = vperm.xlu0 %7105, %v6962
      %v7107 = vpop.permute.xlu0 %7106
      %v7109 = vmul.f32 %v7039, %v7072
      %v7110 = vmul.f32 %v7042, %v7077
      %v7111 = vmul.f32 %v7047, %v7082
      %v7112 = vmul.f32 %v7050, %v7087
      %v7113 = vmul.f32 %v7055, %v7092
      %v7114 = vmul.f32 %v7058, %v7097
      %v7115 = vmul.f32 %v7063, %v7102
      %v7116 = vmul.f32 %v7066, %v7107
      %v7117 = vld [vmem:[#allocation3 + $0xe0] sm:$0xff]
      %v7118 = vld [vmem:[#allocation3 + $0xe8] sm:$0xff]
      %v7119 = vld [vmem:[#allocation3 + $0xf0] sm:$0xff]
      %v7120 = vld [vmem:[#allocation3 + $0xf8] sm:$0xff]
      %v7122 = vsel %vm2498, %v6984, 0
      %v7125 = vsel %vm2498, %v6985, 0
      %v7128 = vsel %vm2498, %v6986, 0
      %v7131 = vsel %vm2498, %v6987, 0
      %7133 = vmatprep.subr.bf16.mxu0 0
      %7134 = vmatpush1.bf16.msra.mxu0 %v7117
      %7135 = vmatprep.subr.bf16.mxu0 0
      %7136 = vmatpush1.bf16.msra.mxu0 %v7118
      %7137 = vmatprep.subr.bf16.mxu0 0
      %7138 = vmatpush1.bf16.msra.mxu0 %v7119
      %7139 = vmatprep.subr.bf16.mxu0 0
      %7140 = vmatpush1.bf16.msra.mxu0 %v7120
      %7141 = vmatprep.subr.bf16.mxu0 0
      %7142 = vmatpush1.bf16.msra.mxu0 0
      %7143 = vmatprep.subr.bf16.mxu0 0
      %7144 = vmatpush1.bf16.msra.mxu0 0
      %7145 = vmatprep.subr.bf16.mxu0 0
      %7146 = vmatpush1.bf16.msra.mxu0 0
      %7147 = vmatprep.subr.bf16.mxu0 0
      %7148 = vmatpush1.bf16.msra.mxu0 0
      %7149 = vmatprep.subr.bf16.mxu0 0
      %7150 = vmatpush1.bf16.msra.mxu0 0
      %7151 = vmatprep.subr.bf16.mxu0 0
      %7152 = vmatpush1.bf16.msra.mxu0 0
      %7153 = vmatprep.subr.bf16.mxu0 0
      %7154 = vmatpush1.bf16.msra.mxu0 0
      %7155 = vmatprep.subr.bf16.mxu0 0
      %7156 = vmatpush1.bf16.msra.mxu0 0
      %7157 = vmatprep.subr.bf16.mxu0 0
      %7158 = vmatpush1.bf16.msra.mxu0 0
      %7159 = vmatprep.subr.bf16.mxu0 0
      %7160 = vmatpush1.bf16.msra.mxu0 0
      %7161 = vmatprep.subr.bf16.mxu0 0
      %7162 = vmatpush1.bf16.msra.mxu0 0
      %7163 = vmatprep.subr.bf16.mxu0 0
      %7164 = vmatpush1.bf16.msra.mxu0 0
      %7165 = vmatprep.mubr.bf16.mxu0 0
      %7166 = vmatmul.mubr.bf16.gmra.mrb[0].mxu0 %v7122
      %v7167 = vpop.f32.mrb[0].mxu0
      %v7168 = vadd.f32 0.0, %v7167
      %v7169 = vpop.f32.mrb[0].mxu0
      %v7170 = vpop.f32.mrb[0].mxu0
      %v7171 = vadd.f32 0.0, %v7170
      %v7172 = vpop.f32.mrb[0].mxu0
      %7173 = vmatprep.mubr.bf16.mxu0 0
      %7174 = vmatmul.mubr.bf16.gmra.mrb[0].mxu0 %v7125
      %v7175 = vpop.f32.mrb[0].mxu0
      %v7176 = vadd.f32 0.0, %v7175
      %v7177 = vpop.f32.mrb[0].mxu0
      %v7178 = vpop.f32.mrb[0].mxu0
      %v7179 = vadd.f32 0.0, %v7178
      %v7180 = vpop.f32.mrb[0].mxu0
      %7181 = vmatprep.mubr.bf16.mxu0 0
      %7182 = vmatmul.mubr.bf16.gmra.mrb[0].mxu0 %v7128
      %v7183 = vpop.f32.mrb[0].mxu0
      %v7184 = vadd.f32 0.0, %v7183
      %v7185 = vpop.f32.mrb[0].mxu0
      %v7186 = vpop.f32.mrb[0].mxu0
      %v7187 = vadd.f32 0.0, %v7186
      %v7188 = vpop.f32.mrb[0].mxu0
      %7189 = vmatprep.mubr.bf16.mxu0 0
      %7190 = vmatmul.mubr.bf16.gmra.mrb[0].mxu0 %v7131
      %v7191 = vpop.f32.mrb[0].mxu0
      %v7192 = vadd.f32 0.0, %v7191
      %v7193 = vpop.f32.mrb[0].mxu0
      %v7194 = vpop.f32.mrb[0].mxu0
      %v7195 = vadd.f32 0.0, %v7194
      %v7196 = vpop.f32.mrb[0].mxu0
      %7197 = vdwg.mxu0
      %7198 = vset.pattern.permute.xlu0 1
      %7199 = vperm.xlu0 %7198, %v6955
      %v7200 = vpop.permute.xlu0 %7199
      %7202 = vset.pattern.permute.xlu0 1
      %7203 = vperm.xlu0 %7202, %v6956
      %v7204 = vpop.permute.xlu0 %7203
      %7206 = vset.pattern.permute.xlu0 1
      %7207 = vperm.xlu0 %7206, %v6957
      %v7208 = vpop.permute.xlu0 %7207
      %7210 = vset.pattern.permute.xlu0 1
      %7211 = vperm.xlu0 %7210, %v6958
      %v7212 = vpop.permute.xlu0 %7211
      %7214 = vset.pattern.permute.xlu0 1
      %7215 = vperm.xlu0 %7214, %v6959
      %v7216 = vpop.permute.xlu0 %7215
      %7218 = vset.pattern.permute.xlu0 1
      %7219 = vperm.xlu0 %7218, %v6960
      %v7220 = vpop.permute.xlu0 %7219
      %7222 = vset.pattern.permute.xlu0 1
      %7223 = vperm.xlu0 %7222, %v6961
      %v7224 = vpop.permute.xlu0 %7223
      %7226 = vset.pattern.permute.xlu0 1
      %7227 = vperm.xlu0 %7226, %v6962
      %v7228 = vpop.permute.xlu0 %7227
      %v7230 = vmul.f32 %v7168, %v7200
      %v7231 = vmul.f32 %v7171, %v7204
      %v7232 = vmul.f32 %v7176, %v7208
      %v7233 = vmul.f32 %v7179, %v7212
      %v7234 = vmul.f32 %v7184, %v7216
      %v7235 = vmul.f32 %v7187, %v7220
      %v7236 = vmul.f32 %v7192, %v7224
      %v7237 = vmul.f32 %v7195, %v7228
      %v7238 = vadd.f32 %v7109, %v7230
      %v7239 = vadd.f32 %v7110, %v7231
      %v7240 = vadd.f32 %v7111, %v7232
      %v7241 = vadd.f32 %v7112, %v7233
      %v7242 = vadd.f32 %v7113, %v7234
      %v7243 = vadd.f32 %v7114, %v7235
      %v7244 = vadd.f32 %v7115, %v7236
      %v7245 = vadd.f32 %v7116, %v7237
      %v7246 = vld [vmem:[#allocation6 + $0x1c0] sm:$0xff]
      %v7247 = vld [vmem:[#allocation6 + $0x1c8] sm:$0xff]
      %v7248 = vld [vmem:[#allocation6 + $0x1d0] sm:$0xff]
      %v7249 = vld [vmem:[#allocation6 + $0x1d8] sm:$0xff]
      %v7250 = vld [vmem:[#allocation6 + $0x1e0] sm:$0xff]
      %v7251 = vld [vmem:[#allocation6 + $0x1e8] sm:$0xff]
      %v7252 = vld [vmem:[#allocation6 + $0x1f0] sm:$0xff]
      %v7253 = vld [vmem:[#allocation6 + $0x1f8] sm:$0xff]
      %v7254 = vadd.f32 %v7238, %v7246
      %v7255 = vadd.f32 %v7239, %v7247
      %v7256 = vadd.f32 %v7240, %v7248
      %v7257 = vadd.f32 %v7241, %v7249
      %v7258 = vadd.f32 %v7242, %v7250
      %v7259 = vadd.f32 %v7243, %v7251
      %v7260 = vadd.f32 %v7244, %v7252
      %v7261 = vadd.f32 %v7245, %v7253
      %v7262 = vxor.u32 %v7254, 2147483648
      %v7263 = vxor.u32 %v7255, 2147483648
      %v7264 = vxor.u32 %v7256, 2147483648
      %v7265 = vxor.u32 %v7257, 2147483648
      %v7266 = vxor.u32 %v7258, 2147483648
      %v7267 = vxor.u32 %v7259, 2147483648
      %v7268 = vxor.u32 %v7260, 2147483648
      %v7269 = vxor.u32 %v7261, 2147483648
      %v7270 = vmul.f32 %v7262, 1.442695
      %v7271 = vpow.pop %v7270
      %v7272 = vmul.f32 %v7263, 1.442695
      %v7273 = vpow.pop %v7272
      %v7274 = vmul.f32 %v7264, 1.442695
      %v7275 = vpow.pop %v7274
      %v7276 = vmul.f32 %v7265, 1.442695
      %v7277 = vpow.pop %v7276
      %v7278 = vmul.f32 %v7266, 1.442695
      %v7279 = vpow.pop %v7278
      %v7280 = vmul.f32 %v7267, 1.442695
      %v7281 = vpow.pop %v7280
      %v7282 = vmul.f32 %v7268, 1.442695
      %v7283 = vpow.pop %v7282
      %v7284 = vmul.f32 %v7269, 1.442695
      %v7285 = vpow.pop %v7284
      %v7286 = vadd.f32 %v7271, 1.0
      %v7287 = vadd.f32 %v7273, 1.0
      %v7288 = vadd.f32 %v7275, 1.0
      %v7289 = vadd.f32 %v7277, 1.0
      %v7290 = vadd.f32 %v7279, 1.0
      %v7291 = vadd.f32 %v7281, 1.0
      %v7292 = vadd.f32 %v7283, 1.0
      %v7293 = vadd.f32 %v7285, 1.0
      %v7294 = vrcp.pop %v7286
      %v7295 = vmul.f32 1.0, %v7294
      %v7296 = vrcp.pop %v7287
      %v7297 = vmul.f32 1.0, %v7296
      %v7298 = vrcp.pop %v7288
      %v7299 = vmul.f32 1.0, %v7298
      %v7300 = vrcp.pop %v7289
      %v7301 = vmul.f32 1.0, %v7300
      %v7302 = vrcp.pop %v7290
      %v7303 = vmul.f32 1.0, %v7302
      %v7304 = vrcp.pop %v7291
      %v7305 = vmul.f32 1.0, %v7304
      %v7306 = vrcp.pop %v7292
      %v7307 = vmul.f32 1.0, %v7306
      %v7308 = vrcp.pop %v7293
      %v7309 = vmul.f32 1.0, %v7308
      %7310 = vst.msk [vmem:[%s401 + $0x1c0] sm:$0xff] %vm578, %v7295
      %7311 = vst.msk [vmem:[%s401 + $0x1c8] sm:$0xff] %vm578, %v7297
      %7312 = vst.msk [vmem:[%s401 + $0x1d0] sm:$0xff] %vm578, %v7299
      %7313 = vst.msk [vmem:[%s401 + $0x1d8] sm:$0xff] %vm578, %v7301
      %7314 = vst.msk [vmem:[%s401 + $0x1e0] sm:$0xff] %vm578, %v7303
      %7315 = vst.msk [vmem:[%s401 + $0x1e8] sm:$0xff] %vm578, %v7305
      %7316 = vst.msk [vmem:[%s401 + $0x1f0] sm:$0xff] %vm578, %v7307
      %7317 = vst.msk [vmem:[%s401 + $0x1f8] sm:$0xff] %vm578, %v7309
      %s7318 = smul.u32 64, %s19
      %p7319 = scmp.lt.s32.totalorder %s7318, 511
      %s7320 = scalar_select %p7319, %s7318, 511
      %s7321 = smul.addr %s7320, 8
      %s7322 = scalar_lea.vmem %s8, %s7321
      // Predicated region
      $region53: #{ginn_autoencoder_global_forward.1} parent=51 // pred_check
        %p7323 = pneg %p230
      $region54: #{ginn_autoencoder_global_forward.1} parent=51 // pred_check_branch
        %7325 = sbr.rel (%p7323) target = $region56
      $region55: #{ginn_autoencoder_global_forward.1} parent=51 // pred_region
        %s7326 = smul.u32 64, %s19
      $region56: #{ginn_autoencoder_global_forward.1} parent=51 // pred_fallthru
        _
    $region52: #{ginn_autoencoder_global_forward.1} parent=5 // pred_fallthru
      _
    %p7327 = scmp.le.s32.totalorder 2, %s14
    // Predicated region
    $region57: #{ginn_autoencoder_global_forward.1} parent=5 // pred_check
      %p7328 = pneg %p7327
    $region58: #{ginn_autoencoder_global_forward.1} parent=5 // pred_check_branch
      %7330 = sbr.rel (%p7328) target = $region60
    $region59: #{ginn_autoencoder_global_forward.1} parent=5 // pred_region
      %s7331 = ssub.s32 %s14, 2
      // Predicated region
      $region61: #{ginn_autoencoder_global_forward.1} parent=59 // pred_check
        %p7332 = pneg %p236
      $region62: #{ginn_autoencoder_global_forward.1} parent=59 // pred_check_branch
        %7334 = sbr.rel (%p7332) target = $region64
      $region63: #{ginn_autoencoder_global_forward.1} parent=59 // pred_region
        %s7335 = smul.u32 64, %s20
        %p7336 = scmp.lt.s32.totalorder %s7335, 511
        %s7337 = scalar_select %p7336, %s7335, 511
        %s7338 = smul.addr %s7337, 8
        %s7339 = scalar_lea.vmem %s8, %s7338
      $region64: #{ginn_autoencoder_global_forward.1} parent=59 // pred_fallthru
        _
    $region60: #{ginn_autoencoder_global_forward.1} parent=5 // pred_fallthru
      _
  $region6: #{ginn_autoencoder_global_forward.1} parent=0 // loop_footer
    %s18 = sadd.s32 1, %s14
  $region7: #{ginn_autoencoder_global_forward.1} parent=0 // loop_footer_branch
    %13 = sbr.rel target = $region3
  $region8: #{ginn_autoencoder_global_forward.1} parent=0 // loop_exit
    _

</llo_original>
